<compile_context>
chip_gen: v5e
topology: v5e:2x2
jax: 0.10.0
libtpu: 0.0.40
codegen_flags: <defaults>
</compile_context>

<pallas_src>
import functools
import math

import jax
import jax.numpy as jnp
from jax.experimental import pallas as pl
from jax.experimental.pallas import tpu as pltpu


_TM_TARGET_ROWS = 1024          # target rows per tile (review: 512-2048, VMEM-safe on v7x)
_VMEM_LIMIT = 32 * 1024 * 1024  # explicit scoped-VMEM budget (safe on v5e/v6e/v7x)


def _lcm(a, b):
    return a * b // math.gcd(a, b)


def _choose_tm(mrow, wpad, target=_TM_TARGET_ROWS):
    """Largest row-tile <= target that divides mrow, is a multiple of 8 (sublane
    alignment) and of wpad (so tile boundaries land on image-row starts)."""
    unit = _lcm(8, wpad)
    t = (min(target, mrow) // unit) * unit
    while t >= unit:
        if mrow % t == 0:
            return t
        t -= unit
    return mrow  # fall back to full extent (allowed: block == full array dim)


# --------------------------------------------------------------------------- kernels
def _accum_conv3x3(v_refs, w_ref, tm, cout):
    """Accumulate the 9 taps of a 3x3 SAME conv as MXU matmuls.

    v_refs: three (1, tm, Cin) f32 refs = rows shifted by dy=0,1,2 (width-padded,
            row-flattened layout).  dx shifts are circular sublane rolls; wrapped
            rows only ever land in the discarded width-pad output columns.
    w_ref:  (9, Cin, Cout) bf16 taps, index = dy*3+dx.
    """
    acc = jnp.zeros((tm, cout), jnp.float32)
    for dy, vref in enumerate(v_refs):
        v = vref[0]                                   # (tm, Cin) f32
        for dx in range(3):
            shift = (1 - dx) % tm
            sh = v if shift == 0 else pltpu.roll(v, shift, axis=0)
            acc = acc + jnp.dot(sh.astype(jnp.bfloat16), w_ref[dy * 3 + dx],
                                preferred_element_type=jnp.float32)
    return acc


def _conv3x3_kernel(v0, v1, v2, w_ref, b_ref, o_ref, *, wpad, relu, zero_pad_cols):
    """3x3 SAME conv + bias (+ ReLU); optionally zero the width-pad columns so the
    output can be consumed directly as the zero-padded input of the next conv."""
    tm = o_ref.shape[1]
    cout = o_ref.shape[2]
    acc = _accum_conv3x3((v0, v1, v2), w_ref, tm, cout)
    acc = acc + b_ref[...]
    if relu:
        acc = jnp.maximum(acc, 0.0)
    if zero_pad_cols:
        r = jax.lax.broadcasted_iota(jnp.int32, (tm, cout), 0) % wpad
        acc = jnp.where((r != 0) & (r != wpad - 1), acc, 0.0)
    o_ref[0] = acc.astype(o_ref.dtype)


def _feat_heads_kernel(v0, v1, v2, wf_ref, bf_ref, wh_ref, bh_ref, o_ref):
    """Fused CSP head: feat = ReLU(3x3 conv) kept in VMEM, then one lane-dense
    (tm, head_ch) @ (head_ch, 128) matmul producing [cls|reg|off_x|off_y|0...]."""
    tm = o_ref.shape[1]
    ch = wf_ref.shape[2]
    acc = _accum_conv3x3((v0, v1, v2), wf_ref, tm, ch)
    feat = jnp.maximum(acc + bf_ref[...], 0.0)                     # (tm, head_ch) f32
    heads = jnp.dot(feat.astype(jnp.bfloat16), wh_ref[...],
                    preferred_element_type=jnp.float32) + bh_ref[...]  # (tm, 128)
    # sigmoid on the cls column only; reciprocal goes to the (otherwise idle) EUP.
    sig = jnp.clip(pl.reciprocal(1.0 + jnp.exp(-heads), approx=True), 0.0, 1.0)
    col = jax.lax.broadcasted_iota(jnp.int32, heads.shape, 1)
    heads = jnp.where(col == 0, sig, heads)
    o_ref[0] = heads.astype(o_ref.dtype)


# --------------------------------------------------------------------- pallas wrappers
def _conv3x3_pallas(views, w9, b, *, wpad, relu, zero_pad_cols):
    n, mrow, cin = views[0].shape
    cout = w9.shape[-1]
    tm = _choose_tm(mrow, wpad)
    grid = (n, mrow // tm)
    vspec = pl.BlockSpec((1, tm, cin), lambda ni, i: (ni, i, 0))
    cost = pl.CostEstimate(
        flops=2 * n * mrow * 9 * cin * cout,
        transcendentals=0,
        bytes_accessed=(3 * n * mrow * cin + n * mrow * cout) * 4 + w9.size * 2)
    return pl.pallas_call(
        functools.partial(_conv3x3_kernel, wpad=wpad, relu=relu,
                          zero_pad_cols=zero_pad_cols),
        out_shape=jax.ShapeDtypeStruct((n, mrow, cout), jnp.float32),
        grid=grid,
        in_specs=[vspec, vspec, vspec,
                  pl.BlockSpec(w9.shape, lambda ni, i: (0, 0, 0)),
                  pl.BlockSpec((1, cout), lambda ni, i: (0, 0))],
        out_specs=pl.BlockSpec((1, tm, cout), lambda ni, i: (ni, i, 0)),
        compiler_params=pltpu.CompilerParams(
            dimension_semantics=("parallel", "parallel"),
            vmem_limit_bytes=_VMEM_LIMIT),
        cost_estimate=cost,
    )(views[0], views[1], views[2], w9, b)


def _feat_heads_pallas(views, wf9, bf, wh, bh, *, wpad):
    n, mrow, cin = views[0].shape
    ch = wf9.shape[-1]
    nh = wh.shape[-1]                     # 128-lane padded fused head width
    tm = _choose_tm(mrow, wpad)
    grid = (n, mrow // tm)
    vspec = pl.BlockSpec((1, tm, cin), lambda ni, i: (ni, i, 0))
    cost = pl.CostEstimate(
        flops=2 * n * mrow * (9 * cin * ch + ch * nh),
        transcendentals=n * mrow * nh,
        bytes_accessed=(3 * n * mrow * cin + n * mrow * nh) * 4
                       + (wf9.size + wh.size) * 2)
    return pl.pallas_call(
        _feat_heads_kernel,
        out_shape=jax.ShapeDtypeStruct((n, mrow, nh), jnp.float32),
        grid=grid,
        in_specs=[vspec, vspec, vspec,
                  pl.BlockSpec(wf9.shape, lambda ni, i: (0, 0, 0)),
                  pl.BlockSpec((1, ch), lambda ni, i: (0, 0)),
                  pl.BlockSpec(wh.shape, lambda ni, i: (0, 0)),
                  pl.BlockSpec((1, nh), lambda ni, i: (0, 0))],
        out_specs=pl.BlockSpec((1, tm, nh), lambda ni, i: (ni, i, 0)),
        compiler_params=pltpu.CompilerParams(
            dimension_semantics=("parallel", "parallel"),
            vmem_limit_bytes=_VMEM_LIMIT),
        cost_estimate=cost,
    )(views[0], views[1], views[2], wf9, bf, wh, bh)


# --------------------------------------------------------------------------- forward
def _shift_views(xp):
    """xp: (N, H+2, W+2, C) zero-padded.  Returns three dy-shifted, row-flattened
    views of shape (N, H*(W+2), C) (the only residual halo-materialization cost)."""
    n, hp, wp, c = xp.shape
    h = hp - 2
    return tuple(xp[:, dy:dy + h, :, :].reshape(n, h * wp, c) for dy in range(3))


def _csp_forward(params, x_nchw):
    # x.type(torch.cuda.FloatTensor) -> cast to float32; NCHW -> NHWC for the kernels.
    x = jnp.transpose(x_nchw.astype(jnp.float32), (0, 2, 3, 1))
    n, h, w, _ = x.shape
    wpad = w + 2

    # backbone stand-in: 3x3 conv + ReLU; pad columns zeroed in-kernel so the result
    # is directly the zero W-padded input of the head conv.
    xp = jnp.pad(x, ((0, 0), (1, 1), (1, 1), (0, 0)))
    bb = _conv3x3_pallas(_shift_views(xp), params["w_bb"], params["b_bb"],
                         wpad=wpad, relu=True, zero_pad_cols=True)
    c_bb = bb.shape[-1]

    # CSP_Head: feat 3x3 conv + ReLU fused with the three 1x1 heads (one launch).
    bbp = jnp.pad(bb.reshape(n, h, wpad, c_bb), ((0, 0), (1, 1), (0, 0), (0, 0)))
    out = _feat_heads_pallas(_shift_views(bbp), params["w_feat"], params["b_feat"],
                             params["w_heads"], params["b_heads"], wpad=wpad)

    # drop width-pad columns and lane padding; split fused channels.
    out = out.reshape(n, h, wpad, -1)[:, :, 1:w + 1, :4]
    cls_map, reg_map, off_map = out[..., 0:1], out[..., 1:2], out[..., 2:4]
    to_nchw = lambda t: jnp.transpose(t, (0, 3, 1, 2))
    return to_nchw(cls_map), to_nchw(reg_map), to_nchw(off_map)


class CSPPallas:
    """CSP detector forward pass with fused Pallas-TPU conv kernels."""

    def __init__(self, in_ch=4, backbone_ch=32, head_ch=64, head_pad=128, seed=0):
        key = jax.random.PRNGKey(seed)
        k = jax.random.split(key, 8)

        def normal(kk, shape, std=0.01):
            return std * jax.random.normal(kk, shape, dtype=jnp.float32)

        def pack3x3(w_oihw):
            cout, cin = w_oihw.shape[0], w_oihw.shape[1]
            # tap order dy*3+dx, each tap (Cin, Cout); bf16 MXU operands.
            return jnp.transpose(w_oihw, (2, 3, 1, 0)).reshape(9, cin, cout).astype(jnp.bfloat16)

        w_bb = normal(k[0], (backbone_ch, in_ch, 3, 3), std=0.1)
        w_feat = normal(k[1], (head_ch, backbone_ch, 3, 3), std=0.01)

        prior = 0.01  # focal-loss prior bias on the cls head, as in CSP init_weights
        w_cls = normal(k[2], (1, head_ch, 1, 1), std=0.01)
        b_cls = jnp.full((1,), -math.log((1.0 - prior) / prior), jnp.float32)
        w_reg = normal(k[3], (1, head_ch, 1, 1), std=0.01)
        b_reg = jnp.zeros((1,), jnp.float32)
        w_off = normal(k[4], (2, head_ch, 1, 1), std=0.01)
        b_off = jnp.zeros((2,), jnp.float32)

        # fused, lane-dense head: columns [cls, reg, off_x, off_y, 0 ... 0] (width 128)
        wh = jnp.concatenate([w_cls.reshape(1, head_ch),
                              w_reg.reshape(1, head_ch),
                              w_off.reshape(2, head_ch)], axis=0).T          # (head_ch, 4)
        wh = jnp.pad(wh, ((0, 0), (0, head_pad - 4))).astype(jnp.bfloat16)   # (head_ch, 128)
        bh = jnp.pad(jnp.concatenate([b_cls, b_reg, b_off]),
                     (0, head_pad - 4)).reshape(1, head_pad)

        self.params = {
            "w_bb": pack3x3(w_bb), "b_bb": jnp.zeros((1, backbone_ch), jnp.float32),
            "w_feat": pack3x3(w_feat), "b_feat": jnp.zeros((1, head_ch), jnp.float32),
            "w_heads": wh, "b_heads": bh,
        }
        self._fwd = jax.jit(_csp_forward)

    def __call__(self, x_nchw):
        return self._fwd(self.params, x_nchw)


if __name__ == "__main__":
    key = jax.random.PRNGKey(0)
    x = jax.random.normal(key, (2, 4, 16, 16), dtype=jnp.float32)  # NCHW

    model = CSPPallas(in_ch=4, backbone_ch=32, head_ch=64, seed=0)
    cls_map, reg_map, off_map = model(x)
    jax.block_until_ready((cls_map, reg_map, off_map))

    assert cls_map.shape == (2, 1, 16, 16)
    assert reg_map.shape == (2, 1, 16, 16)
    assert off_map.shape == (2, 2, 16, 16)
    assert bool(jnp.all(cls_map >= 0.0)) and bool(jnp.all(cls_map <= 1.0))
    assert bool(jnp.all(jnp.isfinite(reg_map))) and bool(jnp.all(jnp.isfinite(off_map)))
    print("KERNEL_OK")
</pallas_src>

<mosaic_0001>
module attributes {stable_mosaic.version = 11 : i64} {
  func.func @_conv3x3_kernel(%arg0: i32, %arg1: i32, %arg2: memref<1x288x4xf32, #tpu.memory_space<vmem>>, %arg3: memref<1x288x4xf32, #tpu.memory_space<vmem>>, %arg4: memref<1x288x4xf32, #tpu.memory_space<vmem>>, %arg5: memref<9x4x32xbf16, #tpu.memory_space<vmem>>, %arg6: memref<1x32xf32, #tpu.memory_space<vmem>>, %arg7: memref<1x288x32xf32, #tpu.memory_space<vmem>>) attributes {dimension_semantics = [#tpu.dimension_semantics<parallel>, #tpu.dimension_semantics<parallel>], iteration_bounds = array<i64: 2, 1>, scalar_prefetch = 0 : i64, scratch_operands = 0 : i64, tpu.core_type = #tpu.core_type<tc>, window_params = [{transform_indices = @transform_0, window_bounds = array<i64: 1, 288, 4>}, {transform_indices = @transform_1, window_bounds = array<i64: 1, 288, 4>}, {transform_indices = @transform_2, window_bounds = array<i64: 1, 288, 4>}, {pipeline_mode = #tpu.pipeline_mode<synchronous>, transform_indices = @transform_3, window_bounds = array<i64: 9, 4, 32>}, {pipeline_mode = #tpu.pipeline_mode<synchronous>, transform_indices = @transform_4, window_bounds = array<i64: 1, 32>}, {transform_indices = @transform_5, window_bounds = array<i64: 1, 288, 32>}]} {
    %cst = arith.constant 0.000000e+00 : f32
    %0 = vector.broadcast %cst : f32 to vector<288x32xf32>
    %c0 = arith.constant 0 : index
    %c0_0 = arith.constant 0 : index
    %c0_1 = arith.constant 0 : index
    %1 = vector.load %arg2[%c0, %c0_0, %c0_1] : memref<1x288x4xf32, #tpu.memory_space<vmem>>, vector<1x288x4xf32>
    %2 = vector.shape_cast %1 : vector<1x288x4xf32> to vector<288x4xf32>
    %c1_i32 = arith.constant 1 : i32
    %3 = tpu.dynamic_rotate %2 by %c1_i32 dim 0 : vector<288x4xf32>, i32 -> vector<288x4xf32>
    %4 = arith.truncf %3 : vector<288x4xf32> to vector<288x4xbf16>
    %c0_2 = arith.constant 0 : index
    %c0_3 = arith.constant 0 : index
    %c0_4 = arith.constant 0 : index
    %5 = vector.load %arg5[%c0_2, %c0_3, %c0_4] : memref<9x4x32xbf16, #tpu.memory_space<vmem>>, vector<1x4x32xbf16>
    %6 = vector.shape_cast %5 : vector<1x4x32xbf16> to vector<4x32xbf16>
    %cst_5 = arith.constant dense<0.000000e+00> : vector<288x32xf32>
    %7 = tpu.matmul %4, %6, %cst_5 {dimension_numbers = #tpu.dot_dimension_numbers<[1], [0], [0], [1], [0, 0, 1, 1], [], []>} : vector<288x4xbf16>, vector<4x32xbf16>, vector<288x32xf32> -> vector<288x32xf32>
    %8 = arith.addf %0, %7 : vector<288x32xf32>
    %9 = arith.truncf %2 : vector<288x4xf32> to vector<288x4xbf16>
    %c1 = arith.constant 1 : index
    %c0_6 = arith.constant 0 : index
    %c0_7 = arith.constant 0 : index
    %10 = vector.load %arg5[%c1, %c0_6, %c0_7] : memref<9x4x32xbf16, #tpu.memory_space<vmem>>, vector<1x4x32xbf16>
    %11 = vector.shape_cast %10 : vector<1x4x32xbf16> to vector<4x32xbf16>
    %cst_8 = arith.constant dense<0.000000e+00> : vector<288x32xf32>
    %12 = tpu.matmul %9, %11, %cst_8 {dimension_numbers = #tpu.dot_dimension_numbers<[1], [0], [0], [1], [0, 0, 1, 1], [], []>} : vector<288x4xbf16>, vector<4x32xbf16>, vector<288x32xf32> -> vector<288x32xf32>
    %13 = arith.addf %8, %12 : vector<288x32xf32>
    %c287_i32 = arith.constant 287 : i32
    %14 = tpu.dynamic_rotate %2 by %c287_i32 dim 0 : vector<288x4xf32>, i32 -> vector<288x4xf32>
    %15 = arith.truncf %14 : vector<288x4xf32> to vector<288x4xbf16>
    %c2 = arith.constant 2 : index
    %c0_9 = arith.constant 0 : index
    %c0_10 = arith.constant 0 : index
    %16 = vector.load %arg5[%c2, %c0_9, %c0_10] : memref<9x4x32xbf16, #tpu.memory_space<vmem>>, vector<1x4x32xbf16>
    %17 = vector.shape_cast %16 : vector<1x4x32xbf16> to vector<4x32xbf16>
    %cst_11 = arith.constant dense<0.000000e+00> : vector<288x32xf32>
    %18 = tpu.matmul %15, %17, %cst_11 {dimension_numbers = #tpu.dot_dimension_numbers<[1], [0], [0], [1], [0, 0, 1, 1], [], []>} : vector<288x4xbf16>, vector<4x32xbf16>, vector<288x32xf32> -> vector<288x32xf32>
    %19 = arith.addf %13, %18 : vector<288x32xf32>
    %c0_12 = arith.constant 0 : index
    %c0_13 = arith.constant 0 : index
    %c0_14 = arith.constant 0 : index
    %20 = vector.load %arg3[%c0_12, %c0_13, %c0_14] : memref<1x288x4xf32, #tpu.memory_space<vmem>>, vector<1x288x4xf32>
    %21 = vector.shape_cast %20 : vector<1x288x4xf32> to vector<288x4xf32>
    %c1_i32_15 = arith.constant 1 : i32
    %22 = tpu.dynamic_rotate %21 by %c1_i32_15 dim 0 : vector<288x4xf32>, i32 -> vector<288x4xf32>
    %23 = arith.truncf %22 : vector<288x4xf32> to vector<288x4xbf16>
    %c3 = arith.constant 3 : index
    %c0_16 = arith.constant 0 : index
    %c0_17 = arith.constant 0 : index
    %24 = vector.load %arg5[%c3, %c0_16, %c0_17] : memref<9x4x32xbf16, #tpu.memory_space<vmem>>, vector<1x4x32xbf16>
    %25 = vector.shape_cast %24 : vector<1x4x32xbf16> to vector<4x32xbf16>
    %cst_18 = arith.constant dense<0.000000e+00> : vector<288x32xf32>
    %26 = tpu.matmul %23, %25, %cst_18 {dimension_numbers = #tpu.dot_dimension_numbers<[1], [0], [0], [1], [0, 0, 1, 1], [], []>} : vector<288x4xbf16>, vector<4x32xbf16>, vector<288x32xf32> -> vector<288x32xf32>
    %27 = arith.addf %19, %26 : vector<288x32xf32>
    %28 = arith.truncf %21 : vector<288x4xf32> to vector<288x4xbf16>
    %c4 = arith.constant 4 : index
    %c0_19 = arith.constant 0 : index
    %c0_20 = arith.constant 0 : index
    %29 = vector.load %arg5[%c4, %c0_19, %c0_20] : memref<9x4x32xbf16, #tpu.memory_space<vmem>>, vector<1x4x32xbf16>
    %30 = vector.shape_cast %29 : vector<1x4x32xbf16> to vector<4x32xbf16>
    %cst_21 = arith.constant dense<0.000000e+00> : vector<288x32xf32>
    %31 = tpu.matmul %28, %30, %cst_21 {dimension_numbers = #tpu.dot_dimension_numbers<[1], [0], [0], [1], [0, 0, 1, 1], [], []>} : vector<288x4xbf16>, vector<4x32xbf16>, vector<288x32xf32> -> vector<288x32xf32>
    %32 = arith.addf %27, %31 : vector<288x32xf32>
    %c287_i32_22 = arith.constant 287 : i32
    %33 = tpu.dynamic_rotate %21 by %c287_i32_22 dim 0 : vector<288x4xf32>, i32 -> vector<288x4xf32>
    %34 = arith.truncf %33 : vector<288x4xf32> to vector<288x4xbf16>
    %c5 = arith.constant 5 : index
    %c0_23 = arith.constant 0 : index
    %c0_24 = arith.constant 0 : index
    %35 = vector.load %arg5[%c5, %c0_23, %c0_24] : memref<9x4x32xbf16, #tpu.memory_space<vmem>>, vector<1x4x32xbf16>
    %36 = vector.shape_cast %35 : vector<1x4x32xbf16> to vector<4x32xbf16>
    %cst_25 = arith.constant dense<0.000000e+00> : vector<288x32xf32>
    %37 = tpu.matmul %34, %36, %cst_25 {dimension_numbers = #tpu.dot_dimension_numbers<[1], [0], [0], [1], [0, 0, 1, 1], [], []>} : vector<288x4xbf16>, vector<4x32xbf16>, vector<288x32xf32> -> vector<288x32xf32>
    %38 = arith.addf %32, %37 : vector<288x32xf32>
    %c0_26 = arith.constant 0 : index
    %c0_27 = arith.constant 0 : index
    %c0_28 = arith.constant 0 : index
    %39 = vector.load %arg4[%c0_26, %c0_27, %c0_28] : memref<1x288x4xf32, #tpu.memory_space<vmem>>, vector<1x288x4xf32>
    %40 = vector.shape_cast %39 : vector<1x288x4xf32> to vector<288x4xf32>
    %c1_i32_29 = arith.constant 1 : i32
    %41 = tpu.dynamic_rotate %40 by %c1_i32_29 dim 0 : vector<288x4xf32>, i32 -> vector<288x4xf32>
    %42 = arith.truncf %41 : vector<288x4xf32> to vector<288x4xbf16>
    %c6 = arith.constant 6 : index
    %c0_30 = arith.constant 0 : index
    %c0_31 = arith.constant 0 : index
    %43 = vector.load %arg5[%c6, %c0_30, %c0_31] : memref<9x4x32xbf16, #tpu.memory_space<vmem>>, vector<1x4x32xbf16>
    %44 = vector.shape_cast %43 : vector<1x4x32xbf16> to vector<4x32xbf16>
    %cst_32 = arith.constant dense<0.000000e+00> : vector<288x32xf32>
    %45 = tpu.matmul %42, %44, %cst_32 {dimension_numbers = #tpu.dot_dimension_numbers<[1], [0], [0], [1], [0, 0, 1, 1], [], []>} : vector<288x4xbf16>, vector<4x32xbf16>, vector<288x32xf32> -> vector<288x32xf32>
    %46 = arith.addf %38, %45 : vector<288x32xf32>
    %47 = arith.truncf %40 : vector<288x4xf32> to vector<288x4xbf16>
    %c7 = arith.constant 7 : index
    %c0_33 = arith.constant 0 : index
    %c0_34 = arith.constant 0 : index
    %48 = vector.load %arg5[%c7, %c0_33, %c0_34] : memref<9x4x32xbf16, #tpu.memory_space<vmem>>, vector<1x4x32xbf16>
    %49 = vector.shape_cast %48 : vector<1x4x32xbf16> to vector<4x32xbf16>
    %cst_35 = arith.constant dense<0.000000e+00> : vector<288x32xf32>
    %50 = tpu.matmul %47, %49, %cst_35 {dimension_numbers = #tpu.dot_dimension_numbers<[1], [0], [0], [1], [0, 0, 1, 1], [], []>} : vector<288x4xbf16>, vector<4x32xbf16>, vector<288x32xf32> -> vector<288x32xf32>
    %51 = arith.addf %46, %50 : vector<288x32xf32>
    %c287_i32_36 = arith.constant 287 : i32
    %52 = tpu.dynamic_rotate %40 by %c287_i32_36 dim 0 : vector<288x4xf32>, i32 -> vector<288x4xf32>
    %53 = arith.truncf %52 : vector<288x4xf32> to vector<288x4xbf16>
    %c8 = arith.constant 8 : index
    %c0_37 = arith.constant 0 : index
    %c0_38 = arith.constant 0 : index
    %54 = vector.load %arg5[%c8, %c0_37, %c0_38] : memref<9x4x32xbf16, #tpu.memory_space<vmem>>, vector<1x4x32xbf16>
    %55 = vector.shape_cast %54 : vector<1x4x32xbf16> to vector<4x32xbf16>
    %cst_39 = arith.constant dense<0.000000e+00> : vector<288x32xf32>
    %56 = tpu.matmul %53, %55, %cst_39 {dimension_numbers = #tpu.dot_dimension_numbers<[1], [0], [0], [1], [0, 0, 1, 1], [], []>} : vector<288x4xbf16>, vector<4x32xbf16>, vector<288x32xf32> -> vector<288x32xf32>
    %57 = arith.addf %51, %56 : vector<288x32xf32>
    %c0_40 = arith.constant 0 : index
    %c0_41 = arith.constant 0 : index
    %58 = vector.load %arg6[%c0_40, %c0_41] : memref<1x32xf32, #tpu.memory_space<vmem>>, vector<1x32xf32>
    %59 = vector.broadcast %58 : vector<1x32xf32> to vector<288x32xf32>
    %60 = arith.addf %57, %59 : vector<288x32xf32>
    %cst_42 = arith.constant 0.000000e+00 : f32
    %61 = vector.broadcast %cst_42 : f32 to vector<288x32xf32>
    %62 = arith.maximumf %60, %61 : vector<288x32xf32>
    %63 = tpu.iota {dimensions = array<i32: 0>} : vector<288x32xi32>
    %c18_i32 = arith.constant 18 : i32
    %c0_i32 = arith.constant 0 : i32
    %64 = arith.cmpi eq, %c18_i32, %c0_i32 : i32
    %c1_i32_43 = arith.constant 1 : i32
    %65 = arith.select %64, %c1_i32_43, %c18_i32 : i32
    %66 = vector.broadcast %65 : i32 to vector<288x32xi32>
    %67 = arith.remsi %63, %66 : vector<288x32xi32>
    %c0_i32_44 = arith.constant 0 : i32
    %68 = vector.broadcast %c0_i32_44 : i32 to vector<288x32xi32>
    %69 = arith.cmpi ne, %67, %68 : vector<288x32xi32>
    %c0_i32_45 = arith.constant 0 : i32
    %70 = vector.broadcast %c0_i32_45 : i32 to vector<288x32xi32>
    %71 = arith.cmpi slt, %67, %70 : vector<288x32xi32>
    %c0_i32_46 = arith.constant 0 : i32
    %72 = arith.cmpi slt, %65, %c0_i32_46 : i32
    %73 = vector.broadcast %72 : i1 to vector<288x32xi1>
    %74 = vector.broadcast %73 : vector<288x32xi1> to vector<288x32xi1>
    %75 = arith.xori %71, %74 : vector<288x32xi1>
    %76 = arith.andi %75, %69 : vector<288x32xi1>
    %77 = vector.broadcast %65 : i32 to vector<288x32xi32>
    %78 = arith.addi %67, %77 : vector<288x32xi32>
    %79 = arith.select %76, %78, %67 : vector<288x32xi1>, vector<288x32xi32>
    %c0_i32_47 = arith.constant 0 : i32
    %80 = vector.broadcast %c0_i32_47 : i32 to vector<288x32xi32>
    %81 = arith.cmpi ne, %79, %80 : vector<288x32xi32>
    %c17_i32 = arith.constant 17 : i32
    %82 = vector.broadcast %c17_i32 : i32 to vector<288x32xi32>
    %83 = arith.cmpi ne, %79, %82 : vector<288x32xi32>
    %84 = arith.andi %81, %83 : vector<288x32xi1>
    %cst_48 = arith.constant 0.000000e+00 : f32
    %85 = vector.broadcast %cst_48 : f32 to vector<288x32xf32>
    %86 = arith.select %84, %62, %85 : vector<288x32xi1>, vector<288x32xf32>
    %c0_49 = arith.constant 0 : index
    %c0_50 = arith.constant 0 : index
    %c0_51 = arith.constant 0 : index
    %87 = vector.load %arg7[%c0_49, %c0_50, %c0_51] : memref<1x288x32xf32, #tpu.memory_space<vmem>>, vector<1x288x32xf32>
    %88 = vector.shape_cast %87 : vector<1x288x32xf32> to vector<288x32xf32>
    %89 = vector.shape_cast %86 : vector<288x32xf32> to vector<1x288x32xf32>
    tpu.vector_store %arg7[%c0_49, %c0_50, %c0_51], %89 {strides = array<i32>} : memref<1x288x32xf32, #tpu.memory_space<vmem>>, vector<1x288x32xf32>,
    return
  }
  func.func @transform_0(%arg0: i32, %arg1: i32) -> (i32, i32, i32) {
    %c0_i32 = arith.constant 0 : i32
    %c0_i32_0 = arith.constant 0 : i32
    return %arg0, %arg1, %c0_i32 : i32, i32, i32
  }
  func.func @transform_1(%arg0: i32, %arg1: i32) -> (i32, i32, i32) {
    %c0_i32 = arith.constant 0 : i32
    %c0_i32_0 = arith.constant 0 : i32
    return %arg0, %arg1, %c0_i32 : i32, i32, i32
  }
  func.func @transform_2(%arg0: i32, %arg1: i32) -> (i32, i32, i32) {
    %c0_i32 = arith.constant 0 : i32
    %c0_i32_0 = arith.constant 0 : i32
    return %arg0, %arg1, %c0_i32 : i32, i32, i32
  }
  func.func @transform_3(%arg0: i32, %arg1: i32) -> (i32, i32, i32) {
    %c0_i32 = arith.constant 0 : i32
    %c0_i32_0 = arith.constant 0 : i32
    %c0_i32_1 = arith.constant 0 : i32
    %c0_i32_2 = arith.constant 0 : i32
    return %c0_i32, %c0_i32_0, %c0_i32_1 : i32, i32, i32
  }
  func.func @transform_4(%arg0: i32, %arg1: i32) -> (i32, i32) {
    %c0_i32 = arith.constant 0 : i32
    %c0_i32_0 = arith.constant 0 : i32
    %c0_i32_1 = arith.constant 0 : i32
    return %c0_i32, %c0_i32_0 : i32, i32
  }
  func.func @transform_5(%arg0: i32, %arg1: i32) -> (i32, i32, i32) {
    %c0_i32 = arith.constant 0 : i32
    %c0_i32_0 = arith.constant 0 : i32
    return %arg0, %arg1, %c0_i32 : i32, i32, i32
  }
}

module attributes {stable_mosaic.version = 11 : i64} {
  func.func @_feat_heads_kernel(%arg0: i32, %arg1: i32, %arg2: memref<1x288x32xf32, #tpu.memory_space<vmem>>, %arg3: memref<1x288x32xf32, #tpu.memory_space<vmem>>, %arg4: memref<1x288x32xf32, #tpu.memory_space<vmem>>, %arg5: memref<9x32x64xbf16, #tpu.memory_space<vmem>>, %arg6: memref<1x64xf32, #tpu.memory_space<vmem>>, %arg7: memref<64x128xbf16, #tpu.memory_space<vmem>>, %arg8: memref<1x128xf32, #tpu.memory_space<vmem>>, %arg9: memref<1x288x128xf32, #tpu.memory_space<vmem>>) attributes {dimension_semantics = [#tpu.dimension_semantics<parallel>, #tpu.dimension_semantics<parallel>], iteration_bounds = array<i64: 2, 1>, scalar_prefetch = 0 : i64, scratch_operands = 0 : i64, tpu.core_type = #tpu.core_type<tc>, window_params = [{transform_indices = @transform_0, window_bounds = array<i64: 1, 288, 32>}, {transform_indices = @transform_1, window_bounds = array<i64: 1, 288, 32>}, {transform_indices = @transform_2, window_bounds = array<i64: 1, 288, 32>}, {pipeline_mode = #tpu.pipeline_mode<synchronous>, transform_indices = @transform_3, window_bounds = array<i64: 9, 32, 64>}, {pipeline_mode = #tpu.pipeline_mode<synchronous>, transform_indices = @transform_4, window_bounds = array<i64: 1, 64>}, {pipeline_mode = #tpu.pipeline_mode<synchronous>, transform_indices = @transform_5, window_bounds = array<i64: 64, 128>}, {pipeline_mode = #tpu.pipeline_mode<synchronous>, transform_indices = @transform_6, window_bounds = array<i64: 1, 128>}, {transform_indices = @transform_7, window_bounds = array<i64: 1, 288, 128>}]} {
    %cst = arith.constant 0.000000e+00 : f32
    %0 = vector.broadcast %cst : f32 to vector<288x64xf32>
    %c0 = arith.constant 0 : index
    %c0_0 = arith.constant 0 : index
    %c0_1 = arith.constant 0 : index
    %1 = vector.load %arg2[%c0, %c0_0, %c0_1] : memref<1x288x32xf32, #tpu.memory_space<vmem>>, vector<1x288x32xf32>
    %2 = vector.shape_cast %1 : vector<1x288x32xf32> to vector<288x32xf32>
    %c1_i32 = arith.constant 1 : i32
    %3 = tpu.dynamic_rotate %2 by %c1_i32 dim 0 : vector<288x32xf32>, i32 -> vector<288x32xf32>
    %4 = arith.truncf %3 : vector<288x32xf32> to vector<288x32xbf16>
    %c0_2 = arith.constant 0 : index
    %c0_3 = arith.constant 0 : index
    %c0_4 = arith.constant 0 : index
    %5 = vector.load %arg5[%c0_2, %c0_3, %c0_4] : memref<9x32x64xbf16, #tpu.memory_space<vmem>>, vector<1x32x64xbf16>
    %6 = vector.shape_cast %5 : vector<1x32x64xbf16> to vector<32x64xbf16>
    %cst_5 = arith.constant dense<0.000000e+00> : vector<288x64xf32>
    %7 = tpu.matmul %4, %6, %cst_5 {dimension_numbers = #tpu.dot_dimension_numbers<[1], [0], [0], [1], [0, 0, 1, 1], [], []>} : vector<288x32xbf16>, vector<32x64xbf16>, vector<288x64xf32> -> vector<288x64xf32>
    %8 = arith.addf %0, %7 : vector<288x64xf32>
    %9 = arith.truncf %2 : vector<288x32xf32> to vector<288x32xbf16>
    %c1 = arith.constant 1 : index
    %c0_6 = arith.constant 0 : index
    %c0_7 = arith.constant 0 : index
    %10 = vector.load %arg5[%c1, %c0_6, %c0_7] : memref<9x32x64xbf16, #tpu.memory_space<vmem>>, vector<1x32x64xbf16>
    %11 = vector.shape_cast %10 : vector<1x32x64xbf16> to vector<32x64xbf16>
    %cst_8 = arith.constant dense<0.000000e+00> : vector<288x64xf32>
    %12 = tpu.matmul %9, %11, %cst_8 {dimension_numbers = #tpu.dot_dimension_numbers<[1], [0], [0], [1], [0, 0, 1, 1], [], []>} : vector<288x32xbf16>, vector<32x64xbf16>, vector<288x64xf32> -> vector<288x64xf32>
    %13 = arith.addf %8, %12 : vector<288x64xf32>
    %c287_i32 = arith.constant 287 : i32
    %14 = tpu.dynamic_rotate %2 by %c287_i32 dim 0 : vector<288x32xf32>, i32 -> vector<288x32xf32>
    %15 = arith.truncf %14 : vector<288x32xf32> to vector<288x32xbf16>
    %c2 = arith.constant 2 : index
    %c0_9 = arith.constant 0 : index
    %c0_10 = arith.constant 0 : index
    %16 = vector.load %arg5[%c2, %c0_9, %c0_10] : memref<9x32x64xbf16, #tpu.memory_space<vmem>>, vector<1x32x64xbf16>
    %17 = vector.shape_cast %16 : vector<1x32x64xbf16> to vector<32x64xbf16>
    %cst_11 = arith.constant dense<0.000000e+00> : vector<288x64xf32>
    %18 = tpu.matmul %15, %17, %cst_11 {dimension_numbers = #tpu.dot_dimension_numbers<[1], [0], [0], [1], [0, 0, 1, 1], [], []>} : vector<288x32xbf16>, vector<32x64xbf16>, vector<288x64xf32> -> vector<288x64xf32>
    %19 = arith.addf %13, %18 : vector<288x64xf32>
    %c0_12 = arith.constant 0 : index
    %c0_13 = arith.constant 0 : index
    %c0_14 = arith.constant 0 : index
    %20 = vector.load %arg3[%c0_12, %c0_13, %c0_14] : memref<1x288x32xf32, #tpu.memory_space<vmem>>, vector<1x288x32xf32>
    %21 = vector.shape_cast %20 : vector<1x288x32xf32> to vector<288x32xf32>
    %c1_i32_15 = arith.constant 1 : i32
    %22 = tpu.dynamic_rotate %21 by %c1_i32_15 dim 0 : vector<288x32xf32>, i32 -> vector<288x32xf32>
    %23 = arith.truncf %22 : vector<288x32xf32> to vector<288x32xbf16>
    %c3 = arith.constant 3 : index
    %c0_16 = arith.constant 0 : index
    %c0_17 = arith.constant 0 : index
    %24 = vector.load %arg5[%c3, %c0_16, %c0_17] : memref<9x32x64xbf16, #tpu.memory_space<vmem>>, vector<1x32x64xbf16>
    %25 = vector.shape_cast %24 : vector<1x32x64xbf16> to vector<32x64xbf16>
    %cst_18 = arith.constant dense<0.000000e+00> : vector<288x64xf32>
    %26 = tpu.matmul %23, %25, %cst_18 {dimension_numbers = #tpu.dot_dimension_numbers<[1], [0], [0], [1], [0, 0, 1, 1], [], []>} : vector<288x32xbf16>, vector<32x64xbf16>, vector<288x64xf32> -> vector<288x64xf32>
    %27 = arith.addf %19, %26 : vector<288x64xf32>
    %28 = arith.truncf %21 : vector<288x32xf32> to vector<288x32xbf16>
    %c4 = arith.constant 4 : index
    %c0_19 = arith.constant 0 : index
    %c0_20 = arith.constant 0 : index
    %29 = vector.load %arg5[%c4, %c0_19, %c0_20] : memref<9x32x64xbf16, #tpu.memory_space<vmem>>, vector<1x32x64xbf16>
    %30 = vector.shape_cast %29 : vector<1x32x64xbf16> to vector<32x64xbf16>
    %cst_21 = arith.constant dense<0.000000e+00> : vector<288x64xf32>
    %31 = tpu.matmul %28, %30, %cst_21 {dimension_numbers = #tpu.dot_dimension_numbers<[1], [0], [0], [1], [0, 0, 1, 1], [], []>} : vector<288x32xbf16>, vector<32x64xbf16>, vector<288x64xf32> -> vector<288x64xf32>
    %32 = arith.addf %27, %31 : vector<288x64xf32>
    %c287_i32_22 = arith.constant 287 : i32
    %33 = tpu.dynamic_rotate %21 by %c287_i32_22 dim 0 : vector<288x32xf32>, i32 -> vector<288x32xf32>
    %34 = arith.truncf %33 : vector<288x32xf32> to vector<288x32xbf16>
    %c5 = arith.constant 5 : index
    %c0_23 = arith.constant 0 : index
    %c0_24 = arith.constant 0 : index
    %35 = vector.load %arg5[%c5, %c0_23, %c0_24] : memref<9x32x64xbf16, #tpu.memory_space<vmem>>, vector<1x32x64xbf16>
    %36 = vector.shape_cast %35 : vector<1x32x64xbf16> to vector<32x64xbf16>
    %cst_25 = arith.constant dense<0.000000e+00> : vector<288x64xf32>
    %37 = tpu.matmul %34, %36, %cst_25 {dimension_numbers = #tpu.dot_dimension_numbers<[1], [0], [0], [1], [0, 0, 1, 1], [], []>} : vector<288x32xbf16>, vector<32x64xbf16>, vector<288x64xf32> -> vector<288x64xf32>
    %38 = arith.addf %32, %37 : vector<288x64xf32>
    %c0_26 = arith.constant 0 : index
    %c0_27 = arith.constant 0 : index
    %c0_28 = arith.constant 0 : index
    %39 = vector.load %arg4[%c0_26, %c0_27, %c0_28] : memref<1x288x32xf32, #tpu.memory_space<vmem>>, vector<1x288x32xf32>
    %40 = vector.shape_cast %39 : vector<1x288x32xf32> to vector<288x32xf32>
    %c1_i32_29 = arith.constant 1 : i32
    %41 = tpu.dynamic_rotate %40 by %c1_i32_29 dim 0 : vector<288x32xf32>, i32 -> vector<288x32xf32>
    %42 = arith.truncf %41 : vector<288x32xf32> to vector<288x32xbf16>
    %c6 = arith.constant 6 : index
    %c0_30 = arith.constant 0 : index
    %c0_31 = arith.constant 0 : index
    %43 = vector.load %arg5[%c6, %c0_30, %c0_31] : memref<9x32x64xbf16, #tpu.memory_space<vmem>>, vector<1x32x64xbf16>
    %44 = vector.shape_cast %43 : vector<1x32x64xbf16> to vector<32x64xbf16>
    %cst_32 = arith.constant dense<0.000000e+00> : vector<288x64xf32>
    %45 = tpu.matmul %42, %44, %cst_32 {dimension_numbers = #tpu.dot_dimension_numbers<[1], [0], [0], [1], [0, 0, 1, 1], [], []>} : vector<288x32xbf16>, vector<32x64xbf16>, vector<288x64xf32> -> vector<288x64xf32>
    %46 = arith.addf %38, %45 : vector<288x64xf32>
    %47 = arith.truncf %40 : vector<288x32xf32> to vector<288x32xbf16>
    %c7 = arith.constant 7 : index
    %c0_33 = arith.constant 0 : index
    %c0_34 = arith.constant 0 : index
    %48 = vector.load %arg5[%c7, %c0_33, %c0_34] : memref<9x32x64xbf16, #tpu.memory_space<vmem>>, vector<1x32x64xbf16>
    %49 = vector.shape_cast %48 : vector<1x32x64xbf16> to vector<32x64xbf16>
    %cst_35 = arith.constant dense<0.000000e+00> : vector<288x64xf32>
    %50 = tpu.matmul %47, %49, %cst_35 {dimension_numbers = #tpu.dot_dimension_numbers<[1], [0], [0], [1], [0, 0, 1, 1], [], []>} : vector<288x32xbf16>, vector<32x64xbf16>, vector<288x64xf32> -> vector<288x64xf32>
    %51 = arith.addf %46, %50 : vector<288x64xf32>
    %c287_i32_36 = arith.constant 287 : i32
    %52 = tpu.dynamic_rotate %40 by %c287_i32_36 dim 0 : vector<288x32xf32>, i32 -> vector<288x32xf32>
    %53 = arith.truncf %52 : vector<288x32xf32> to vector<288x32xbf16>
    %c8 = arith.constant 8 : index
    %c0_37 = arith.constant 0 : index
    %c0_38 = arith.constant 0 : index
    %54 = vector.load %arg5[%c8, %c0_37, %c0_38] : memref<9x32x64xbf16, #tpu.memory_space<vmem>>, vector<1x32x64xbf16>
    %55 = vector.shape_cast %54 : vector<1x32x64xbf16> to vector<32x64xbf16>
    %cst_39 = arith.constant dense<0.000000e+00> : vector<288x64xf32>
    %56 = tpu.matmul %53, %55, %cst_39 {dimension_numbers = #tpu.dot_dimension_numbers<[1], [0], [0], [1], [0, 0, 1, 1], [], []>} : vector<288x32xbf16>, vector<32x64xbf16>, vector<288x64xf32> -> vector<288x64xf32>
    %57 = arith.addf %51, %56 : vector<288x64xf32>
    %c0_40 = arith.constant 0 : index
    %c0_41 = arith.constant 0 : index
    %58 = vector.load %arg6[%c0_40, %c0_41] : memref<1x64xf32, #tpu.memory_space<vmem>>, vector<1x64xf32>
    %59 = vector.broadcast %58 : vector<1x64xf32> to vector<288x64xf32>
    %60 = arith.addf %57, %59 : vector<288x64xf32>
    %cst_42 = arith.constant 0.000000e+00 : f32
    %61 = vector.broadcast %cst_42 : f32 to vector<288x64xf32>
    %62 = arith.maximumf %60, %61 : vector<288x64xf32>
    %63 = arith.truncf %62 : vector<288x64xf32> to vector<288x64xbf16>
    %c0_43 = arith.constant 0 : index
    %c0_44 = arith.constant 0 : index
    %64 = vector.load %arg7[%c0_43, %c0_44] : memref<64x128xbf16, #tpu.memory_space<vmem>>, vector<64x128xbf16>
    %cst_45 = arith.constant dense<0.000000e+00> : vector<288x128xf32>
    %65 = tpu.matmul %63, %64, %cst_45 {dimension_numbers = #tpu.dot_dimension_numbers<[1], [0], [0], [1], [0, 0, 1, 1], [], []>} : vector<288x64xbf16>, vector<64x128xbf16>, vector<288x128xf32> -> vector<288x128xf32>
    %c0_46 = arith.constant 0 : index
    %c0_47 = arith.constant 0 : index
    %66 = vector.load %arg8[%c0_46, %c0_47] : memref<1x128xf32, #tpu.memory_space<vmem>>, vector<1x128xf32>
    %67 = vector.broadcast %66 : vector<1x128xf32> to vector<288x128xf32>
    %68 = arith.addf %65, %67 : vector<288x128xf32>
    %cst_48 = arith.constant 0.000000e+00 : f32
    %69 = vector.broadcast %cst_48 : f32 to vector<288x128xf32>
    %70 = arith.subf %69, %68 : vector<288x128xf32>
    %71 = math.exp %70 : vector<288x128xf32>
    %cst_49 = arith.constant 1.000000e+00 : f32
    %72 = vector.broadcast %cst_49 : f32 to vector<288x128xf32>
    %73 = arith.addf %72, %71 : vector<288x128xf32>
    %74 = tpu.reciprocal %73 {approx = true} : vector<288x128xf32> -> vector<288x128xf32>
    %cst_50 = arith.constant 0.000000e+00 : f32
    %cst_51 = arith.constant 1.000000e+00 : f32
    %75 = vector.broadcast %cst_50 : f32 to vector<288x128xf32>
    %76 = arith.maximumf %75, %74 : vector<288x128xf32>
    %77 = vector.broadcast %cst_51 : f32 to vector<288x128xf32>
    %78 = arith.minimumf %77, %76 : vector<288x128xf32>
    %79 = tpu.iota {dimensions = array<i32: 1>} : vector<288x128xi32>
    %c0_i32 = arith.constant 0 : i32
    %80 = vector.broadcast %c0_i32 : i32 to vector<288x128xi32>
    %81 = arith.cmpi eq, %79, %80 : vector<288x128xi32>
    %82 = arith.select %81, %78, %68 : vector<288x128xi1>, vector<288x128xf32>
    %c0_52 = arith.constant 0 : index
    %c0_53 = arith.constant 0 : index
    %c0_54 = arith.constant 0 : index
    %83 = vector.load %arg9[%c0_52, %c0_53, %c0_54] : memref<1x288x128xf32, #tpu.memory_space<vmem>>, vector<1x288x128xf32>
    %84 = vector.shape_cast %83 : vector<1x288x128xf32> to vector<288x128xf32>
    %85 = vector.shape_cast %82 : vector<288x128xf32> to vector<1x288x128xf32>
    tpu.vector_store %arg9[%c0_52, %c0_53, %c0_54], %85 {strides = array<i32>} : memref<1x288x128xf32, #tpu.memory_space<vmem>>, vector<1x288x128xf32>,
    return
  }
  func.func @transform_0(%arg0: i32, %arg1: i32) -> (i32, i32, i32) {
    %c0_i32 = arith.constant 0 : i32
    %c0_i32_0 = arith.constant 0 : i32
    return %arg0, %arg1, %c0_i32 : i32, i32, i32
  }
  func.func @transform_1(%arg0: i32, %arg1: i32) -> (i32, i32, i32) {
    %c0_i32 = arith.constant 0 : i32
    %c0_i32_0 = arith.constant 0 : i32
    return %arg0, %arg1, %c0_i32 : i32, i32, i32
  }
  func.func @transform_2(%arg0: i32, %arg1: i32) -> (i32, i32, i32) {
    %c0_i32 = arith.constant 0 : i32
    %c0_i32_0 = arith.constant 0 : i32
    return %arg0, %arg1, %c0_i32 : i32, i32, i32
  }
  func.func @transform_3(%arg0: i32, %arg1: i32) -> (i32, i32, i32) {
    %c0_i32 = arith.constant 0 : i32
    %c0_i32_0 = arith.constant 0 : i32
    %c0_i32_1 = arith.constant 0 : i32
    %c0_i32_2 = arith.constant 0 : i32
    return %c0_i32, %c0_i32_0, %c0_i32_1 : i32, i32, i32
  }
  func.func @transform_4(%arg0: i32, %arg1: i32) -> (i32, i32) {
    %c0_i32 = arith.constant 0 : i32
    %c0_i32_0 = arith.constant 0 : i32
    %c0_i32_1 = arith.constant 0 : i32
    return %c0_i32, %c0_i32_0 : i32, i32
  }
  func.func @transform_5(%arg0: i32, %arg1: i32) -> (i32, i32) {
    %c0_i32 = arith.constant 0 : i32
    %c0_i32_0 = arith.constant 0 : i32
    %c0_i32_1 = arith.constant 0 : i32
    return %c0_i32, %c0_i32_0 : i32, i32
  }
  func.func @transform_6(%arg0: i32, %arg1: i32) -> (i32, i32) {
    %c0_i32 = arith.constant 0 : i32
    %c0_i32_0 = arith.constant 0 : i32
    %c0_i32_1 = arith.constant 0 : i32
    return %c0_i32, %c0_i32_0 : i32, i32
  }
  func.func @transform_7(%arg0: i32, %arg1: i32) -> (i32, i32, i32) {
    %c0_i32 = arith.constant 0 : i32
    %c0_i32_0 = arith.constant 0 : i32
    return %arg0, %arg1, %c0_i32 : i32, i32, i32
  }
}

</mosaic_0001>

<llo_original>
// kernel: _csp_forward.3
$region0: #{_csp_forward.3}
  #allocation0 [shape = 'u32[]', space=smem, size = 0x4, offset = 0x4, fixed_abs, tag = 'smem constant byte address 0x4 - core index']
  #allocation1 [shape = 'u32[72,128]{1,0:T(1,128)}', space=vmem, size = 0x9000, scoped, tag = 'internal scratch']
  %s0 = inlined_call_operand.vmem [shape: f32[2,288,32], index: 0, kind: input, shape index: {}]
  %s1 = inlined_call_operand.vmem [shape: f32[2,288,32], index: 1, kind: input, shape index: {}]
  %s2 = inlined_call_operand.vmem [shape: f32[2,288,32], index: 2, kind: input, shape index: {}]
  %s3 = inlined_call_operand.vmem [shape: bf16[9,32,64], index: 3, kind: input, shape index: {}]
  %s4 = inlined_call_operand.vmem [shape: f32[1,64], index: 4, kind: input, shape index: {}]
  %s5 = inlined_call_operand.vmem [shape: bf16[64,128], index: 5, kind: input, shape index: {}]
  %s6 = inlined_call_operand.vmem [shape: f32[1,128], index: 6, kind: input, shape index: {}]
  %s7 = inlined_call_operand.vmem [shape: f32[2,288,128], index: 7, kind: output, shape index: {}]
  %s8 = sld [smem:[#allocation0]]
  $region61: #{_csp_forward.3} parent=0
    _
  %s10 = ssub.s32 1, %s8
  %s11 = scalar_select 0, %s10, %s8
  loop: start=0, step=1, limit=4
  $region2: #{_csp_forward.3} parent=0 // loop_pre_header
    _
  $region3: #{_csp_forward.3} parent=0 // loop_header
    %s13 = sphi 0, %s17
    %p14 = scmp.ge.s32.totalorder %s13, 4
    %s20 = sphi 0, %s32
    %s21 = sphi 0, %s28
    %s22 = sphi 0, %s20
    %s23 = sphi 0, %s21
    %s24 = sphi 0, %s22
    %s25 = sphi 0, %s23
    %s37 = sphi 0, %s39
    %s40 = sphi 0, %s37
    %s41 = sphi 0, %s40
    %s57 = sphi 0, %s41
    %s65 = sphi 0, %s67
    %s68 = sphi 0, %s65
    %s69 = sphi 0, %s68
    %s85 = sphi 0, %s69
    %s93 = sphi 0, %s95
    %s96 = sphi 0, %s93
    %s97 = sphi 0, %s96
    %s113 = sphi 0, %s97
    %s117 = sphi 0, %s117
    %s119 = sphi 0, %s117
    %s120 = sphi 0, %s119
    %s134 = sphi 0, %s120
    %s138 = sphi 0, %s138
    %s140 = sphi 0, %s138
    %s141 = sphi 0, %s140
    %s155 = sphi 0, %s141
    %s159 = sphi 0, %s159
    %s161 = sphi 0, %s159
    %s162 = sphi 0, %s161
    %s176 = sphi 0, %s162
    %s180 = sphi 0, %s180
    %s182 = sphi 0, %s180
    %s183 = sphi 0, %s182
    %s197 = sphi 0, %s183
    %s205 = sphi 0, %s207
    %s208 = sphi 0, %s205
    %s209 = sphi 0, %s208
    %s225 = sphi 0, %s209
  $region4: #{_csp_forward.3} parent=0 // loop_header_branch
    %16 = sbr.rel (%p14) target = $region8
  $region5: #{_csp_forward.3} parent=0 // loop_body
    %s18 = ssub.s32 %s13, 1
    %s19 = ssub.s32 %s13, 2
    %s26 = sadd.s32 1, %s21
    %p27 = scmp.ge.s32.totalorder %s26, 1
    %s28 = scalar_select %p27, 0, %s26
    %s29 = sadd.s32 1, %s20
    %s30 = scalar_select %p27, %s29, %s20
    %p31 = scmp.ge.s32.totalorder %s30, 2
    %s32 = scalar_select %p31, 0, %s30
    %s33 = ssub.s32 %s20, %s32
    %s34 = ssub.s32 %s21, %s28
    %s35 = sor.u32 %s33, %s34
    %p36 = scmp.eq.s32.totalorder %s35, 0
    %s38 = sadd.s32 %s37, 1
    %s39 = scalar_select %p36, %s37, %s38
    %p42 = pneg %p36
    %p43 = scmp.eq.s32.totalorder %s13, 1
    %p44 = por %p42, %p43
    %p45 = scmp.ne.s32.totalorder %s37, %s40
    %p46 = scmp.eq.s32.totalorder %s13, 0
    %p47 = por %p45, %p46
    %p48 = scmp.ne.s32.totalorder %s37, %s40
    %p49 = scmp.eq.s32.totalorder %s18, 1
    %p50 = por %p48, %p49
    %p51 = scmp.ne.s32.totalorder %s40, %s41
    %p52 = scmp.eq.s32.totalorder %s18, 0
    %p53 = por %p51, %p52
    %p54 = scmp.ne.s32.totalorder %s40, %s41
    %p55 = scmp.eq.s32.totalorder %s19, 1
    %p56 = por %p54, %p55
    %p58 = scmp.ne.s32.totalorder %s41, %s57
    %p59 = scmp.eq.s32.totalorder %s19, 0
    %p60 = por %p58, %p59
    %s61 = ssub.s32 %s20, %s32
    %s62 = ssub.s32 %s21, %s28
    %s63 = sor.u32 %s61, %s62
    %p64 = scmp.eq.s32.totalorder %s63, 0
    %s66 = sadd.s32 %s65, 1
    %s67 = scalar_select %p64, %s65, %s66
    %p70 = pneg %p64
    %p71 = scmp.eq.s32.totalorder %s13, 1
    %p72 = por %p70, %p71
    %p73 = scmp.ne.s32.totalorder %s65, %s68
    %p74 = scmp.eq.s32.totalorder %s13, 0
    %p75 = por %p73, %p74
    %p76 = scmp.ne.s32.totalorder %s65, %s68
    %p77 = scmp.eq.s32.totalorder %s18, 1
    %p78 = por %p76, %p77
    %p79 = scmp.ne.s32.totalorder %s68, %s69
    %p80 = scmp.eq.s32.totalorder %s18, 0
    %p81 = por %p79, %p80
    %p82 = scmp.ne.s32.totalorder %s68, %s69
    %p83 = scmp.eq.s32.totalorder %s19, 1
    %p84 = por %p82, %p83
    %p86 = scmp.ne.s32.totalorder %s69, %s85
    %p87 = scmp.eq.s32.totalorder %s19, 0
    %p88 = por %p86, %p87
    %s89 = ssub.s32 %s20, %s32
    %s90 = ssub.s32 %s21, %s28
    %s91 = sor.u32 %s89, %s90
    %p92 = scmp.eq.s32.totalorder %s91, 0
    %s94 = sadd.s32 %s93, 1
    %s95 = scalar_select %p92, %s93, %s94
    %p98 = pneg %p92
    %p99 = scmp.eq.s32.totalorder %s13, 1
    %p100 = por %p98, %p99
    %p101 = scmp.ne.s32.totalorder %s93, %s96
    %p102 = scmp.eq.s32.totalorder %s13, 0
    %p103 = por %p101, %p102
    %p104 = scmp.ne.s32.totalorder %s93, %s96
    %p105 = scmp.eq.s32.totalorder %s18, 1
    %p106 = por %p104, %p105
    %p107 = scmp.ne.s32.totalorder %s96, %s97
    %p108 = scmp.eq.s32.totalorder %s18, 0
    %p109 = por %p107, %p108
    %p110 = scmp.ne.s32.totalorder %s96, %s97
    %p111 = scmp.eq.s32.totalorder %s19, 1
    %p112 = por %p110, %p111
    %p114 = scmp.ne.s32.totalorder %s97, %s113
    %p115 = scmp.eq.s32.totalorder %s19, 0
    %p116 = por %p114, %p115
    %s118 = sadd.s32 %s117, 1
    %p121 = scmp.eq.s32.totalorder %s13, 1
    %p122 = scmp.ne.s32.totalorder %s117, %s119
    %p123 = scmp.eq.s32.totalorder %s13, 0
    %p124 = por %p122, %p123
    %p125 = scmp.ne.s32.totalorder %s117, %s119
    %p126 = scmp.eq.s32.totalorder %s18, 1
    %p127 = por %p125, %p126
    %p128 = scmp.ne.s32.totalorder %s119, %s120
    %p129 = scmp.eq.s32.totalorder %s18, 0
    %p130 = por %p128, %p129
    %p131 = scmp.ne.s32.totalorder %s119, %s120
    %p132 = scmp.eq.s32.totalorder %s19, 1
    %p133 = por %p131, %p132
    %p135 = scmp.ne.s32.totalorder %s120, %s134
    %p136 = scmp.eq.s32.totalorder %s19, 0
    %p137 = por %p135, %p136
    %s139 = sadd.s32 %s138, 1
    %p142 = scmp.eq.s32.totalorder %s13, 1
    %p143 = scmp.ne.s32.totalorder %s138, %s140
    %p144 = scmp.eq.s32.totalorder %s13, 0
    %p145 = por %p143, %p144
    %p146 = scmp.ne.s32.totalorder %s138, %s140
    %p147 = scmp.eq.s32.totalorder %s18, 1
    %p148 = por %p146, %p147
    %p149 = scmp.ne.s32.totalorder %s140, %s141
    %p150 = scmp.eq.s32.totalorder %s18, 0
    %p151 = por %p149, %p150
    %p152 = scmp.ne.s32.totalorder %s140, %s141
    %p153 = scmp.eq.s32.totalorder %s19, 1
    %p154 = por %p152, %p153
    %p156 = scmp.ne.s32.totalorder %s141, %s155
    %p157 = scmp.eq.s32.totalorder %s19, 0
    %p158 = por %p156, %p157
    %s160 = sadd.s32 %s159, 1
    %p163 = scmp.eq.s32.totalorder %s13, 1
    %p164 = scmp.ne.s32.totalorder %s159, %s161
    %p165 = scmp.eq.s32.totalorder %s13, 0
    %p166 = por %p164, %p165
    %p167 = scmp.ne.s32.totalorder %s159, %s161
    %p168 = scmp.eq.s32.totalorder %s18, 1
    %p169 = por %p167, %p168
    %p170 = scmp.ne.s32.totalorder %s161, %s162
    %p171 = scmp.eq.s32.totalorder %s18, 0
    %p172 = por %p170, %p171
    %p173 = scmp.ne.s32.totalorder %s161, %s162
    %p174 = scmp.eq.s32.totalorder %s19, 1
    %p175 = por %p173, %p174
    %p177 = scmp.ne.s32.totalorder %s162, %s176
    %p178 = scmp.eq.s32.totalorder %s19, 0
    %p179 = por %p177, %p178
    %s181 = sadd.s32 %s180, 1
    %p184 = scmp.eq.s32.totalorder %s13, 1
    %p185 = scmp.ne.s32.totalorder %s180, %s182
    %p186 = scmp.eq.s32.totalorder %s13, 0
    %p187 = por %p185, %p186
    %p188 = scmp.ne.s32.totalorder %s180, %s182
    %p189 = scmp.eq.s32.totalorder %s18, 1
    %p190 = por %p188, %p189
    %p191 = scmp.ne.s32.totalorder %s182, %s183
    %p192 = scmp.eq.s32.totalorder %s18, 0
    %p193 = por %p191, %p192
    %p194 = scmp.ne.s32.totalorder %s182, %s183
    %p195 = scmp.eq.s32.totalorder %s19, 1
    %p196 = por %p194, %p195
    %p198 = scmp.ne.s32.totalorder %s183, %s197
    %p199 = scmp.eq.s32.totalorder %s19, 0
    %p200 = por %p198, %p199
    %s201 = ssub.s32 %s20, %s32
    %s202 = ssub.s32 %s21, %s28
    %s203 = sor.u32 %s201, %s202
    %p204 = scmp.eq.s32.totalorder %s203, 0
    %s206 = sadd.s32 %s205, 1
    %s207 = scalar_select %p204, %s205, %s206
    %p210 = pneg %p204
    %p211 = scmp.eq.s32.totalorder %s13, 1
    %p212 = por %p210, %p211
    %p213 = scmp.ne.s32.totalorder %s205, %s208
    %p214 = scmp.eq.s32.totalorder %s13, 0
    %p215 = por %p213, %p214
    %p216 = scmp.ne.s32.totalorder %s205, %s208
    %p217 = scmp.eq.s32.totalorder %s18, 1
    %p218 = por %p216, %p217
    %p219 = scmp.ne.s32.totalorder %s208, %s209
    %p220 = scmp.eq.s32.totalorder %s18, 0
    %p221 = por %p219, %p220
    %p222 = scmp.ne.s32.totalorder %s208, %s209
    %p223 = scmp.eq.s32.totalorder %s19, 1
    %p224 = por %p222, %p223
    %p226 = scmp.ne.s32.totalorder %s209, %s225
    %p227 = scmp.eq.s32.totalorder %s19, 0
    %p228 = por %p226, %p227
    %p229 = scmp.le.s32.totalorder 1, %s13
    %p230 = scmp.lt.s32.totalorder %s13, 3
    %p231 = pnand %p229, %p230
    %p232 = pneg %p231
    // Predicated region
    $region9: #{_csp_forward.3} parent=5 // pred_check
      _
    $region10: #{_csp_forward.3} parent=5 // pred_check_branch
      %234 = sbr.rel (%p231) target = $region12
    $region11: #{_csp_forward.3} parent=5 // pred_region
      %s235 = ssub.s32 %s13, 1
      // Predicated region
      $region13: #{_csp_forward.3} parent=11 // pred_check
        %p236 = pneg %p130
      $region14: #{_csp_forward.3} parent=11 // pred_check_branch
        %238 = sbr.rel (%p236) target = $region16
      $region15: #{_csp_forward.3} parent=11 // pred_region
        _
      $region16: #{_csp_forward.3} parent=11 // pred_fallthru
        _
      // Predicated region
      $region17: #{_csp_forward.3} parent=11 // pred_check
        %p239 = pneg %p151
      $region18: #{_csp_forward.3} parent=11 // pred_check_branch
        %241 = sbr.rel (%p239) target = $region20
      $region19: #{_csp_forward.3} parent=11 // pred_region
        _
      $region20: #{_csp_forward.3} parent=11 // pred_fallthru
        _
      // Predicated region
      $region21: #{_csp_forward.3} parent=11 // pred_check
        %p242 = pneg %p172
      $region22: #{_csp_forward.3} parent=11 // pred_check_branch
        %244 = sbr.rel (%p242) target = $region24
      $region23: #{_csp_forward.3} parent=11 // pred_region
        _
      $region24: #{_csp_forward.3} parent=11 // pred_fallthru
        _
      // Predicated region
      $region25: #{_csp_forward.3} parent=11 // pred_check
        %p245 = pneg %p193
      $region26: #{_csp_forward.3} parent=11 // pred_check_branch
        %247 = sbr.rel (%p245) target = $region28
      $region27: #{_csp_forward.3} parent=11 // pred_region
        _
      $region28: #{_csp_forward.3} parent=11 // pred_fallthru
        _
    $region12: #{_csp_forward.3} parent=5 // pred_fallthru
      _
    %p248 = scmp.lt.s32.totalorder %s13, 2
    // Predicated region
    $region29: #{_csp_forward.3} parent=5 // pred_check
      %p249 = pneg %p248
    $region30: #{_csp_forward.3} parent=5 // pred_check_branch
      %251 = sbr.rel (%p249) target = $region32
    $region31: #{_csp_forward.3} parent=5 // pred_region
      // Predicated region
      $region33: #{_csp_forward.3} parent=31 // pred_check
        %p252 = pneg %p47
      $region34: #{_csp_forward.3} parent=31 // pred_check_branch
        %254 = sbr.rel (%p252) target = $region36
      $region35: #{_csp_forward.3} parent=31 // pred_region
        %s255 = smul.u32 36, %s21
        %p256 = scmp.lt.s32.totalorder %s20, 1
        %s257 = scalar_select %p256, %s20, 1
        %p258 = scmp.lt.s32.totalorder %s255, 35
        %s259 = scalar_select %p258, %s255, 35
        %s260 = smul.addr %s257, 36
        %s261 = sadd.s32 %s259, %s260
        %s262 = smul.addr %s261, 8
        %s263 = scalar_lea.vmem %s0, %s262
        %s264 = smul.u32 36, %s21
      $region36: #{_csp_forward.3} parent=31 // pred_fallthru
        _
      // Predicated region
      $region37: #{_csp_forward.3} parent=31 // pred_check
        %p265 = pneg %p75
      $region38: #{_csp_forward.3} parent=31 // pred_check_branch
        %267 = sbr.rel (%p265) target = $region40
      $region39: #{_csp_forward.3} parent=31 // pred_region
        %s268 = smul.u32 36, %s21
        %p269 = scmp.lt.s32.totalorder %s20, 1
        %s270 = scalar_select %p269, %s20, 1
        %p271 = scmp.lt.s32.totalorder %s268, 35
        %s272 = scalar_select %p271, %s268, 35
        %s273 = smul.addr %s270, 36
        %s274 = sadd.s32 %s272, %s273
        %s275 = smul.addr %s274, 8
        %s276 = scalar_lea.vmem %s1, %s275
        %s277 = smul.u32 36, %s21
      $region40: #{_csp_forward.3} parent=31 // pred_fallthru
        _
      // Predicated region
      $region41: #{_csp_forward.3} parent=31 // pred_check
        %p278 = pneg %p103
      $region42: #{_csp_forward.3} parent=31 // pred_check_branch
        %280 = sbr.rel (%p278) target = $region44
      $region43: #{_csp_forward.3} parent=31 // pred_region
        %s281 = smul.u32 36, %s21
        %p282 = scmp.lt.s32.totalorder %s20, 1
        %s283 = scalar_select %p282, %s20, 1
        %p284 = scmp.lt.s32.totalorder %s281, 35
        %s285 = scalar_select %p284, %s281, 35
        %s286 = smul.addr %s283, 36
        %s287 = sadd.s32 %s285, %s286
        %s288 = smul.addr %s287, 8
        %s289 = scalar_lea.vmem %s2, %s288
        %s290 = smul.u32 36, %s21
      $region44: #{_csp_forward.3} parent=31 // pred_fallthru
        _
    $region32: #{_csp_forward.3} parent=5 // pred_fallthru
      _
    %p291 = scmp.le.s32.totalorder 1, %s13
    %p292 = scmp.lt.s32.totalorder %s13, 3
    %p293 = pnand %p291, %p292
    %p294 = pneg %p293
    // Predicated region
    $region45: #{_csp_forward.3} parent=5 // pred_check
      _
    $region46: #{_csp_forward.3} parent=5 // pred_check_branch
      %296 = sbr.rel (%p293) target = $region48
    $region47: #{_csp_forward.3} parent=5 // pred_region
      %s297 = ssub.s32 %s13, 1
      %s298 = smul.u32 36, %s23
      %p299 = scmp.lt.s32.totalorder %s22, 1
      %s300 = scalar_select %p299, %s22, 1
      %p301 = scmp.lt.s32.totalorder %s298, 35
      %s302 = scalar_select %p301, %s298, 35
      %s303 = smul.addr %s300, 36
      %s304 = sadd.s32 %s302, %s303
      %s305 = smul.addr %s304, 8
      %s306 = scalar_lea.vmem %s0, %s305
      %p307 = pneg %p53
      %p308 = pneg %p50
      %s309 = smul.u32 36, %s23
      %p310 = scmp.lt.s32.totalorder %s22, 1
      %s311 = scalar_select %p310, %s22, 1
      %p312 = scmp.lt.s32.totalorder %s309, 35
      %s313 = scalar_select %p312, %s309, 35
      %s314 = smul.addr %s311, 36
      %s315 = sadd.s32 %s313, %s314
      %s316 = smul.addr %s315, 8
      %s317 = scalar_lea.vmem %s1, %s316
      %p318 = pneg %p81
      %p319 = pneg %p78
      %s320 = smul.u32 36, %s23
      %p321 = scmp.lt.s32.totalorder %s22, 1
      %s322 = scalar_select %p321, %s22, 1
      %p323 = scmp.lt.s32.totalorder %s320, 35
      %s324 = scalar_select %p323, %s320, 35
      %s325 = smul.addr %s322, 36
      %s326 = sadd.s32 %s324, %s325
      %s327 = smul.addr %s326, 8
      %s328 = scalar_lea.vmem %s2, %s327
      %p329 = pneg %p109
      %p330 = pneg %p106
      %p331 = pneg %p130
      %p332 = pneg %p127
      %p333 = pneg %p151
      %p334 = pneg %p148
      %p335 = pneg %p172
      %p336 = pneg %p169
      %p337 = pneg %p193
      %p338 = pneg %p190
      %p339 = pneg %p221
      %p340 = pneg %p218
      %s341 = smul.u32 36, %s23
      %p342 = scmp.lt.s32.totalorder %s22, 1
      %s343 = scalar_select %p342, %s22, 1
      %p344 = scmp.lt.s32.totalorder %s341, 35
      %s345 = scalar_select %p344, %s341, 35
      %s346 = smul.addr %s343, 36
      %s347 = sadd.s32 %s345, %s346
      %s348 = smul.addr %s347, 8
      %s349 = scalar_lea.vmem %s7, %s348
      %s350 = smul.u32 36, %s23
      %p351 = scmp.lt.s32.totalorder %s22, 1
      %s352 = scalar_select %p351, %s22, 1
      %p353 = scmp.lt.s32.totalorder %s350, 35
      %s354 = scalar_select %p353, %s350, 35
      %s355 = smul.addr %s352, 36
      %s356 = sadd.s32 %s354, %s355
      %s357 = smul.addr %s356, 8
      %s358 = scalar_lea.vmem %s0, %s357
      %s359 = smul.u32 36, %s23
      %s360 = smul.u32 36, %s23
      %p361 = scmp.lt.s32.totalorder %s22, 1
      %s362 = scalar_select %p361, %s22, 1
      %p363 = scmp.lt.s32.totalorder %s360, 35
      %s364 = scalar_select %p363, %s360, 35
      %s365 = smul.addr %s362, 36
      %s366 = sadd.s32 %s364, %s365
      %s367 = smul.addr %s366, 8
      %s368 = scalar_lea.vmem %s1, %s367
      %s369 = smul.u32 36, %s23
      %s370 = smul.u32 36, %s23
      %p371 = scmp.lt.s32.totalorder %s22, 1
      %s372 = scalar_select %p371, %s22, 1
      %p373 = scmp.lt.s32.totalorder %s370, 35
      %s374 = scalar_select %p373, %s370, 35
      %s375 = smul.addr %s372, 36
      %s376 = sadd.s32 %s374, %s375
      %s377 = smul.addr %s376, 8
      %s378 = scalar_lea.vmem %s2, %s377
      %s379 = smul.u32 36, %s23
      %s380 = smul.u32 36, %s23
      %p381 = scmp.lt.s32.totalorder %s22, 1
      %s382 = scalar_select %p381, %s22, 1
      %p383 = scmp.lt.s32.totalorder %s380, 35
      %s384 = scalar_select %p383, %s380, 35
      %s385 = smul.addr %s382, 36
      %s386 = sadd.s32 %s384, %s385
      %s387 = smul.addr %s386, 8
      %s388 = scalar_lea.vmem %s7, %s387
      %s389 = smul.u32 36, %s23
      %v391 = vld [vmem:[%s358] sm:$0xff]
      %v392 = vld [vmem:[%s358 + $0x8] sm:$0xff]
      %v393 = vld [vmem:[%s358 + $0x10] sm:$0xff]
      %v394 = vld [vmem:[%s358 + $0x18] sm:$0xff]
      %v395 = vld [vmem:[%s358 + $0x20] sm:$0xff]
      %v396 = vld [vmem:[%s358 + $0x28] sm:$0xff]
      %v397 = vld [vmem:[%s358 + $0x30] sm:$0xff]
      %v398 = vld [vmem:[%s358 + $0x38] sm:$0xff]
      %v399 = vld [vmem:[%s358 + $0x40] sm:$0xff]
      %v400 = vld [vmem:[%s358 + $0x48] sm:$0xff]
      %v401 = vld [vmem:[%s358 + $0x50] sm:$0xff]
      %v402 = vld [vmem:[%s358 + $0x58] sm:$0xff]
      %v403 = vld [vmem:[%s358 + $0x60] sm:$0xff]
      %v404 = vld [vmem:[%s358 + $0x68] sm:$0xff]
      %v405 = vld [vmem:[%s358 + $0x70] sm:$0xff]
      %v406 = vld [vmem:[%s358 + $0x78] sm:$0xff]
      %v407 = vld [vmem:[%s358 + $0x80] sm:$0xff]
      %v408 = vld [vmem:[%s358 + $0x88] sm:$0xff]
      %v409 = vld [vmem:[%s358 + $0x90] sm:$0xff]
      %v410 = vld [vmem:[%s358 + $0x98] sm:$0xff]
      %v411 = vld [vmem:[%s358 + $0xa0] sm:$0xff]
      %v412 = vld [vmem:[%s358 + $0xa8] sm:$0xff]
      %v413 = vld [vmem:[%s358 + $0xb0] sm:$0xff]
      %v414 = vld [vmem:[%s358 + $0xb8] sm:$0xff]
      %v415 = vld [vmem:[%s358 + $0xc0] sm:$0xff]
      %v416 = vld [vmem:[%s358 + $0xc8] sm:$0xff]
      %v417 = vld [vmem:[%s358 + $0xd0] sm:$0xff]
      %v418 = vld [vmem:[%s358 + $0xd8] sm:$0xff]
      %v419 = vld [vmem:[%s358 + $0xe0] sm:$0xff]
      %v420 = vld [vmem:[%s358 + $0xe8] sm:$0xff]
      %v421 = vld [vmem:[%s358 + $0xf0] sm:$0xff]
      %v422 = vld [vmem:[%s358 + $0xf8] sm:$0xff]
      %v423 = vld [vmem:[%s358 + $0x100] sm:$0xff]
      %v424 = vld [vmem:[%s358 + $0x108] sm:$0xff]
      %v425 = vld [vmem:[%s358 + $0x110] sm:$0xff]
      %v426 = vld [vmem:[%s358 + $0x118] sm:$0xff]
      %v427 = vrot.slane %v391, 7
      %v428 = vrot.slane %v392, 7
      %v429 = vrot.slane %v393, 7
      %v430 = vrot.slane %v394, 7
      %v431 = vrot.slane %v395, 7
      %v432 = vrot.slane %v396, 7
      %v433 = vrot.slane %v397, 7
      %v434 = vrot.slane %v398, 7
      %v435 = vrot.slane %v399, 7
      %v436 = vrot.slane %v400, 7
      %v437 = vrot.slane %v401, 7
      %v438 = vrot.slane %v402, 7
      %v439 = vrot.slane %v403, 7
      %v440 = vrot.slane %v404, 7
      %v441 = vrot.slane %v405, 7
      %v442 = vrot.slane %v406, 7
      %v443 = vrot.slane %v407, 7
      %v444 = vrot.slane %v408, 7
      %v445 = vrot.slane %v409, 7
      %v446 = vrot.slane %v410, 7
      %v447 = vrot.slane %v411, 7
      %v448 = vrot.slane %v412, 7
      %v449 = vrot.slane %v413, 7
      %v450 = vrot.slane %v414, 7
      %v451 = vrot.slane %v415, 7
      %v452 = vrot.slane %v416, 7
      %v453 = vrot.slane %v417, 7
      %v454 = vrot.slane %v418, 7
      %v455 = vrot.slane %v419, 7
      %v456 = vrot.slane %v420, 7
      %v457 = vrot.slane %v421, 7
      %v458 = vrot.slane %v422, 7
      %v459 = vrot.slane %v423, 7
      %v460 = vrot.slane %v424, 7
      %v461 = vrot.slane %v425, 7
      %v462 = vrot.slane %v426, 7
      %v463 = vlaneseq
      %v464 = vshrl.u32 %v463, 7
      %vm465 = vcmp.lt.s32.totalorder %v464, 1
      %v466 = vsel %vm465, %v461, %v462
      %v467 = vsel %vm465, %v460, %v461
      %v468 = vsel %vm465, %v459, %v460
      %v469 = vsel %vm465, %v458, %v459
      %v470 = vsel %vm465, %v457, %v458
      %v471 = vsel %vm465, %v456, %v457
      %v472 = vsel %vm465, %v455, %v456
      %v473 = vsel %vm465, %v454, %v455
      %v474 = vsel %vm465, %v453, %v454
      %v475 = vsel %vm465, %v452, %v453
      %v476 = vsel %vm465, %v451, %v452
      %v477 = vsel %vm465, %v450, %v451
      %v478 = vsel %vm465, %v449, %v450
      %v479 = vsel %vm465, %v448, %v449
      %v480 = vsel %vm465, %v447, %v448
      %v481 = vsel %vm465, %v446, %v447
      %v482 = vsel %vm465, %v445, %v446
      %v483 = vsel %vm465, %v444, %v445
      %v484 = vsel %vm465, %v443, %v444
      %v485 = vsel %vm465, %v442, %v443
      %v486 = vsel %vm465, %v441, %v442
      %v487 = vsel %vm465, %v440, %v441
      %v488 = vsel %vm465, %v439, %v440
      %v489 = vsel %vm465, %v438, %v439
      %v490 = vsel %vm465, %v437, %v438
      %v491 = vsel %vm465, %v436, %v437
      %v492 = vsel %vm465, %v435, %v436
      %v493 = vsel %vm465, %v434, %v435
      %v494 = vsel %vm465, %v433, %v434
      %v495 = vsel %vm465, %v432, %v433
      %v496 = vsel %vm465, %v431, %v432
      %v497 = vsel %vm465, %v430, %v431
      %v498 = vsel %vm465, %v429, %v430
      %v499 = vsel %vm465, %v428, %v429
      %v500 = vsel %vm465, %v427, %v428
      %v501 = vsel %vm465, %v462, %v427
      %v502 = vpack.c.bf16 %v500, %v501
      %v503 = vpack.c.bf16 %v498, %v499
      %v504 = vpack.c.bf16 %v496, %v497
      %v505 = vpack.c.bf16 %v494, %v495
      %v506 = vpack.c.bf16 %v492, %v493
      %v507 = vpack.c.bf16 %v490, %v491
      %v508 = vpack.c.bf16 %v488, %v489
      %v509 = vpack.c.bf16 %v486, %v487
      %v510 = vpack.c.bf16 %v484, %v485
      %v511 = vpack.c.bf16 %v482, %v483
      %v512 = vpack.c.bf16 %v480, %v481
      %v513 = vpack.c.bf16 %v478, %v479
      %v514 = vpack.c.bf16 %v476, %v477
      %v515 = vpack.c.bf16 %v474, %v475
      %v516 = vpack.c.bf16 %v472, %v473
      %v517 = vpack.c.bf16 %v470, %v471
      %v518 = vpack.c.bf16 %v468, %v469
      %v519 = vpack.c.bf16 %v466, %v467
      %v520 = vld [vmem:[%s3] sm:$0xf]
      %v521 = vld [vmem:[%s3 + $0x4] sm:$0xf]
      %v522 = vld [vmem:[%s3 + $0x8] sm:$0xf]
      %v523 = vld [vmem:[%s3 + $0xc] sm:$0xf]
      %v524 = vpack.c.bf16 %v392, %v391
      %v525 = vpack.c.bf16 %v394, %v393
      %v526 = vpack.c.bf16 %v396, %v395
      %v527 = vpack.c.bf16 %v398, %v397
      %v528 = vpack.c.bf16 %v400, %v399
      %v529 = vpack.c.bf16 %v402, %v401
      %v530 = vpack.c.bf16 %v404, %v403
      %v531 = vpack.c.bf16 %v406, %v405
      %v532 = vpack.c.bf16 %v408, %v407
      %v533 = vpack.c.bf16 %v410, %v409
      %v534 = vpack.c.bf16 %v412, %v411
      %v535 = vpack.c.bf16 %v414, %v413
      %v536 = vpack.c.bf16 %v416, %v415
      %v537 = vpack.c.bf16 %v418, %v417
      %v538 = vpack.c.bf16 %v420, %v419
      %v539 = vpack.c.bf16 %v422, %v421
      %v540 = vpack.c.bf16 %v424, %v423
      %v541 = vpack.c.bf16 %v426, %v425
      %s542 = scalar_lea.vmem %s3, 16
      %v543 = vld [vmem:[%s542] sm:$0xf]
      %v544 = vld [vmem:[%s542 + $0x4] sm:$0xf]
      %v545 = vld [vmem:[%s542 + $0x8] sm:$0xf]
      %v546 = vld [vmem:[%s542 + $0xc] sm:$0xf]
      %v551 = vunpack.c.l.b16 %v543
      %v552 = vunpack.c.l.b16 %v544
      %v553 = vunpack.c.l.b16 %v545
      %v554 = vunpack.c.l.b16 %v546
      %v555 = vpack.c.b16 %v552, %v551
      %v556 = vpack.c.b16 %v554, %v553
      %vm559 = vcmask 261120
      %v561 = vsel %vm559, %v524, 0
      %v564 = vsel %vm559, %v525, 0
      %v567 = vsel %vm559, %v526, 0
      %v570 = vsel %vm559, %v527, 0
      %v573 = vsel %vm559, %v528, 0
      %v576 = vsel %vm559, %v529, 0
      %v579 = vsel %vm559, %v530, 0
      %v582 = vsel %vm559, %v531, 0
      %v585 = vsel %vm559, %v532, 0
      %v588 = vsel %vm559, %v533, 0
      %v591 = vsel %vm559, %v534, 0
      %v594 = vsel %vm559, %v535, 0
      %v597 = vsel %vm559, %v536, 0
      %v600 = vsel %vm559, %v537, 0
      %v603 = vsel %vm559, %v538, 0
      %v606 = vsel %vm559, %v539, 0
      %v609 = vsel %vm559, %v540, 0
      %v612 = vsel %vm559, %v541, 0
      %614 = vmatpush.bf16.msra.mxu0 0
      %615 = vmatpush.bf16.msra.mxu0 0
      %616 = vmatpush.bf16.msra.mxu0 0
      %617 = vmatpush.bf16.msra.mxu0 0
      %618 = vmatpush.bf16.msra.mxu0 0
      %619 = vmatpush.bf16.msra.mxu0 0
      %620 = vmatpush.bf16.msra.mxu0 %v556
      %621 = vmatpush.bf16.msra.mxu0 %v555
      %622 = vmatmul.bf16.gmra.mxu0 %v561
      %v623 = vpop.f32.mrf.mxu0
      %v624 = vadd.f32 0.0, %v623
      %v625 = vpop.f32.mrf.mxu0
      %v626 = vadd.f32 0.0, %v625
      %627 = vmatmul.bf16.gmra.mxu0 %v564
      %v628 = vpop.f32.mrf.mxu0
      %v629 = vadd.f32 0.0, %v628
      %v630 = vpop.f32.mrf.mxu0
      %v631 = vadd.f32 0.0, %v630
      %632 = vmatmul.bf16.gmra.mxu0 %v567
      %v633 = vpop.f32.mrf.mxu0
      %v634 = vadd.f32 0.0, %v633
      %v635 = vpop.f32.mrf.mxu0
      %v636 = vadd.f32 0.0, %v635
      %637 = vmatmul.bf16.gmra.mxu0 %v570
      %v638 = vpop.f32.mrf.mxu0
      %v639 = vadd.f32 0.0, %v638
      %v640 = vpop.f32.mrf.mxu0
      %v641 = vadd.f32 0.0, %v640
      %642 = vmatmul.bf16.gmra.mxu0 %v573
      %v643 = vpop.f32.mrf.mxu0
      %v644 = vadd.f32 0.0, %v643
      %v645 = vpop.f32.mrf.mxu0
      %v646 = vadd.f32 0.0, %v645
      %647 = vmatmul.bf16.gmra.mxu0 %v576
      %v648 = vpop.f32.mrf.mxu0
      %v649 = vadd.f32 0.0, %v648
      %v650 = vpop.f32.mrf.mxu0
      %v651 = vadd.f32 0.0, %v650
      %652 = vmatmul.bf16.gmra.mxu0 %v579
      %v653 = vpop.f32.mrf.mxu0
      %v654 = vadd.f32 0.0, %v653
      %v655 = vpop.f32.mrf.mxu0
      %v656 = vadd.f32 0.0, %v655
      %657 = vmatmul.bf16.gmra.mxu0 %v582
      %v658 = vpop.f32.mrf.mxu0
      %v659 = vadd.f32 0.0, %v658
      %v660 = vpop.f32.mrf.mxu0
      %v661 = vadd.f32 0.0, %v660
      %662 = vmatmul.bf16.gmra.mxu0 %v585
      %v663 = vpop.f32.mrf.mxu0
      %v664 = vadd.f32 0.0, %v663
      %v665 = vpop.f32.mrf.mxu0
      %v666 = vadd.f32 0.0, %v665
      %667 = vmatmul.bf16.gmra.mxu0 %v588
      %v668 = vpop.f32.mrf.mxu0
      %v669 = vadd.f32 0.0, %v668
      %v670 = vpop.f32.mrf.mxu0
      %v671 = vadd.f32 0.0, %v670
      %672 = vmatmul.bf16.gmra.mxu0 %v591
      %v673 = vpop.f32.mrf.mxu0
      %v674 = vadd.f32 0.0, %v673
      %v675 = vpop.f32.mrf.mxu0
      %v676 = vadd.f32 0.0, %v675
      %677 = vmatmul.bf16.gmra.mxu0 %v594
      %v678 = vpop.f32.mrf.mxu0
      %v679 = vadd.f32 0.0, %v678
      %v680 = vpop.f32.mrf.mxu0
      %v681 = vadd.f32 0.0, %v680
      %682 = vmatmul.bf16.gmra.mxu0 %v597
      %v683 = vpop.f32.mrf.mxu0
      %v684 = vadd.f32 0.0, %v683
      %v685 = vpop.f32.mrf.mxu0
      %v686 = vadd.f32 0.0, %v685
      %687 = vmatmul.bf16.gmra.mxu0 %v600
      %v688 = vpop.f32.mrf.mxu0
      %v689 = vadd.f32 0.0, %v688
      %v690 = vpop.f32.mrf.mxu0
      %v691 = vadd.f32 0.0, %v690
      %692 = vmatmul.bf16.gmra.mxu0 %v603
      %v693 = vpop.f32.mrf.mxu0
      %v694 = vadd.f32 0.0, %v693
      %v695 = vpop.f32.mrf.mxu0
      %v696 = vadd.f32 0.0, %v695
      %697 = vmatmul.bf16.gmra.mxu0 %v606
      %v698 = vpop.f32.mrf.mxu0
      %v699 = vadd.f32 0.0, %v698
      %v700 = vpop.f32.mrf.mxu0
      %v701 = vadd.f32 0.0, %v700
      %702 = vmatmul.bf16.gmra.mxu0 %v609
      %v703 = vpop.f32.mrf.mxu0
      %v704 = vadd.f32 0.0, %v703
      %v705 = vpop.f32.mrf.mxu0
      %v706 = vadd.f32 0.0, %v705
      %707 = vmatmul.bf16.gmra.mxu0 %v612
      %v708 = vpop.f32.mrf.mxu0
      %v709 = vadd.f32 0.0, %v708
      %v710 = vpop.f32.mrf.mxu0
      %v711 = vadd.f32 0.0, %v710
      %712 = vdwg.mxu0
      %v717 = vunpack.c.l.b16 %v520
      %v718 = vunpack.c.l.b16 %v521
      %v719 = vunpack.c.l.b16 %v522
      %v720 = vunpack.c.l.b16 %v523
      %v721 = vpack.c.b16 %v718, %v717
      %v722 = vpack.c.b16 %v720, %v719
      %v726 = vsel %vm559, %v502, 0
      %v729 = vsel %vm559, %v503, 0
      %v732 = vsel %vm559, %v504, 0
      %v735 = vsel %vm559, %v505, 0
      %v738 = vsel %vm559, %v506, 0
      %v741 = vsel %vm559, %v507, 0
      %v744 = vsel %vm559, %v508, 0
      %v747 = vsel %vm559, %v509, 0
      %v750 = vsel %vm559, %v510, 0
      %v753 = vsel %vm559, %v511, 0
      %v756 = vsel %vm559, %v512, 0
      %v759 = vsel %vm559, %v513, 0
      %v762 = vsel %vm559, %v514, 0
      %v765 = vsel %vm559, %v515, 0
      %v768 = vsel %vm559, %v516, 0
      %v771 = vsel %vm559, %v517, 0
      %v774 = vsel %vm559, %v518, 0
      %v777 = vsel %vm559, %v519, 0
      %779 = vmatpush.bf16.msra.mxu0 0
      %780 = vmatpush.bf16.msra.mxu0 0
      %781 = vmatpush.bf16.msra.mxu0 0
      %782 = vmatpush.bf16.msra.mxu0 0
      %783 = vmatpush.bf16.msra.mxu0 0
      %784 = vmatpush.bf16.msra.mxu0 0
      %785 = vmatpush.bf16.msra.mxu0 %v722
      %786 = vmatpush.bf16.msra.mxu0 %v721
      %787 = vmatmul.bf16.gmra.mxu0 %v726
      %v788 = vpop.f32.mrf.mxu0
      %v789 = vadd.f32 %v624, %v788
      %v790 = vpop.f32.mrf.mxu0
      %v791 = vadd.f32 %v626, %v790
      %792 = vmatmul.bf16.gmra.mxu0 %v729
      %v793 = vpop.f32.mrf.mxu0
      %v794 = vadd.f32 %v629, %v793
      %v795 = vpop.f32.mrf.mxu0
      %v796 = vadd.f32 %v631, %v795
      %797 = vmatmul.bf16.gmra.mxu0 %v732
      %v798 = vpop.f32.mrf.mxu0
      %v799 = vadd.f32 %v634, %v798
      %v800 = vpop.f32.mrf.mxu0
      %v801 = vadd.f32 %v636, %v800
      %802 = vmatmul.bf16.gmra.mxu0 %v735
      %v803 = vpop.f32.mrf.mxu0
      %v804 = vadd.f32 %v639, %v803
      %v805 = vpop.f32.mrf.mxu0
      %v806 = vadd.f32 %v641, %v805
      %807 = vmatmul.bf16.gmra.mxu0 %v738
      %v808 = vpop.f32.mrf.mxu0
      %v809 = vadd.f32 %v644, %v808
      %v810 = vpop.f32.mrf.mxu0
      %v811 = vadd.f32 %v646, %v810
      %812 = vmatmul.bf16.gmra.mxu0 %v741
      %v813 = vpop.f32.mrf.mxu0
      %v814 = vadd.f32 %v649, %v813
      %v815 = vpop.f32.mrf.mxu0
      %v816 = vadd.f32 %v651, %v815
      %817 = vmatmul.bf16.gmra.mxu0 %v744
      %v818 = vpop.f32.mrf.mxu0
      %v819 = vadd.f32 %v654, %v818
      %v820 = vpop.f32.mrf.mxu0
      %v821 = vadd.f32 %v656, %v820
      %822 = vmatmul.bf16.gmra.mxu0 %v747
      %v823 = vpop.f32.mrf.mxu0
      %v824 = vadd.f32 %v659, %v823
      %v825 = vpop.f32.mrf.mxu0
      %v826 = vadd.f32 %v661, %v825
      %827 = vmatmul.bf16.gmra.mxu0 %v750
      %v828 = vpop.f32.mrf.mxu0
      %v829 = vadd.f32 %v664, %v828
      %v830 = vpop.f32.mrf.mxu0
      %v831 = vadd.f32 %v666, %v830
      %832 = vmatmul.bf16.gmra.mxu0 %v753
      %v833 = vpop.f32.mrf.mxu0
      %v834 = vadd.f32 %v669, %v833
      %v835 = vpop.f32.mrf.mxu0
      %v836 = vadd.f32 %v671, %v835
      %837 = vmatmul.bf16.gmra.mxu0 %v756
      %v838 = vpop.f32.mrf.mxu0
      %v839 = vadd.f32 %v674, %v838
      %v840 = vpop.f32.mrf.mxu0
      %v841 = vadd.f32 %v676, %v840
      %842 = vmatmul.bf16.gmra.mxu0 %v759
      %v843 = vpop.f32.mrf.mxu0
      %v844 = vadd.f32 %v679, %v843
      %v845 = vpop.f32.mrf.mxu0
      %v846 = vadd.f32 %v681, %v845
      %847 = vmatmul.bf16.gmra.mxu0 %v762
      %v848 = vpop.f32.mrf.mxu0
      %v849 = vadd.f32 %v684, %v848
      %v850 = vpop.f32.mrf.mxu0
      %v851 = vadd.f32 %v686, %v850
      %852 = vmatmul.bf16.gmra.mxu0 %v765
      %v853 = vpop.f32.mrf.mxu0
      %v854 = vadd.f32 %v689, %v853
      %v855 = vpop.f32.mrf.mxu0
      %v856 = vadd.f32 %v691, %v855
      %857 = vmatmul.bf16.gmra.mxu0 %v768
      %v858 = vpop.f32.mrf.mxu0
      %v859 = vadd.f32 %v694, %v858
      %v860 = vpop.f32.mrf.mxu0
      %v861 = vadd.f32 %v696, %v860
      %862 = vmatmul.bf16.gmra.mxu0 %v771
      %v863 = vpop.f32.mrf.mxu0
      %v864 = vadd.f32 %v699, %v863
      %v865 = vpop.f32.mrf.mxu0
      %v866 = vadd.f32 %v701, %v865
      %867 = vmatmul.bf16.gmra.mxu0 %v774
      %v868 = vpop.f32.mrf.mxu0
      %v869 = vadd.f32 %v704, %v868
      %v870 = vpop.f32.mrf.mxu0
      %v871 = vadd.f32 %v706, %v870
      %872 = vmatmul.bf16.gmra.mxu0 %v777
      %v873 = vpop.f32.mrf.mxu0
      %v874 = vadd.f32 %v709, %v873
      %v875 = vpop.f32.mrf.mxu0
      %v876 = vadd.f32 %v711, %v875
      %877 = vdwg.mxu0
      %v878 = vrot.slane %v391, 1
      %v879 = vrot.slane %v392, 1
      %v880 = vrot.slane %v393, 1
      %v881 = vrot.slane %v394, 1
      %v882 = vrot.slane %v395, 1
      %v883 = vrot.slane %v396, 1
      %v884 = vrot.slane %v397, 1
      %v885 = vrot.slane %v398, 1
      %v886 = vrot.slane %v399, 1
      %v887 = vrot.slane %v400, 1
      %v888 = vrot.slane %v401, 1
      %v889 = vrot.slane %v402, 1
      %v890 = vrot.slane %v403, 1
      %v891 = vrot.slane %v404, 1
      %v892 = vrot.slane %v405, 1
      %v893 = vrot.slane %v406, 1
      %v894 = vrot.slane %v407, 1
      %v895 = vrot.slane %v408, 1
      %v896 = vrot.slane %v409, 1
      %v897 = vrot.slane %v410, 1
      %v898 = vrot.slane %v411, 1
      %v899 = vrot.slane %v412, 1
      %v900 = vrot.slane %v413, 1
      %v901 = vrot.slane %v414, 1
      %v902 = vrot.slane %v415, 1
      %v903 = vrot.slane %v416, 1
      %v904 = vrot.slane %v417, 1
      %v905 = vrot.slane %v418, 1
      %v906 = vrot.slane %v419, 1
      %v907 = vrot.slane %v420, 1
      %v908 = vrot.slane %v421, 1
      %v909 = vrot.slane %v422, 1
      %v910 = vrot.slane %v423, 1
      %v911 = vrot.slane %v424, 1
      %v912 = vrot.slane %v425, 1
      %v913 = vrot.slane %v426, 1
      %vm914 = vcmp.lt.s32.totalorder %v464, 7
      %v915 = vsel %vm914, %v912, %v913
      %v916 = vsel %vm914, %v911, %v912
      %v917 = vsel %vm914, %v910, %v911
      %v918 = vsel %vm914, %v909, %v910
      %v919 = vsel %vm914, %v908, %v909
      %v920 = vsel %vm914, %v907, %v908
      %v921 = vsel %vm914, %v906, %v907
      %v922 = vsel %vm914, %v905, %v906
      %v923 = vsel %vm914, %v904, %v905
      %v924 = vsel %vm914, %v903, %v904
      %v925 = vsel %vm914, %v902, %v903
      %v926 = vsel %vm914, %v901, %v902
      %v927 = vsel %vm914, %v900, %v901
      %v928 = vsel %vm914, %v899, %v900
      %v929 = vsel %vm914, %v898, %v899
      %v930 = vsel %vm914, %v897, %v898
      %v931 = vsel %vm914, %v896, %v897
      %v932 = vsel %vm914, %v895, %v896
      %v933 = vsel %vm914, %v894, %v895
      %v934 = vsel %vm914, %v893, %v894
      %v935 = vsel %vm914, %v892, %v893
      %v936 = vsel %vm914, %v891, %v892
      %v937 = vsel %vm914, %v890, %v891
      %v938 = vsel %vm914, %v889, %v890
      %v939 = vsel %vm914, %v888, %v889
      %v940 = vsel %vm914, %v887, %v888
      %v941 = vsel %vm914, %v886, %v887
      %v942 = vsel %vm914, %v885, %v886
      %v943 = vsel %vm914, %v884, %v885
      %v944 = vsel %vm914, %v883, %v884
      %v945 = vsel %vm914, %v882, %v883
      %v946 = vsel %vm914, %v881, %v882
      %v947 = vsel %vm914, %v880, %v881
      %v948 = vsel %vm914, %v879, %v880
      %v949 = vsel %vm914, %v878, %v879
      %v950 = vsel %vm914, %v913, %v878
      %v951 = vpack.c.bf16 %v948, %v949
      %v952 = vpack.c.bf16 %v946, %v947
      %v953 = vpack.c.bf16 %v944, %v945
      %v954 = vpack.c.bf16 %v942, %v943
      %v955 = vpack.c.bf16 %v940, %v941
      %v956 = vpack.c.bf16 %v938, %v939
      %v957 = vpack.c.bf16 %v936, %v937
      %v958 = vpack.c.bf16 %v934, %v935
      %v959 = vpack.c.bf16 %v932, %v933
      %v960 = vpack.c.bf16 %v930, %v931
      %v961 = vpack.c.bf16 %v928, %v929
      %v962 = vpack.c.bf16 %v926, %v927
      %v963 = vpack.c.bf16 %v924, %v925
      %v964 = vpack.c.bf16 %v922, %v923
      %v965 = vpack.c.bf16 %v920, %v921
      %v966 = vpack.c.bf16 %v918, %v919
      %v967 = vpack.c.bf16 %v916, %v917
      %v968 = vpack.c.bf16 %v950, %v915
      %s969 = scalar_lea.vmem %s3, 32
      %v970 = vld [vmem:[%s969] sm:$0xf]
      %v971 = vld [vmem:[%s969 + $0x4] sm:$0xf]
      %v972 = vld [vmem:[%s969 + $0x8] sm:$0xf]
      %v973 = vld [vmem:[%s969 + $0xc] sm:$0xf]
      %v978 = vunpack.c.l.b16 %v970
      %v979 = vunpack.c.l.b16 %v971
      %v980 = vunpack.c.l.b16 %v972
      %v981 = vunpack.c.l.b16 %v973
      %v982 = vpack.c.b16 %v979, %v978
      %v983 = vpack.c.b16 %v981, %v980
      %v987 = vsel %vm559, %v951, 0
      %v990 = vsel %vm559, %v952, 0
      %v993 = vsel %vm559, %v953, 0
      %v996 = vsel %vm559, %v954, 0
      %v999 = vsel %vm559, %v955, 0
      %v1002 = vsel %vm559, %v956, 0
      %v1005 = vsel %vm559, %v957, 0
      %v1008 = vsel %vm559, %v958, 0
      %v1011 = vsel %vm559, %v959, 0
      %v1014 = vsel %vm559, %v960, 0
      %v1017 = vsel %vm559, %v961, 0
      %v1020 = vsel %vm559, %v962, 0
      %v1023 = vsel %vm559, %v963, 0
      %v1026 = vsel %vm559, %v964, 0
      %v1029 = vsel %vm559, %v965, 0
      %v1032 = vsel %vm559, %v966, 0
      %v1035 = vsel %vm559, %v967, 0
      %v1038 = vsel %vm559, %v968, 0
      %1040 = vmatpush.bf16.msra.mxu0 0
      %1041 = vmatpush.bf16.msra.mxu0 0
      %1042 = vmatpush.bf16.msra.mxu0 0
      %1043 = vmatpush.bf16.msra.mxu0 0
      %1044 = vmatpush.bf16.msra.mxu0 0
      %1045 = vmatpush.bf16.msra.mxu0 0
      %1046 = vmatpush.bf16.msra.mxu0 %v983
      %1047 = vmatpush.bf16.msra.mxu0 %v982
      %1048 = vmatmul.bf16.gmra.mxu0 %v987
      %v1049 = vpop.f32.mrf.mxu0
      %v1050 = vadd.f32 0.0, %v1049
      %v1051 = vpop.f32.mrf.mxu0
      %v1052 = vadd.f32 0.0, %v1051
      %1053 = vmatmul.bf16.gmra.mxu0 %v990
      %v1054 = vpop.f32.mrf.mxu0
      %v1055 = vadd.f32 0.0, %v1054
      %v1056 = vpop.f32.mrf.mxu0
      %v1057 = vadd.f32 0.0, %v1056
      %1058 = vmatmul.bf16.gmra.mxu0 %v993
      %v1059 = vpop.f32.mrf.mxu0
      %v1060 = vadd.f32 0.0, %v1059
      %v1061 = vpop.f32.mrf.mxu0
      %v1062 = vadd.f32 0.0, %v1061
      %1063 = vmatmul.bf16.gmra.mxu0 %v996
      %v1064 = vpop.f32.mrf.mxu0
      %v1065 = vadd.f32 0.0, %v1064
      %v1066 = vpop.f32.mrf.mxu0
      %v1067 = vadd.f32 0.0, %v1066
      %1068 = vmatmul.bf16.gmra.mxu0 %v999
      %v1069 = vpop.f32.mrf.mxu0
      %v1070 = vadd.f32 0.0, %v1069
      %v1071 = vpop.f32.mrf.mxu0
      %v1072 = vadd.f32 0.0, %v1071
      %1073 = vmatmul.bf16.gmra.mxu0 %v1002
      %v1074 = vpop.f32.mrf.mxu0
      %v1075 = vadd.f32 0.0, %v1074
      %v1076 = vpop.f32.mrf.mxu0
      %v1077 = vadd.f32 0.0, %v1076
      %1078 = vmatmul.bf16.gmra.mxu0 %v1005
      %v1079 = vpop.f32.mrf.mxu0
      %v1080 = vadd.f32 0.0, %v1079
      %v1081 = vpop.f32.mrf.mxu0
      %v1082 = vadd.f32 0.0, %v1081
      %1083 = vmatmul.bf16.gmra.mxu0 %v1008
      %v1084 = vpop.f32.mrf.mxu0
      %v1085 = vadd.f32 0.0, %v1084
      %v1086 = vpop.f32.mrf.mxu0
      %v1087 = vadd.f32 0.0, %v1086
      %1088 = vmatmul.bf16.gmra.mxu0 %v1011
      %v1089 = vpop.f32.mrf.mxu0
      %v1090 = vadd.f32 0.0, %v1089
      %v1091 = vpop.f32.mrf.mxu0
      %v1092 = vadd.f32 0.0, %v1091
      %1093 = vmatmul.bf16.gmra.mxu0 %v1014
      %v1094 = vpop.f32.mrf.mxu0
      %v1095 = vadd.f32 0.0, %v1094
      %v1096 = vpop.f32.mrf.mxu0
      %v1097 = vadd.f32 0.0, %v1096
      %1098 = vmatmul.bf16.gmra.mxu0 %v1017
      %v1099 = vpop.f32.mrf.mxu0
      %v1100 = vadd.f32 0.0, %v1099
      %v1101 = vpop.f32.mrf.mxu0
      %v1102 = vadd.f32 0.0, %v1101
      %1103 = vmatmul.bf16.gmra.mxu0 %v1020
      %v1104 = vpop.f32.mrf.mxu0
      %v1105 = vadd.f32 0.0, %v1104
      %v1106 = vpop.f32.mrf.mxu0
      %v1107 = vadd.f32 0.0, %v1106
      %1108 = vmatmul.bf16.gmra.mxu0 %v1023
      %v1109 = vpop.f32.mrf.mxu0
      %v1110 = vadd.f32 0.0, %v1109
      %v1111 = vpop.f32.mrf.mxu0
      %v1112 = vadd.f32 0.0, %v1111
      %1113 = vmatmul.bf16.gmra.mxu0 %v1026
      %v1114 = vpop.f32.mrf.mxu0
      %v1115 = vadd.f32 0.0, %v1114
      %v1116 = vpop.f32.mrf.mxu0
      %v1117 = vadd.f32 0.0, %v1116
      %1118 = vmatmul.bf16.gmra.mxu0 %v1029
      %v1119 = vpop.f32.mrf.mxu0
      %v1120 = vadd.f32 0.0, %v1119
      %v1121 = vpop.f32.mrf.mxu0
      %v1122 = vadd.f32 0.0, %v1121
      %1123 = vmatmul.bf16.gmra.mxu0 %v1032
      %v1124 = vpop.f32.mrf.mxu0
      %v1125 = vadd.f32 0.0, %v1124
      %v1126 = vpop.f32.mrf.mxu0
      %v1127 = vadd.f32 0.0, %v1126
      %1128 = vmatmul.bf16.gmra.mxu0 %v1035
      %v1129 = vpop.f32.mrf.mxu0
      %v1130 = vadd.f32 0.0, %v1129
      %v1131 = vpop.f32.mrf.mxu0
      %v1132 = vadd.f32 0.0, %v1131
      %1133 = vmatmul.bf16.gmra.mxu0 %v1038
      %v1134 = vpop.f32.mrf.mxu0
      %v1135 = vadd.f32 0.0, %v1134
      %v1136 = vpop.f32.mrf.mxu0
      %v1137 = vadd.f32 0.0, %v1136
      %1138 = vdwg.mxu0
      %v1139 = vadd.f32 %v789, %v1050
      %v1140 = vadd.f32 %v791, %v1052
      %v1141 = vadd.f32 %v794, %v1055
      %v1142 = vadd.f32 %v796, %v1057
      %v1143 = vadd.f32 %v799, %v1060
      %v1144 = vadd.f32 %v801, %v1062
      %v1145 = vadd.f32 %v804, %v1065
      %v1146 = vadd.f32 %v806, %v1067
      %v1147 = vadd.f32 %v809, %v1070
      %v1148 = vadd.f32 %v811, %v1072
      %v1149 = vadd.f32 %v814, %v1075
      %v1150 = vadd.f32 %v816, %v1077
      %v1151 = vadd.f32 %v819, %v1080
      %v1152 = vadd.f32 %v821, %v1082
      %v1153 = vadd.f32 %v824, %v1085
      %v1154 = vadd.f32 %v826, %v1087
      %v1155 = vadd.f32 %v829, %v1090
      %v1156 = vadd.f32 %v831, %v1092
      %v1157 = vadd.f32 %v834, %v1095
      %v1158 = vadd.f32 %v836, %v1097
      %v1159 = vadd.f32 %v839, %v1100
      %v1160 = vadd.f32 %v841, %v1102
      %v1161 = vadd.f32 %v844, %v1105
      %v1162 = vadd.f32 %v846, %v1107
      %v1163 = vadd.f32 %v849, %v1110
      %v1164 = vadd.f32 %v851, %v1112
      %v1165 = vadd.f32 %v854, %v1115
      %v1166 = vadd.f32 %v856, %v1117
      %v1167 = vadd.f32 %v859, %v1120
      %v1168 = vadd.f32 %v861, %v1122
      %v1169 = vadd.f32 %v864, %v1125
      %v1170 = vadd.f32 %v866, %v1127
      %v1171 = vadd.f32 %v869, %v1130
      %v1172 = vadd.f32 %v871, %v1132
      %v1173 = vadd.f32 %v874, %v1135
      %v1174 = vadd.f32 %v876, %v1137
      %v1175 = vld [vmem:[%s368] sm:$0xff]
      %v1176 = vld [vmem:[%s368 + $0x8] sm:$0xff]
      %v1177 = vld [vmem:[%s368 + $0x10] sm:$0xff]
      %v1178 = vld [vmem:[%s368 + $0x18] sm:$0xff]
      %v1179 = vld [vmem:[%s368 + $0x20] sm:$0xff]
      %v1180 = vld [vmem:[%s368 + $0x28] sm:$0xff]
      %v1181 = vld [vmem:[%s368 + $0x30] sm:$0xff]
      %v1182 = vld [vmem:[%s368 + $0x38] sm:$0xff]
      %v1183 = vld [vmem:[%s368 + $0x40] sm:$0xff]
      %v1184 = vld [vmem:[%s368 + $0x48] sm:$0xff]
      %v1185 = vld [vmem:[%s368 + $0x50] sm:$0xff]
      %v1186 = vld [vmem:[%s368 + $0x58] sm:$0xff]
      %v1187 = vld [vmem:[%s368 + $0x60] sm:$0xff]
      %v1188 = vld [vmem:[%s368 + $0x68] sm:$0xff]
      %v1189 = vld [vmem:[%s368 + $0x70] sm:$0xff]
      %v1190 = vld [vmem:[%s368 + $0x78] sm:$0xff]
      %v1191 = vld [vmem:[%s368 + $0x80] sm:$0xff]
      %v1192 = vld [vmem:[%s368 + $0x88] sm:$0xff]
      %v1193 = vld [vmem:[%s368 + $0x90] sm:$0xff]
      %v1194 = vld [vmem:[%s368 + $0x98] sm:$0xff]
      %v1195 = vld [vmem:[%s368 + $0xa0] sm:$0xff]
      %v1196 = vld [vmem:[%s368 + $0xa8] sm:$0xff]
      %v1197 = vld [vmem:[%s368 + $0xb0] sm:$0xff]
      %v1198 = vld [vmem:[%s368 + $0xb8] sm:$0xff]
      %v1199 = vld [vmem:[%s368 + $0xc0] sm:$0xff]
      %v1200 = vld [vmem:[%s368 + $0xc8] sm:$0xff]
      %v1201 = vld [vmem:[%s368 + $0xd0] sm:$0xff]
      %v1202 = vld [vmem:[%s368 + $0xd8] sm:$0xff]
      %v1203 = vld [vmem:[%s368 + $0xe0] sm:$0xff]
      %v1204 = vld [vmem:[%s368 + $0xe8] sm:$0xff]
      %v1205 = vld [vmem:[%s368 + $0xf0] sm:$0xff]
      %v1206 = vld [vmem:[%s368 + $0xf8] sm:$0xff]
      %v1207 = vld [vmem:[%s368 + $0x100] sm:$0xff]
      %v1208 = vld [vmem:[%s368 + $0x108] sm:$0xff]
      %v1209 = vld [vmem:[%s368 + $0x110] sm:$0xff]
      %v1210 = vld [vmem:[%s368 + $0x118] sm:$0xff]
      %v1211 = vrot.slane %v1175, 7
      %v1212 = vrot.slane %v1176, 7
      %v1213 = vrot.slane %v1177, 7
      %v1214 = vrot.slane %v1178, 7
      %v1215 = vrot.slane %v1179, 7
      %v1216 = vrot.slane %v1180, 7
      %v1217 = vrot.slane %v1181, 7
      %v1218 = vrot.slane %v1182, 7
      %v1219 = vrot.slane %v1183, 7
      %v1220 = vrot.slane %v1184, 7
      %v1221 = vrot.slane %v1185, 7
      %v1222 = vrot.slane %v1186, 7
      %v1223 = vrot.slane %v1187, 7
      %v1224 = vrot.slane %v1188, 7
      %v1225 = vrot.slane %v1189, 7
      %v1226 = vrot.slane %v1190, 7
      %v1227 = vrot.slane %v1191, 7
      %v1228 = vrot.slane %v1192, 7
      %v1229 = vrot.slane %v1193, 7
      %v1230 = vrot.slane %v1194, 7
      %v1231 = vrot.slane %v1195, 7
      %v1232 = vrot.slane %v1196, 7
      %v1233 = vrot.slane %v1197, 7
      %v1234 = vrot.slane %v1198, 7
      %v1235 = vrot.slane %v1199, 7
      %v1236 = vrot.slane %v1200, 7
      %v1237 = vrot.slane %v1201, 7
      %v1238 = vrot.slane %v1202, 7
      %v1239 = vrot.slane %v1203, 7
      %v1240 = vrot.slane %v1204, 7
      %v1241 = vrot.slane %v1205, 7
      %v1242 = vrot.slane %v1206, 7
      %v1243 = vrot.slane %v1207, 7
      %v1244 = vrot.slane %v1208, 7
      %v1245 = vrot.slane %v1209, 7
      %v1246 = vrot.slane %v1210, 7
      %v1247 = vsel %vm465, %v1245, %v1246
      %v1248 = vsel %vm465, %v1244, %v1245
      %v1249 = vsel %vm465, %v1243, %v1244
      %v1250 = vsel %vm465, %v1242, %v1243
      %v1251 = vsel %vm465, %v1241, %v1242
      %v1252 = vsel %vm465, %v1240, %v1241
      %v1253 = vsel %vm465, %v1239, %v1240
      %v1254 = vsel %vm465, %v1238, %v1239
      %v1255 = vsel %vm465, %v1237, %v1238
      %v1256 = vsel %vm465, %v1236, %v1237
      %v1257 = vsel %vm465, %v1235, %v1236
      %v1258 = vsel %vm465, %v1234, %v1235
      %v1259 = vsel %vm465, %v1233, %v1234
      %v1260 = vsel %vm465, %v1232, %v1233
      %v1261 = vsel %vm465, %v1231, %v1232
      %v1262 = vsel %vm465, %v1230, %v1231
      %v1263 = vsel %vm465, %v1229, %v1230
      %v1264 = vsel %vm465, %v1228, %v1229
      %v1265 = vsel %vm465, %v1227, %v1228
      %v1266 = vsel %vm465, %v1226, %v1227
      %v1267 = vsel %vm465, %v1225, %v1226
      %v1268 = vsel %vm465, %v1224, %v1225
      %v1269 = vsel %vm465, %v1223, %v1224
      %v1270 = vsel %vm465, %v1222, %v1223
      %v1271 = vsel %vm465, %v1221, %v1222
      %v1272 = vsel %vm465, %v1220, %v1221
      %v1273 = vsel %vm465, %v1219, %v1220
      %v1274 = vsel %vm465, %v1218, %v1219
      %v1275 = vsel %vm465, %v1217, %v1218
      %v1276 = vsel %vm465, %v1216, %v1217
      %v1277 = vsel %vm465, %v1215, %v1216
      %v1278 = vsel %vm465, %v1214, %v1215
      %v1279 = vsel %vm465, %v1213, %v1214
      %v1280 = vsel %vm465, %v1212, %v1213
      %v1281 = vsel %vm465, %v1211, %v1212
      %v1282 = vsel %vm465, %v1246, %v1211
      %v1283 = vpack.c.bf16 %v1281, %v1282
      %v1284 = vpack.c.bf16 %v1279, %v1280
      %v1285 = vpack.c.bf16 %v1277, %v1278
      %v1286 = vpack.c.bf16 %v1275, %v1276
      %v1287 = vpack.c.bf16 %v1273, %v1274
      %v1288 = vpack.c.bf16 %v1271, %v1272
      %v1289 = vpack.c.bf16 %v1269, %v1270
      %v1290 = vpack.c.bf16 %v1267, %v1268
      %v1291 = vpack.c.bf16 %v1265, %v1266
      %v1292 = vpack.c.bf16 %v1263, %v1264
      %v1293 = vpack.c.bf16 %v1261, %v1262
      %v1294 = vpack.c.bf16 %v1259, %v1260
      %v1295 = vpack.c.bf16 %v1257, %v1258
      %v1296 = vpack.c.bf16 %v1255, %v1256
      %v1297 = vpack.c.bf16 %v1253, %v1254
      %v1298 = vpack.c.bf16 %v1251, %v1252
      %v1299 = vpack.c.bf16 %v1249, %v1250
      %v1300 = vpack.c.bf16 %v1247, %v1248
      %s1301 = scalar_lea.vmem %s3, 48
      %v1302 = vld [vmem:[%s1301] sm:$0xf]
      %v1303 = vld [vmem:[%s1301 + $0x4] sm:$0xf]
      %v1304 = vld [vmem:[%s1301 + $0x8] sm:$0xf]
      %v1305 = vld [vmem:[%s1301 + $0xc] sm:$0xf]
      %v1310 = vunpack.c.l.b16 %v1302
      %v1311 = vunpack.c.l.b16 %v1303
      %v1312 = vunpack.c.l.b16 %v1304
      %v1313 = vunpack.c.l.b16 %v1305
      %v1314 = vpack.c.b16 %v1311, %v1310
      %v1315 = vpack.c.b16 %v1313, %v1312
      %v1319 = vsel %vm559, %v1283, 0
      %v1322 = vsel %vm559, %v1284, 0
      %v1325 = vsel %vm559, %v1285, 0
      %v1328 = vsel %vm559, %v1286, 0
      %v1331 = vsel %vm559, %v1287, 0
      %v1334 = vsel %vm559, %v1288, 0
      %v1337 = vsel %vm559, %v1289, 0
      %v1340 = vsel %vm559, %v1290, 0
      %v1343 = vsel %vm559, %v1291, 0
      %v1346 = vsel %vm559, %v1292, 0
      %v1349 = vsel %vm559, %v1293, 0
      %v1352 = vsel %vm559, %v1294, 0
      %v1355 = vsel %vm559, %v1295, 0
      %v1358 = vsel %vm559, %v1296, 0
      %v1361 = vsel %vm559, %v1297, 0
      %v1364 = vsel %vm559, %v1298, 0
      %v1367 = vsel %vm559, %v1299, 0
      %v1370 = vsel %vm559, %v1300, 0
      %1372 = vmatpush.bf16.msra.mxu0 0
      %1373 = vmatpush.bf16.msra.mxu0 0
      %1374 = vmatpush.bf16.msra.mxu0 0
      %1375 = vmatpush.bf16.msra.mxu0 0
      %1376 = vmatpush.bf16.msra.mxu0 0
      %1377 = vmatpush.bf16.msra.mxu0 0
      %1378 = vmatpush.bf16.msra.mxu0 %v1315
      %1379 = vmatpush.bf16.msra.mxu0 %v1314
      %1380 = vmatmul.bf16.gmra.mxu0 %v1319
      %v1381 = vpop.f32.mrf.mxu0
      %v1382 = vadd.f32 0.0, %v1381
      %v1383 = vpop.f32.mrf.mxu0
      %v1384 = vadd.f32 0.0, %v1383
      %1385 = vmatmul.bf16.gmra.mxu0 %v1322
      %v1386 = vpop.f32.mrf.mxu0
      %v1387 = vadd.f32 0.0, %v1386
      %v1388 = vpop.f32.mrf.mxu0
      %v1389 = vadd.f32 0.0, %v1388
      %1390 = vmatmul.bf16.gmra.mxu0 %v1325
      %v1391 = vpop.f32.mrf.mxu0
      %v1392 = vadd.f32 0.0, %v1391
      %v1393 = vpop.f32.mrf.mxu0
      %v1394 = vadd.f32 0.0, %v1393
      %1395 = vmatmul.bf16.gmra.mxu0 %v1328
      %v1396 = vpop.f32.mrf.mxu0
      %v1397 = vadd.f32 0.0, %v1396
      %v1398 = vpop.f32.mrf.mxu0
      %v1399 = vadd.f32 0.0, %v1398
      %1400 = vmatmul.bf16.gmra.mxu0 %v1331
      %v1401 = vpop.f32.mrf.mxu0
      %v1402 = vadd.f32 0.0, %v1401
      %v1403 = vpop.f32.mrf.mxu0
      %v1404 = vadd.f32 0.0, %v1403
      %1405 = vmatmul.bf16.gmra.mxu0 %v1334
      %v1406 = vpop.f32.mrf.mxu0
      %v1407 = vadd.f32 0.0, %v1406
      %v1408 = vpop.f32.mrf.mxu0
      %v1409 = vadd.f32 0.0, %v1408
      %1410 = vmatmul.bf16.gmra.mxu0 %v1337
      %v1411 = vpop.f32.mrf.mxu0
      %v1412 = vadd.f32 0.0, %v1411
      %v1413 = vpop.f32.mrf.mxu0
      %v1414 = vadd.f32 0.0, %v1413
      %1415 = vmatmul.bf16.gmra.mxu0 %v1340
      %v1416 = vpop.f32.mrf.mxu0
      %v1417 = vadd.f32 0.0, %v1416
      %v1418 = vpop.f32.mrf.mxu0
      %v1419 = vadd.f32 0.0, %v1418
      %1420 = vmatmul.bf16.gmra.mxu0 %v1343
      %v1421 = vpop.f32.mrf.mxu0
      %v1422 = vadd.f32 0.0, %v1421
      %v1423 = vpop.f32.mrf.mxu0
      %v1424 = vadd.f32 0.0, %v1423
      %1425 = vmatmul.bf16.gmra.mxu0 %v1346
      %v1426 = vpop.f32.mrf.mxu0
      %v1427 = vadd.f32 0.0, %v1426
      %v1428 = vpop.f32.mrf.mxu0
      %v1429 = vadd.f32 0.0, %v1428
      %1430 = vmatmul.bf16.gmra.mxu0 %v1349
      %v1431 = vpop.f32.mrf.mxu0
      %v1432 = vadd.f32 0.0, %v1431
      %v1433 = vpop.f32.mrf.mxu0
      %v1434 = vadd.f32 0.0, %v1433
      %1435 = vmatmul.bf16.gmra.mxu0 %v1352
      %v1436 = vpop.f32.mrf.mxu0
      %v1437 = vadd.f32 0.0, %v1436
      %v1438 = vpop.f32.mrf.mxu0
      %v1439 = vadd.f32 0.0, %v1438
      %1440 = vmatmul.bf16.gmra.mxu0 %v1355
      %v1441 = vpop.f32.mrf.mxu0
      %v1442 = vadd.f32 0.0, %v1441
      %v1443 = vpop.f32.mrf.mxu0
      %v1444 = vadd.f32 0.0, %v1443
      %1445 = vmatmul.bf16.gmra.mxu0 %v1358
      %v1446 = vpop.f32.mrf.mxu0
      %v1447 = vadd.f32 0.0, %v1446
      %v1448 = vpop.f32.mrf.mxu0
      %v1449 = vadd.f32 0.0, %v1448
      %1450 = vmatmul.bf16.gmra.mxu0 %v1361
      %v1451 = vpop.f32.mrf.mxu0
      %v1452 = vadd.f32 0.0, %v1451
      %v1453 = vpop.f32.mrf.mxu0
      %v1454 = vadd.f32 0.0, %v1453
      %1455 = vmatmul.bf16.gmra.mxu0 %v1364
      %v1456 = vpop.f32.mrf.mxu0
      %v1457 = vadd.f32 0.0, %v1456
      %v1458 = vpop.f32.mrf.mxu0
      %v1459 = vadd.f32 0.0, %v1458
      %1460 = vmatmul.bf16.gmra.mxu0 %v1367
      %v1461 = vpop.f32.mrf.mxu0
      %v1462 = vadd.f32 0.0, %v1461
      %v1463 = vpop.f32.mrf.mxu0
      %v1464 = vadd.f32 0.0, %v1463
      %1465 = vmatmul.bf16.gmra.mxu0 %v1370
      %v1466 = vpop.f32.mrf.mxu0
      %v1467 = vadd.f32 0.0, %v1466
      %v1468 = vpop.f32.mrf.mxu0
      %v1469 = vadd.f32 0.0, %v1468
      %1470 = vdwg.mxu0
      %v1471 = vadd.f32 %v1139, %v1382
      %v1472 = vadd.f32 %v1140, %v1384
      %v1473 = vadd.f32 %v1141, %v1387
      %v1474 = vadd.f32 %v1142, %v1389
      %v1475 = vadd.f32 %v1143, %v1392
      %v1476 = vadd.f32 %v1144, %v1394
      %v1477 = vadd.f32 %v1145, %v1397
      %v1478 = vadd.f32 %v1146, %v1399
      %v1479 = vadd.f32 %v1147, %v1402
      %v1480 = vadd.f32 %v1148, %v1404
      %v1481 = vadd.f32 %v1149, %v1407
      %v1482 = vadd.f32 %v1150, %v1409
      %v1483 = vadd.f32 %v1151, %v1412
      %v1484 = vadd.f32 %v1152, %v1414
      %v1485 = vadd.f32 %v1153, %v1417
      %v1486 = vadd.f32 %v1154, %v1419
      %v1487 = vadd.f32 %v1155, %v1422
      %v1488 = vadd.f32 %v1156, %v1424
      %v1489 = vadd.f32 %v1157, %v1427
      %v1490 = vadd.f32 %v1158, %v1429
      %v1491 = vadd.f32 %v1159, %v1432
      %v1492 = vadd.f32 %v1160, %v1434
      %v1493 = vadd.f32 %v1161, %v1437
      %v1494 = vadd.f32 %v1162, %v1439
      %v1495 = vadd.f32 %v1163, %v1442
      %v1496 = vadd.f32 %v1164, %v1444
      %v1497 = vadd.f32 %v1165, %v1447
      %v1498 = vadd.f32 %v1166, %v1449
      %v1499 = vadd.f32 %v1167, %v1452
      %v1500 = vadd.f32 %v1168, %v1454
      %v1501 = vadd.f32 %v1169, %v1457
      %v1502 = vadd.f32 %v1170, %v1459
      %v1503 = vadd.f32 %v1171, %v1462
      %v1504 = vadd.f32 %v1172, %v1464
      %v1505 = vadd.f32 %v1173, %v1467
      %v1506 = vadd.f32 %v1174, %v1469
      %v1507 = vpack.c.bf16 %v1176, %v1175
      %v1508 = vpack.c.bf16 %v1178, %v1177
      %v1509 = vpack.c.bf16 %v1180, %v1179
      %v1510 = vpack.c.bf16 %v1182, %v1181
      %v1511 = vpack.c.bf16 %v1184, %v1183
      %v1512 = vpack.c.bf16 %v1186, %v1185
      %v1513 = vpack.c.bf16 %v1188, %v1187
      %v1514 = vpack.c.bf16 %v1190, %v1189
      %v1515 = vpack.c.bf16 %v1192, %v1191
      %v1516 = vpack.c.bf16 %v1194, %v1193
      %v1517 = vpack.c.bf16 %v1196, %v1195
      %v1518 = vpack.c.bf16 %v1198, %v1197
      %v1519 = vpack.c.bf16 %v1200, %v1199
      %v1520 = vpack.c.bf16 %v1202, %v1201
      %v1521 = vpack.c.bf16 %v1204, %v1203
      %v1522 = vpack.c.bf16 %v1206, %v1205
      %v1523 = vpack.c.bf16 %v1208, %v1207
      %v1524 = vpack.c.bf16 %v1210, %v1209
      %s1525 = scalar_lea.vmem %s3, 64
      %v1526 = vld [vmem:[%s1525] sm:$0xf]
      %v1527 = vld [vmem:[%s1525 + $0x4] sm:$0xf]
      %v1528 = vld [vmem:[%s1525 + $0x8] sm:$0xf]
      %v1529 = vld [vmem:[%s1525 + $0xc] sm:$0xf]
      %v1534 = vunpack.c.l.b16 %v1526
      %v1535 = vunpack.c.l.b16 %v1527
      %v1536 = vunpack.c.l.b16 %v1528
      %v1537 = vunpack.c.l.b16 %v1529
      %v1538 = vpack.c.b16 %v1535, %v1534
      %v1539 = vpack.c.b16 %v1537, %v1536
      %v1543 = vsel %vm559, %v1507, 0
      %v1546 = vsel %vm559, %v1508, 0
      %v1549 = vsel %vm559, %v1509, 0
      %v1552 = vsel %vm559, %v1510, 0
      %v1555 = vsel %vm559, %v1511, 0
      %v1558 = vsel %vm559, %v1512, 0
      %v1561 = vsel %vm559, %v1513, 0
      %v1564 = vsel %vm559, %v1514, 0
      %v1567 = vsel %vm559, %v1515, 0
      %v1570 = vsel %vm559, %v1516, 0
      %v1573 = vsel %vm559, %v1517, 0
      %v1576 = vsel %vm559, %v1518, 0
      %v1579 = vsel %vm559, %v1519, 0
      %v1582 = vsel %vm559, %v1520, 0
      %v1585 = vsel %vm559, %v1521, 0
      %v1588 = vsel %vm559, %v1522, 0
      %v1591 = vsel %vm559, %v1523, 0
      %v1594 = vsel %vm559, %v1524, 0
      %1596 = vmatpush.bf16.msra.mxu0 0
      %1597 = vmatpush.bf16.msra.mxu0 0
      %1598 = vmatpush.bf16.msra.mxu0 0
      %1599 = vmatpush.bf16.msra.mxu0 0
      %1600 = vmatpush.bf16.msra.mxu0 0
      %1601 = vmatpush.bf16.msra.mxu0 0
      %1602 = vmatpush.bf16.msra.mxu0 %v1539
      %1603 = vmatpush.bf16.msra.mxu0 %v1538
      %1604 = vmatmul.bf16.gmra.mxu0 %v1543
      %v1605 = vpop.f32.mrf.mxu0
      %v1606 = vadd.f32 0.0, %v1605
      %v1607 = vpop.f32.mrf.mxu0
      %v1608 = vadd.f32 0.0, %v1607
      %1609 = vmatmul.bf16.gmra.mxu0 %v1546
      %v1610 = vpop.f32.mrf.mxu0
      %v1611 = vadd.f32 0.0, %v1610
      %v1612 = vpop.f32.mrf.mxu0
      %v1613 = vadd.f32 0.0, %v1612
      %1614 = vmatmul.bf16.gmra.mxu0 %v1549
      %v1615 = vpop.f32.mrf.mxu0
      %v1616 = vadd.f32 0.0, %v1615
      %v1617 = vpop.f32.mrf.mxu0
      %v1618 = vadd.f32 0.0, %v1617
      %1619 = vmatmul.bf16.gmra.mxu0 %v1552
      %v1620 = vpop.f32.mrf.mxu0
      %v1621 = vadd.f32 0.0, %v1620
      %v1622 = vpop.f32.mrf.mxu0
      %v1623 = vadd.f32 0.0, %v1622
      %1624 = vmatmul.bf16.gmra.mxu0 %v1555
      %v1625 = vpop.f32.mrf.mxu0
      %v1626 = vadd.f32 0.0, %v1625
      %v1627 = vpop.f32.mrf.mxu0
      %v1628 = vadd.f32 0.0, %v1627
      %1629 = vmatmul.bf16.gmra.mxu0 %v1558
      %v1630 = vpop.f32.mrf.mxu0
      %v1631 = vadd.f32 0.0, %v1630
      %v1632 = vpop.f32.mrf.mxu0
      %v1633 = vadd.f32 0.0, %v1632
      %1634 = vmatmul.bf16.gmra.mxu0 %v1561
      %v1635 = vpop.f32.mrf.mxu0
      %v1636 = vadd.f32 0.0, %v1635
      %v1637 = vpop.f32.mrf.mxu0
      %v1638 = vadd.f32 0.0, %v1637
      %1639 = vmatmul.bf16.gmra.mxu0 %v1564
      %v1640 = vpop.f32.mrf.mxu0
      %v1641 = vadd.f32 0.0, %v1640
      %v1642 = vpop.f32.mrf.mxu0
      %v1643 = vadd.f32 0.0, %v1642
      %1644 = vmatmul.bf16.gmra.mxu0 %v1567
      %v1645 = vpop.f32.mrf.mxu0
      %v1646 = vadd.f32 0.0, %v1645
      %v1647 = vpop.f32.mrf.mxu0
      %v1648 = vadd.f32 0.0, %v1647
      %1649 = vmatmul.bf16.gmra.mxu0 %v1570
      %v1650 = vpop.f32.mrf.mxu0
      %v1651 = vadd.f32 0.0, %v1650
      %v1652 = vpop.f32.mrf.mxu0
      %v1653 = vadd.f32 0.0, %v1652
      %1654 = vmatmul.bf16.gmra.mxu0 %v1573
      %v1655 = vpop.f32.mrf.mxu0
      %v1656 = vadd.f32 0.0, %v1655
      %v1657 = vpop.f32.mrf.mxu0
      %v1658 = vadd.f32 0.0, %v1657
      %1659 = vmatmul.bf16.gmra.mxu0 %v1576
      %v1660 = vpop.f32.mrf.mxu0
      %v1661 = vadd.f32 0.0, %v1660
      %v1662 = vpop.f32.mrf.mxu0
      %v1663 = vadd.f32 0.0, %v1662
      %1664 = vmatmul.bf16.gmra.mxu0 %v1579
      %v1665 = vpop.f32.mrf.mxu0
      %v1666 = vadd.f32 0.0, %v1665
      %v1667 = vpop.f32.mrf.mxu0
      %v1668 = vadd.f32 0.0, %v1667
      %1669 = vmatmul.bf16.gmra.mxu0 %v1582
      %v1670 = vpop.f32.mrf.mxu0
      %v1671 = vadd.f32 0.0, %v1670
      %v1672 = vpop.f32.mrf.mxu0
      %v1673 = vadd.f32 0.0, %v1672
      %1674 = vmatmul.bf16.gmra.mxu0 %v1585
      %v1675 = vpop.f32.mrf.mxu0
      %v1676 = vadd.f32 0.0, %v1675
      %v1677 = vpop.f32.mrf.mxu0
      %v1678 = vadd.f32 0.0, %v1677
      %1679 = vmatmul.bf16.gmra.mxu0 %v1588
      %v1680 = vpop.f32.mrf.mxu0
      %v1681 = vadd.f32 0.0, %v1680
      %v1682 = vpop.f32.mrf.mxu0
      %v1683 = vadd.f32 0.0, %v1682
      %1684 = vmatmul.bf16.gmra.mxu0 %v1591
      %v1685 = vpop.f32.mrf.mxu0
      %v1686 = vadd.f32 0.0, %v1685
      %v1687 = vpop.f32.mrf.mxu0
      %v1688 = vadd.f32 0.0, %v1687
      %1689 = vmatmul.bf16.gmra.mxu0 %v1594
      %v1690 = vpop.f32.mrf.mxu0
      %v1691 = vadd.f32 0.0, %v1690
      %v1692 = vpop.f32.mrf.mxu0
      %v1693 = vadd.f32 0.0, %v1692
      %1694 = vdwg.mxu0
      %v1695 = vadd.f32 %v1471, %v1606
      %v1696 = vadd.f32 %v1472, %v1608
      %v1697 = vadd.f32 %v1473, %v1611
      %v1698 = vadd.f32 %v1474, %v1613
      %v1699 = vadd.f32 %v1475, %v1616
      %v1700 = vadd.f32 %v1476, %v1618
      %v1701 = vadd.f32 %v1477, %v1621
      %v1702 = vadd.f32 %v1478, %v1623
      %v1703 = vadd.f32 %v1479, %v1626
      %v1704 = vadd.f32 %v1480, %v1628
      %v1705 = vadd.f32 %v1481, %v1631
      %v1706 = vadd.f32 %v1482, %v1633
      %v1707 = vadd.f32 %v1483, %v1636
      %v1708 = vadd.f32 %v1484, %v1638
      %v1709 = vadd.f32 %v1485, %v1641
      %v1710 = vadd.f32 %v1486, %v1643
      %v1711 = vadd.f32 %v1487, %v1646
      %v1712 = vadd.f32 %v1488, %v1648
      %v1713 = vadd.f32 %v1489, %v1651
      %v1714 = vadd.f32 %v1490, %v1653
      %v1715 = vadd.f32 %v1491, %v1656
      %v1716 = vadd.f32 %v1492, %v1658
      %v1717 = vadd.f32 %v1493, %v1661
      %v1718 = vadd.f32 %v1494, %v1663
      %v1719 = vadd.f32 %v1495, %v1666
      %v1720 = vadd.f32 %v1496, %v1668
      %v1721 = vadd.f32 %v1497, %v1671
      %v1722 = vadd.f32 %v1498, %v1673
      %v1723 = vadd.f32 %v1499, %v1676
      %v1724 = vadd.f32 %v1500, %v1678
      %v1725 = vadd.f32 %v1501, %v1681
      %v1726 = vadd.f32 %v1502, %v1683
      %v1727 = vadd.f32 %v1503, %v1686
      %v1728 = vadd.f32 %v1504, %v1688
      %v1729 = vadd.f32 %v1505, %v1691
      %v1730 = vadd.f32 %v1506, %v1693
      %v1731 = vrot.slane %v1175, 1
      %v1732 = vrot.slane %v1176, 1
      %v1733 = vrot.slane %v1177, 1
      %v1734 = vrot.slane %v1178, 1
      %v1735 = vrot.slane %v1179, 1
      %v1736 = vrot.slane %v1180, 1
      %v1737 = vrot.slane %v1181, 1
      %v1738 = vrot.slane %v1182, 1
      %v1739 = vrot.slane %v1183, 1
      %v1740 = vrot.slane %v1184, 1
      %v1741 = vrot.slane %v1185, 1
      %v1742 = vrot.slane %v1186, 1
      %v1743 = vrot.slane %v1187, 1
      %v1744 = vrot.slane %v1188, 1
      %v1745 = vrot.slane %v1189, 1
      %v1746 = vrot.slane %v1190, 1
      %v1747 = vrot.slane %v1191, 1
      %v1748 = vrot.slane %v1192, 1
      %v1749 = vrot.slane %v1193, 1
      %v1750 = vrot.slane %v1194, 1
      %v1751 = vrot.slane %v1195, 1
      %v1752 = vrot.slane %v1196, 1
      %v1753 = vrot.slane %v1197, 1
      %v1754 = vrot.slane %v1198, 1
      %v1755 = vrot.slane %v1199, 1
      %v1756 = vrot.slane %v1200, 1
      %v1757 = vrot.slane %v1201, 1
      %v1758 = vrot.slane %v1202, 1
      %v1759 = vrot.slane %v1203, 1
      %v1760 = vrot.slane %v1204, 1
      %v1761 = vrot.slane %v1205, 1
      %v1762 = vrot.slane %v1206, 1
      %v1763 = vrot.slane %v1207, 1
      %v1764 = vrot.slane %v1208, 1
      %v1765 = vrot.slane %v1209, 1
      %v1766 = vrot.slane %v1210, 1
      %v1767 = vsel %vm914, %v1765, %v1766
      %v1768 = vsel %vm914, %v1764, %v1765
      %v1769 = vsel %vm914, %v1763, %v1764
      %v1770 = vsel %vm914, %v1762, %v1763
      %v1771 = vsel %vm914, %v1761, %v1762
      %v1772 = vsel %vm914, %v1760, %v1761
      %v1773 = vsel %vm914, %v1759, %v1760
      %v1774 = vsel %vm914, %v1758, %v1759
      %v1775 = vsel %vm914, %v1757, %v1758
      %v1776 = vsel %vm914, %v1756, %v1757
      %v1777 = vsel %vm914, %v1755, %v1756
      %v1778 = vsel %vm914, %v1754, %v1755
      %v1779 = vsel %vm914, %v1753, %v1754
      %v1780 = vsel %vm914, %v1752, %v1753
      %v1781 = vsel %vm914, %v1751, %v1752
      %v1782 = vsel %vm914, %v1750, %v1751
      %v1783 = vsel %vm914, %v1749, %v1750
      %v1784 = vsel %vm914, %v1748, %v1749
      %v1785 = vsel %vm914, %v1747, %v1748
      %v1786 = vsel %vm914, %v1746, %v1747
      %v1787 = vsel %vm914, %v1745, %v1746
      %v1788 = vsel %vm914, %v1744, %v1745
      %v1789 = vsel %vm914, %v1743, %v1744
      %v1790 = vsel %vm914, %v1742, %v1743
      %v1791 = vsel %vm914, %v1741, %v1742
      %v1792 = vsel %vm914, %v1740, %v1741
      %v1793 = vsel %vm914, %v1739, %v1740
      %v1794 = vsel %vm914, %v1738, %v1739
      %v1795 = vsel %vm914, %v1737, %v1738
      %v1796 = vsel %vm914, %v1736, %v1737
      %v1797 = vsel %vm914, %v1735, %v1736
      %v1798 = vsel %vm914, %v1734, %v1735
      %v1799 = vsel %vm914, %v1733, %v1734
      %v1800 = vsel %vm914, %v1732, %v1733
      %v1801 = vsel %vm914, %v1731, %v1732
      %v1802 = vsel %vm914, %v1766, %v1731
      %v1803 = vpack.c.bf16 %v1800, %v1801
      %v1804 = vpack.c.bf16 %v1798, %v1799
      %v1805 = vpack.c.bf16 %v1796, %v1797
      %v1806 = vpack.c.bf16 %v1794, %v1795
      %v1807 = vpack.c.bf16 %v1792, %v1793
      %v1808 = vpack.c.bf16 %v1790, %v1791
      %v1809 = vpack.c.bf16 %v1788, %v1789
      %v1810 = vpack.c.bf16 %v1786, %v1787
      %v1811 = vpack.c.bf16 %v1784, %v1785
      %v1812 = vpack.c.bf16 %v1782, %v1783
      %v1813 = vpack.c.bf16 %v1780, %v1781
      %v1814 = vpack.c.bf16 %v1778, %v1779
      %v1815 = vpack.c.bf16 %v1776, %v1777
      %v1816 = vpack.c.bf16 %v1774, %v1775
      %v1817 = vpack.c.bf16 %v1772, %v1773
      %v1818 = vpack.c.bf16 %v1770, %v1771
      %v1819 = vpack.c.bf16 %v1768, %v1769
      %v1820 = vpack.c.bf16 %v1802, %v1767
      %s1821 = scalar_lea.vmem %s3, 80
      %v1822 = vld [vmem:[%s1821] sm:$0xf]
      %v1823 = vld [vmem:[%s1821 + $0x4] sm:$0xf]
      %v1824 = vld [vmem:[%s1821 + $0x8] sm:$0xf]
      %v1825 = vld [vmem:[%s1821 + $0xc] sm:$0xf]
      %v1830 = vunpack.c.l.b16 %v1822
      %v1831 = vunpack.c.l.b16 %v1823
      %v1832 = vunpack.c.l.b16 %v1824
      %v1833 = vunpack.c.l.b16 %v1825
      %v1834 = vpack.c.b16 %v1831, %v1830
      %v1835 = vpack.c.b16 %v1833, %v1832
      %v1839 = vsel %vm559, %v1803, 0
      %v1842 = vsel %vm559, %v1804, 0
      %v1845 = vsel %vm559, %v1805, 0
      %v1848 = vsel %vm559, %v1806, 0
      %v1851 = vsel %vm559, %v1807, 0
      %v1854 = vsel %vm559, %v1808, 0
      %v1857 = vsel %vm559, %v1809, 0
      %v1860 = vsel %vm559, %v1810, 0
      %v1863 = vsel %vm559, %v1811, 0
      %v1866 = vsel %vm559, %v1812, 0
      %v1869 = vsel %vm559, %v1813, 0
      %v1872 = vsel %vm559, %v1814, 0
      %v1875 = vsel %vm559, %v1815, 0
      %v1878 = vsel %vm559, %v1816, 0
      %v1881 = vsel %vm559, %v1817, 0
      %v1884 = vsel %vm559, %v1818, 0
      %v1887 = vsel %vm559, %v1819, 0
      %v1890 = vsel %vm559, %v1820, 0
      %1892 = vmatpush.bf16.msra.mxu0 0
      %1893 = vmatpush.bf16.msra.mxu0 0
      %1894 = vmatpush.bf16.msra.mxu0 0
      %1895 = vmatpush.bf16.msra.mxu0 0
      %1896 = vmatpush.bf16.msra.mxu0 0
      %1897 = vmatpush.bf16.msra.mxu0 0
      %1898 = vmatpush.bf16.msra.mxu0 %v1835
      %1899 = vmatpush.bf16.msra.mxu0 %v1834
      %1900 = vmatmul.bf16.gmra.mxu0 %v1839
      %v1901 = vpop.f32.mrf.mxu0
      %v1902 = vadd.f32 0.0, %v1901
      %v1903 = vpop.f32.mrf.mxu0
      %v1904 = vadd.f32 0.0, %v1903
      %1905 = vmatmul.bf16.gmra.mxu0 %v1842
      %v1906 = vpop.f32.mrf.mxu0
      %v1907 = vadd.f32 0.0, %v1906
      %v1908 = vpop.f32.mrf.mxu0
      %v1909 = vadd.f32 0.0, %v1908
      %1910 = vmatmul.bf16.gmra.mxu0 %v1845
      %v1911 = vpop.f32.mrf.mxu0
      %v1912 = vadd.f32 0.0, %v1911
      %v1913 = vpop.f32.mrf.mxu0
      %v1914 = vadd.f32 0.0, %v1913
      %1915 = vmatmul.bf16.gmra.mxu0 %v1848
      %v1916 = vpop.f32.mrf.mxu0
      %v1917 = vadd.f32 0.0, %v1916
      %v1918 = vpop.f32.mrf.mxu0
      %v1919 = vadd.f32 0.0, %v1918
      %1920 = vmatmul.bf16.gmra.mxu0 %v1851
      %v1921 = vpop.f32.mrf.mxu0
      %v1922 = vadd.f32 0.0, %v1921
      %v1923 = vpop.f32.mrf.mxu0
      %v1924 = vadd.f32 0.0, %v1923
      %1925 = vmatmul.bf16.gmra.mxu0 %v1854
      %v1926 = vpop.f32.mrf.mxu0
      %v1927 = vadd.f32 0.0, %v1926
      %v1928 = vpop.f32.mrf.mxu0
      %v1929 = vadd.f32 0.0, %v1928
      %1930 = vmatmul.bf16.gmra.mxu0 %v1857
      %v1931 = vpop.f32.mrf.mxu0
      %v1932 = vadd.f32 0.0, %v1931
      %v1933 = vpop.f32.mrf.mxu0
      %v1934 = vadd.f32 0.0, %v1933
      %1935 = vmatmul.bf16.gmra.mxu0 %v1860
      %v1936 = vpop.f32.mrf.mxu0
      %v1937 = vadd.f32 0.0, %v1936
      %v1938 = vpop.f32.mrf.mxu0
      %v1939 = vadd.f32 0.0, %v1938
      %1940 = vmatmul.bf16.gmra.mxu0 %v1863
      %v1941 = vpop.f32.mrf.mxu0
      %v1942 = vadd.f32 0.0, %v1941
      %v1943 = vpop.f32.mrf.mxu0
      %v1944 = vadd.f32 0.0, %v1943
      %1945 = vmatmul.bf16.gmra.mxu0 %v1866
      %v1946 = vpop.f32.mrf.mxu0
      %v1947 = vadd.f32 0.0, %v1946
      %v1948 = vpop.f32.mrf.mxu0
      %v1949 = vadd.f32 0.0, %v1948
      %1950 = vmatmul.bf16.gmra.mxu0 %v1869
      %v1951 = vpop.f32.mrf.mxu0
      %v1952 = vadd.f32 0.0, %v1951
      %v1953 = vpop.f32.mrf.mxu0
      %v1954 = vadd.f32 0.0, %v1953
      %1955 = vmatmul.bf16.gmra.mxu0 %v1872
      %v1956 = vpop.f32.mrf.mxu0
      %v1957 = vadd.f32 0.0, %v1956
      %v1958 = vpop.f32.mrf.mxu0
      %v1959 = vadd.f32 0.0, %v1958
      %1960 = vmatmul.bf16.gmra.mxu0 %v1875
      %v1961 = vpop.f32.mrf.mxu0
      %v1962 = vadd.f32 0.0, %v1961
      %v1963 = vpop.f32.mrf.mxu0
      %v1964 = vadd.f32 0.0, %v1963
      %1965 = vmatmul.bf16.gmra.mxu0 %v1878
      %v1966 = vpop.f32.mrf.mxu0
      %v1967 = vadd.f32 0.0, %v1966
      %v1968 = vpop.f32.mrf.mxu0
      %v1969 = vadd.f32 0.0, %v1968
      %1970 = vmatmul.bf16.gmra.mxu0 %v1881
      %v1971 = vpop.f32.mrf.mxu0
      %v1972 = vadd.f32 0.0, %v1971
      %v1973 = vpop.f32.mrf.mxu0
      %v1974 = vadd.f32 0.0, %v1973
      %1975 = vmatmul.bf16.gmra.mxu0 %v1884
      %v1976 = vpop.f32.mrf.mxu0
      %v1977 = vadd.f32 0.0, %v1976
      %v1978 = vpop.f32.mrf.mxu0
      %v1979 = vadd.f32 0.0, %v1978
      %1980 = vmatmul.bf16.gmra.mxu0 %v1887
      %v1981 = vpop.f32.mrf.mxu0
      %v1982 = vadd.f32 0.0, %v1981
      %v1983 = vpop.f32.mrf.mxu0
      %v1984 = vadd.f32 0.0, %v1983
      %1985 = vmatmul.bf16.gmra.mxu0 %v1890
      %v1986 = vpop.f32.mrf.mxu0
      %v1987 = vadd.f32 0.0, %v1986
      %v1988 = vpop.f32.mrf.mxu0
      %v1989 = vadd.f32 0.0, %v1988
      %1990 = vdwg.mxu0
      %v1991 = vadd.f32 %v1695, %v1902
      %v1992 = vadd.f32 %v1696, %v1904
      %v1993 = vadd.f32 %v1697, %v1907
      %v1994 = vadd.f32 %v1698, %v1909
      %v1995 = vadd.f32 %v1699, %v1912
      %v1996 = vadd.f32 %v1700, %v1914
      %v1997 = vadd.f32 %v1701, %v1917
      %v1998 = vadd.f32 %v1702, %v1919
      %v1999 = vadd.f32 %v1703, %v1922
      %v2000 = vadd.f32 %v1704, %v1924
      %v2001 = vadd.f32 %v1705, %v1927
      %v2002 = vadd.f32 %v1706, %v1929
      %v2003 = vadd.f32 %v1707, %v1932
      %v2004 = vadd.f32 %v1708, %v1934
      %v2005 = vadd.f32 %v1709, %v1937
      %v2006 = vadd.f32 %v1710, %v1939
      %v2007 = vadd.f32 %v1711, %v1942
      %v2008 = vadd.f32 %v1712, %v1944
      %v2009 = vadd.f32 %v1713, %v1947
      %v2010 = vadd.f32 %v1714, %v1949
      %v2011 = vadd.f32 %v1715, %v1952
      %v2012 = vadd.f32 %v1716, %v1954
      %v2013 = vadd.f32 %v1717, %v1957
      %v2014 = vadd.f32 %v1718, %v1959
      %v2015 = vadd.f32 %v1719, %v1962
      %v2016 = vadd.f32 %v1720, %v1964
      %v2017 = vadd.f32 %v1721, %v1967
      %v2018 = vadd.f32 %v1722, %v1969
      %v2019 = vadd.f32 %v1723, %v1972
      %v2020 = vadd.f32 %v1724, %v1974
      %v2021 = vadd.f32 %v1725, %v1977
      %v2022 = vadd.f32 %v1726, %v1979
      %v2023 = vadd.f32 %v1727, %v1982
      %v2024 = vadd.f32 %v1728, %v1984
      %v2025 = vadd.f32 %v1729, %v1987
      %v2026 = vadd.f32 %v1730, %v1989
      %v2027 = vld [vmem:[%s378] sm:$0xff]
      %v2028 = vld [vmem:[%s378 + $0x8] sm:$0xff]
      %v2029 = vld [vmem:[%s378 + $0x10] sm:$0xff]
      %v2030 = vld [vmem:[%s378 + $0x18] sm:$0xff]
      %v2031 = vld [vmem:[%s378 + $0x20] sm:$0xff]
      %v2032 = vld [vmem:[%s378 + $0x28] sm:$0xff]
      %v2033 = vld [vmem:[%s378 + $0x30] sm:$0xff]
      %v2034 = vld [vmem:[%s378 + $0x38] sm:$0xff]
      %v2035 = vld [vmem:[%s378 + $0x40] sm:$0xff]
      %v2036 = vld [vmem:[%s378 + $0x48] sm:$0xff]
      %v2037 = vld [vmem:[%s378 + $0x50] sm:$0xff]
      %v2038 = vld [vmem:[%s378 + $0x58] sm:$0xff]
      %v2039 = vld [vmem:[%s378 + $0x60] sm:$0xff]
      %v2040 = vld [vmem:[%s378 + $0x68] sm:$0xff]
      %v2041 = vld [vmem:[%s378 + $0x70] sm:$0xff]
      %v2042 = vld [vmem:[%s378 + $0x78] sm:$0xff]
      %v2043 = vld [vmem:[%s378 + $0x80] sm:$0xff]
      %v2044 = vld [vmem:[%s378 + $0x88] sm:$0xff]
      %v2045 = vld [vmem:[%s378 + $0x90] sm:$0xff]
      %v2046 = vld [vmem:[%s378 + $0x98] sm:$0xff]
      %v2047 = vld [vmem:[%s378 + $0xa0] sm:$0xff]
      %v2048 = vld [vmem:[%s378 + $0xa8] sm:$0xff]
      %v2049 = vld [vmem:[%s378 + $0xb0] sm:$0xff]
      %v2050 = vld [vmem:[%s378 + $0xb8] sm:$0xff]
      %v2051 = vld [vmem:[%s378 + $0xc0] sm:$0xff]
      %v2052 = vld [vmem:[%s378 + $0xc8] sm:$0xff]
      %v2053 = vld [vmem:[%s378 + $0xd0] sm:$0xff]
      %v2054 = vld [vmem:[%s378 + $0xd8] sm:$0xff]
      %v2055 = vld [vmem:[%s378 + $0xe0] sm:$0xff]
      %v2056 = vld [vmem:[%s378 + $0xe8] sm:$0xff]
      %v2057 = vld [vmem:[%s378 + $0xf0] sm:$0xff]
      %v2058 = vld [vmem:[%s378 + $0xf8] sm:$0xff]
      %v2059 = vld [vmem:[%s378 + $0x100] sm:$0xff]
      %v2060 = vld [vmem:[%s378 + $0x108] sm:$0xff]
      %v2061 = vld [vmem:[%s378 + $0x110] sm:$0xff]
      %v2062 = vld [vmem:[%s378 + $0x118] sm:$0xff]
      %v2063 = vrot.slane %v2027, 7
      %v2064 = vrot.slane %v2028, 7
      %v2065 = vrot.slane %v2029, 7
      %v2066 = vrot.slane %v2030, 7
      %v2067 = vrot.slane %v2031, 7
      %v2068 = vrot.slane %v2032, 7
      %v2069 = vrot.slane %v2033, 7
      %v2070 = vrot.slane %v2034, 7
      %v2071 = vrot.slane %v2035, 7
      %v2072 = vrot.slane %v2036, 7
      %v2073 = vrot.slane %v2037, 7
      %v2074 = vrot.slane %v2038, 7
      %v2075 = vrot.slane %v2039, 7
      %v2076 = vrot.slane %v2040, 7
      %v2077 = vrot.slane %v2041, 7
      %v2078 = vrot.slane %v2042, 7
      %v2079 = vrot.slane %v2043, 7
      %v2080 = vrot.slane %v2044, 7
      %v2081 = vrot.slane %v2045, 7
      %v2082 = vrot.slane %v2046, 7
      %v2083 = vrot.slane %v2047, 7
      %v2084 = vrot.slane %v2048, 7
      %v2085 = vrot.slane %v2049, 7
      %v2086 = vrot.slane %v2050, 7
      %v2087 = vrot.slane %v2051, 7
      %v2088 = vrot.slane %v2052, 7
      %v2089 = vrot.slane %v2053, 7
      %v2090 = vrot.slane %v2054, 7
      %v2091 = vrot.slane %v2055, 7
      %v2092 = vrot.slane %v2056, 7
      %v2093 = vrot.slane %v2057, 7
      %v2094 = vrot.slane %v2058, 7
      %v2095 = vrot.slane %v2059, 7
      %v2096 = vrot.slane %v2060, 7
      %v2097 = vrot.slane %v2061, 7
      %v2098 = vrot.slane %v2062, 7
      %v2099 = vsel %vm465, %v2097, %v2098
      %v2100 = vsel %vm465, %v2096, %v2097
      %v2101 = vsel %vm465, %v2095, %v2096
      %v2102 = vsel %vm465, %v2094, %v2095
      %v2103 = vsel %vm465, %v2093, %v2094
      %v2104 = vsel %vm465, %v2092, %v2093
      %v2105 = vsel %vm465, %v2091, %v2092
      %v2106 = vsel %vm465, %v2090, %v2091
      %v2107 = vsel %vm465, %v2089, %v2090
      %v2108 = vsel %vm465, %v2088, %v2089
      %v2109 = vsel %vm465, %v2087, %v2088
      %v2110 = vsel %vm465, %v2086, %v2087
      %v2111 = vsel %vm465, %v2085, %v2086
      %v2112 = vsel %vm465, %v2084, %v2085
      %v2113 = vsel %vm465, %v2083, %v2084
      %v2114 = vsel %vm465, %v2082, %v2083
      %v2115 = vsel %vm465, %v2081, %v2082
      %v2116 = vsel %vm465, %v2080, %v2081
      %v2117 = vsel %vm465, %v2079, %v2080
      %v2118 = vsel %vm465, %v2078, %v2079
      %v2119 = vsel %vm465, %v2077, %v2078
      %v2120 = vsel %vm465, %v2076, %v2077
      %v2121 = vsel %vm465, %v2075, %v2076
      %v2122 = vsel %vm465, %v2074, %v2075
      %v2123 = vsel %vm465, %v2073, %v2074
      %v2124 = vsel %vm465, %v2072, %v2073
      %v2125 = vsel %vm465, %v2071, %v2072
      %v2126 = vsel %vm465, %v2070, %v2071
      %v2127 = vsel %vm465, %v2069, %v2070
      %v2128 = vsel %vm465, %v2068, %v2069
      %v2129 = vsel %vm465, %v2067, %v2068
      %v2130 = vsel %vm465, %v2066, %v2067
      %v2131 = vsel %vm465, %v2065, %v2066
      %v2132 = vsel %vm465, %v2064, %v2065
      %v2133 = vsel %vm465, %v2063, %v2064
      %v2134 = vsel %vm465, %v2098, %v2063
      %v2135 = vpack.c.bf16 %v2133, %v2134
      %v2136 = vpack.c.bf16 %v2131, %v2132
      %v2137 = vpack.c.bf16 %v2129, %v2130
      %v2138 = vpack.c.bf16 %v2127, %v2128
      %v2139 = vpack.c.bf16 %v2125, %v2126
      %v2140 = vpack.c.bf16 %v2123, %v2124
      %v2141 = vpack.c.bf16 %v2121, %v2122
      %v2142 = vpack.c.bf16 %v2119, %v2120
      %v2143 = vpack.c.bf16 %v2117, %v2118
      %v2144 = vpack.c.bf16 %v2115, %v2116
      %v2145 = vpack.c.bf16 %v2113, %v2114
      %v2146 = vpack.c.bf16 %v2111, %v2112
      %v2147 = vpack.c.bf16 %v2109, %v2110
      %v2148 = vpack.c.bf16 %v2107, %v2108
      %v2149 = vpack.c.bf16 %v2105, %v2106
      %v2150 = vpack.c.bf16 %v2103, %v2104
      %v2151 = vpack.c.bf16 %v2101, %v2102
      %v2152 = vpack.c.bf16 %v2099, %v2100
      %s2153 = scalar_lea.vmem %s3, 96
      %v2154 = vld [vmem:[%s2153] sm:$0xf]
      %v2155 = vld [vmem:[%s2153 + $0x4] sm:$0xf]
      %v2156 = vld [vmem:[%s2153 + $0x8] sm:$0xf]
      %v2157 = vld [vmem:[%s2153 + $0xc] sm:$0xf]
      %v2162 = vunpack.c.l.b16 %v2154
      %v2163 = vunpack.c.l.b16 %v2155
      %v2164 = vunpack.c.l.b16 %v2156
      %v2165 = vunpack.c.l.b16 %v2157
      %v2166 = vpack.c.b16 %v2163, %v2162
      %v2167 = vpack.c.b16 %v2165, %v2164
      %v2171 = vsel %vm559, %v2135, 0
      %v2174 = vsel %vm559, %v2136, 0
      %v2177 = vsel %vm559, %v2137, 0
      %v2180 = vsel %vm559, %v2138, 0
      %v2183 = vsel %vm559, %v2139, 0
      %v2186 = vsel %vm559, %v2140, 0
      %v2189 = vsel %vm559, %v2141, 0
      %v2192 = vsel %vm559, %v2142, 0
      %v2195 = vsel %vm559, %v2143, 0
      %v2198 = vsel %vm559, %v2144, 0
      %v2201 = vsel %vm559, %v2145, 0
      %v2204 = vsel %vm559, %v2146, 0
      %v2207 = vsel %vm559, %v2147, 0
      %v2210 = vsel %vm559, %v2148, 0
      %v2213 = vsel %vm559, %v2149, 0
      %v2216 = vsel %vm559, %v2150, 0
      %v2219 = vsel %vm559, %v2151, 0
      %v2222 = vsel %vm559, %v2152, 0
      %2224 = vmatpush.bf16.msra.mxu0 0
      %2225 = vmatpush.bf16.msra.mxu0 0
      %2226 = vmatpush.bf16.msra.mxu0 0
      %2227 = vmatpush.bf16.msra.mxu0 0
      %2228 = vmatpush.bf16.msra.mxu0 0
      %2229 = vmatpush.bf16.msra.mxu0 0
      %2230 = vmatpush.bf16.msra.mxu0 %v2167
      %2231 = vmatpush.bf16.msra.mxu0 %v2166
      %2232 = vmatmul.bf16.gmra.mxu0 %v2171
      %v2233 = vpop.f32.mrf.mxu0
      %v2234 = vadd.f32 0.0, %v2233
      %v2235 = vpop.f32.mrf.mxu0
      %v2236 = vadd.f32 0.0, %v2235
      %2237 = vmatmul.bf16.gmra.mxu0 %v2174
      %v2238 = vpop.f32.mrf.mxu0
      %v2239 = vadd.f32 0.0, %v2238
      %v2240 = vpop.f32.mrf.mxu0
      %v2241 = vadd.f32 0.0, %v2240
      %2242 = vmatmul.bf16.gmra.mxu0 %v2177
      %v2243 = vpop.f32.mrf.mxu0
      %v2244 = vadd.f32 0.0, %v2243
      %v2245 = vpop.f32.mrf.mxu0
      %v2246 = vadd.f32 0.0, %v2245
      %2247 = vmatmul.bf16.gmra.mxu0 %v2180
      %v2248 = vpop.f32.mrf.mxu0
      %v2249 = vadd.f32 0.0, %v2248
      %v2250 = vpop.f32.mrf.mxu0
      %v2251 = vadd.f32 0.0, %v2250
      %2252 = vmatmul.bf16.gmra.mxu0 %v2183
      %v2253 = vpop.f32.mrf.mxu0
      %v2254 = vadd.f32 0.0, %v2253
      %v2255 = vpop.f32.mrf.mxu0
      %v2256 = vadd.f32 0.0, %v2255
      %2257 = vmatmul.bf16.gmra.mxu0 %v2186
      %v2258 = vpop.f32.mrf.mxu0
      %v2259 = vadd.f32 0.0, %v2258
      %v2260 = vpop.f32.mrf.mxu0
      %v2261 = vadd.f32 0.0, %v2260
      %2262 = vmatmul.bf16.gmra.mxu0 %v2189
      %v2263 = vpop.f32.mrf.mxu0
      %v2264 = vadd.f32 0.0, %v2263
      %v2265 = vpop.f32.mrf.mxu0
      %v2266 = vadd.f32 0.0, %v2265
      %2267 = vmatmul.bf16.gmra.mxu0 %v2192
      %v2268 = vpop.f32.mrf.mxu0
      %v2269 = vadd.f32 0.0, %v2268
      %v2270 = vpop.f32.mrf.mxu0
      %v2271 = vadd.f32 0.0, %v2270
      %2272 = vmatmul.bf16.gmra.mxu0 %v2195
      %v2273 = vpop.f32.mrf.mxu0
      %v2274 = vadd.f32 0.0, %v2273
      %v2275 = vpop.f32.mrf.mxu0
      %v2276 = vadd.f32 0.0, %v2275
      %2277 = vmatmul.bf16.gmra.mxu0 %v2198
      %v2278 = vpop.f32.mrf.mxu0
      %v2279 = vadd.f32 0.0, %v2278
      %v2280 = vpop.f32.mrf.mxu0
      %v2281 = vadd.f32 0.0, %v2280
      %2282 = vmatmul.bf16.gmra.mxu0 %v2201
      %v2283 = vpop.f32.mrf.mxu0
      %v2284 = vadd.f32 0.0, %v2283
      %v2285 = vpop.f32.mrf.mxu0
      %v2286 = vadd.f32 0.0, %v2285
      %2287 = vmatmul.bf16.gmra.mxu0 %v2204
      %v2288 = vpop.f32.mrf.mxu0
      %v2289 = vadd.f32 0.0, %v2288
      %v2290 = vpop.f32.mrf.mxu0
      %v2291 = vadd.f32 0.0, %v2290
      %2292 = vmatmul.bf16.gmra.mxu0 %v2207
      %v2293 = vpop.f32.mrf.mxu0
      %v2294 = vadd.f32 0.0, %v2293
      %v2295 = vpop.f32.mrf.mxu0
      %v2296 = vadd.f32 0.0, %v2295
      %2297 = vmatmul.bf16.gmra.mxu0 %v2210
      %v2298 = vpop.f32.mrf.mxu0
      %v2299 = vadd.f32 0.0, %v2298
      %v2300 = vpop.f32.mrf.mxu0
      %v2301 = vadd.f32 0.0, %v2300
      %2302 = vmatmul.bf16.gmra.mxu0 %v2213
      %v2303 = vpop.f32.mrf.mxu0
      %v2304 = vadd.f32 0.0, %v2303
      %v2305 = vpop.f32.mrf.mxu0
      %v2306 = vadd.f32 0.0, %v2305
      %2307 = vmatmul.bf16.gmra.mxu0 %v2216
      %v2308 = vpop.f32.mrf.mxu0
      %v2309 = vadd.f32 0.0, %v2308
      %v2310 = vpop.f32.mrf.mxu0
      %v2311 = vadd.f32 0.0, %v2310
      %2312 = vmatmul.bf16.gmra.mxu0 %v2219
      %v2313 = vpop.f32.mrf.mxu0
      %v2314 = vadd.f32 0.0, %v2313
      %v2315 = vpop.f32.mrf.mxu0
      %v2316 = vadd.f32 0.0, %v2315
      %2317 = vmatmul.bf16.gmra.mxu0 %v2222
      %v2318 = vpop.f32.mrf.mxu0
      %v2319 = vadd.f32 0.0, %v2318
      %v2320 = vpop.f32.mrf.mxu0
      %v2321 = vadd.f32 0.0, %v2320
      %2322 = vdwg.mxu0
      %v2323 = vadd.f32 %v1991, %v2234
      %v2324 = vadd.f32 %v1992, %v2236
      %v2325 = vadd.f32 %v1993, %v2239
      %v2326 = vadd.f32 %v1994, %v2241
      %v2327 = vadd.f32 %v1995, %v2244
      %v2328 = vadd.f32 %v1996, %v2246
      %v2329 = vadd.f32 %v1997, %v2249
      %v2330 = vadd.f32 %v1998, %v2251
      %v2331 = vadd.f32 %v1999, %v2254
      %v2332 = vadd.f32 %v2000, %v2256
      %v2333 = vadd.f32 %v2001, %v2259
      %v2334 = vadd.f32 %v2002, %v2261
      %v2335 = vadd.f32 %v2003, %v2264
      %v2336 = vadd.f32 %v2004, %v2266
      %v2337 = vadd.f32 %v2005, %v2269
      %v2338 = vadd.f32 %v2006, %v2271
      %v2339 = vadd.f32 %v2007, %v2274
      %v2340 = vadd.f32 %v2008, %v2276
      %v2341 = vadd.f32 %v2009, %v2279
      %v2342 = vadd.f32 %v2010, %v2281
      %v2343 = vadd.f32 %v2011, %v2284
      %v2344 = vadd.f32 %v2012, %v2286
      %v2345 = vadd.f32 %v2013, %v2289
      %v2346 = vadd.f32 %v2014, %v2291
      %v2347 = vadd.f32 %v2015, %v2294
      %v2348 = vadd.f32 %v2016, %v2296
      %v2349 = vadd.f32 %v2017, %v2299
      %v2350 = vadd.f32 %v2018, %v2301
      %v2351 = vadd.f32 %v2019, %v2304
      %v2352 = vadd.f32 %v2020, %v2306
      %v2353 = vadd.f32 %v2021, %v2309
      %v2354 = vadd.f32 %v2022, %v2311
      %v2355 = vadd.f32 %v2023, %v2314
      %v2356 = vadd.f32 %v2024, %v2316
      %v2357 = vadd.f32 %v2025, %v2319
      %v2358 = vadd.f32 %v2026, %v2321
      %v2359 = vpack.c.bf16 %v2028, %v2027
      %v2360 = vpack.c.bf16 %v2030, %v2029
      %v2361 = vpack.c.bf16 %v2032, %v2031
      %v2362 = vpack.c.bf16 %v2034, %v2033
      %v2363 = vpack.c.bf16 %v2036, %v2035
      %v2364 = vpack.c.bf16 %v2038, %v2037
      %v2365 = vpack.c.bf16 %v2040, %v2039
      %v2366 = vpack.c.bf16 %v2042, %v2041
      %v2367 = vpack.c.bf16 %v2044, %v2043
      %v2368 = vpack.c.bf16 %v2046, %v2045
      %v2369 = vpack.c.bf16 %v2048, %v2047
      %v2370 = vpack.c.bf16 %v2050, %v2049
      %v2371 = vpack.c.bf16 %v2052, %v2051
      %v2372 = vpack.c.bf16 %v2054, %v2053
      %v2373 = vpack.c.bf16 %v2056, %v2055
      %v2374 = vpack.c.bf16 %v2058, %v2057
      %v2375 = vpack.c.bf16 %v2060, %v2059
      %v2376 = vpack.c.bf16 %v2062, %v2061
      %s2377 = scalar_lea.vmem %s3, 112
      %v2378 = vld [vmem:[%s2377] sm:$0xf]
      %v2379 = vld [vmem:[%s2377 + $0x4] sm:$0xf]
      %v2380 = vld [vmem:[%s2377 + $0x8] sm:$0xf]
      %v2381 = vld [vmem:[%s2377 + $0xc] sm:$0xf]
      %v2386 = vunpack.c.l.b16 %v2378
      %v2387 = vunpack.c.l.b16 %v2379
      %v2388 = vunpack.c.l.b16 %v2380
      %v2389 = vunpack.c.l.b16 %v2381
      %v2390 = vpack.c.b16 %v2387, %v2386
      %v2391 = vpack.c.b16 %v2389, %v2388
      %v2395 = vsel %vm559, %v2359, 0
      %v2398 = vsel %vm559, %v2360, 0
      %v2401 = vsel %vm559, %v2361, 0
      %v2404 = vsel %vm559, %v2362, 0
      %v2407 = vsel %vm559, %v2363, 0
      %v2410 = vsel %vm559, %v2364, 0
      %v2413 = vsel %vm559, %v2365, 0
      %v2416 = vsel %vm559, %v2366, 0
      %v2419 = vsel %vm559, %v2367, 0
      %v2422 = vsel %vm559, %v2368, 0
      %v2425 = vsel %vm559, %v2369, 0
      %v2428 = vsel %vm559, %v2370, 0
      %v2431 = vsel %vm559, %v2371, 0
      %v2434 = vsel %vm559, %v2372, 0
      %v2437 = vsel %vm559, %v2373, 0
      %v2440 = vsel %vm559, %v2374, 0
      %v2443 = vsel %vm559, %v2375, 0
      %v2446 = vsel %vm559, %v2376, 0
      %2448 = vmatpush.bf16.msra.mxu0 0
      %2449 = vmatpush.bf16.msra.mxu0 0
      %2450 = vmatpush.bf16.msra.mxu0 0
      %2451 = vmatpush.bf16.msra.mxu0 0
      %2452 = vmatpush.bf16.msra.mxu0 0
      %2453 = vmatpush.bf16.msra.mxu0 0
      %2454 = vmatpush.bf16.msra.mxu0 %v2391
      %2455 = vmatpush.bf16.msra.mxu0 %v2390
      %2456 = vmatmul.bf16.gmra.mxu0 %v2395
      %v2457 = vpop.f32.mrf.mxu0
      %v2458 = vadd.f32 0.0, %v2457
      %v2459 = vpop.f32.mrf.mxu0
      %v2460 = vadd.f32 0.0, %v2459
      %2461 = vmatmul.bf16.gmra.mxu0 %v2398
      %v2462 = vpop.f32.mrf.mxu0
      %v2463 = vadd.f32 0.0, %v2462
      %v2464 = vpop.f32.mrf.mxu0
      %v2465 = vadd.f32 0.0, %v2464
      %2466 = vmatmul.bf16.gmra.mxu0 %v2401
      %v2467 = vpop.f32.mrf.mxu0
      %v2468 = vadd.f32 0.0, %v2467
      %v2469 = vpop.f32.mrf.mxu0
      %v2470 = vadd.f32 0.0, %v2469
      %2471 = vmatmul.bf16.gmra.mxu0 %v2404
      %v2472 = vpop.f32.mrf.mxu0
      %v2473 = vadd.f32 0.0, %v2472
      %v2474 = vpop.f32.mrf.mxu0
      %v2475 = vadd.f32 0.0, %v2474
      %2476 = vmatmul.bf16.gmra.mxu0 %v2407
      %v2477 = vpop.f32.mrf.mxu0
      %v2478 = vadd.f32 0.0, %v2477
      %v2479 = vpop.f32.mrf.mxu0
      %v2480 = vadd.f32 0.0, %v2479
      %2481 = vmatmul.bf16.gmra.mxu0 %v2410
      %v2482 = vpop.f32.mrf.mxu0
      %v2483 = vadd.f32 0.0, %v2482
      %v2484 = vpop.f32.mrf.mxu0
      %v2485 = vadd.f32 0.0, %v2484
      %2486 = vmatmul.bf16.gmra.mxu0 %v2413
      %v2487 = vpop.f32.mrf.mxu0
      %v2488 = vadd.f32 0.0, %v2487
      %v2489 = vpop.f32.mrf.mxu0
      %v2490 = vadd.f32 0.0, %v2489
      %2491 = vmatmul.bf16.gmra.mxu0 %v2416
      %v2492 = vpop.f32.mrf.mxu0
      %v2493 = vadd.f32 0.0, %v2492
      %v2494 = vpop.f32.mrf.mxu0
      %v2495 = vadd.f32 0.0, %v2494
      %2496 = vmatmul.bf16.gmra.mxu0 %v2419
      %v2497 = vpop.f32.mrf.mxu0
      %v2498 = vadd.f32 0.0, %v2497
      %v2499 = vpop.f32.mrf.mxu0
      %v2500 = vadd.f32 0.0, %v2499
      %2501 = vmatmul.bf16.gmra.mxu0 %v2422
      %v2502 = vpop.f32.mrf.mxu0
      %v2503 = vadd.f32 0.0, %v2502
      %v2504 = vpop.f32.mrf.mxu0
      %v2505 = vadd.f32 0.0, %v2504
      %2506 = vmatmul.bf16.gmra.mxu0 %v2425
      %v2507 = vpop.f32.mrf.mxu0
      %v2508 = vadd.f32 0.0, %v2507
      %v2509 = vpop.f32.mrf.mxu0
      %v2510 = vadd.f32 0.0, %v2509
      %2511 = vmatmul.bf16.gmra.mxu0 %v2428
      %v2512 = vpop.f32.mrf.mxu0
      %v2513 = vadd.f32 0.0, %v2512
      %v2514 = vpop.f32.mrf.mxu0
      %v2515 = vadd.f32 0.0, %v2514
      %2516 = vmatmul.bf16.gmra.mxu0 %v2431
      %v2517 = vpop.f32.mrf.mxu0
      %v2518 = vadd.f32 0.0, %v2517
      %v2519 = vpop.f32.mrf.mxu0
      %v2520 = vadd.f32 0.0, %v2519
      %2521 = vmatmul.bf16.gmra.mxu0 %v2434
      %v2522 = vpop.f32.mrf.mxu0
      %v2523 = vadd.f32 0.0, %v2522
      %v2524 = vpop.f32.mrf.mxu0
      %v2525 = vadd.f32 0.0, %v2524
      %2526 = vmatmul.bf16.gmra.mxu0 %v2437
      %v2527 = vpop.f32.mrf.mxu0
      %v2528 = vadd.f32 0.0, %v2527
      %v2529 = vpop.f32.mrf.mxu0
      %v2530 = vadd.f32 0.0, %v2529
      %2531 = vmatmul.bf16.gmra.mxu0 %v2440
      %v2532 = vpop.f32.mrf.mxu0
      %v2533 = vadd.f32 0.0, %v2532
      %v2534 = vpop.f32.mrf.mxu0
      %v2535 = vadd.f32 0.0, %v2534
      %2536 = vmatmul.bf16.gmra.mxu0 %v2443
      %v2537 = vpop.f32.mrf.mxu0
      %v2538 = vadd.f32 0.0, %v2537
      %v2539 = vpop.f32.mrf.mxu0
      %v2540 = vadd.f32 0.0, %v2539
      %2541 = vmatmul.bf16.gmra.mxu0 %v2446
      %v2542 = vpop.f32.mrf.mxu0
      %v2543 = vadd.f32 0.0, %v2542
      %v2544 = vpop.f32.mrf.mxu0
      %v2545 = vadd.f32 0.0, %v2544
      %2546 = vdwg.mxu0
      %v2547 = vadd.f32 %v2323, %v2458
      %v2548 = vadd.f32 %v2324, %v2460
      %v2549 = vadd.f32 %v2325, %v2463
      %v2550 = vadd.f32 %v2326, %v2465
      %v2551 = vadd.f32 %v2327, %v2468
      %v2552 = vadd.f32 %v2328, %v2470
      %v2553 = vadd.f32 %v2329, %v2473
      %v2554 = vadd.f32 %v2330, %v2475
      %v2555 = vadd.f32 %v2331, %v2478
      %v2556 = vadd.f32 %v2332, %v2480
      %v2557 = vadd.f32 %v2333, %v2483
      %v2558 = vadd.f32 %v2334, %v2485
      %v2559 = vadd.f32 %v2335, %v2488
      %v2560 = vadd.f32 %v2336, %v2490
      %v2561 = vadd.f32 %v2337, %v2493
      %v2562 = vadd.f32 %v2338, %v2495
      %v2563 = vadd.f32 %v2339, %v2498
      %v2564 = vadd.f32 %v2340, %v2500
      %v2565 = vadd.f32 %v2341, %v2503
      %v2566 = vadd.f32 %v2342, %v2505
      %v2567 = vadd.f32 %v2343, %v2508
      %v2568 = vadd.f32 %v2344, %v2510
      %v2569 = vadd.f32 %v2345, %v2513
      %v2570 = vadd.f32 %v2346, %v2515
      %v2571 = vadd.f32 %v2347, %v2518
      %v2572 = vadd.f32 %v2348, %v2520
      %v2573 = vadd.f32 %v2349, %v2523
      %v2574 = vadd.f32 %v2350, %v2525
      %v2575 = vadd.f32 %v2351, %v2528
      %v2576 = vadd.f32 %v2352, %v2530
      %v2577 = vadd.f32 %v2353, %v2533
      %v2578 = vadd.f32 %v2354, %v2535
      %v2579 = vadd.f32 %v2355, %v2538
      %v2580 = vadd.f32 %v2356, %v2540
      %v2581 = vadd.f32 %v2357, %v2543
      %v2582 = vadd.f32 %v2358, %v2545
      %v2583 = vrot.slane %v2027, 1
      %v2584 = vrot.slane %v2028, 1
      %v2585 = vrot.slane %v2029, 1
      %v2586 = vrot.slane %v2030, 1
      %v2587 = vrot.slane %v2031, 1
      %v2588 = vrot.slane %v2032, 1
      %v2589 = vrot.slane %v2033, 1
      %v2590 = vrot.slane %v2034, 1
      %v2591 = vrot.slane %v2035, 1
      %v2592 = vrot.slane %v2036, 1
      %v2593 = vrot.slane %v2037, 1
      %v2594 = vrot.slane %v2038, 1
      %v2595 = vrot.slane %v2039, 1
      %v2596 = vrot.slane %v2040, 1
      %v2597 = vrot.slane %v2041, 1
      %v2598 = vrot.slane %v2042, 1
      %v2599 = vrot.slane %v2043, 1
      %v2600 = vrot.slane %v2044, 1
      %v2601 = vrot.slane %v2045, 1
      %v2602 = vrot.slane %v2046, 1
      %v2603 = vrot.slane %v2047, 1
      %v2604 = vrot.slane %v2048, 1
      %v2605 = vrot.slane %v2049, 1
      %v2606 = vrot.slane %v2050, 1
      %v2607 = vrot.slane %v2051, 1
      %v2608 = vrot.slane %v2052, 1
      %v2609 = vrot.slane %v2053, 1
      %v2610 = vrot.slane %v2054, 1
      %v2611 = vrot.slane %v2055, 1
      %v2612 = vrot.slane %v2056, 1
      %v2613 = vrot.slane %v2057, 1
      %v2614 = vrot.slane %v2058, 1
      %v2615 = vrot.slane %v2059, 1
      %v2616 = vrot.slane %v2060, 1
      %v2617 = vrot.slane %v2061, 1
      %v2618 = vrot.slane %v2062, 1
      %v2619 = vsel %vm914, %v2617, %v2618
      %v2620 = vsel %vm914, %v2616, %v2617
      %v2621 = vsel %vm914, %v2615, %v2616
      %v2622 = vsel %vm914, %v2614, %v2615
      %v2623 = vsel %vm914, %v2613, %v2614
      %v2624 = vsel %vm914, %v2612, %v2613
      %v2625 = vsel %vm914, %v2611, %v2612
      %v2626 = vsel %vm914, %v2610, %v2611
      %v2627 = vsel %vm914, %v2609, %v2610
      %v2628 = vsel %vm914, %v2608, %v2609
      %v2629 = vsel %vm914, %v2607, %v2608
      %v2630 = vsel %vm914, %v2606, %v2607
      %v2631 = vsel %vm914, %v2605, %v2606
      %v2632 = vsel %vm914, %v2604, %v2605
      %v2633 = vsel %vm914, %v2603, %v2604
      %v2634 = vsel %vm914, %v2602, %v2603
      %v2635 = vsel %vm914, %v2601, %v2602
      %v2636 = vsel %vm914, %v2600, %v2601
      %v2637 = vsel %vm914, %v2599, %v2600
      %v2638 = vsel %vm914, %v2598, %v2599
      %v2639 = vsel %vm914, %v2597, %v2598
      %v2640 = vsel %vm914, %v2596, %v2597
      %v2641 = vsel %vm914, %v2595, %v2596
      %v2642 = vsel %vm914, %v2594, %v2595
      %v2643 = vsel %vm914, %v2593, %v2594
      %v2644 = vsel %vm914, %v2592, %v2593
      %v2645 = vsel %vm914, %v2591, %v2592
      %v2646 = vsel %vm914, %v2590, %v2591
      %v2647 = vsel %vm914, %v2589, %v2590
      %v2648 = vsel %vm914, %v2588, %v2589
      %v2649 = vsel %vm914, %v2587, %v2588
      %v2650 = vsel %vm914, %v2586, %v2587
      %v2651 = vsel %vm914, %v2585, %v2586
      %v2652 = vsel %vm914, %v2584, %v2585
      %v2653 = vsel %vm914, %v2583, %v2584
      %v2654 = vsel %vm914, %v2618, %v2583
      %v2655 = vpack.c.bf16 %v2652, %v2653
      %v2656 = vpack.c.bf16 %v2650, %v2651
      %v2657 = vpack.c.bf16 %v2648, %v2649
      %v2658 = vpack.c.bf16 %v2646, %v2647
      %v2659 = vpack.c.bf16 %v2644, %v2645
      %v2660 = vpack.c.bf16 %v2642, %v2643
      %v2661 = vpack.c.bf16 %v2640, %v2641
      %v2662 = vpack.c.bf16 %v2638, %v2639
      %v2663 = vpack.c.bf16 %v2636, %v2637
      %v2664 = vpack.c.bf16 %v2634, %v2635
      %v2665 = vpack.c.bf16 %v2632, %v2633
      %v2666 = vpack.c.bf16 %v2630, %v2631
      %v2667 = vpack.c.bf16 %v2628, %v2629
      %v2668 = vpack.c.bf16 %v2626, %v2627
      %v2669 = vpack.c.bf16 %v2624, %v2625
      %v2670 = vpack.c.bf16 %v2622, %v2623
      %v2671 = vpack.c.bf16 %v2620, %v2621
      %v2672 = vpack.c.bf16 %v2654, %v2619
      %s2673 = scalar_lea.vmem %s3, 128
      %v2674 = vld [vmem:[%s2673] sm:$0xf]
      %v2675 = vld [vmem:[%s2673 + $0x4] sm:$0xf]
      %v2676 = vld [vmem:[%s2673 + $0x8] sm:$0xf]
      %v2677 = vld [vmem:[%s2673 + $0xc] sm:$0xf]
      %v2682 = vunpack.c.l.b16 %v2674
      %v2683 = vunpack.c.l.b16 %v2675
      %v2684 = vunpack.c.l.b16 %v2676
      %v2685 = vunpack.c.l.b16 %v2677
      %v2686 = vpack.c.b16 %v2683, %v2682
      %v2687 = vpack.c.b16 %v2685, %v2684
      %v2691 = vsel %vm559, %v2655, 0
      %v2694 = vsel %vm559, %v2656, 0
      %v2697 = vsel %vm559, %v2657, 0
      %v2700 = vsel %vm559, %v2658, 0
      %v2703 = vsel %vm559, %v2659, 0
      %v2706 = vsel %vm559, %v2660, 0
      %v2709 = vsel %vm559, %v2661, 0
      %v2712 = vsel %vm559, %v2662, 0
      %v2715 = vsel %vm559, %v2663, 0
      %v2718 = vsel %vm559, %v2664, 0
      %v2721 = vsel %vm559, %v2665, 0
      %v2724 = vsel %vm559, %v2666, 0
      %v2727 = vsel %vm559, %v2667, 0
      %v2730 = vsel %vm559, %v2668, 0
      %v2733 = vsel %vm559, %v2669, 0
      %v2736 = vsel %vm559, %v2670, 0
      %v2739 = vsel %vm559, %v2671, 0
      %v2742 = vsel %vm559, %v2672, 0
      %2744 = vmatpush.bf16.msra.mxu0 0
      %2745 = vmatpush.bf16.msra.mxu0 0
      %2746 = vmatpush.bf16.msra.mxu0 0
      %2747 = vmatpush.bf16.msra.mxu0 0
      %2748 = vmatpush.bf16.msra.mxu0 0
      %2749 = vmatpush.bf16.msra.mxu0 0
      %2750 = vmatpush.bf16.msra.mxu0 %v2687
      %2751 = vmatpush.bf16.msra.mxu0 %v2686
      %2752 = vmatmul.bf16.gmra.mxu0 %v2691
      %v2753 = vpop.f32.mrf.mxu0
      %v2754 = vadd.f32 0.0, %v2753
      %v2755 = vpop.f32.mrf.mxu0
      %v2756 = vadd.f32 0.0, %v2755
      %2757 = vmatmul.bf16.gmra.mxu0 %v2694
      %v2758 = vpop.f32.mrf.mxu0
      %v2759 = vadd.f32 0.0, %v2758
      %v2760 = vpop.f32.mrf.mxu0
      %v2761 = vadd.f32 0.0, %v2760
      %2762 = vmatmul.bf16.gmra.mxu0 %v2697
      %v2763 = vpop.f32.mrf.mxu0
      %v2764 = vadd.f32 0.0, %v2763
      %v2765 = vpop.f32.mrf.mxu0
      %v2766 = vadd.f32 0.0, %v2765
      %2767 = vmatmul.bf16.gmra.mxu0 %v2700
      %v2768 = vpop.f32.mrf.mxu0
      %v2769 = vadd.f32 0.0, %v2768
      %v2770 = vpop.f32.mrf.mxu0
      %v2771 = vadd.f32 0.0, %v2770
      %2772 = vmatmul.bf16.gmra.mxu0 %v2703
      %v2773 = vpop.f32.mrf.mxu0
      %v2774 = vadd.f32 0.0, %v2773
      %v2775 = vpop.f32.mrf.mxu0
      %v2776 = vadd.f32 0.0, %v2775
      %2777 = vmatmul.bf16.gmra.mxu0 %v2706
      %v2778 = vpop.f32.mrf.mxu0
      %v2779 = vadd.f32 0.0, %v2778
      %v2780 = vpop.f32.mrf.mxu0
      %v2781 = vadd.f32 0.0, %v2780
      %2782 = vmatmul.bf16.gmra.mxu0 %v2709
      %v2783 = vpop.f32.mrf.mxu0
      %v2784 = vadd.f32 0.0, %v2783
      %v2785 = vpop.f32.mrf.mxu0
      %v2786 = vadd.f32 0.0, %v2785
      %2787 = vmatmul.bf16.gmra.mxu0 %v2712
      %v2788 = vpop.f32.mrf.mxu0
      %v2789 = vadd.f32 0.0, %v2788
      %v2790 = vpop.f32.mrf.mxu0
      %v2791 = vadd.f32 0.0, %v2790
      %2792 = vmatmul.bf16.gmra.mxu0 %v2715
      %v2793 = vpop.f32.mrf.mxu0
      %v2794 = vadd.f32 0.0, %v2793
      %v2795 = vpop.f32.mrf.mxu0
      %v2796 = vadd.f32 0.0, %v2795
      %2797 = vmatmul.bf16.gmra.mxu0 %v2718
      %v2798 = vpop.f32.mrf.mxu0
      %v2799 = vadd.f32 0.0, %v2798
      %v2800 = vpop.f32.mrf.mxu0
      %v2801 = vadd.f32 0.0, %v2800
      %2802 = vmatmul.bf16.gmra.mxu0 %v2721
      %v2803 = vpop.f32.mrf.mxu0
      %v2804 = vadd.f32 0.0, %v2803
      %v2805 = vpop.f32.mrf.mxu0
      %v2806 = vadd.f32 0.0, %v2805
      %2807 = vmatmul.bf16.gmra.mxu0 %v2724
      %v2808 = vpop.f32.mrf.mxu0
      %v2809 = vadd.f32 0.0, %v2808
      %v2810 = vpop.f32.mrf.mxu0
      %v2811 = vadd.f32 0.0, %v2810
      %2812 = vmatmul.bf16.gmra.mxu0 %v2727
      %v2813 = vpop.f32.mrf.mxu0
      %v2814 = vadd.f32 0.0, %v2813
      %v2815 = vpop.f32.mrf.mxu0
      %v2816 = vadd.f32 0.0, %v2815
      %2817 = vmatmul.bf16.gmra.mxu0 %v2730
      %v2818 = vpop.f32.mrf.mxu0
      %v2819 = vadd.f32 0.0, %v2818
      %v2820 = vpop.f32.mrf.mxu0
      %v2821 = vadd.f32 0.0, %v2820
      %2822 = vmatmul.bf16.gmra.mxu0 %v2733
      %v2823 = vpop.f32.mrf.mxu0
      %v2824 = vadd.f32 0.0, %v2823
      %v2825 = vpop.f32.mrf.mxu0
      %v2826 = vadd.f32 0.0, %v2825
      %2827 = vmatmul.bf16.gmra.mxu0 %v2736
      %v2828 = vpop.f32.mrf.mxu0
      %v2829 = vadd.f32 0.0, %v2828
      %v2830 = vpop.f32.mrf.mxu0
      %v2831 = vadd.f32 0.0, %v2830
      %2832 = vmatmul.bf16.gmra.mxu0 %v2739
      %v2833 = vpop.f32.mrf.mxu0
      %v2834 = vadd.f32 0.0, %v2833
      %v2835 = vpop.f32.mrf.mxu0
      %v2836 = vadd.f32 0.0, %v2835
      %2837 = vmatmul.bf16.gmra.mxu0 %v2742
      %v2838 = vpop.f32.mrf.mxu0
      %v2839 = vadd.f32 0.0, %v2838
      %v2840 = vpop.f32.mrf.mxu0
      %v2841 = vadd.f32 0.0, %v2840
      %2842 = vdwg.mxu0
      %v2843 = vadd.f32 %v2547, %v2754
      %v2844 = vadd.f32 %v2548, %v2756
      %v2845 = vadd.f32 %v2549, %v2759
      %v2846 = vadd.f32 %v2550, %v2761
      %v2847 = vadd.f32 %v2551, %v2764
      %v2848 = vadd.f32 %v2552, %v2766
      %v2849 = vadd.f32 %v2553, %v2769
      %v2850 = vadd.f32 %v2554, %v2771
      %v2851 = vadd.f32 %v2555, %v2774
      %v2852 = vadd.f32 %v2556, %v2776
      %v2853 = vadd.f32 %v2557, %v2779
      %v2854 = vadd.f32 %v2558, %v2781
      %v2855 = vadd.f32 %v2559, %v2784
      %v2856 = vadd.f32 %v2560, %v2786
      %v2857 = vadd.f32 %v2561, %v2789
      %v2858 = vadd.f32 %v2562, %v2791
      %v2859 = vadd.f32 %v2563, %v2794
      %v2860 = vadd.f32 %v2564, %v2796
      %v2861 = vadd.f32 %v2565, %v2799
      %v2862 = vadd.f32 %v2566, %v2801
      %v2863 = vadd.f32 %v2567, %v2804
      %v2864 = vadd.f32 %v2568, %v2806
      %v2865 = vadd.f32 %v2569, %v2809
      %v2866 = vadd.f32 %v2570, %v2811
      %v2867 = vadd.f32 %v2571, %v2814
      %v2868 = vadd.f32 %v2572, %v2816
      %v2869 = vadd.f32 %v2573, %v2819
      %v2870 = vadd.f32 %v2574, %v2821
      %v2871 = vadd.f32 %v2575, %v2824
      %v2872 = vadd.f32 %v2576, %v2826
      %v2873 = vadd.f32 %v2577, %v2829
      %v2874 = vadd.f32 %v2578, %v2831
      %v2875 = vadd.f32 %v2579, %v2834
      %v2876 = vadd.f32 %v2580, %v2836
      %v2877 = vadd.f32 %v2581, %v2839
      %v2878 = vadd.f32 %v2582, %v2841
      %v2879 = vld [vmem:[%s4] sm:$0x1]
      %v2881 = vperm.slane %v2879, 0
      %v2883 = vadd.f32 %v2843, %v2881
      %v2884 = vadd.f32 %v2844, %v2881
      %v2885 = vadd.f32 %v2845, %v2881
      %v2886 = vadd.f32 %v2846, %v2881
      %v2887 = vadd.f32 %v2847, %v2881
      %v2888 = vadd.f32 %v2848, %v2881
      %v2889 = vadd.f32 %v2849, %v2881
      %v2890 = vadd.f32 %v2850, %v2881
      %v2891 = vadd.f32 %v2851, %v2881
      %v2892 = vadd.f32 %v2852, %v2881
      %v2893 = vadd.f32 %v2853, %v2881
      %v2894 = vadd.f32 %v2854, %v2881
      %v2895 = vadd.f32 %v2855, %v2881
      %v2896 = vadd.f32 %v2856, %v2881
      %v2897 = vadd.f32 %v2857, %v2881
      %v2898 = vadd.f32 %v2858, %v2881
      %v2899 = vadd.f32 %v2859, %v2881
      %v2900 = vadd.f32 %v2860, %v2881
      %v2901 = vadd.f32 %v2861, %v2881
      %v2902 = vadd.f32 %v2862, %v2881
      %v2903 = vadd.f32 %v2863, %v2881
      %v2904 = vadd.f32 %v2864, %v2881
      %v2905 = vadd.f32 %v2865, %v2881
      %v2906 = vadd.f32 %v2866, %v2881
      %v2907 = vadd.f32 %v2867, %v2881
      %v2908 = vadd.f32 %v2868, %v2881
      %v2909 = vadd.f32 %v2869, %v2881
      %v2910 = vadd.f32 %v2870, %v2881
      %v2911 = vadd.f32 %v2871, %v2881
      %v2912 = vadd.f32 %v2872, %v2881
      %v2913 = vadd.f32 %v2873, %v2881
      %v2914 = vadd.f32 %v2874, %v2881
      %v2915 = vadd.f32 %v2875, %v2881
      %v2916 = vadd.f32 %v2876, %v2881
      %v2917 = vadd.f32 %v2877, %v2881
      %v2918 = vadd.f32 %v2878, %v2881
      %v2919 = vmax.f32 %v2883, 0.0
      %v2920 = vmax.f32 %v2884, 0.0
      %v2921 = vmax.f32 %v2885, 0.0
      %v2922 = vmax.f32 %v2886, 0.0
      %v2923 = vmax.f32 %v2887, 0.0
      %v2924 = vmax.f32 %v2888, 0.0
      %v2925 = vmax.f32 %v2889, 0.0
      %v2926 = vmax.f32 %v2890, 0.0
      %v2927 = vmax.f32 %v2891, 0.0
      %v2928 = vmax.f32 %v2892, 0.0
      %v2929 = vmax.f32 %v2893, 0.0
      %v2930 = vmax.f32 %v2894, 0.0
      %v2931 = vmax.f32 %v2895, 0.0
      %v2932 = vmax.f32 %v2896, 0.0
      %v2933 = vmax.f32 %v2897, 0.0
      %v2934 = vmax.f32 %v2898, 0.0
      %v2935 = vmax.f32 %v2899, 0.0
      %v2936 = vmax.f32 %v2900, 0.0
      %v2937 = vmax.f32 %v2901, 0.0
      %v2938 = vmax.f32 %v2902, 0.0
      %v2939 = vmax.f32 %v2903, 0.0
      %v2940 = vmax.f32 %v2904, 0.0
      %v2941 = vmax.f32 %v2905, 0.0
      %v2942 = vmax.f32 %v2906, 0.0
      %v2943 = vmax.f32 %v2907, 0.0
      %v2944 = vmax.f32 %v2908, 0.0
      %v2945 = vmax.f32 %v2909, 0.0
      %v2946 = vmax.f32 %v2910, 0.0
      %v2947 = vmax.f32 %v2911, 0.0
      %v2948 = vmax.f32 %v2912, 0.0
      %v2949 = vmax.f32 %v2913, 0.0
      %v2950 = vmax.f32 %v2914, 0.0
      %v2951 = vmax.f32 %v2915, 0.0
      %v2952 = vmax.f32 %v2916, 0.0
      %v2953 = vmax.f32 %v2917, 0.0
      %v2954 = vmax.f32 %v2918, 0.0
      %v2955 = vpack.c.bf16 %v2920, %v2919
      %v2956 = vpack.c.bf16 %v2922, %v2921
      %v2957 = vpack.c.bf16 %v2924, %v2923
      %v2958 = vpack.c.bf16 %v2926, %v2925
      %v2959 = vpack.c.bf16 %v2928, %v2927
      %v2960 = vpack.c.bf16 %v2930, %v2929
      %v2961 = vpack.c.bf16 %v2932, %v2931
      %v2962 = vpack.c.bf16 %v2934, %v2933
      %v2963 = vpack.c.bf16 %v2936, %v2935
      %v2964 = vpack.c.bf16 %v2938, %v2937
      %v2965 = vpack.c.bf16 %v2940, %v2939
      %v2966 = vpack.c.bf16 %v2942, %v2941
      %v2967 = vpack.c.bf16 %v2944, %v2943
      %v2968 = vpack.c.bf16 %v2946, %v2945
      %v2969 = vpack.c.bf16 %v2948, %v2947
      %v2970 = vpack.c.bf16 %v2950, %v2949
      %v2971 = vpack.c.bf16 %v2952, %v2951
      %v2972 = vpack.c.bf16 %v2954, %v2953
      %v2973 = vld [vmem:[%s5] sm:$0xf]
      %v2974 = vld [vmem:[%s5 + $0x4] sm:$0xf]
      %v2975 = vld [vmem:[%s5 + $0x8] sm:$0xf]
      %v2976 = vld [vmem:[%s5 + $0xc] sm:$0xf]
      %v2977 = vld [vmem:[%s5 + $0x10] sm:$0xf]
      %v2978 = vld [vmem:[%s5 + $0x14] sm:$0xf]
      %v2979 = vld [vmem:[%s5 + $0x18] sm:$0xf]
      %v2980 = vld [vmem:[%s5 + $0x1c] sm:$0xf]
      %v2981 = vld [vmem:[%s6] sm:$0x1]
      %v2983 = vperm.slane %v2981, 0
      %v2993 = vunpack.c.l.b16 %v2973
      %v2994 = vunpack.c.l.b16 %v2974
      %v2995 = vunpack.c.l.b16 %v2975
      %v2996 = vunpack.c.l.b16 %v2976
      %v2997 = vunpack.c.l.b16 %v2977
      %v2998 = vunpack.c.l.b16 %v2978
      %v2999 = vunpack.c.l.b16 %v2979
      %v3000 = vunpack.c.l.b16 %v2980
      %v3001 = vpack.c.b16 %v2994, %v2993
      %v3002 = vpack.c.b16 %v2996, %v2995
      %v3003 = vpack.c.b16 %v2998, %v2997
      %v3004 = vpack.c.b16 %v3000, %v2999
      %vm3009 = vcmask 523264
      %v3011 = vsel %vm3009, %v2955, 0
      %v3014 = vsel %vm3009, %v2956, 0
      %v3017 = vsel %vm3009, %v2957, 0
      %v3020 = vsel %vm3009, %v2958, 0
      %v3023 = vsel %vm3009, %v2959, 0
      %v3026 = vsel %vm3009, %v2960, 0
      %v3029 = vsel %vm3009, %v2961, 0
      %v3032 = vsel %vm3009, %v2962, 0
      %v3035 = vsel %vm3009, %v2963, 0
      %v3038 = vsel %vm3009, %v2964, 0
      %v3041 = vsel %vm3009, %v2965, 0
      %v3044 = vsel %vm3009, %v2966, 0
      %v3047 = vsel %vm3009, %v2967, 0
      %v3050 = vsel %vm3009, %v2968, 0
      %v3053 = vsel %vm3009, %v2969, 0
      %v3056 = vsel %vm3009, %v2970, 0
      %v3059 = vsel %vm3009, %v2971, 0
      %v3062 = vsel %vm3009, %v2972, 0
      %3064 = vmatpush.bf16.msra.mxu0 0
      %3065 = vmatpush.bf16.msra.mxu0 0
      %3066 = vmatpush.bf16.msra.mxu0 0
      %3067 = vmatpush.bf16.msra.mxu0 0
      %3068 = vmatpush.bf16.msra.mxu0 %v3004
      %3069 = vmatpush.bf16.msra.mxu0 %v3003
      %3070 = vmatpush.bf16.msra.mxu0 %v3002
      %3071 = vmatpush.bf16.msra.mxu0 %v3001
      %3072 = vmatmul.bf16.gmra.mxu0 %v3011
      %v3073 = vpop.f32.mrf.mxu0
      %v3074 = vadd.f32 %v2983, %v3073
      %v3075 = vpop.f32.mrf.mxu0
      %v3076 = vadd.f32 %v2983, %v3075
      %3077 = vmatmul.bf16.gmra.mxu0 %v3014
      %v3078 = vpop.f32.mrf.mxu0
      %v3079 = vadd.f32 %v2983, %v3078
      %v3080 = vpop.f32.mrf.mxu0
      %v3081 = vadd.f32 %v2983, %v3080
      %3082 = vmatmul.bf16.gmra.mxu0 %v3017
      %v3083 = vpop.f32.mrf.mxu0
      %v3084 = vadd.f32 %v2983, %v3083
      %v3085 = vpop.f32.mrf.mxu0
      %v3086 = vadd.f32 %v2983, %v3085
      %3087 = vmatmul.bf16.gmra.mxu0 %v3020
      %v3088 = vpop.f32.mrf.mxu0
      %v3089 = vadd.f32 %v2983, %v3088
      %v3090 = vpop.f32.mrf.mxu0
      %v3091 = vadd.f32 %v2983, %v3090
      %3092 = vmatmul.bf16.gmra.mxu0 %v3023
      %v3093 = vpop.f32.mrf.mxu0
      %v3094 = vadd.f32 %v2983, %v3093
      %v3095 = vpop.f32.mrf.mxu0
      %v3096 = vadd.f32 %v2983, %v3095
      %3097 = vmatmul.bf16.gmra.mxu0 %v3026
      %v3098 = vpop.f32.mrf.mxu0
      %v3099 = vadd.f32 %v2983, %v3098
      %v3100 = vpop.f32.mrf.mxu0
      %v3101 = vadd.f32 %v2983, %v3100
      %3102 = vmatmul.bf16.gmra.mxu0 %v3029
      %v3103 = vpop.f32.mrf.mxu0
      %v3104 = vadd.f32 %v2983, %v3103
      %v3105 = vpop.f32.mrf.mxu0
      %v3106 = vadd.f32 %v2983, %v3105
      %3107 = vmatmul.bf16.gmra.mxu0 %v3032
      %v3108 = vpop.f32.mrf.mxu0
      %v3109 = vadd.f32 %v2983, %v3108
      %v3110 = vpop.f32.mrf.mxu0
      %v3111 = vadd.f32 %v2983, %v3110
      %3112 = vmatmul.bf16.gmra.mxu0 %v3035
      %v3113 = vpop.f32.mrf.mxu0
      %v3114 = vadd.f32 %v2983, %v3113
      %v3115 = vpop.f32.mrf.mxu0
      %v3116 = vadd.f32 %v2983, %v3115
      %3117 = vmatmul.bf16.gmra.mxu0 %v3038
      %v3118 = vpop.f32.mrf.mxu0
      %v3119 = vadd.f32 %v2983, %v3118
      %v3120 = vpop.f32.mrf.mxu0
      %v3121 = vadd.f32 %v2983, %v3120
      %3122 = vmatmul.bf16.gmra.mxu0 %v3041
      %v3123 = vpop.f32.mrf.mxu0
      %v3124 = vadd.f32 %v2983, %v3123
      %v3125 = vpop.f32.mrf.mxu0
      %v3126 = vadd.f32 %v2983, %v3125
      %3127 = vmatmul.bf16.gmra.mxu0 %v3044
      %v3128 = vpop.f32.mrf.mxu0
      %v3129 = vadd.f32 %v2983, %v3128
      %v3130 = vpop.f32.mrf.mxu0
      %v3131 = vadd.f32 %v2983, %v3130
      %3132 = vmatmul.bf16.gmra.mxu0 %v3047
      %v3133 = vpop.f32.mrf.mxu0
      %v3134 = vadd.f32 %v2983, %v3133
      %v3135 = vpop.f32.mrf.mxu0
      %v3136 = vadd.f32 %v2983, %v3135
      %3137 = vmatmul.bf16.gmra.mxu0 %v3050
      %v3138 = vpop.f32.mrf.mxu0
      %v3139 = vadd.f32 %v2983, %v3138
      %v3140 = vpop.f32.mrf.mxu0
      %v3141 = vadd.f32 %v2983, %v3140
      %3142 = vmatmul.bf16.gmra.mxu0 %v3053
      %v3143 = vpop.f32.mrf.mxu0
      %v3144 = vadd.f32 %v2983, %v3143
      %v3145 = vpop.f32.mrf.mxu0
      %v3146 = vadd.f32 %v2983, %v3145
      %3147 = vmatmul.bf16.gmra.mxu0 %v3056
      %v3148 = vpop.f32.mrf.mxu0
      %v3149 = vadd.f32 %v2983, %v3148
      %v3150 = vpop.f32.mrf.mxu0
      %v3151 = vadd.f32 %v2983, %v3150
      %3152 = vmatmul.bf16.gmra.mxu0 %v3059
      %v3153 = vpop.f32.mrf.mxu0
      %v3154 = vadd.f32 %v2983, %v3153
      %v3155 = vpop.f32.mrf.mxu0
      %v3156 = vadd.f32 %v2983, %v3155
      %3157 = vmatmul.bf16.gmra.mxu0 %v3062
      %v3158 = vpop.f32.mrf.mxu0
      %v3159 = vadd.f32 %v2983, %v3158
      %v3160 = vpop.f32.mrf.mxu0
      %v3161 = vadd.f32 %v2983, %v3160
      %3162 = vdwg.mxu0
      %v3163 = vsub.f32 0.0, %v3074
      %v3164 = vsub.f32 0.0, %v3076
      %v3165 = vsub.f32 0.0, %v3079
      %v3166 = vsub.f32 0.0, %v3081
      %v3167 = vsub.f32 0.0, %v3084
      %v3168 = vsub.f32 0.0, %v3086
      %v3169 = vsub.f32 0.0, %v3089
      %v3170 = vsub.f32 0.0, %v3091
      %v3171 = vsub.f32 0.0, %v3094
      %v3172 = vsub.f32 0.0, %v3096
      %v3173 = vsub.f32 0.0, %v3099
      %v3174 = vsub.f32 0.0, %v3101
      %v3175 = vsub.f32 0.0, %v3104
      %v3176 = vsub.f32 0.0, %v3106
      %v3177 = vsub.f32 0.0, %v3109
      %v3178 = vsub.f32 0.0, %v3111
      %v3179 = vsub.f32 0.0, %v3114
      %v3180 = vsub.f32 0.0, %v3116
      %v3181 = vsub.f32 0.0, %v3119
      %v3182 = vsub.f32 0.0, %v3121
      %v3183 = vsub.f32 0.0, %v3124
      %v3184 = vsub.f32 0.0, %v3126
      %v3185 = vsub.f32 0.0, %v3129
      %v3186 = vsub.f32 0.0, %v3131
      %v3187 = vsub.f32 0.0, %v3134
      %v3188 = vsub.f32 0.0, %v3136
      %v3189 = vsub.f32 0.0, %v3139
      %v3190 = vsub.f32 0.0, %v3141
      %v3191 = vsub.f32 0.0, %v3144
      %v3192 = vsub.f32 0.0, %v3146
      %v3193 = vsub.f32 0.0, %v3149
      %v3194 = vsub.f32 0.0, %v3151
      %v3195 = vsub.f32 0.0, %v3154
      %v3196 = vsub.f32 0.0, %v3156
      %v3197 = vsub.f32 0.0, %v3159
      %v3198 = vsub.f32 0.0, %v3161
      %v3199 = vmul.f32 %v3163, 1.442695
      %v3200 = vpow.pop %v3199
      %v3201 = vmul.f32 %v3164, 1.442695
      %v3202 = vpow.pop %v3201
      %v3203 = vmul.f32 %v3165, 1.442695
      %v3204 = vpow.pop %v3203
      %v3205 = vmul.f32 %v3166, 1.442695
      %v3206 = vpow.pop %v3205
      %v3207 = vmul.f32 %v3167, 1.442695
      %v3208 = vpow.pop %v3207
      %v3209 = vmul.f32 %v3168, 1.442695
      %v3210 = vpow.pop %v3209
      %v3211 = vmul.f32 %v3169, 1.442695
      %v3212 = vpow.pop %v3211
      %v3213 = vmul.f32 %v3170, 1.442695
      %v3214 = vpow.pop %v3213
      %v3215 = vmul.f32 %v3171, 1.442695
      %v3216 = vpow.pop %v3215
      %v3217 = vmul.f32 %v3172, 1.442695
      %v3218 = vpow.pop %v3217
      %v3219 = vmul.f32 %v3173, 1.442695
      %v3220 = vpow.pop %v3219
      %v3221 = vmul.f32 %v3174, 1.442695
      %v3222 = vpow.pop %v3221
      %v3223 = vmul.f32 %v3175, 1.442695
      %v3224 = vpow.pop %v3223
      %v3225 = vmul.f32 %v3176, 1.442695
      %v3226 = vpow.pop %v3225
      %v3227 = vmul.f32 %v3177, 1.442695
      %v3228 = vpow.pop %v3227
      %v3229 = vmul.f32 %v3178, 1.442695
      %v3230 = vpow.pop %v3229
      %v3231 = vmul.f32 %v3179, 1.442695
      %v3232 = vpow.pop %v3231
      %v3233 = vmul.f32 %v3180, 1.442695
      %v3234 = vpow.pop %v3233
      %v3235 = vmul.f32 %v3181, 1.442695
      %v3236 = vpow.pop %v3235
      %v3237 = vmul.f32 %v3182, 1.442695
      %v3238 = vpow.pop %v3237
      %v3239 = vmul.f32 %v3183, 1.442695
      %v3240 = vpow.pop %v3239
      %v3241 = vmul.f32 %v3184, 1.442695
      %v3242 = vpow.pop %v3241
      %v3243 = vmul.f32 %v3185, 1.442695
      %v3244 = vpow.pop %v3243
      %v3245 = vmul.f32 %v3186, 1.442695
      %v3246 = vpow.pop %v3245
      %v3247 = vmul.f32 %v3187, 1.442695
      %v3248 = vpow.pop %v3247
      %v3249 = vmul.f32 %v3188, 1.442695
      %v3250 = vpow.pop %v3249
      %v3251 = vmul.f32 %v3189, 1.442695
      %v3252 = vpow.pop %v3251
      %v3253 = vmul.f32 %v3190, 1.442695
      %v3254 = vpow.pop %v3253
      %v3255 = vmul.f32 %v3191, 1.442695
      %v3256 = vpow.pop %v3255
      %v3257 = vmul.f32 %v3192, 1.442695
      %v3258 = vpow.pop %v3257
      %v3259 = vmul.f32 %v3193, 1.442695
      %v3260 = vpow.pop %v3259
      %v3261 = vmul.f32 %v3194, 1.442695
      %v3262 = vpow.pop %v3261
      %v3263 = vmul.f32 %v3195, 1.442695
      %v3264 = vpow.pop %v3263
      %v3265 = vmul.f32 %v3196, 1.442695
      %v3266 = vpow.pop %v3265
      %v3267 = vmul.f32 %v3197, 1.442695
      %v3268 = vpow.pop %v3267
      %v3269 = vmul.f32 %v3198, 1.442695
      %v3270 = vpow.pop %v3269
      %v3271 = vadd.f32 %v3200, 1.0
      %v3272 = vadd.f32 %v3202, 1.0
      %v3273 = vadd.f32 %v3204, 1.0
      %v3274 = vadd.f32 %v3206, 1.0
      %v3275 = vadd.f32 %v3208, 1.0
      %v3276 = vadd.f32 %v3210, 1.0
      %v3277 = vadd.f32 %v3212, 1.0
      %v3278 = vadd.f32 %v3214, 1.0
      %v3279 = vadd.f32 %v3216, 1.0
      %v3280 = vadd.f32 %v3218, 1.0
      %v3281 = vadd.f32 %v3220, 1.0
      %v3282 = vadd.f32 %v3222, 1.0
      %v3283 = vadd.f32 %v3224, 1.0
      %v3284 = vadd.f32 %v3226, 1.0
      %v3285 = vadd.f32 %v3228, 1.0
      %v3286 = vadd.f32 %v3230, 1.0
      %v3287 = vadd.f32 %v3232, 1.0
      %v3288 = vadd.f32 %v3234, 1.0
      %v3289 = vadd.f32 %v3236, 1.0
      %v3290 = vadd.f32 %v3238, 1.0
      %v3291 = vadd.f32 %v3240, 1.0
      %v3292 = vadd.f32 %v3242, 1.0
      %v3293 = vadd.f32 %v3244, 1.0
      %v3294 = vadd.f32 %v3246, 1.0
      %v3295 = vadd.f32 %v3248, 1.0
      %v3296 = vadd.f32 %v3250, 1.0
      %v3297 = vadd.f32 %v3252, 1.0
      %v3298 = vadd.f32 %v3254, 1.0
      %v3299 = vadd.f32 %v3256, 1.0
      %v3300 = vadd.f32 %v3258, 1.0
      %v3301 = vadd.f32 %v3260, 1.0
      %v3302 = vadd.f32 %v3262, 1.0
      %v3303 = vadd.f32 %v3264, 1.0
      %v3304 = vadd.f32 %v3266, 1.0
      %v3305 = vadd.f32 %v3268, 1.0
      %v3306 = vadd.f32 %v3270, 1.0
      %v3307 = vrcp.pop %v3271
      %v3308 = vrcp.pop %v3272
      %v3309 = vrcp.pop %v3273
      %v3310 = vrcp.pop %v3274
      %v3311 = vrcp.pop %v3275
      %v3312 = vrcp.pop %v3276
      %v3313 = vrcp.pop %v3277
      %v3314 = vrcp.pop %v3278
      %v3315 = vrcp.pop %v3279
      %v3316 = vrcp.pop %v3280
      %v3317 = vrcp.pop %v3281
      %v3318 = vrcp.pop %v3282
      %v3319 = vrcp.pop %v3283
      %v3320 = vrcp.pop %v3284
      %v3321 = vrcp.pop %v3285
      %v3322 = vrcp.pop %v3286
      %v3323 = vrcp.pop %v3287
      %v3324 = vrcp.pop %v3288
      %v3325 = vrcp.pop %v3289
      %v3326 = vrcp.pop %v3290
      %v3327 = vrcp.pop %v3291
      %v3328 = vrcp.pop %v3292
      %v3329 = vrcp.pop %v3293
      %v3330 = vrcp.pop %v3294
      %v3331 = vrcp.pop %v3295
      %v3332 = vrcp.pop %v3296
      %v3333 = vrcp.pop %v3297
      %v3334 = vrcp.pop %v3298
      %v3335 = vrcp.pop %v3299
      %v3336 = vrcp.pop %v3300
      %v3337 = vrcp.pop %v3301
      %v3338 = vrcp.pop %v3302
      %v3339 = vrcp.pop %v3303
      %v3340 = vrcp.pop %v3304
      %v3341 = vrcp.pop %v3305
      %v3342 = vrcp.pop %v3306
      %v3343 = vmax.f32 %v3307, 0.0
      %v3344 = vmax.f32 %v3308, 0.0
      %v3345 = vmax.f32 %v3309, 0.0
      %v3346 = vmax.f32 %v3310, 0.0
      %v3347 = vmax.f32 %v3311, 0.0
      %v3348 = vmax.f32 %v3312, 0.0
      %v3349 = vmax.f32 %v3313, 0.0
      %v3350 = vmax.f32 %v3314, 0.0
      %v3351 = vmax.f32 %v3315, 0.0
      %v3352 = vmax.f32 %v3316, 0.0
      %v3353 = vmax.f32 %v3317, 0.0
      %v3354 = vmax.f32 %v3318, 0.0
      %v3355 = vmax.f32 %v3319, 0.0
      %v3356 = vmax.f32 %v3320, 0.0
      %v3357 = vmax.f32 %v3321, 0.0
      %v3358 = vmax.f32 %v3322, 0.0
      %v3359 = vmax.f32 %v3323, 0.0
      %v3360 = vmax.f32 %v3324, 0.0
      %v3361 = vmax.f32 %v3325, 0.0
      %v3362 = vmax.f32 %v3326, 0.0
      %v3363 = vmax.f32 %v3327, 0.0
      %v3364 = vmax.f32 %v3328, 0.0
      %v3365 = vmax.f32 %v3329, 0.0
      %v3366 = vmax.f32 %v3330, 0.0
      %v3367 = vmax.f32 %v3331, 0.0
      %v3368 = vmax.f32 %v3332, 0.0
      %v3369 = vmax.f32 %v3333, 0.0
      %v3370 = vmax.f32 %v3334, 0.0
      %v3371 = vmax.f32 %v3335, 0.0
      %v3372 = vmax.f32 %v3336, 0.0
      %v3373 = vmax.f32 %v3337, 0.0
      %v3374 = vmax.f32 %v3338, 0.0
      %v3375 = vmax.f32 %v3339, 0.0
      %v3376 = vmax.f32 %v3340, 0.0
      %v3377 = vmax.f32 %v3341, 0.0
      %v3378 = vmax.f32 %v3342, 0.0
      %v3379 = vmin.f32 %v3343, 1.0
      %v3380 = vmin.f32 %v3344, 1.0
      %v3381 = vmin.f32 %v3345, 1.0
      %v3382 = vmin.f32 %v3346, 1.0
      %v3383 = vmin.f32 %v3347, 1.0
      %v3384 = vmin.f32 %v3348, 1.0
      %v3385 = vmin.f32 %v3349, 1.0
      %v3386 = vmin.f32 %v3350, 1.0
      %v3387 = vmin.f32 %v3351, 1.0
      %v3388 = vmin.f32 %v3352, 1.0
      %v3389 = vmin.f32 %v3353, 1.0
      %v3390 = vmin.f32 %v3354, 1.0
      %v3391 = vmin.f32 %v3355, 1.0
      %v3392 = vmin.f32 %v3356, 1.0
      %v3393 = vmin.f32 %v3357, 1.0
      %v3394 = vmin.f32 %v3358, 1.0
      %v3395 = vmin.f32 %v3359, 1.0
      %v3396 = vmin.f32 %v3360, 1.0
      %v3397 = vmin.f32 %v3361, 1.0
      %v3398 = vmin.f32 %v3362, 1.0
      %v3399 = vmin.f32 %v3363, 1.0
      %v3400 = vmin.f32 %v3364, 1.0
      %v3401 = vmin.f32 %v3365, 1.0
      %v3402 = vmin.f32 %v3366, 1.0
      %v3403 = vmin.f32 %v3367, 1.0
      %v3404 = vmin.f32 %v3368, 1.0
      %v3405 = vmin.f32 %v3369, 1.0
      %v3406 = vmin.f32 %v3370, 1.0
      %v3407 = vmin.f32 %v3371, 1.0
      %v3408 = vmin.f32 %v3372, 1.0
      %v3409 = vmin.f32 %v3373, 1.0
      %v3410 = vmin.f32 %v3374, 1.0
      %v3411 = vmin.f32 %v3375, 1.0
      %v3412 = vmin.f32 %v3376, 1.0
      %v3413 = vmin.f32 %v3377, 1.0
      %v3414 = vmin.f32 %v3378, 1.0
      %v3415 = vlaneseq
      %v3416 = vand.u32 %v3415, 127
      %vm3417 = vcmp.eq.s32.totalorder %v3416, 0
      %v3418 = vsel %vm3417, %v3379, %v3074
      %v3419 = vsel %vm3417, %v3380, %v3076
      %v3420 = vsel %vm3417, %v3381, %v3079
      %v3421 = vsel %vm3417, %v3382, %v3081
      %v3422 = vsel %vm3417, %v3383, %v3084
      %v3423 = vsel %vm3417, %v3384, %v3086
      %v3424 = vsel %vm3417, %v3385, %v3089
      %v3425 = vsel %vm3417, %v3386, %v3091
      %v3426 = vsel %vm3417, %v3387, %v3094
      %v3427 = vsel %vm3417, %v3388, %v3096
      %v3428 = vsel %vm3417, %v3389, %v3099
      %v3429 = vsel %vm3417, %v3390, %v3101
      %v3430 = vsel %vm3417, %v3391, %v3104
      %v3431 = vsel %vm3417, %v3392, %v3106
      %v3432 = vsel %vm3417, %v3393, %v3109
      %v3433 = vsel %vm3417, %v3394, %v3111
      %v3434 = vsel %vm3417, %v3395, %v3114
      %v3435 = vsel %vm3417, %v3396, %v3116
      %v3436 = vsel %vm3417, %v3397, %v3119
      %v3437 = vsel %vm3417, %v3398, %v3121
      %v3438 = vsel %vm3417, %v3399, %v3124
      %v3439 = vsel %vm3417, %v3400, %v3126
      %v3440 = vsel %vm3417, %v3401, %v3129
      %v3441 = vsel %vm3417, %v3402, %v3131
      %v3442 = vsel %vm3417, %v3403, %v3134
      %v3443 = vsel %vm3417, %v3404, %v3136
      %v3444 = vsel %vm3417, %v3405, %v3139
      %v3445 = vsel %vm3417, %v3406, %v3141
      %v3446 = vsel %vm3417, %v3407, %v3144
      %v3447 = vsel %vm3417, %v3408, %v3146
      %v3448 = vsel %vm3417, %v3409, %v3149
      %v3449 = vsel %vm3417, %v3410, %v3151
      %v3450 = vsel %vm3417, %v3411, %v3154
      %v3451 = vsel %vm3417, %v3412, %v3156
      %v3452 = vsel %vm3417, %v3413, %v3159
      %v3453 = vsel %vm3417, %v3414, %v3161
      %3454 = vst [vmem:[%s388] sm:$0xff] %v3418
      %3455 = vst [vmem:[%s388 + $0x8] sm:$0xff] %v3419
      %3456 = vst [vmem:[%s388 + $0x10] sm:$0xff] %v3420
      %3457 = vst [vmem:[%s388 + $0x18] sm:$0xff] %v3421
      %3458 = vst [vmem:[%s388 + $0x20] sm:$0xff] %v3422
      %3459 = vst [vmem:[%s388 + $0x28] sm:$0xff] %v3423
      %3460 = vst [vmem:[%s388 + $0x30] sm:$0xff] %v3424
      %3461 = vst [vmem:[%s388 + $0x38] sm:$0xff] %v3425
      %3462 = vst [vmem:[%s388 + $0x40] sm:$0xff] %v3426
      %3463 = vst [vmem:[%s388 + $0x48] sm:$0xff] %v3427
      %3464 = vst [vmem:[%s388 + $0x50] sm:$0xff] %v3428
      %3465 = vst [vmem:[%s388 + $0x58] sm:$0xff] %v3429
      %3466 = vst [vmem:[%s388 + $0x60] sm:$0xff] %v3430
      %3467 = vst [vmem:[%s388 + $0x68] sm:$0xff] %v3431
      %3468 = vst [vmem:[%s388 + $0x70] sm:$0xff] %v3432
      %3469 = vst [vmem:[%s388 + $0x78] sm:$0xff] %v3433
      %3470 = vst [vmem:[%s388 + $0x80] sm:$0xff] %v3434
      %3471 = vst [vmem:[%s388 + $0x88] sm:$0xff] %v3435
      %3472 = vst [vmem:[%s388 + $0x90] sm:$0xff] %v3436
      %3473 = vst [vmem:[%s388 + $0x98] sm:$0xff] %v3437
      %3474 = vst [vmem:[%s388 + $0xa0] sm:$0xff] %v3438
      %3475 = vst [vmem:[%s388 + $0xa8] sm:$0xff] %v3439
      %3476 = vst [vmem:[%s388 + $0xb0] sm:$0xff] %v3440
      %3477 = vst [vmem:[%s388 + $0xb8] sm:$0xff] %v3441
      %3478 = vst [vmem:[%s388 + $0xc0] sm:$0xff] %v3442
      %3479 = vst [vmem:[%s388 + $0xc8] sm:$0xff] %v3443
      %3480 = vst [vmem:[%s388 + $0xd0] sm:$0xff] %v3444
      %3481 = vst [vmem:[%s388 + $0xd8] sm:$0xff] %v3445
      %3482 = vst [vmem:[%s388 + $0xe0] sm:$0xff] %v3446
      %3483 = vst [vmem:[%s388 + $0xe8] sm:$0xff] %v3447
      %3484 = vst [vmem:[%s388 + $0xf0] sm:$0xff] %v3448
      %3485 = vst [vmem:[%s388 + $0xf8] sm:$0xff] %v3449
      %3486 = vst [vmem:[%s388 + $0x100] sm:$0xff] %v3450
      %3487 = vst [vmem:[%s388 + $0x108] sm:$0xff] %v3451
      %3488 = vst [vmem:[%s388 + $0x110] sm:$0xff] %v3452
      %3489 = vst [vmem:[%s388 + $0x118] sm:$0xff] %v3453
      %s3490 = smul.u32 36, %s23
      %p3491 = scmp.lt.s32.totalorder %s22, 1
      %s3492 = scalar_select %p3491, %s22, 1
      %p3493 = scmp.lt.s32.totalorder %s3490, 35
      %s3494 = scalar_select %p3493, %s3490, 35
      %s3495 = smul.addr %s3492, 36
      %s3496 = sadd.s32 %s3494, %s3495
      %s3497 = smul.addr %s3496, 8
      %s3498 = scalar_lea.vmem %s7, %s3497
      // Predicated region
      $region49: #{_csp_forward.3} parent=47 // pred_check
        %p3499 = pneg %p218
      $region50: #{_csp_forward.3} parent=47 // pred_check_branch
        %3501 = sbr.rel (%p3499) target = $region52
      $region51: #{_csp_forward.3} parent=47 // pred_region
        %s3502 = smul.u32 36, %s23
      $region52: #{_csp_forward.3} parent=47 // pred_fallthru
        _
    $region48: #{_csp_forward.3} parent=5 // pred_fallthru
      _
    %p3503 = scmp.le.s32.totalorder 2, %s13
    // Predicated region
    $region53: #{_csp_forward.3} parent=5 // pred_check
      %p3504 = pneg %p3503
    $region54: #{_csp_forward.3} parent=5 // pred_check_branch
      %3506 = sbr.rel (%p3504) target = $region56
    $region55: #{_csp_forward.3} parent=5 // pred_region
      %s3507 = ssub.s32 %s13, 2
      // Predicated region
      $region57: #{_csp_forward.3} parent=55 // pred_check
        %p3508 = pneg %p224
      $region58: #{_csp_forward.3} parent=55 // pred_check_branch
        %3510 = sbr.rel (%p3508) target = $region60
      $region59: #{_csp_forward.3} parent=55 // pred_region
        %s3511 = smul.u32 36, %s25
        %p3512 = scmp.lt.s32.totalorder %s24, 1
        %s3513 = scalar_select %p3512, %s24, 1
        %p3514 = scmp.lt.s32.totalorder %s3511, 35
        %s3515 = scalar_select %p3514, %s3511, 35
        %s3516 = smul.addr %s3513, 36
        %s3517 = sadd.s32 %s3515, %s3516
        %s3518 = smul.addr %s3517, 8
        %s3519 = scalar_lea.vmem %s7, %s3518
      $region60: #{_csp_forward.3} parent=55 // pred_fallthru
        _
    $region56: #{_csp_forward.3} parent=5 // pred_fallthru
      _
  $region6: #{_csp_forward.3} parent=0 // loop_footer
    %s17 = sadd.s32 1, %s13
  $region7: #{_csp_forward.3} parent=0 // loop_footer_branch
    %12 = sbr.rel target = $region3
  $region8: #{_csp_forward.3} parent=0 // loop_exit
    _

// kernel: _csp_forward.2
$region0: #{_csp_forward.2}
  #allocation0 [shape = 'u32[]', space=smem, size = 0x4, offset = 0x4, fixed_abs, tag = 'smem constant byte address 0x4 - core index']
  #allocation1 [shape = 'u32[72,128]{1,0:T(1,128)}', space=vmem, size = 0x9000, scoped, tag = 'internal scratch']
  %s0 = inlined_call_operand.vmem [shape: f32[2,288,4], index: 0, kind: input, shape index: {}]
  %s1 = inlined_call_operand.vmem [shape: f32[2,288,4], index: 1, kind: input, shape index: {}]
  %s2 = inlined_call_operand.vmem [shape: f32[2,288,4], index: 2, kind: input, shape index: {}]
  %s3 = inlined_call_operand.vmem [shape: bf16[9,4,32], index: 3, kind: input, shape index: {}]
  %s4 = inlined_call_operand.vmem [shape: f32[1,32], index: 4, kind: input, shape index: {}]
  %s5 = inlined_call_operand.vmem [shape: f32[2,288,32], index: 5, kind: output, shape index: {}]
  %s6 = sld [smem:[#allocation0]]
  $region53: #{_csp_forward.2} parent=0
    _
  %s8 = ssub.s32 1, %s6
  %s9 = scalar_select 0, %s8, %s6
  loop: start=0, step=1, limit=4
  $region2: #{_csp_forward.2} parent=0 // loop_pre_header
    _
  $region3: #{_csp_forward.2} parent=0 // loop_header
    %s11 = sphi 0, %s15
    %p12 = scmp.ge.s32.totalorder %s11, 4
    %s18 = sphi 0, %s30
    %s19 = sphi 0, %s26
    %s20 = sphi 0, %s18
    %s21 = sphi 0, %s19
    %s22 = sphi 0, %s20
    %s23 = sphi 0, %s21
    %s35 = sphi 0, %s37
    %s38 = sphi 0, %s35
    %s39 = sphi 0, %s38
    %s55 = sphi 0, %s39
    %s63 = sphi 0, %s65
    %s66 = sphi 0, %s63
    %s67 = sphi 0, %s66
    %s83 = sphi 0, %s67
    %s91 = sphi 0, %s93
    %s94 = sphi 0, %s91
    %s95 = sphi 0, %s94
    %s111 = sphi 0, %s95
    %s115 = sphi 0, %s115
    %s117 = sphi 0, %s115
    %s118 = sphi 0, %s117
    %s132 = sphi 0, %s118
    %s136 = sphi 0, %s136
    %s138 = sphi 0, %s136
    %s139 = sphi 0, %s138
    %s153 = sphi 0, %s139
    %s161 = sphi 0, %s163
    %s164 = sphi 0, %s161
    %s165 = sphi 0, %s164
    %s181 = sphi 0, %s165
  $region4: #{_csp_forward.2} parent=0 // loop_header_branch
    %14 = sbr.rel (%p12) target = $region8
  $region5: #{_csp_forward.2} parent=0 // loop_body
    %s16 = ssub.s32 %s11, 1
    %s17 = ssub.s32 %s11, 2
    %s24 = sadd.s32 1, %s19
    %p25 = scmp.ge.s32.totalorder %s24, 1
    %s26 = scalar_select %p25, 0, %s24
    %s27 = sadd.s32 1, %s18
    %s28 = scalar_select %p25, %s27, %s18
    %p29 = scmp.ge.s32.totalorder %s28, 2
    %s30 = scalar_select %p29, 0, %s28
    %s31 = ssub.s32 %s18, %s30
    %s32 = ssub.s32 %s19, %s26
    %s33 = sor.u32 %s31, %s32
    %p34 = scmp.eq.s32.totalorder %s33, 0
    %s36 = sadd.s32 %s35, 1
    %s37 = scalar_select %p34, %s35, %s36
    %p40 = pneg %p34
    %p41 = scmp.eq.s32.totalorder %s11, 1
    %p42 = por %p40, %p41
    %p43 = scmp.ne.s32.totalorder %s35, %s38
    %p44 = scmp.eq.s32.totalorder %s11, 0
    %p45 = por %p43, %p44
    %p46 = scmp.ne.s32.totalorder %s35, %s38
    %p47 = scmp.eq.s32.totalorder %s16, 1
    %p48 = por %p46, %p47
    %p49 = scmp.ne.s32.totalorder %s38, %s39
    %p50 = scmp.eq.s32.totalorder %s16, 0
    %p51 = por %p49, %p50
    %p52 = scmp.ne.s32.totalorder %s38, %s39
    %p53 = scmp.eq.s32.totalorder %s17, 1
    %p54 = por %p52, %p53
    %p56 = scmp.ne.s32.totalorder %s39, %s55
    %p57 = scmp.eq.s32.totalorder %s17, 0
    %p58 = por %p56, %p57
    %s59 = ssub.s32 %s18, %s30
    %s60 = ssub.s32 %s19, %s26
    %s61 = sor.u32 %s59, %s60
    %p62 = scmp.eq.s32.totalorder %s61, 0
    %s64 = sadd.s32 %s63, 1
    %s65 = scalar_select %p62, %s63, %s64
    %p68 = pneg %p62
    %p69 = scmp.eq.s32.totalorder %s11, 1
    %p70 = por %p68, %p69
    %p71 = scmp.ne.s32.totalorder %s63, %s66
    %p72 = scmp.eq.s32.totalorder %s11, 0
    %p73 = por %p71, %p72
    %p74 = scmp.ne.s32.totalorder %s63, %s66
    %p75 = scmp.eq.s32.totalorder %s16, 1
    %p76 = por %p74, %p75
    %p77 = scmp.ne.s32.totalorder %s66, %s67
    %p78 = scmp.eq.s32.totalorder %s16, 0
    %p79 = por %p77, %p78
    %p80 = scmp.ne.s32.totalorder %s66, %s67
    %p81 = scmp.eq.s32.totalorder %s17, 1
    %p82 = por %p80, %p81
    %p84 = scmp.ne.s32.totalorder %s67, %s83
    %p85 = scmp.eq.s32.totalorder %s17, 0
    %p86 = por %p84, %p85
    %s87 = ssub.s32 %s18, %s30
    %s88 = ssub.s32 %s19, %s26
    %s89 = sor.u32 %s87, %s88
    %p90 = scmp.eq.s32.totalorder %s89, 0
    %s92 = sadd.s32 %s91, 1
    %s93 = scalar_select %p90, %s91, %s92
    %p96 = pneg %p90
    %p97 = scmp.eq.s32.totalorder %s11, 1
    %p98 = por %p96, %p97
    %p99 = scmp.ne.s32.totalorder %s91, %s94
    %p100 = scmp.eq.s32.totalorder %s11, 0
    %p101 = por %p99, %p100
    %p102 = scmp.ne.s32.totalorder %s91, %s94
    %p103 = scmp.eq.s32.totalorder %s16, 1
    %p104 = por %p102, %p103
    %p105 = scmp.ne.s32.totalorder %s94, %s95
    %p106 = scmp.eq.s32.totalorder %s16, 0
    %p107 = por %p105, %p106
    %p108 = scmp.ne.s32.totalorder %s94, %s95
    %p109 = scmp.eq.s32.totalorder %s17, 1
    %p110 = por %p108, %p109
    %p112 = scmp.ne.s32.totalorder %s95, %s111
    %p113 = scmp.eq.s32.totalorder %s17, 0
    %p114 = por %p112, %p113
    %s116 = sadd.s32 %s115, 1
    %p119 = scmp.eq.s32.totalorder %s11, 1
    %p120 = scmp.ne.s32.totalorder %s115, %s117
    %p121 = scmp.eq.s32.totalorder %s11, 0
    %p122 = por %p120, %p121
    %p123 = scmp.ne.s32.totalorder %s115, %s117
    %p124 = scmp.eq.s32.totalorder %s16, 1
    %p125 = por %p123, %p124
    %p126 = scmp.ne.s32.totalorder %s117, %s118
    %p127 = scmp.eq.s32.totalorder %s16, 0
    %p128 = por %p126, %p127
    %p129 = scmp.ne.s32.totalorder %s117, %s118
    %p130 = scmp.eq.s32.totalorder %s17, 1
    %p131 = por %p129, %p130
    %p133 = scmp.ne.s32.totalorder %s118, %s132
    %p134 = scmp.eq.s32.totalorder %s17, 0
    %p135 = por %p133, %p134
    %s137 = sadd.s32 %s136, 1
    %p140 = scmp.eq.s32.totalorder %s11, 1
    %p141 = scmp.ne.s32.totalorder %s136, %s138
    %p142 = scmp.eq.s32.totalorder %s11, 0
    %p143 = por %p141, %p142
    %p144 = scmp.ne.s32.totalorder %s136, %s138
    %p145 = scmp.eq.s32.totalorder %s16, 1
    %p146 = por %p144, %p145
    %p147 = scmp.ne.s32.totalorder %s138, %s139
    %p148 = scmp.eq.s32.totalorder %s16, 0
    %p149 = por %p147, %p148
    %p150 = scmp.ne.s32.totalorder %s138, %s139
    %p151 = scmp.eq.s32.totalorder %s17, 1
    %p152 = por %p150, %p151
    %p154 = scmp.ne.s32.totalorder %s139, %s153
    %p155 = scmp.eq.s32.totalorder %s17, 0
    %p156 = por %p154, %p155
    %s157 = ssub.s32 %s18, %s30
    %s158 = ssub.s32 %s19, %s26
    %s159 = sor.u32 %s157, %s158
    %p160 = scmp.eq.s32.totalorder %s159, 0
    %s162 = sadd.s32 %s161, 1
    %s163 = scalar_select %p160, %s161, %s162
    %p166 = pneg %p160
    %p167 = scmp.eq.s32.totalorder %s11, 1
    %p168 = por %p166, %p167
    %p169 = scmp.ne.s32.totalorder %s161, %s164
    %p170 = scmp.eq.s32.totalorder %s11, 0
    %p171 = por %p169, %p170
    %p172 = scmp.ne.s32.totalorder %s161, %s164
    %p173 = scmp.eq.s32.totalorder %s16, 1
    %p174 = por %p172, %p173
    %p175 = scmp.ne.s32.totalorder %s164, %s165
    %p176 = scmp.eq.s32.totalorder %s16, 0
    %p177 = por %p175, %p176
    %p178 = scmp.ne.s32.totalorder %s164, %s165
    %p179 = scmp.eq.s32.totalorder %s17, 1
    %p180 = por %p178, %p179
    %p182 = scmp.ne.s32.totalorder %s165, %s181
    %p183 = scmp.eq.s32.totalorder %s17, 0
    %p184 = por %p182, %p183
    %p185 = scmp.le.s32.totalorder 1, %s11
    %p186 = scmp.lt.s32.totalorder %s11, 3
    %p187 = pnand %p185, %p186
    %p188 = pneg %p187
    // Predicated region
    $region9: #{_csp_forward.2} parent=5 // pred_check
      _
    $region10: #{_csp_forward.2} parent=5 // pred_check_branch
      %190 = sbr.rel (%p187) target = $region12
    $region11: #{_csp_forward.2} parent=5 // pred_region
      %s191 = ssub.s32 %s11, 1
      // Predicated region
      $region13: #{_csp_forward.2} parent=11 // pred_check
        %p192 = pneg %p128
      $region14: #{_csp_forward.2} parent=11 // pred_check_branch
        %194 = sbr.rel (%p192) target = $region16
      $region15: #{_csp_forward.2} parent=11 // pred_region
        _
      $region16: #{_csp_forward.2} parent=11 // pred_fallthru
        _
      // Predicated region
      $region17: #{_csp_forward.2} parent=11 // pred_check
        %p195 = pneg %p149
      $region18: #{_csp_forward.2} parent=11 // pred_check_branch
        %197 = sbr.rel (%p195) target = $region20
      $region19: #{_csp_forward.2} parent=11 // pred_region
        _
      $region20: #{_csp_forward.2} parent=11 // pred_fallthru
        _
    $region12: #{_csp_forward.2} parent=5 // pred_fallthru
      _
    %p198 = scmp.lt.s32.totalorder %s11, 2
    // Predicated region
    $region21: #{_csp_forward.2} parent=5 // pred_check
      %p199 = pneg %p198
    $region22: #{_csp_forward.2} parent=5 // pred_check_branch
      %201 = sbr.rel (%p199) target = $region24
    $region23: #{_csp_forward.2} parent=5 // pred_region
      // Predicated region
      $region25: #{_csp_forward.2} parent=23 // pred_check
        %p202 = pneg %p45
      $region26: #{_csp_forward.2} parent=23 // pred_check_branch
        %204 = sbr.rel (%p202) target = $region28
      $region27: #{_csp_forward.2} parent=23 // pred_region
        %s205 = smul.u32 36, %s19
        %p206 = scmp.lt.s32.totalorder %s18, 1
        %s207 = scalar_select %p206, %s18, 1
        %p208 = scmp.lt.s32.totalorder %s205, 35
        %s209 = scalar_select %p208, %s205, 35
        %s210 = smul.addr %s207, 36
        %s211 = sadd.s32 %s209, %s210
        %s212 = smul.addr %s211, 8
        %s213 = scalar_lea.vmem %s0, %s212
        %s214 = smul.u32 36, %s19
      $region28: #{_csp_forward.2} parent=23 // pred_fallthru
        _
      // Predicated region
      $region29: #{_csp_forward.2} parent=23 // pred_check
        %p215 = pneg %p73
      $region30: #{_csp_forward.2} parent=23 // pred_check_branch
        %217 = sbr.rel (%p215) target = $region32
      $region31: #{_csp_forward.2} parent=23 // pred_region
        %s218 = smul.u32 36, %s19
        %p219 = scmp.lt.s32.totalorder %s18, 1
        %s220 = scalar_select %p219, %s18, 1
        %p221 = scmp.lt.s32.totalorder %s218, 35
        %s222 = scalar_select %p221, %s218, 35
        %s223 = smul.addr %s220, 36
        %s224 = sadd.s32 %s222, %s223
        %s225 = smul.addr %s224, 8
        %s226 = scalar_lea.vmem %s1, %s225
        %s227 = smul.u32 36, %s19
      $region32: #{_csp_forward.2} parent=23 // pred_fallthru
        _
      // Predicated region
      $region33: #{_csp_forward.2} parent=23 // pred_check
        %p228 = pneg %p101
      $region34: #{_csp_forward.2} parent=23 // pred_check_branch
        %230 = sbr.rel (%p228) target = $region36
      $region35: #{_csp_forward.2} parent=23 // pred_region
        %s231 = smul.u32 36, %s19
        %p232 = scmp.lt.s32.totalorder %s18, 1
        %s233 = scalar_select %p232, %s18, 1
        %p234 = scmp.lt.s32.totalorder %s231, 35
        %s235 = scalar_select %p234, %s231, 35
        %s236 = smul.addr %s233, 36
        %s237 = sadd.s32 %s235, %s236
        %s238 = smul.addr %s237, 8
        %s239 = scalar_lea.vmem %s2, %s238
        %s240 = smul.u32 36, %s19
      $region36: #{_csp_forward.2} parent=23 // pred_fallthru
        _
    $region24: #{_csp_forward.2} parent=5 // pred_fallthru
      _
    %p241 = scmp.le.s32.totalorder 1, %s11
    %p242 = scmp.lt.s32.totalorder %s11, 3
    %p243 = pnand %p241, %p242
    %p244 = pneg %p243
    // Predicated region
    $region37: #{_csp_forward.2} parent=5 // pred_check
      _
    $region38: #{_csp_forward.2} parent=5 // pred_check_branch
      %246 = sbr.rel (%p243) target = $region40
    $region39: #{_csp_forward.2} parent=5 // pred_region
      %s247 = ssub.s32 %s11, 1
      %s248 = smul.u32 36, %s21
      %p249 = scmp.lt.s32.totalorder %s20, 1
      %s250 = scalar_select %p249, %s20, 1
      %p251 = scmp.lt.s32.totalorder %s248, 35
      %s252 = scalar_select %p251, %s248, 35
      %s253 = smul.addr %s250, 36
      %s254 = sadd.s32 %s252, %s253
      %s255 = smul.addr %s254, 8
      %s256 = scalar_lea.vmem %s0, %s255
      %p257 = pneg %p51
      %p258 = pneg %p48
      %s259 = smul.u32 36, %s21
      %p260 = scmp.lt.s32.totalorder %s20, 1
      %s261 = scalar_select %p260, %s20, 1
      %p262 = scmp.lt.s32.totalorder %s259, 35
      %s263 = scalar_select %p262, %s259, 35
      %s264 = smul.addr %s261, 36
      %s265 = sadd.s32 %s263, %s264
      %s266 = smul.addr %s265, 8
      %s267 = scalar_lea.vmem %s1, %s266
      %p268 = pneg %p79
      %p269 = pneg %p76
      %s270 = smul.u32 36, %s21
      %p271 = scmp.lt.s32.totalorder %s20, 1
      %s272 = scalar_select %p271, %s20, 1
      %p273 = scmp.lt.s32.totalorder %s270, 35
      %s274 = scalar_select %p273, %s270, 35
      %s275 = smul.addr %s272, 36
      %s276 = sadd.s32 %s274, %s275
      %s277 = smul.addr %s276, 8
      %s278 = scalar_lea.vmem %s2, %s277
      %p279 = pneg %p107
      %p280 = pneg %p104
      %p281 = pneg %p128
      %p282 = pneg %p125
      %p283 = pneg %p149
      %p284 = pneg %p146
      %p285 = pneg %p177
      %p286 = pneg %p174
      %s287 = smul.u32 36, %s21
      %p288 = scmp.lt.s32.totalorder %s20, 1
      %s289 = scalar_select %p288, %s20, 1
      %p290 = scmp.lt.s32.totalorder %s287, 35
      %s291 = scalar_select %p290, %s287, 35
      %s292 = smul.addr %s289, 36
      %s293 = sadd.s32 %s291, %s292
      %s294 = smul.addr %s293, 8
      %s295 = scalar_lea.vmem %s5, %s294
      %s296 = smul.u32 36, %s21
      %p297 = scmp.lt.s32.totalorder %s20, 1
      %s298 = scalar_select %p297, %s20, 1
      %p299 = scmp.lt.s32.totalorder %s296, 35
      %s300 = scalar_select %p299, %s296, 35
      %s301 = smul.addr %s298, 36
      %s302 = sadd.s32 %s300, %s301
      %s303 = smul.addr %s302, 8
      %s304 = scalar_lea.vmem %s0, %s303
      %s305 = smul.u32 36, %s21
      %s306 = smul.u32 36, %s21
      %p307 = scmp.lt.s32.totalorder %s20, 1
      %s308 = scalar_select %p307, %s20, 1
      %p309 = scmp.lt.s32.totalorder %s306, 35
      %s310 = scalar_select %p309, %s306, 35
      %s311 = smul.addr %s308, 36
      %s312 = sadd.s32 %s310, %s311
      %s313 = smul.addr %s312, 8
      %s314 = scalar_lea.vmem %s1, %s313
      %s315 = smul.u32 36, %s21
      %s316 = smul.u32 36, %s21
      %p317 = scmp.lt.s32.totalorder %s20, 1
      %s318 = scalar_select %p317, %s20, 1
      %p319 = scmp.lt.s32.totalorder %s316, 35
      %s320 = scalar_select %p319, %s316, 35
      %s321 = smul.addr %s318, 36
      %s322 = sadd.s32 %s320, %s321
      %s323 = smul.addr %s322, 8
      %s324 = scalar_lea.vmem %s2, %s323
      %s325 = smul.u32 36, %s21
      %s326 = smul.u32 36, %s21
      %p327 = scmp.lt.s32.totalorder %s20, 1
      %s328 = scalar_select %p327, %s20, 1
      %p329 = scmp.lt.s32.totalorder %s326, 35
      %s330 = scalar_select %p329, %s326, 35
      %s331 = smul.addr %s328, 36
      %s332 = sadd.s32 %s330, %s331
      %s333 = smul.addr %s332, 8
      %s334 = scalar_lea.vmem %s5, %s333
      %s335 = smul.u32 36, %s21
      %v337 = vld [vmem:[%s304] sm:$0xff]
      %v338 = vld [vmem:[%s304 + $0x8] sm:$0xff]
      %v339 = vld [vmem:[%s304 + $0x10] sm:$0xff]
      %v340 = vld [vmem:[%s304 + $0x18] sm:$0xff]
      %v341 = vld [vmem:[%s304 + $0x20] sm:$0xff]
      %v342 = vld [vmem:[%s304 + $0x28] sm:$0xff]
      %v343 = vld [vmem:[%s304 + $0x30] sm:$0xff]
      %v344 = vld [vmem:[%s304 + $0x38] sm:$0xff]
      %v345 = vld [vmem:[%s304 + $0x40] sm:$0xff]
      %v346 = vld [vmem:[%s304 + $0x48] sm:$0xff]
      %v347 = vld [vmem:[%s304 + $0x50] sm:$0xff]
      %v348 = vld [vmem:[%s304 + $0x58] sm:$0xff]
      %v349 = vld [vmem:[%s304 + $0x60] sm:$0xff]
      %v350 = vld [vmem:[%s304 + $0x68] sm:$0xff]
      %v351 = vld [vmem:[%s304 + $0x70] sm:$0xff]
      %v352 = vld [vmem:[%s304 + $0x78] sm:$0xff]
      %v353 = vld [vmem:[%s304 + $0x80] sm:$0xff]
      %v354 = vld [vmem:[%s304 + $0x88] sm:$0xff]
      %v355 = vld [vmem:[%s304 + $0x90] sm:$0xff]
      %v356 = vld [vmem:[%s304 + $0x98] sm:$0xff]
      %v357 = vld [vmem:[%s304 + $0xa0] sm:$0xff]
      %v358 = vld [vmem:[%s304 + $0xa8] sm:$0xff]
      %v359 = vld [vmem:[%s304 + $0xb0] sm:$0xff]
      %v360 = vld [vmem:[%s304 + $0xb8] sm:$0xff]
      %v361 = vld [vmem:[%s304 + $0xc0] sm:$0xff]
      %v362 = vld [vmem:[%s304 + $0xc8] sm:$0xff]
      %v363 = vld [vmem:[%s304 + $0xd0] sm:$0xff]
      %v364 = vld [vmem:[%s304 + $0xd8] sm:$0xff]
      %v365 = vld [vmem:[%s304 + $0xe0] sm:$0xff]
      %v366 = vld [vmem:[%s304 + $0xe8] sm:$0xff]
      %v367 = vld [vmem:[%s304 + $0xf0] sm:$0xff]
      %v368 = vld [vmem:[%s304 + $0xf8] sm:$0xff]
      %v369 = vld [vmem:[%s304 + $0x100] sm:$0xff]
      %v370 = vld [vmem:[%s304 + $0x108] sm:$0xff]
      %v371 = vld [vmem:[%s304 + $0x110] sm:$0xff]
      %v372 = vld [vmem:[%s304 + $0x118] sm:$0xff]
      %v373 = vrot.slane %v337, 7
      %v374 = vrot.slane %v338, 7
      %v375 = vrot.slane %v339, 7
      %v376 = vrot.slane %v340, 7
      %v377 = vrot.slane %v341, 7
      %v378 = vrot.slane %v342, 7
      %v379 = vrot.slane %v343, 7
      %v380 = vrot.slane %v344, 7
      %v381 = vrot.slane %v345, 7
      %v382 = vrot.slane %v346, 7
      %v383 = vrot.slane %v347, 7
      %v384 = vrot.slane %v348, 7
      %v385 = vrot.slane %v349, 7
      %v386 = vrot.slane %v350, 7
      %v387 = vrot.slane %v351, 7
      %v388 = vrot.slane %v352, 7
      %v389 = vrot.slane %v353, 7
      %v390 = vrot.slane %v354, 7
      %v391 = vrot.slane %v355, 7
      %v392 = vrot.slane %v356, 7
      %v393 = vrot.slane %v357, 7
      %v394 = vrot.slane %v358, 7
      %v395 = vrot.slane %v359, 7
      %v396 = vrot.slane %v360, 7
      %v397 = vrot.slane %v361, 7
      %v398 = vrot.slane %v362, 7
      %v399 = vrot.slane %v363, 7
      %v400 = vrot.slane %v364, 7
      %v401 = vrot.slane %v365, 7
      %v402 = vrot.slane %v366, 7
      %v403 = vrot.slane %v367, 7
      %v404 = vrot.slane %v368, 7
      %v405 = vrot.slane %v369, 7
      %v406 = vrot.slane %v370, 7
      %v407 = vrot.slane %v371, 7
      %v408 = vrot.slane %v372, 7
      %v409 = vlaneseq
      %v410 = vshrl.u32 %v409, 7
      %vm411 = vcmp.lt.s32.totalorder %v410, 1
      %v412 = vsel %vm411, %v407, %v408
      %v413 = vsel %vm411, %v406, %v407
      %v414 = vsel %vm411, %v405, %v406
      %v415 = vsel %vm411, %v404, %v405
      %v416 = vsel %vm411, %v403, %v404
      %v417 = vsel %vm411, %v402, %v403
      %v418 = vsel %vm411, %v401, %v402
      %v419 = vsel %vm411, %v400, %v401
      %v420 = vsel %vm411, %v399, %v400
      %v421 = vsel %vm411, %v398, %v399
      %v422 = vsel %vm411, %v397, %v398
      %v423 = vsel %vm411, %v396, %v397
      %v424 = vsel %vm411, %v395, %v396
      %v425 = vsel %vm411, %v394, %v395
      %v426 = vsel %vm411, %v393, %v394
      %v427 = vsel %vm411, %v392, %v393
      %v428 = vsel %vm411, %v391, %v392
      %v429 = vsel %vm411, %v390, %v391
      %v430 = vsel %vm411, %v389, %v390
      %v431 = vsel %vm411, %v388, %v389
      %v432 = vsel %vm411, %v387, %v388
      %v433 = vsel %vm411, %v386, %v387
      %v434 = vsel %vm411, %v385, %v386
      %v435 = vsel %vm411, %v384, %v385
      %v436 = vsel %vm411, %v383, %v384
      %v437 = vsel %vm411, %v382, %v383
      %v438 = vsel %vm411, %v381, %v382
      %v439 = vsel %vm411, %v380, %v381
      %v440 = vsel %vm411, %v379, %v380
      %v441 = vsel %vm411, %v378, %v379
      %v442 = vsel %vm411, %v377, %v378
      %v443 = vsel %vm411, %v376, %v377
      %v444 = vsel %vm411, %v375, %v376
      %v445 = vsel %vm411, %v374, %v375
      %v446 = vsel %vm411, %v373, %v374
      %v447 = vsel %vm411, %v408, %v373
      %v448 = vpack.c.bf16 %v446, %v447
      %v449 = vpack.c.bf16 %v444, %v445
      %v450 = vpack.c.bf16 %v442, %v443
      %v451 = vpack.c.bf16 %v440, %v441
      %v452 = vpack.c.bf16 %v438, %v439
      %v453 = vpack.c.bf16 %v436, %v437
      %v454 = vpack.c.bf16 %v434, %v435
      %v455 = vpack.c.bf16 %v432, %v433
      %v456 = vpack.c.bf16 %v430, %v431
      %v457 = vpack.c.bf16 %v428, %v429
      %v458 = vpack.c.bf16 %v426, %v427
      %v459 = vpack.c.bf16 %v424, %v425
      %v460 = vpack.c.bf16 %v422, %v423
      %v461 = vpack.c.bf16 %v420, %v421
      %v462 = vpack.c.bf16 %v418, %v419
      %v463 = vpack.c.bf16 %v416, %v417
      %v464 = vpack.c.bf16 %v414, %v415
      %v465 = vpack.c.bf16 %v412, %v413
      %v466 = vld [vmem:[%s3] sm:$0x3]
      %v467 = vpack.c.bf16 %v338, %v337
      %v468 = vpack.c.bf16 %v340, %v339
      %v469 = vpack.c.bf16 %v342, %v341
      %v470 = vpack.c.bf16 %v344, %v343
      %v471 = vpack.c.bf16 %v346, %v345
      %v472 = vpack.c.bf16 %v348, %v347
      %v473 = vpack.c.bf16 %v350, %v349
      %v474 = vpack.c.bf16 %v352, %v351
      %v475 = vpack.c.bf16 %v354, %v353
      %v476 = vpack.c.bf16 %v356, %v355
      %v477 = vpack.c.bf16 %v358, %v357
      %v478 = vpack.c.bf16 %v360, %v359
      %v479 = vpack.c.bf16 %v362, %v361
      %v480 = vpack.c.bf16 %v364, %v363
      %v481 = vpack.c.bf16 %v366, %v365
      %v482 = vpack.c.bf16 %v368, %v367
      %v483 = vpack.c.bf16 %v370, %v369
      %v484 = vpack.c.bf16 %v372, %v371
      %s485 = scalar_lea.vmem %s3, 2
      %v486 = vld [vmem:[%s485] sm:$0x3]
      %vm487 = vcmask 31744
      %v489 = vsel %vm487, %v467, 0
      %v492 = vsel %vm487, %v468, 0
      %v495 = vsel %vm487, %v469, 0
      %v498 = vsel %vm487, %v470, 0
      %v501 = vsel %vm487, %v471, 0
      %v504 = vsel %vm487, %v472, 0
      %v507 = vsel %vm487, %v473, 0
      %v510 = vsel %vm487, %v474, 0
      %v513 = vsel %vm487, %v475, 0
      %v516 = vsel %vm487, %v476, 0
      %v519 = vsel %vm487, %v477, 0
      %v522 = vsel %vm487, %v478, 0
      %v525 = vsel %vm487, %v479, 0
      %v528 = vsel %vm487, %v480, 0
      %v531 = vsel %vm487, %v481, 0
      %v534 = vsel %vm487, %v482, 0
      %v537 = vsel %vm487, %v483, 0
      %v540 = vsel %vm487, %v484, 0
      %vm542 = vcmask 1041408
      %v544 = vsel %vm542, %v486, 0
      %546 = vmatpush.bf16.msra.mxu0 0
      %547 = vmatpush.bf16.msra.mxu0 0
      %548 = vmatpush.bf16.msra.mxu0 0
      %549 = vmatpush.bf16.msra.mxu0 0
      %550 = vmatpush.bf16.msra.mxu0 0
      %551 = vmatpush.bf16.msra.mxu0 0
      %552 = vmatpush.bf16.msra.mxu0 0
      %553 = vmatpush.bf16.msra.mxu0 %v544
      %554 = vmatmul.bf16.gmra.mxu0 %v489
      %v555 = vpop.f32.mrf.mxu0
      %v556 = vadd.f32 0.0, %v555
      %v557 = vpop.f32.mrf.mxu0
      %v558 = vadd.f32 0.0, %v557
      %559 = vmatmul.bf16.gmra.mxu0 %v492
      %v560 = vpop.f32.mrf.mxu0
      %v561 = vadd.f32 0.0, %v560
      %v562 = vpop.f32.mrf.mxu0
      %v563 = vadd.f32 0.0, %v562
      %564 = vmatmul.bf16.gmra.mxu0 %v495
      %v565 = vpop.f32.mrf.mxu0
      %v566 = vadd.f32 0.0, %v565
      %v567 = vpop.f32.mrf.mxu0
      %v568 = vadd.f32 0.0, %v567
      %569 = vmatmul.bf16.gmra.mxu0 %v498
      %v570 = vpop.f32.mrf.mxu0
      %v571 = vadd.f32 0.0, %v570
      %v572 = vpop.f32.mrf.mxu0
      %v573 = vadd.f32 0.0, %v572
      %574 = vmatmul.bf16.gmra.mxu0 %v501
      %v575 = vpop.f32.mrf.mxu0
      %v576 = vadd.f32 0.0, %v575
      %v577 = vpop.f32.mrf.mxu0
      %v578 = vadd.f32 0.0, %v577
      %579 = vmatmul.bf16.gmra.mxu0 %v504
      %v580 = vpop.f32.mrf.mxu0
      %v581 = vadd.f32 0.0, %v580
      %v582 = vpop.f32.mrf.mxu0
      %v583 = vadd.f32 0.0, %v582
      %584 = vmatmul.bf16.gmra.mxu0 %v507
      %v585 = vpop.f32.mrf.mxu0
      %v586 = vadd.f32 0.0, %v585
      %v587 = vpop.f32.mrf.mxu0
      %v588 = vadd.f32 0.0, %v587
      %589 = vmatmul.bf16.gmra.mxu0 %v510
      %v590 = vpop.f32.mrf.mxu0
      %v591 = vadd.f32 0.0, %v590
      %v592 = vpop.f32.mrf.mxu0
      %v593 = vadd.f32 0.0, %v592
      %594 = vmatmul.bf16.gmra.mxu0 %v513
      %v595 = vpop.f32.mrf.mxu0
      %v596 = vadd.f32 0.0, %v595
      %v597 = vpop.f32.mrf.mxu0
      %v598 = vadd.f32 0.0, %v597
      %599 = vmatmul.bf16.gmra.mxu0 %v516
      %v600 = vpop.f32.mrf.mxu0
      %v601 = vadd.f32 0.0, %v600
      %v602 = vpop.f32.mrf.mxu0
      %v603 = vadd.f32 0.0, %v602
      %604 = vmatmul.bf16.gmra.mxu0 %v519
      %v605 = vpop.f32.mrf.mxu0
      %v606 = vadd.f32 0.0, %v605
      %v607 = vpop.f32.mrf.mxu0
      %v608 = vadd.f32 0.0, %v607
      %609 = vmatmul.bf16.gmra.mxu0 %v522
      %v610 = vpop.f32.mrf.mxu0
      %v611 = vadd.f32 0.0, %v610
      %v612 = vpop.f32.mrf.mxu0
      %v613 = vadd.f32 0.0, %v612
      %614 = vmatmul.bf16.gmra.mxu0 %v525
      %v615 = vpop.f32.mrf.mxu0
      %v616 = vadd.f32 0.0, %v615
      %v617 = vpop.f32.mrf.mxu0
      %v618 = vadd.f32 0.0, %v617
      %619 = vmatmul.bf16.gmra.mxu0 %v528
      %v620 = vpop.f32.mrf.mxu0
      %v621 = vadd.f32 0.0, %v620
      %v622 = vpop.f32.mrf.mxu0
      %v623 = vadd.f32 0.0, %v622
      %624 = vmatmul.bf16.gmra.mxu0 %v531
      %v625 = vpop.f32.mrf.mxu0
      %v626 = vadd.f32 0.0, %v625
      %v627 = vpop.f32.mrf.mxu0
      %v628 = vadd.f32 0.0, %v627
      %629 = vmatmul.bf16.gmra.mxu0 %v534
      %v630 = vpop.f32.mrf.mxu0
      %v631 = vadd.f32 0.0, %v630
      %v632 = vpop.f32.mrf.mxu0
      %v633 = vadd.f32 0.0, %v632
      %634 = vmatmul.bf16.gmra.mxu0 %v537
      %v635 = vpop.f32.mrf.mxu0
      %v636 = vadd.f32 0.0, %v635
      %v637 = vpop.f32.mrf.mxu0
      %v638 = vadd.f32 0.0, %v637
      %639 = vmatmul.bf16.gmra.mxu0 %v540
      %v640 = vpop.f32.mrf.mxu0
      %v641 = vadd.f32 0.0, %v640
      %v642 = vpop.f32.mrf.mxu0
      %v643 = vadd.f32 0.0, %v642
      %644 = vdwg.mxu0
      %v646 = vsel %vm487, %v448, 0
      %v649 = vsel %vm487, %v449, 0
      %v652 = vsel %vm487, %v450, 0
      %v655 = vsel %vm487, %v451, 0
      %v658 = vsel %vm487, %v452, 0
      %v661 = vsel %vm487, %v453, 0
      %v664 = vsel %vm487, %v454, 0
      %v667 = vsel %vm487, %v455, 0
      %v670 = vsel %vm487, %v456, 0
      %v673 = vsel %vm487, %v457, 0
      %v676 = vsel %vm487, %v458, 0
      %v679 = vsel %vm487, %v459, 0
      %v682 = vsel %vm487, %v460, 0
      %v685 = vsel %vm487, %v461, 0
      %v688 = vsel %vm487, %v462, 0
      %v691 = vsel %vm487, %v463, 0
      %v694 = vsel %vm487, %v464, 0
      %v697 = vsel %vm487, %v465, 0
      %v700 = vsel %vm542, %v466, 0
      %702 = vmatpush.bf16.msra.mxu0 0
      %703 = vmatpush.bf16.msra.mxu0 0
      %704 = vmatpush.bf16.msra.mxu0 0
      %705 = vmatpush.bf16.msra.mxu0 0
      %706 = vmatpush.bf16.msra.mxu0 0
      %707 = vmatpush.bf16.msra.mxu0 0
      %708 = vmatpush.bf16.msra.mxu0 0
      %709 = vmatpush.bf16.msra.mxu0 %v700
      %710 = vmatmul.bf16.gmra.mxu0 %v646
      %v711 = vpop.f32.mrf.mxu0
      %v712 = vadd.f32 %v556, %v711
      %v713 = vpop.f32.mrf.mxu0
      %v714 = vadd.f32 %v558, %v713
      %715 = vmatmul.bf16.gmra.mxu0 %v649
      %v716 = vpop.f32.mrf.mxu0
      %v717 = vadd.f32 %v561, %v716
      %v718 = vpop.f32.mrf.mxu0
      %v719 = vadd.f32 %v563, %v718
      %720 = vmatmul.bf16.gmra.mxu0 %v652
      %v721 = vpop.f32.mrf.mxu0
      %v722 = vadd.f32 %v566, %v721
      %v723 = vpop.f32.mrf.mxu0
      %v724 = vadd.f32 %v568, %v723
      %725 = vmatmul.bf16.gmra.mxu0 %v655
      %v726 = vpop.f32.mrf.mxu0
      %v727 = vadd.f32 %v571, %v726
      %v728 = vpop.f32.mrf.mxu0
      %v729 = vadd.f32 %v573, %v728
      %730 = vmatmul.bf16.gmra.mxu0 %v658
      %v731 = vpop.f32.mrf.mxu0
      %v732 = vadd.f32 %v576, %v731
      %v733 = vpop.f32.mrf.mxu0
      %v734 = vadd.f32 %v578, %v733
      %735 = vmatmul.bf16.gmra.mxu0 %v661
      %v736 = vpop.f32.mrf.mxu0
      %v737 = vadd.f32 %v581, %v736
      %v738 = vpop.f32.mrf.mxu0
      %v739 = vadd.f32 %v583, %v738
      %740 = vmatmul.bf16.gmra.mxu0 %v664
      %v741 = vpop.f32.mrf.mxu0
      %v742 = vadd.f32 %v586, %v741
      %v743 = vpop.f32.mrf.mxu0
      %v744 = vadd.f32 %v588, %v743
      %745 = vmatmul.bf16.gmra.mxu0 %v667
      %v746 = vpop.f32.mrf.mxu0
      %v747 = vadd.f32 %v591, %v746
      %v748 = vpop.f32.mrf.mxu0
      %v749 = vadd.f32 %v593, %v748
      %750 = vmatmul.bf16.gmra.mxu0 %v670
      %v751 = vpop.f32.mrf.mxu0
      %v752 = vadd.f32 %v596, %v751
      %v753 = vpop.f32.mrf.mxu0
      %v754 = vadd.f32 %v598, %v753
      %755 = vmatmul.bf16.gmra.mxu0 %v673
      %v756 = vpop.f32.mrf.mxu0
      %v757 = vadd.f32 %v601, %v756
      %v758 = vpop.f32.mrf.mxu0
      %v759 = vadd.f32 %v603, %v758
      %760 = vmatmul.bf16.gmra.mxu0 %v676
      %v761 = vpop.f32.mrf.mxu0
      %v762 = vadd.f32 %v606, %v761
      %v763 = vpop.f32.mrf.mxu0
      %v764 = vadd.f32 %v608, %v763
      %765 = vmatmul.bf16.gmra.mxu0 %v679
      %v766 = vpop.f32.mrf.mxu0
      %v767 = vadd.f32 %v611, %v766
      %v768 = vpop.f32.mrf.mxu0
      %v769 = vadd.f32 %v613, %v768
      %770 = vmatmul.bf16.gmra.mxu0 %v682
      %v771 = vpop.f32.mrf.mxu0
      %v772 = vadd.f32 %v616, %v771
      %v773 = vpop.f32.mrf.mxu0
      %v774 = vadd.f32 %v618, %v773
      %775 = vmatmul.bf16.gmra.mxu0 %v685
      %v776 = vpop.f32.mrf.mxu0
      %v777 = vadd.f32 %v621, %v776
      %v778 = vpop.f32.mrf.mxu0
      %v779 = vadd.f32 %v623, %v778
      %780 = vmatmul.bf16.gmra.mxu0 %v688
      %v781 = vpop.f32.mrf.mxu0
      %v782 = vadd.f32 %v626, %v781
      %v783 = vpop.f32.mrf.mxu0
      %v784 = vadd.f32 %v628, %v783
      %785 = vmatmul.bf16.gmra.mxu0 %v691
      %v786 = vpop.f32.mrf.mxu0
      %v787 = vadd.f32 %v631, %v786
      %v788 = vpop.f32.mrf.mxu0
      %v789 = vadd.f32 %v633, %v788
      %790 = vmatmul.bf16.gmra.mxu0 %v694
      %v791 = vpop.f32.mrf.mxu0
      %v792 = vadd.f32 %v636, %v791
      %v793 = vpop.f32.mrf.mxu0
      %v794 = vadd.f32 %v638, %v793
      %795 = vmatmul.bf16.gmra.mxu0 %v697
      %v796 = vpop.f32.mrf.mxu0
      %v797 = vadd.f32 %v641, %v796
      %v798 = vpop.f32.mrf.mxu0
      %v799 = vadd.f32 %v643, %v798
      %800 = vdwg.mxu0
      %v801 = vrot.slane %v337, 1
      %v802 = vrot.slane %v338, 1
      %v803 = vrot.slane %v339, 1
      %v804 = vrot.slane %v340, 1
      %v805 = vrot.slane %v341, 1
      %v806 = vrot.slane %v342, 1
      %v807 = vrot.slane %v343, 1
      %v808 = vrot.slane %v344, 1
      %v809 = vrot.slane %v345, 1
      %v810 = vrot.slane %v346, 1
      %v811 = vrot.slane %v347, 1
      %v812 = vrot.slane %v348, 1
      %v813 = vrot.slane %v349, 1
      %v814 = vrot.slane %v350, 1
      %v815 = vrot.slane %v351, 1
      %v816 = vrot.slane %v352, 1
      %v817 = vrot.slane %v353, 1
      %v818 = vrot.slane %v354, 1
      %v819 = vrot.slane %v355, 1
      %v820 = vrot.slane %v356, 1
      %v821 = vrot.slane %v357, 1
      %v822 = vrot.slane %v358, 1
      %v823 = vrot.slane %v359, 1
      %v824 = vrot.slane %v360, 1
      %v825 = vrot.slane %v361, 1
      %v826 = vrot.slane %v362, 1
      %v827 = vrot.slane %v363, 1
      %v828 = vrot.slane %v364, 1
      %v829 = vrot.slane %v365, 1
      %v830 = vrot.slane %v366, 1
      %v831 = vrot.slane %v367, 1
      %v832 = vrot.slane %v368, 1
      %v833 = vrot.slane %v369, 1
      %v834 = vrot.slane %v370, 1
      %v835 = vrot.slane %v371, 1
      %v836 = vrot.slane %v372, 1
      %vm837 = vcmp.lt.s32.totalorder %v410, 7
      %v838 = vsel %vm837, %v835, %v836
      %v839 = vsel %vm837, %v834, %v835
      %v840 = vsel %vm837, %v833, %v834
      %v841 = vsel %vm837, %v832, %v833
      %v842 = vsel %vm837, %v831, %v832
      %v843 = vsel %vm837, %v830, %v831
      %v844 = vsel %vm837, %v829, %v830
      %v845 = vsel %vm837, %v828, %v829
      %v846 = vsel %vm837, %v827, %v828
      %v847 = vsel %vm837, %v826, %v827
      %v848 = vsel %vm837, %v825, %v826
      %v849 = vsel %vm837, %v824, %v825
      %v850 = vsel %vm837, %v823, %v824
      %v851 = vsel %vm837, %v822, %v823
      %v852 = vsel %vm837, %v821, %v822
      %v853 = vsel %vm837, %v820, %v821
      %v854 = vsel %vm837, %v819, %v820
      %v855 = vsel %vm837, %v818, %v819
      %v856 = vsel %vm837, %v817, %v818
      %v857 = vsel %vm837, %v816, %v817
      %v858 = vsel %vm837, %v815, %v816
      %v859 = vsel %vm837, %v814, %v815
      %v860 = vsel %vm837, %v813, %v814
      %v861 = vsel %vm837, %v812, %v813
      %v862 = vsel %vm837, %v811, %v812
      %v863 = vsel %vm837, %v810, %v811
      %v864 = vsel %vm837, %v809, %v810
      %v865 = vsel %vm837, %v808, %v809
      %v866 = vsel %vm837, %v807, %v808
      %v867 = vsel %vm837, %v806, %v807
      %v868 = vsel %vm837, %v805, %v806
      %v869 = vsel %vm837, %v804, %v805
      %v870 = vsel %vm837, %v803, %v804
      %v871 = vsel %vm837, %v802, %v803
      %v872 = vsel %vm837, %v801, %v802
      %v873 = vsel %vm837, %v836, %v801
      %v874 = vpack.c.bf16 %v871, %v872
      %v875 = vpack.c.bf16 %v869, %v870
      %v876 = vpack.c.bf16 %v867, %v868
      %v877 = vpack.c.bf16 %v865, %v866
      %v878 = vpack.c.bf16 %v863, %v864
      %v879 = vpack.c.bf16 %v861, %v862
      %v880 = vpack.c.bf16 %v859, %v860
      %v881 = vpack.c.bf16 %v857, %v858
      %v882 = vpack.c.bf16 %v855, %v856
      %v883 = vpack.c.bf16 %v853, %v854
      %v884 = vpack.c.bf16 %v851, %v852
      %v885 = vpack.c.bf16 %v849, %v850
      %v886 = vpack.c.bf16 %v847, %v848
      %v887 = vpack.c.bf16 %v845, %v846
      %v888 = vpack.c.bf16 %v843, %v844
      %v889 = vpack.c.bf16 %v841, %v842
      %v890 = vpack.c.bf16 %v839, %v840
      %v891 = vpack.c.bf16 %v873, %v838
      %s892 = scalar_lea.vmem %s3, 4
      %v893 = vld [vmem:[%s892] sm:$0x3]
      %v895 = vsel %vm487, %v874, 0
      %v898 = vsel %vm487, %v875, 0
      %v901 = vsel %vm487, %v876, 0
      %v904 = vsel %vm487, %v877, 0
      %v907 = vsel %vm487, %v878, 0
      %v910 = vsel %vm487, %v879, 0
      %v913 = vsel %vm487, %v880, 0
      %v916 = vsel %vm487, %v881, 0
      %v919 = vsel %vm487, %v882, 0
      %v922 = vsel %vm487, %v883, 0
      %v925 = vsel %vm487, %v884, 0
      %v928 = vsel %vm487, %v885, 0
      %v931 = vsel %vm487, %v886, 0
      %v934 = vsel %vm487, %v887, 0
      %v937 = vsel %vm487, %v888, 0
      %v940 = vsel %vm487, %v889, 0
      %v943 = vsel %vm487, %v890, 0
      %v946 = vsel %vm487, %v891, 0
      %v949 = vsel %vm542, %v893, 0
      %951 = vmatpush.bf16.msra.mxu0 0
      %952 = vmatpush.bf16.msra.mxu0 0
      %953 = vmatpush.bf16.msra.mxu0 0
      %954 = vmatpush.bf16.msra.mxu0 0
      %955 = vmatpush.bf16.msra.mxu0 0
      %956 = vmatpush.bf16.msra.mxu0 0
      %957 = vmatpush.bf16.msra.mxu0 0
      %958 = vmatpush.bf16.msra.mxu0 %v949
      %959 = vmatmul.bf16.gmra.mxu0 %v895
      %v960 = vpop.f32.mrf.mxu0
      %v961 = vadd.f32 0.0, %v960
      %v962 = vpop.f32.mrf.mxu0
      %v963 = vadd.f32 0.0, %v962
      %964 = vmatmul.bf16.gmra.mxu0 %v898
      %v965 = vpop.f32.mrf.mxu0
      %v966 = vadd.f32 0.0, %v965
      %v967 = vpop.f32.mrf.mxu0
      %v968 = vadd.f32 0.0, %v967
      %969 = vmatmul.bf16.gmra.mxu0 %v901
      %v970 = vpop.f32.mrf.mxu0
      %v971 = vadd.f32 0.0, %v970
      %v972 = vpop.f32.mrf.mxu0
      %v973 = vadd.f32 0.0, %v972
      %974 = vmatmul.bf16.gmra.mxu0 %v904
      %v975 = vpop.f32.mrf.mxu0
      %v976 = vadd.f32 0.0, %v975
      %v977 = vpop.f32.mrf.mxu0
      %v978 = vadd.f32 0.0, %v977
      %979 = vmatmul.bf16.gmra.mxu0 %v907
      %v980 = vpop.f32.mrf.mxu0
      %v981 = vadd.f32 0.0, %v980
      %v982 = vpop.f32.mrf.mxu0
      %v983 = vadd.f32 0.0, %v982
      %984 = vmatmul.bf16.gmra.mxu0 %v910
      %v985 = vpop.f32.mrf.mxu0
      %v986 = vadd.f32 0.0, %v985
      %v987 = vpop.f32.mrf.mxu0
      %v988 = vadd.f32 0.0, %v987
      %989 = vmatmul.bf16.gmra.mxu0 %v913
      %v990 = vpop.f32.mrf.mxu0
      %v991 = vadd.f32 0.0, %v990
      %v992 = vpop.f32.mrf.mxu0
      %v993 = vadd.f32 0.0, %v992
      %994 = vmatmul.bf16.gmra.mxu0 %v916
      %v995 = vpop.f32.mrf.mxu0
      %v996 = vadd.f32 0.0, %v995
      %v997 = vpop.f32.mrf.mxu0
      %v998 = vadd.f32 0.0, %v997
      %999 = vmatmul.bf16.gmra.mxu0 %v919
      %v1000 = vpop.f32.mrf.mxu0
      %v1001 = vadd.f32 0.0, %v1000
      %v1002 = vpop.f32.mrf.mxu0
      %v1003 = vadd.f32 0.0, %v1002
      %1004 = vmatmul.bf16.gmra.mxu0 %v922
      %v1005 = vpop.f32.mrf.mxu0
      %v1006 = vadd.f32 0.0, %v1005
      %v1007 = vpop.f32.mrf.mxu0
      %v1008 = vadd.f32 0.0, %v1007
      %1009 = vmatmul.bf16.gmra.mxu0 %v925
      %v1010 = vpop.f32.mrf.mxu0
      %v1011 = vadd.f32 0.0, %v1010
      %v1012 = vpop.f32.mrf.mxu0
      %v1013 = vadd.f32 0.0, %v1012
      %1014 = vmatmul.bf16.gmra.mxu0 %v928
      %v1015 = vpop.f32.mrf.mxu0
      %v1016 = vadd.f32 0.0, %v1015
      %v1017 = vpop.f32.mrf.mxu0
      %v1018 = vadd.f32 0.0, %v1017
      %1019 = vmatmul.bf16.gmra.mxu0 %v931
      %v1020 = vpop.f32.mrf.mxu0
      %v1021 = vadd.f32 0.0, %v1020
      %v1022 = vpop.f32.mrf.mxu0
      %v1023 = vadd.f32 0.0, %v1022
      %1024 = vmatmul.bf16.gmra.mxu0 %v934
      %v1025 = vpop.f32.mrf.mxu0
      %v1026 = vadd.f32 0.0, %v1025
      %v1027 = vpop.f32.mrf.mxu0
      %v1028 = vadd.f32 0.0, %v1027
      %1029 = vmatmul.bf16.gmra.mxu0 %v937
      %v1030 = vpop.f32.mrf.mxu0
      %v1031 = vadd.f32 0.0, %v1030
      %v1032 = vpop.f32.mrf.mxu0
      %v1033 = vadd.f32 0.0, %v1032
      %1034 = vmatmul.bf16.gmra.mxu0 %v940
      %v1035 = vpop.f32.mrf.mxu0
      %v1036 = vadd.f32 0.0, %v1035
      %v1037 = vpop.f32.mrf.mxu0
      %v1038 = vadd.f32 0.0, %v1037
      %1039 = vmatmul.bf16.gmra.mxu0 %v943
      %v1040 = vpop.f32.mrf.mxu0
      %v1041 = vadd.f32 0.0, %v1040
      %v1042 = vpop.f32.mrf.mxu0
      %v1043 = vadd.f32 0.0, %v1042
      %1044 = vmatmul.bf16.gmra.mxu0 %v946
      %v1045 = vpop.f32.mrf.mxu0
      %v1046 = vadd.f32 0.0, %v1045
      %v1047 = vpop.f32.mrf.mxu0
      %v1048 = vadd.f32 0.0, %v1047
      %1049 = vdwg.mxu0
      %v1050 = vadd.f32 %v712, %v961
      %v1051 = vadd.f32 %v714, %v963
      %v1052 = vadd.f32 %v717, %v966
      %v1053 = vadd.f32 %v719, %v968
      %v1054 = vadd.f32 %v722, %v971
      %v1055 = vadd.f32 %v724, %v973
      %v1056 = vadd.f32 %v727, %v976
      %v1057 = vadd.f32 %v729, %v978
      %v1058 = vadd.f32 %v732, %v981
      %v1059 = vadd.f32 %v734, %v983
      %v1060 = vadd.f32 %v737, %v986
      %v1061 = vadd.f32 %v739, %v988
      %v1062 = vadd.f32 %v742, %v991
      %v1063 = vadd.f32 %v744, %v993
      %v1064 = vadd.f32 %v747, %v996
      %v1065 = vadd.f32 %v749, %v998
      %v1066 = vadd.f32 %v752, %v1001
      %v1067 = vadd.f32 %v754, %v1003
      %v1068 = vadd.f32 %v757, %v1006
      %v1069 = vadd.f32 %v759, %v1008
      %v1070 = vadd.f32 %v762, %v1011
      %v1071 = vadd.f32 %v764, %v1013
      %v1072 = vadd.f32 %v767, %v1016
      %v1073 = vadd.f32 %v769, %v1018
      %v1074 = vadd.f32 %v772, %v1021
      %v1075 = vadd.f32 %v774, %v1023
      %v1076 = vadd.f32 %v777, %v1026
      %v1077 = vadd.f32 %v779, %v1028
      %v1078 = vadd.f32 %v782, %v1031
      %v1079 = vadd.f32 %v784, %v1033
      %v1080 = vadd.f32 %v787, %v1036
      %v1081 = vadd.f32 %v789, %v1038
      %v1082 = vadd.f32 %v792, %v1041
      %v1083 = vadd.f32 %v794, %v1043
      %v1084 = vadd.f32 %v797, %v1046
      %v1085 = vadd.f32 %v799, %v1048
      %v1086 = vld [vmem:[%s314] sm:$0xff]
      %v1087 = vld [vmem:[%s314 + $0x8] sm:$0xff]
      %v1088 = vld [vmem:[%s314 + $0x10] sm:$0xff]
      %v1089 = vld [vmem:[%s314 + $0x18] sm:$0xff]
      %v1090 = vld [vmem:[%s314 + $0x20] sm:$0xff]
      %v1091 = vld [vmem:[%s314 + $0x28] sm:$0xff]
      %v1092 = vld [vmem:[%s314 + $0x30] sm:$0xff]
      %v1093 = vld [vmem:[%s314 + $0x38] sm:$0xff]
      %v1094 = vld [vmem:[%s314 + $0x40] sm:$0xff]
      %v1095 = vld [vmem:[%s314 + $0x48] sm:$0xff]
      %v1096 = vld [vmem:[%s314 + $0x50] sm:$0xff]
      %v1097 = vld [vmem:[%s314 + $0x58] sm:$0xff]
      %v1098 = vld [vmem:[%s314 + $0x60] sm:$0xff]
      %v1099 = vld [vmem:[%s314 + $0x68] sm:$0xff]
      %v1100 = vld [vmem:[%s314 + $0x70] sm:$0xff]
      %v1101 = vld [vmem:[%s314 + $0x78] sm:$0xff]
      %v1102 = vld [vmem:[%s314 + $0x80] sm:$0xff]
      %v1103 = vld [vmem:[%s314 + $0x88] sm:$0xff]
      %v1104 = vld [vmem:[%s314 + $0x90] sm:$0xff]
      %v1105 = vld [vmem:[%s314 + $0x98] sm:$0xff]
      %v1106 = vld [vmem:[%s314 + $0xa0] sm:$0xff]
      %v1107 = vld [vmem:[%s314 + $0xa8] sm:$0xff]
      %v1108 = vld [vmem:[%s314 + $0xb0] sm:$0xff]
      %v1109 = vld [vmem:[%s314 + $0xb8] sm:$0xff]
      %v1110 = vld [vmem:[%s314 + $0xc0] sm:$0xff]
      %v1111 = vld [vmem:[%s314 + $0xc8] sm:$0xff]
      %v1112 = vld [vmem:[%s314 + $0xd0] sm:$0xff]
      %v1113 = vld [vmem:[%s314 + $0xd8] sm:$0xff]
      %v1114 = vld [vmem:[%s314 + $0xe0] sm:$0xff]
      %v1115 = vld [vmem:[%s314 + $0xe8] sm:$0xff]
      %v1116 = vld [vmem:[%s314 + $0xf0] sm:$0xff]
      %v1117 = vld [vmem:[%s314 + $0xf8] sm:$0xff]
      %v1118 = vld [vmem:[%s314 + $0x100] sm:$0xff]
      %v1119 = vld [vmem:[%s314 + $0x108] sm:$0xff]
      %v1120 = vld [vmem:[%s314 + $0x110] sm:$0xff]
      %v1121 = vld [vmem:[%s314 + $0x118] sm:$0xff]
      %v1122 = vrot.slane %v1086, 7
      %v1123 = vrot.slane %v1087, 7
      %v1124 = vrot.slane %v1088, 7
      %v1125 = vrot.slane %v1089, 7
      %v1126 = vrot.slane %v1090, 7
      %v1127 = vrot.slane %v1091, 7
      %v1128 = vrot.slane %v1092, 7
      %v1129 = vrot.slane %v1093, 7
      %v1130 = vrot.slane %v1094, 7
      %v1131 = vrot.slane %v1095, 7
      %v1132 = vrot.slane %v1096, 7
      %v1133 = vrot.slane %v1097, 7
      %v1134 = vrot.slane %v1098, 7
      %v1135 = vrot.slane %v1099, 7
      %v1136 = vrot.slane %v1100, 7
      %v1137 = vrot.slane %v1101, 7
      %v1138 = vrot.slane %v1102, 7
      %v1139 = vrot.slane %v1103, 7
      %v1140 = vrot.slane %v1104, 7
      %v1141 = vrot.slane %v1105, 7
      %v1142 = vrot.slane %v1106, 7
      %v1143 = vrot.slane %v1107, 7
      %v1144 = vrot.slane %v1108, 7
      %v1145 = vrot.slane %v1109, 7
      %v1146 = vrot.slane %v1110, 7
      %v1147 = vrot.slane %v1111, 7
      %v1148 = vrot.slane %v1112, 7
      %v1149 = vrot.slane %v1113, 7
      %v1150 = vrot.slane %v1114, 7
      %v1151 = vrot.slane %v1115, 7
      %v1152 = vrot.slane %v1116, 7
      %v1153 = vrot.slane %v1117, 7
      %v1154 = vrot.slane %v1118, 7
      %v1155 = vrot.slane %v1119, 7
      %v1156 = vrot.slane %v1120, 7
      %v1157 = vrot.slane %v1121, 7
      %v1158 = vsel %vm411, %v1156, %v1157
      %v1159 = vsel %vm411, %v1155, %v1156
      %v1160 = vsel %vm411, %v1154, %v1155
      %v1161 = vsel %vm411, %v1153, %v1154
      %v1162 = vsel %vm411, %v1152, %v1153
      %v1163 = vsel %vm411, %v1151, %v1152
      %v1164 = vsel %vm411, %v1150, %v1151
      %v1165 = vsel %vm411, %v1149, %v1150
      %v1166 = vsel %vm411, %v1148, %v1149
      %v1167 = vsel %vm411, %v1147, %v1148
      %v1168 = vsel %vm411, %v1146, %v1147
      %v1169 = vsel %vm411, %v1145, %v1146
      %v1170 = vsel %vm411, %v1144, %v1145
      %v1171 = vsel %vm411, %v1143, %v1144
      %v1172 = vsel %vm411, %v1142, %v1143
      %v1173 = vsel %vm411, %v1141, %v1142
      %v1174 = vsel %vm411, %v1140, %v1141
      %v1175 = vsel %vm411, %v1139, %v1140
      %v1176 = vsel %vm411, %v1138, %v1139
      %v1177 = vsel %vm411, %v1137, %v1138
      %v1178 = vsel %vm411, %v1136, %v1137
      %v1179 = vsel %vm411, %v1135, %v1136
      %v1180 = vsel %vm411, %v1134, %v1135
      %v1181 = vsel %vm411, %v1133, %v1134
      %v1182 = vsel %vm411, %v1132, %v1133
      %v1183 = vsel %vm411, %v1131, %v1132
      %v1184 = vsel %vm411, %v1130, %v1131
      %v1185 = vsel %vm411, %v1129, %v1130
      %v1186 = vsel %vm411, %v1128, %v1129
      %v1187 = vsel %vm411, %v1127, %v1128
      %v1188 = vsel %vm411, %v1126, %v1127
      %v1189 = vsel %vm411, %v1125, %v1126
      %v1190 = vsel %vm411, %v1124, %v1125
      %v1191 = vsel %vm411, %v1123, %v1124
      %v1192 = vsel %vm411, %v1122, %v1123
      %v1193 = vsel %vm411, %v1157, %v1122
      %v1194 = vpack.c.bf16 %v1192, %v1193
      %v1195 = vpack.c.bf16 %v1190, %v1191
      %v1196 = vpack.c.bf16 %v1188, %v1189
      %v1197 = vpack.c.bf16 %v1186, %v1187
      %v1198 = vpack.c.bf16 %v1184, %v1185
      %v1199 = vpack.c.bf16 %v1182, %v1183
      %v1200 = vpack.c.bf16 %v1180, %v1181
      %v1201 = vpack.c.bf16 %v1178, %v1179
      %v1202 = vpack.c.bf16 %v1176, %v1177
      %v1203 = vpack.c.bf16 %v1174, %v1175
      %v1204 = vpack.c.bf16 %v1172, %v1173
      %v1205 = vpack.c.bf16 %v1170, %v1171
      %v1206 = vpack.c.bf16 %v1168, %v1169
      %v1207 = vpack.c.bf16 %v1166, %v1167
      %v1208 = vpack.c.bf16 %v1164, %v1165
      %v1209 = vpack.c.bf16 %v1162, %v1163
      %v1210 = vpack.c.bf16 %v1160, %v1161
      %v1211 = vpack.c.bf16 %v1158, %v1159
      %s1212 = scalar_lea.vmem %s3, 6
      %v1213 = vld [vmem:[%s1212] sm:$0x3]
      %v1215 = vsel %vm487, %v1194, 0
      %v1218 = vsel %vm487, %v1195, 0
      %v1221 = vsel %vm487, %v1196, 0
      %v1224 = vsel %vm487, %v1197, 0
      %v1227 = vsel %vm487, %v1198, 0
      %v1230 = vsel %vm487, %v1199, 0
      %v1233 = vsel %vm487, %v1200, 0
      %v1236 = vsel %vm487, %v1201, 0
      %v1239 = vsel %vm487, %v1202, 0
      %v1242 = vsel %vm487, %v1203, 0
      %v1245 = vsel %vm487, %v1204, 0
      %v1248 = vsel %vm487, %v1205, 0
      %v1251 = vsel %vm487, %v1206, 0
      %v1254 = vsel %vm487, %v1207, 0
      %v1257 = vsel %vm487, %v1208, 0
      %v1260 = vsel %vm487, %v1209, 0
      %v1263 = vsel %vm487, %v1210, 0
      %v1266 = vsel %vm487, %v1211, 0
      %v1269 = vsel %vm542, %v1213, 0
      %1271 = vmatpush.bf16.msra.mxu0 0
      %1272 = vmatpush.bf16.msra.mxu0 0
      %1273 = vmatpush.bf16.msra.mxu0 0
      %1274 = vmatpush.bf16.msra.mxu0 0
      %1275 = vmatpush.bf16.msra.mxu0 0
      %1276 = vmatpush.bf16.msra.mxu0 0
      %1277 = vmatpush.bf16.msra.mxu0 0
      %1278 = vmatpush.bf16.msra.mxu0 %v1269
      %1279 = vmatmul.bf16.gmra.mxu0 %v1215
      %v1280 = vpop.f32.mrf.mxu0
      %v1281 = vadd.f32 0.0, %v1280
      %v1282 = vpop.f32.mrf.mxu0
      %v1283 = vadd.f32 0.0, %v1282
      %1284 = vmatmul.bf16.gmra.mxu0 %v1218
      %v1285 = vpop.f32.mrf.mxu0
      %v1286 = vadd.f32 0.0, %v1285
      %v1287 = vpop.f32.mrf.mxu0
      %v1288 = vadd.f32 0.0, %v1287
      %1289 = vmatmul.bf16.gmra.mxu0 %v1221
      %v1290 = vpop.f32.mrf.mxu0
      %v1291 = vadd.f32 0.0, %v1290
      %v1292 = vpop.f32.mrf.mxu0
      %v1293 = vadd.f32 0.0, %v1292
      %1294 = vmatmul.bf16.gmra.mxu0 %v1224
      %v1295 = vpop.f32.mrf.mxu0
      %v1296 = vadd.f32 0.0, %v1295
      %v1297 = vpop.f32.mrf.mxu0
      %v1298 = vadd.f32 0.0, %v1297
      %1299 = vmatmul.bf16.gmra.mxu0 %v1227
      %v1300 = vpop.f32.mrf.mxu0
      %v1301 = vadd.f32 0.0, %v1300
      %v1302 = vpop.f32.mrf.mxu0
      %v1303 = vadd.f32 0.0, %v1302
      %1304 = vmatmul.bf16.gmra.mxu0 %v1230
      %v1305 = vpop.f32.mrf.mxu0
      %v1306 = vadd.f32 0.0, %v1305
      %v1307 = vpop.f32.mrf.mxu0
      %v1308 = vadd.f32 0.0, %v1307
      %1309 = vmatmul.bf16.gmra.mxu0 %v1233
      %v1310 = vpop.f32.mrf.mxu0
      %v1311 = vadd.f32 0.0, %v1310
      %v1312 = vpop.f32.mrf.mxu0
      %v1313 = vadd.f32 0.0, %v1312
      %1314 = vmatmul.bf16.gmra.mxu0 %v1236
      %v1315 = vpop.f32.mrf.mxu0
      %v1316 = vadd.f32 0.0, %v1315
      %v1317 = vpop.f32.mrf.mxu0
      %v1318 = vadd.f32 0.0, %v1317
      %1319 = vmatmul.bf16.gmra.mxu0 %v1239
      %v1320 = vpop.f32.mrf.mxu0
      %v1321 = vadd.f32 0.0, %v1320
      %v1322 = vpop.f32.mrf.mxu0
      %v1323 = vadd.f32 0.0, %v1322
      %1324 = vmatmul.bf16.gmra.mxu0 %v1242
      %v1325 = vpop.f32.mrf.mxu0
      %v1326 = vadd.f32 0.0, %v1325
      %v1327 = vpop.f32.mrf.mxu0
      %v1328 = vadd.f32 0.0, %v1327
      %1329 = vmatmul.bf16.gmra.mxu0 %v1245
      %v1330 = vpop.f32.mrf.mxu0
      %v1331 = vadd.f32 0.0, %v1330
      %v1332 = vpop.f32.mrf.mxu0
      %v1333 = vadd.f32 0.0, %v1332
      %1334 = vmatmul.bf16.gmra.mxu0 %v1248
      %v1335 = vpop.f32.mrf.mxu0
      %v1336 = vadd.f32 0.0, %v1335
      %v1337 = vpop.f32.mrf.mxu0
      %v1338 = vadd.f32 0.0, %v1337
      %1339 = vmatmul.bf16.gmra.mxu0 %v1251
      %v1340 = vpop.f32.mrf.mxu0
      %v1341 = vadd.f32 0.0, %v1340
      %v1342 = vpop.f32.mrf.mxu0
      %v1343 = vadd.f32 0.0, %v1342
      %1344 = vmatmul.bf16.gmra.mxu0 %v1254
      %v1345 = vpop.f32.mrf.mxu0
      %v1346 = vadd.f32 0.0, %v1345
      %v1347 = vpop.f32.mrf.mxu0
      %v1348 = vadd.f32 0.0, %v1347
      %1349 = vmatmul.bf16.gmra.mxu0 %v1257
      %v1350 = vpop.f32.mrf.mxu0
      %v1351 = vadd.f32 0.0, %v1350
      %v1352 = vpop.f32.mrf.mxu0
      %v1353 = vadd.f32 0.0, %v1352
      %1354 = vmatmul.bf16.gmra.mxu0 %v1260
      %v1355 = vpop.f32.mrf.mxu0
      %v1356 = vadd.f32 0.0, %v1355
      %v1357 = vpop.f32.mrf.mxu0
      %v1358 = vadd.f32 0.0, %v1357
      %1359 = vmatmul.bf16.gmra.mxu0 %v1263
      %v1360 = vpop.f32.mrf.mxu0
      %v1361 = vadd.f32 0.0, %v1360
      %v1362 = vpop.f32.mrf.mxu0
      %v1363 = vadd.f32 0.0, %v1362
      %1364 = vmatmul.bf16.gmra.mxu0 %v1266
      %v1365 = vpop.f32.mrf.mxu0
      %v1366 = vadd.f32 0.0, %v1365
      %v1367 = vpop.f32.mrf.mxu0
      %v1368 = vadd.f32 0.0, %v1367
      %1369 = vdwg.mxu0
      %v1370 = vadd.f32 %v1050, %v1281
      %v1371 = vadd.f32 %v1051, %v1283
      %v1372 = vadd.f32 %v1052, %v1286
      %v1373 = vadd.f32 %v1053, %v1288
      %v1374 = vadd.f32 %v1054, %v1291
      %v1375 = vadd.f32 %v1055, %v1293
      %v1376 = vadd.f32 %v1056, %v1296
      %v1377 = vadd.f32 %v1057, %v1298
      %v1378 = vadd.f32 %v1058, %v1301
      %v1379 = vadd.f32 %v1059, %v1303
      %v1380 = vadd.f32 %v1060, %v1306
      %v1381 = vadd.f32 %v1061, %v1308
      %v1382 = vadd.f32 %v1062, %v1311
      %v1383 = vadd.f32 %v1063, %v1313
      %v1384 = vadd.f32 %v1064, %v1316
      %v1385 = vadd.f32 %v1065, %v1318
      %v1386 = vadd.f32 %v1066, %v1321
      %v1387 = vadd.f32 %v1067, %v1323
      %v1388 = vadd.f32 %v1068, %v1326
      %v1389 = vadd.f32 %v1069, %v1328
      %v1390 = vadd.f32 %v1070, %v1331
      %v1391 = vadd.f32 %v1071, %v1333
      %v1392 = vadd.f32 %v1072, %v1336
      %v1393 = vadd.f32 %v1073, %v1338
      %v1394 = vadd.f32 %v1074, %v1341
      %v1395 = vadd.f32 %v1075, %v1343
      %v1396 = vadd.f32 %v1076, %v1346
      %v1397 = vadd.f32 %v1077, %v1348
      %v1398 = vadd.f32 %v1078, %v1351
      %v1399 = vadd.f32 %v1079, %v1353
      %v1400 = vadd.f32 %v1080, %v1356
      %v1401 = vadd.f32 %v1081, %v1358
      %v1402 = vadd.f32 %v1082, %v1361
      %v1403 = vadd.f32 %v1083, %v1363
      %v1404 = vadd.f32 %v1084, %v1366
      %v1405 = vadd.f32 %v1085, %v1368
      %v1406 = vpack.c.bf16 %v1087, %v1086
      %v1407 = vpack.c.bf16 %v1089, %v1088
      %v1408 = vpack.c.bf16 %v1091, %v1090
      %v1409 = vpack.c.bf16 %v1093, %v1092
      %v1410 = vpack.c.bf16 %v1095, %v1094
      %v1411 = vpack.c.bf16 %v1097, %v1096
      %v1412 = vpack.c.bf16 %v1099, %v1098
      %v1413 = vpack.c.bf16 %v1101, %v1100
      %v1414 = vpack.c.bf16 %v1103, %v1102
      %v1415 = vpack.c.bf16 %v1105, %v1104
      %v1416 = vpack.c.bf16 %v1107, %v1106
      %v1417 = vpack.c.bf16 %v1109, %v1108
      %v1418 = vpack.c.bf16 %v1111, %v1110
      %v1419 = vpack.c.bf16 %v1113, %v1112
      %v1420 = vpack.c.bf16 %v1115, %v1114
      %v1421 = vpack.c.bf16 %v1117, %v1116
      %v1422 = vpack.c.bf16 %v1119, %v1118
      %v1423 = vpack.c.bf16 %v1121, %v1120
      %s1424 = scalar_lea.vmem %s3, 8
      %v1425 = vld [vmem:[%s1424] sm:$0x3]
      %v1427 = vsel %vm487, %v1406, 0
      %v1430 = vsel %vm487, %v1407, 0
      %v1433 = vsel %vm487, %v1408, 0
      %v1436 = vsel %vm487, %v1409, 0
      %v1439 = vsel %vm487, %v1410, 0
      %v1442 = vsel %vm487, %v1411, 0
      %v1445 = vsel %vm487, %v1412, 0
      %v1448 = vsel %vm487, %v1413, 0
      %v1451 = vsel %vm487, %v1414, 0
      %v1454 = vsel %vm487, %v1415, 0
      %v1457 = vsel %vm487, %v1416, 0
      %v1460 = vsel %vm487, %v1417, 0
      %v1463 = vsel %vm487, %v1418, 0
      %v1466 = vsel %vm487, %v1419, 0
      %v1469 = vsel %vm487, %v1420, 0
      %v1472 = vsel %vm487, %v1421, 0
      %v1475 = vsel %vm487, %v1422, 0
      %v1478 = vsel %vm487, %v1423, 0
      %v1481 = vsel %vm542, %v1425, 0
      %1483 = vmatpush.bf16.msra.mxu0 0
      %1484 = vmatpush.bf16.msra.mxu0 0
      %1485 = vmatpush.bf16.msra.mxu0 0
      %1486 = vmatpush.bf16.msra.mxu0 0
      %1487 = vmatpush.bf16.msra.mxu0 0
      %1488 = vmatpush.bf16.msra.mxu0 0
      %1489 = vmatpush.bf16.msra.mxu0 0
      %1490 = vmatpush.bf16.msra.mxu0 %v1481
      %1491 = vmatmul.bf16.gmra.mxu0 %v1427
      %v1492 = vpop.f32.mrf.mxu0
      %v1493 = vadd.f32 0.0, %v1492
      %v1494 = vpop.f32.mrf.mxu0
      %v1495 = vadd.f32 0.0, %v1494
      %1496 = vmatmul.bf16.gmra.mxu0 %v1430
      %v1497 = vpop.f32.mrf.mxu0
      %v1498 = vadd.f32 0.0, %v1497
      %v1499 = vpop.f32.mrf.mxu0
      %v1500 = vadd.f32 0.0, %v1499
      %1501 = vmatmul.bf16.gmra.mxu0 %v1433
      %v1502 = vpop.f32.mrf.mxu0
      %v1503 = vadd.f32 0.0, %v1502
      %v1504 = vpop.f32.mrf.mxu0
      %v1505 = vadd.f32 0.0, %v1504
      %1506 = vmatmul.bf16.gmra.mxu0 %v1436
      %v1507 = vpop.f32.mrf.mxu0
      %v1508 = vadd.f32 0.0, %v1507
      %v1509 = vpop.f32.mrf.mxu0
      %v1510 = vadd.f32 0.0, %v1509
      %1511 = vmatmul.bf16.gmra.mxu0 %v1439
      %v1512 = vpop.f32.mrf.mxu0
      %v1513 = vadd.f32 0.0, %v1512
      %v1514 = vpop.f32.mrf.mxu0
      %v1515 = vadd.f32 0.0, %v1514
      %1516 = vmatmul.bf16.gmra.mxu0 %v1442
      %v1517 = vpop.f32.mrf.mxu0
      %v1518 = vadd.f32 0.0, %v1517
      %v1519 = vpop.f32.mrf.mxu0
      %v1520 = vadd.f32 0.0, %v1519
      %1521 = vmatmul.bf16.gmra.mxu0 %v1445
      %v1522 = vpop.f32.mrf.mxu0
      %v1523 = vadd.f32 0.0, %v1522
      %v1524 = vpop.f32.mrf.mxu0
      %v1525 = vadd.f32 0.0, %v1524
      %1526 = vmatmul.bf16.gmra.mxu0 %v1448
      %v1527 = vpop.f32.mrf.mxu0
      %v1528 = vadd.f32 0.0, %v1527
      %v1529 = vpop.f32.mrf.mxu0
      %v1530 = vadd.f32 0.0, %v1529
      %1531 = vmatmul.bf16.gmra.mxu0 %v1451
      %v1532 = vpop.f32.mrf.mxu0
      %v1533 = vadd.f32 0.0, %v1532
      %v1534 = vpop.f32.mrf.mxu0
      %v1535 = vadd.f32 0.0, %v1534
      %1536 = vmatmul.bf16.gmra.mxu0 %v1454
      %v1537 = vpop.f32.mrf.mxu0
      %v1538 = vadd.f32 0.0, %v1537
      %v1539 = vpop.f32.mrf.mxu0
      %v1540 = vadd.f32 0.0, %v1539
      %1541 = vmatmul.bf16.gmra.mxu0 %v1457
      %v1542 = vpop.f32.mrf.mxu0
      %v1543 = vadd.f32 0.0, %v1542
      %v1544 = vpop.f32.mrf.mxu0
      %v1545 = vadd.f32 0.0, %v1544
      %1546 = vmatmul.bf16.gmra.mxu0 %v1460
      %v1547 = vpop.f32.mrf.mxu0
      %v1548 = vadd.f32 0.0, %v1547
      %v1549 = vpop.f32.mrf.mxu0
      %v1550 = vadd.f32 0.0, %v1549
      %1551 = vmatmul.bf16.gmra.mxu0 %v1463
      %v1552 = vpop.f32.mrf.mxu0
      %v1553 = vadd.f32 0.0, %v1552
      %v1554 = vpop.f32.mrf.mxu0
      %v1555 = vadd.f32 0.0, %v1554
      %1556 = vmatmul.bf16.gmra.mxu0 %v1466
      %v1557 = vpop.f32.mrf.mxu0
      %v1558 = vadd.f32 0.0, %v1557
      %v1559 = vpop.f32.mrf.mxu0
      %v1560 = vadd.f32 0.0, %v1559
      %1561 = vmatmul.bf16.gmra.mxu0 %v1469
      %v1562 = vpop.f32.mrf.mxu0
      %v1563 = vadd.f32 0.0, %v1562
      %v1564 = vpop.f32.mrf.mxu0
      %v1565 = vadd.f32 0.0, %v1564
      %1566 = vmatmul.bf16.gmra.mxu0 %v1472
      %v1567 = vpop.f32.mrf.mxu0
      %v1568 = vadd.f32 0.0, %v1567
      %v1569 = vpop.f32.mrf.mxu0
      %v1570 = vadd.f32 0.0, %v1569
      %1571 = vmatmul.bf16.gmra.mxu0 %v1475
      %v1572 = vpop.f32.mrf.mxu0
      %v1573 = vadd.f32 0.0, %v1572
      %v1574 = vpop.f32.mrf.mxu0
      %v1575 = vadd.f32 0.0, %v1574
      %1576 = vmatmul.bf16.gmra.mxu0 %v1478
      %v1577 = vpop.f32.mrf.mxu0
      %v1578 = vadd.f32 0.0, %v1577
      %v1579 = vpop.f32.mrf.mxu0
      %v1580 = vadd.f32 0.0, %v1579
      %1581 = vdwg.mxu0
      %v1582 = vadd.f32 %v1370, %v1493
      %v1583 = vadd.f32 %v1371, %v1495
      %v1584 = vadd.f32 %v1372, %v1498
      %v1585 = vadd.f32 %v1373, %v1500
      %v1586 = vadd.f32 %v1374, %v1503
      %v1587 = vadd.f32 %v1375, %v1505
      %v1588 = vadd.f32 %v1376, %v1508
      %v1589 = vadd.f32 %v1377, %v1510
      %v1590 = vadd.f32 %v1378, %v1513
      %v1591 = vadd.f32 %v1379, %v1515
      %v1592 = vadd.f32 %v1380, %v1518
      %v1593 = vadd.f32 %v1381, %v1520
      %v1594 = vadd.f32 %v1382, %v1523
      %v1595 = vadd.f32 %v1383, %v1525
      %v1596 = vadd.f32 %v1384, %v1528
      %v1597 = vadd.f32 %v1385, %v1530
      %v1598 = vadd.f32 %v1386, %v1533
      %v1599 = vadd.f32 %v1387, %v1535
      %v1600 = vadd.f32 %v1388, %v1538
      %v1601 = vadd.f32 %v1389, %v1540
      %v1602 = vadd.f32 %v1390, %v1543
      %v1603 = vadd.f32 %v1391, %v1545
      %v1604 = vadd.f32 %v1392, %v1548
      %v1605 = vadd.f32 %v1393, %v1550
      %v1606 = vadd.f32 %v1394, %v1553
      %v1607 = vadd.f32 %v1395, %v1555
      %v1608 = vadd.f32 %v1396, %v1558
      %v1609 = vadd.f32 %v1397, %v1560
      %v1610 = vadd.f32 %v1398, %v1563
      %v1611 = vadd.f32 %v1399, %v1565
      %v1612 = vadd.f32 %v1400, %v1568
      %v1613 = vadd.f32 %v1401, %v1570
      %v1614 = vadd.f32 %v1402, %v1573
      %v1615 = vadd.f32 %v1403, %v1575
      %v1616 = vadd.f32 %v1404, %v1578
      %v1617 = vadd.f32 %v1405, %v1580
      %v1618 = vrot.slane %v1086, 1
      %v1619 = vrot.slane %v1087, 1
      %v1620 = vrot.slane %v1088, 1
      %v1621 = vrot.slane %v1089, 1
      %v1622 = vrot.slane %v1090, 1
      %v1623 = vrot.slane %v1091, 1
      %v1624 = vrot.slane %v1092, 1
      %v1625 = vrot.slane %v1093, 1
      %v1626 = vrot.slane %v1094, 1
      %v1627 = vrot.slane %v1095, 1
      %v1628 = vrot.slane %v1096, 1
      %v1629 = vrot.slane %v1097, 1
      %v1630 = vrot.slane %v1098, 1
      %v1631 = vrot.slane %v1099, 1
      %v1632 = vrot.slane %v1100, 1
      %v1633 = vrot.slane %v1101, 1
      %v1634 = vrot.slane %v1102, 1
      %v1635 = vrot.slane %v1103, 1
      %v1636 = vrot.slane %v1104, 1
      %v1637 = vrot.slane %v1105, 1
      %v1638 = vrot.slane %v1106, 1
      %v1639 = vrot.slane %v1107, 1
      %v1640 = vrot.slane %v1108, 1
      %v1641 = vrot.slane %v1109, 1
      %v1642 = vrot.slane %v1110, 1
      %v1643 = vrot.slane %v1111, 1
      %v1644 = vrot.slane %v1112, 1
      %v1645 = vrot.slane %v1113, 1
      %v1646 = vrot.slane %v1114, 1
      %v1647 = vrot.slane %v1115, 1
      %v1648 = vrot.slane %v1116, 1
      %v1649 = vrot.slane %v1117, 1
      %v1650 = vrot.slane %v1118, 1
      %v1651 = vrot.slane %v1119, 1
      %v1652 = vrot.slane %v1120, 1
      %v1653 = vrot.slane %v1121, 1
      %v1654 = vsel %vm837, %v1652, %v1653
      %v1655 = vsel %vm837, %v1651, %v1652
      %v1656 = vsel %vm837, %v1650, %v1651
      %v1657 = vsel %vm837, %v1649, %v1650
      %v1658 = vsel %vm837, %v1648, %v1649
      %v1659 = vsel %vm837, %v1647, %v1648
      %v1660 = vsel %vm837, %v1646, %v1647
      %v1661 = vsel %vm837, %v1645, %v1646
      %v1662 = vsel %vm837, %v1644, %v1645
      %v1663 = vsel %vm837, %v1643, %v1644
      %v1664 = vsel %vm837, %v1642, %v1643
      %v1665 = vsel %vm837, %v1641, %v1642
      %v1666 = vsel %vm837, %v1640, %v1641
      %v1667 = vsel %vm837, %v1639, %v1640
      %v1668 = vsel %vm837, %v1638, %v1639
      %v1669 = vsel %vm837, %v1637, %v1638
      %v1670 = vsel %vm837, %v1636, %v1637
      %v1671 = vsel %vm837, %v1635, %v1636
      %v1672 = vsel %vm837, %v1634, %v1635
      %v1673 = vsel %vm837, %v1633, %v1634
      %v1674 = vsel %vm837, %v1632, %v1633
      %v1675 = vsel %vm837, %v1631, %v1632
      %v1676 = vsel %vm837, %v1630, %v1631
      %v1677 = vsel %vm837, %v1629, %v1630
      %v1678 = vsel %vm837, %v1628, %v1629
      %v1679 = vsel %vm837, %v1627, %v1628
      %v1680 = vsel %vm837, %v1626, %v1627
      %v1681 = vsel %vm837, %v1625, %v1626
      %v1682 = vsel %vm837, %v1624, %v1625
      %v1683 = vsel %vm837, %v1623, %v1624
      %v1684 = vsel %vm837, %v1622, %v1623
      %v1685 = vsel %vm837, %v1621, %v1622
      %v1686 = vsel %vm837, %v1620, %v1621
      %v1687 = vsel %vm837, %v1619, %v1620
      %v1688 = vsel %vm837, %v1618, %v1619
      %v1689 = vsel %vm837, %v1653, %v1618
      %v1690 = vpack.c.bf16 %v1687, %v1688
      %v1691 = vpack.c.bf16 %v1685, %v1686
      %v1692 = vpack.c.bf16 %v1683, %v1684
      %v1693 = vpack.c.bf16 %v1681, %v1682
      %v1694 = vpack.c.bf16 %v1679, %v1680
      %v1695 = vpack.c.bf16 %v1677, %v1678
      %v1696 = vpack.c.bf16 %v1675, %v1676
      %v1697 = vpack.c.bf16 %v1673, %v1674
      %v1698 = vpack.c.bf16 %v1671, %v1672
      %v1699 = vpack.c.bf16 %v1669, %v1670
      %v1700 = vpack.c.bf16 %v1667, %v1668
      %v1701 = vpack.c.bf16 %v1665, %v1666
      %v1702 = vpack.c.bf16 %v1663, %v1664
      %v1703 = vpack.c.bf16 %v1661, %v1662
      %v1704 = vpack.c.bf16 %v1659, %v1660
      %v1705 = vpack.c.bf16 %v1657, %v1658
      %v1706 = vpack.c.bf16 %v1655, %v1656
      %v1707 = vpack.c.bf16 %v1689, %v1654
      %s1708 = scalar_lea.vmem %s3, 10
      %v1709 = vld [vmem:[%s1708] sm:$0x3]
      %v1711 = vsel %vm487, %v1690, 0
      %v1714 = vsel %vm487, %v1691, 0
      %v1717 = vsel %vm487, %v1692, 0
      %v1720 = vsel %vm487, %v1693, 0
      %v1723 = vsel %vm487, %v1694, 0
      %v1726 = vsel %vm487, %v1695, 0
      %v1729 = vsel %vm487, %v1696, 0
      %v1732 = vsel %vm487, %v1697, 0
      %v1735 = vsel %vm487, %v1698, 0
      %v1738 = vsel %vm487, %v1699, 0
      %v1741 = vsel %vm487, %v1700, 0
      %v1744 = vsel %vm487, %v1701, 0
      %v1747 = vsel %vm487, %v1702, 0
      %v1750 = vsel %vm487, %v1703, 0
      %v1753 = vsel %vm487, %v1704, 0
      %v1756 = vsel %vm487, %v1705, 0
      %v1759 = vsel %vm487, %v1706, 0
      %v1762 = vsel %vm487, %v1707, 0
      %v1765 = vsel %vm542, %v1709, 0
      %1767 = vmatpush.bf16.msra.mxu0 0
      %1768 = vmatpush.bf16.msra.mxu0 0
      %1769 = vmatpush.bf16.msra.mxu0 0
      %1770 = vmatpush.bf16.msra.mxu0 0
      %1771 = vmatpush.bf16.msra.mxu0 0
      %1772 = vmatpush.bf16.msra.mxu0 0
      %1773 = vmatpush.bf16.msra.mxu0 0
      %1774 = vmatpush.bf16.msra.mxu0 %v1765
      %1775 = vmatmul.bf16.gmra.mxu0 %v1711
      %v1776 = vpop.f32.mrf.mxu0
      %v1777 = vadd.f32 0.0, %v1776
      %v1778 = vpop.f32.mrf.mxu0
      %v1779 = vadd.f32 0.0, %v1778
      %1780 = vmatmul.bf16.gmra.mxu0 %v1714
      %v1781 = vpop.f32.mrf.mxu0
      %v1782 = vadd.f32 0.0, %v1781
      %v1783 = vpop.f32.mrf.mxu0
      %v1784 = vadd.f32 0.0, %v1783
      %1785 = vmatmul.bf16.gmra.mxu0 %v1717
      %v1786 = vpop.f32.mrf.mxu0
      %v1787 = vadd.f32 0.0, %v1786
      %v1788 = vpop.f32.mrf.mxu0
      %v1789 = vadd.f32 0.0, %v1788
      %1790 = vmatmul.bf16.gmra.mxu0 %v1720
      %v1791 = vpop.f32.mrf.mxu0
      %v1792 = vadd.f32 0.0, %v1791
      %v1793 = vpop.f32.mrf.mxu0
      %v1794 = vadd.f32 0.0, %v1793
      %1795 = vmatmul.bf16.gmra.mxu0 %v1723
      %v1796 = vpop.f32.mrf.mxu0
      %v1797 = vadd.f32 0.0, %v1796
      %v1798 = vpop.f32.mrf.mxu0
      %v1799 = vadd.f32 0.0, %v1798
      %1800 = vmatmul.bf16.gmra.mxu0 %v1726
      %v1801 = vpop.f32.mrf.mxu0
      %v1802 = vadd.f32 0.0, %v1801
      %v1803 = vpop.f32.mrf.mxu0
      %v1804 = vadd.f32 0.0, %v1803
      %1805 = vmatmul.bf16.gmra.mxu0 %v1729
      %v1806 = vpop.f32.mrf.mxu0
      %v1807 = vadd.f32 0.0, %v1806
      %v1808 = vpop.f32.mrf.mxu0
      %v1809 = vadd.f32 0.0, %v1808
      %1810 = vmatmul.bf16.gmra.mxu0 %v1732
      %v1811 = vpop.f32.mrf.mxu0
      %v1812 = vadd.f32 0.0, %v1811
      %v1813 = vpop.f32.mrf.mxu0
      %v1814 = vadd.f32 0.0, %v1813
      %1815 = vmatmul.bf16.gmra.mxu0 %v1735
      %v1816 = vpop.f32.mrf.mxu0
      %v1817 = vadd.f32 0.0, %v1816
      %v1818 = vpop.f32.mrf.mxu0
      %v1819 = vadd.f32 0.0, %v1818
      %1820 = vmatmul.bf16.gmra.mxu0 %v1738
      %v1821 = vpop.f32.mrf.mxu0
      %v1822 = vadd.f32 0.0, %v1821
      %v1823 = vpop.f32.mrf.mxu0
      %v1824 = vadd.f32 0.0, %v1823
      %1825 = vmatmul.bf16.gmra.mxu0 %v1741
      %v1826 = vpop.f32.mrf.mxu0
      %v1827 = vadd.f32 0.0, %v1826
      %v1828 = vpop.f32.mrf.mxu0
      %v1829 = vadd.f32 0.0, %v1828
      %1830 = vmatmul.bf16.gmra.mxu0 %v1744
      %v1831 = vpop.f32.mrf.mxu0
      %v1832 = vadd.f32 0.0, %v1831
      %v1833 = vpop.f32.mrf.mxu0
      %v1834 = vadd.f32 0.0, %v1833
      %1835 = vmatmul.bf16.gmra.mxu0 %v1747
      %v1836 = vpop.f32.mrf.mxu0
      %v1837 = vadd.f32 0.0, %v1836
      %v1838 = vpop.f32.mrf.mxu0
      %v1839 = vadd.f32 0.0, %v1838
      %1840 = vmatmul.bf16.gmra.mxu0 %v1750
      %v1841 = vpop.f32.mrf.mxu0
      %v1842 = vadd.f32 0.0, %v1841
      %v1843 = vpop.f32.mrf.mxu0
      %v1844 = vadd.f32 0.0, %v1843
      %1845 = vmatmul.bf16.gmra.mxu0 %v1753
      %v1846 = vpop.f32.mrf.mxu0
      %v1847 = vadd.f32 0.0, %v1846
      %v1848 = vpop.f32.mrf.mxu0
      %v1849 = vadd.f32 0.0, %v1848
      %1850 = vmatmul.bf16.gmra.mxu0 %v1756
      %v1851 = vpop.f32.mrf.mxu0
      %v1852 = vadd.f32 0.0, %v1851
      %v1853 = vpop.f32.mrf.mxu0
      %v1854 = vadd.f32 0.0, %v1853
      %1855 = vmatmul.bf16.gmra.mxu0 %v1759
      %v1856 = vpop.f32.mrf.mxu0
      %v1857 = vadd.f32 0.0, %v1856
      %v1858 = vpop.f32.mrf.mxu0
      %v1859 = vadd.f32 0.0, %v1858
      %1860 = vmatmul.bf16.gmra.mxu0 %v1762
      %v1861 = vpop.f32.mrf.mxu0
      %v1862 = vadd.f32 0.0, %v1861
      %v1863 = vpop.f32.mrf.mxu0
      %v1864 = vadd.f32 0.0, %v1863
      %1865 = vdwg.mxu0
      %v1866 = vadd.f32 %v1582, %v1777
      %v1867 = vadd.f32 %v1583, %v1779
      %v1868 = vadd.f32 %v1584, %v1782
      %v1869 = vadd.f32 %v1585, %v1784
      %v1870 = vadd.f32 %v1586, %v1787
      %v1871 = vadd.f32 %v1587, %v1789
      %v1872 = vadd.f32 %v1588, %v1792
      %v1873 = vadd.f32 %v1589, %v1794
      %v1874 = vadd.f32 %v1590, %v1797
      %v1875 = vadd.f32 %v1591, %v1799
      %v1876 = vadd.f32 %v1592, %v1802
      %v1877 = vadd.f32 %v1593, %v1804
      %v1878 = vadd.f32 %v1594, %v1807
      %v1879 = vadd.f32 %v1595, %v1809
      %v1880 = vadd.f32 %v1596, %v1812
      %v1881 = vadd.f32 %v1597, %v1814
      %v1882 = vadd.f32 %v1598, %v1817
      %v1883 = vadd.f32 %v1599, %v1819
      %v1884 = vadd.f32 %v1600, %v1822
      %v1885 = vadd.f32 %v1601, %v1824
      %v1886 = vadd.f32 %v1602, %v1827
      %v1887 = vadd.f32 %v1603, %v1829
      %v1888 = vadd.f32 %v1604, %v1832
      %v1889 = vadd.f32 %v1605, %v1834
      %v1890 = vadd.f32 %v1606, %v1837
      %v1891 = vadd.f32 %v1607, %v1839
      %v1892 = vadd.f32 %v1608, %v1842
      %v1893 = vadd.f32 %v1609, %v1844
      %v1894 = vadd.f32 %v1610, %v1847
      %v1895 = vadd.f32 %v1611, %v1849
      %v1896 = vadd.f32 %v1612, %v1852
      %v1897 = vadd.f32 %v1613, %v1854
      %v1898 = vadd.f32 %v1614, %v1857
      %v1899 = vadd.f32 %v1615, %v1859
      %v1900 = vadd.f32 %v1616, %v1862
      %v1901 = vadd.f32 %v1617, %v1864
      %v1902 = vld [vmem:[%s324] sm:$0xff]
      %v1903 = vld [vmem:[%s324 + $0x8] sm:$0xff]
      %v1904 = vld [vmem:[%s324 + $0x10] sm:$0xff]
      %v1905 = vld [vmem:[%s324 + $0x18] sm:$0xff]
      %v1906 = vld [vmem:[%s324 + $0x20] sm:$0xff]
      %v1907 = vld [vmem:[%s324 + $0x28] sm:$0xff]
      %v1908 = vld [vmem:[%s324 + $0x30] sm:$0xff]
      %v1909 = vld [vmem:[%s324 + $0x38] sm:$0xff]
      %v1910 = vld [vmem:[%s324 + $0x40] sm:$0xff]
      %v1911 = vld [vmem:[%s324 + $0x48] sm:$0xff]
      %v1912 = vld [vmem:[%s324 + $0x50] sm:$0xff]
      %v1913 = vld [vmem:[%s324 + $0x58] sm:$0xff]
      %v1914 = vld [vmem:[%s324 + $0x60] sm:$0xff]
      %v1915 = vld [vmem:[%s324 + $0x68] sm:$0xff]
      %v1916 = vld [vmem:[%s324 + $0x70] sm:$0xff]
      %v1917 = vld [vmem:[%s324 + $0x78] sm:$0xff]
      %v1918 = vld [vmem:[%s324 + $0x80] sm:$0xff]
      %v1919 = vld [vmem:[%s324 + $0x88] sm:$0xff]
      %v1920 = vld [vmem:[%s324 + $0x90] sm:$0xff]
      %v1921 = vld [vmem:[%s324 + $0x98] sm:$0xff]
      %v1922 = vld [vmem:[%s324 + $0xa0] sm:$0xff]
      %v1923 = vld [vmem:[%s324 + $0xa8] sm:$0xff]
      %v1924 = vld [vmem:[%s324 + $0xb0] sm:$0xff]
      %v1925 = vld [vmem:[%s324 + $0xb8] sm:$0xff]
      %v1926 = vld [vmem:[%s324 + $0xc0] sm:$0xff]
      %v1927 = vld [vmem:[%s324 + $0xc8] sm:$0xff]
      %v1928 = vld [vmem:[%s324 + $0xd0] sm:$0xff]
      %v1929 = vld [vmem:[%s324 + $0xd8] sm:$0xff]
      %v1930 = vld [vmem:[%s324 + $0xe0] sm:$0xff]
      %v1931 = vld [vmem:[%s324 + $0xe8] sm:$0xff]
      %v1932 = vld [vmem:[%s324 + $0xf0] sm:$0xff]
      %v1933 = vld [vmem:[%s324 + $0xf8] sm:$0xff]
      %v1934 = vld [vmem:[%s324 + $0x100] sm:$0xff]
      %v1935 = vld [vmem:[%s324 + $0x108] sm:$0xff]
      %v1936 = vld [vmem:[%s324 + $0x110] sm:$0xff]
      %v1937 = vld [vmem:[%s324 + $0x118] sm:$0xff]
      %v1938 = vrot.slane %v1902, 7
      %v1939 = vrot.slane %v1903, 7
      %v1940 = vrot.slane %v1904, 7
      %v1941 = vrot.slane %v1905, 7
      %v1942 = vrot.slane %v1906, 7
      %v1943 = vrot.slane %v1907, 7
      %v1944 = vrot.slane %v1908, 7
      %v1945 = vrot.slane %v1909, 7
      %v1946 = vrot.slane %v1910, 7
      %v1947 = vrot.slane %v1911, 7
      %v1948 = vrot.slane %v1912, 7
      %v1949 = vrot.slane %v1913, 7
      %v1950 = vrot.slane %v1914, 7
      %v1951 = vrot.slane %v1915, 7
      %v1952 = vrot.slane %v1916, 7
      %v1953 = vrot.slane %v1917, 7
      %v1954 = vrot.slane %v1918, 7
      %v1955 = vrot.slane %v1919, 7
      %v1956 = vrot.slane %v1920, 7
      %v1957 = vrot.slane %v1921, 7
      %v1958 = vrot.slane %v1922, 7
      %v1959 = vrot.slane %v1923, 7
      %v1960 = vrot.slane %v1924, 7
      %v1961 = vrot.slane %v1925, 7
      %v1962 = vrot.slane %v1926, 7
      %v1963 = vrot.slane %v1927, 7
      %v1964 = vrot.slane %v1928, 7
      %v1965 = vrot.slane %v1929, 7
      %v1966 = vrot.slane %v1930, 7
      %v1967 = vrot.slane %v1931, 7
      %v1968 = vrot.slane %v1932, 7
      %v1969 = vrot.slane %v1933, 7
      %v1970 = vrot.slane %v1934, 7
      %v1971 = vrot.slane %v1935, 7
      %v1972 = vrot.slane %v1936, 7
      %v1973 = vrot.slane %v1937, 7
      %v1974 = vsel %vm411, %v1972, %v1973
      %v1975 = vsel %vm411, %v1971, %v1972
      %v1976 = vsel %vm411, %v1970, %v1971
      %v1977 = vsel %vm411, %v1969, %v1970
      %v1978 = vsel %vm411, %v1968, %v1969
      %v1979 = vsel %vm411, %v1967, %v1968
      %v1980 = vsel %vm411, %v1966, %v1967
      %v1981 = vsel %vm411, %v1965, %v1966
      %v1982 = vsel %vm411, %v1964, %v1965
      %v1983 = vsel %vm411, %v1963, %v1964
      %v1984 = vsel %vm411, %v1962, %v1963
      %v1985 = vsel %vm411, %v1961, %v1962
      %v1986 = vsel %vm411, %v1960, %v1961
      %v1987 = vsel %vm411, %v1959, %v1960
      %v1988 = vsel %vm411, %v1958, %v1959
      %v1989 = vsel %vm411, %v1957, %v1958
      %v1990 = vsel %vm411, %v1956, %v1957
      %v1991 = vsel %vm411, %v1955, %v1956
      %v1992 = vsel %vm411, %v1954, %v1955
      %v1993 = vsel %vm411, %v1953, %v1954
      %v1994 = vsel %vm411, %v1952, %v1953
      %v1995 = vsel %vm411, %v1951, %v1952
      %v1996 = vsel %vm411, %v1950, %v1951
      %v1997 = vsel %vm411, %v1949, %v1950
      %v1998 = vsel %vm411, %v1948, %v1949
      %v1999 = vsel %vm411, %v1947, %v1948
      %v2000 = vsel %vm411, %v1946, %v1947
      %v2001 = vsel %vm411, %v1945, %v1946
      %v2002 = vsel %vm411, %v1944, %v1945
      %v2003 = vsel %vm411, %v1943, %v1944
      %v2004 = vsel %vm411, %v1942, %v1943
      %v2005 = vsel %vm411, %v1941, %v1942
      %v2006 = vsel %vm411, %v1940, %v1941
      %v2007 = vsel %vm411, %v1939, %v1940
      %v2008 = vsel %vm411, %v1938, %v1939
      %v2009 = vsel %vm411, %v1973, %v1938
      %v2010 = vpack.c.bf16 %v2008, %v2009
      %v2011 = vpack.c.bf16 %v2006, %v2007
      %v2012 = vpack.c.bf16 %v2004, %v2005
      %v2013 = vpack.c.bf16 %v2002, %v2003
      %v2014 = vpack.c.bf16 %v2000, %v2001
      %v2015 = vpack.c.bf16 %v1998, %v1999
      %v2016 = vpack.c.bf16 %v1996, %v1997
      %v2017 = vpack.c.bf16 %v1994, %v1995
      %v2018 = vpack.c.bf16 %v1992, %v1993
      %v2019 = vpack.c.bf16 %v1990, %v1991
      %v2020 = vpack.c.bf16 %v1988, %v1989
      %v2021 = vpack.c.bf16 %v1986, %v1987
      %v2022 = vpack.c.bf16 %v1984, %v1985
      %v2023 = vpack.c.bf16 %v1982, %v1983
      %v2024 = vpack.c.bf16 %v1980, %v1981
      %v2025 = vpack.c.bf16 %v1978, %v1979
      %v2026 = vpack.c.bf16 %v1976, %v1977
      %v2027 = vpack.c.bf16 %v1974, %v1975
      %s2028 = scalar_lea.vmem %s3, 12
      %v2029 = vld [vmem:[%s2028] sm:$0x3]
      %v2031 = vsel %vm487, %v2010, 0
      %v2034 = vsel %vm487, %v2011, 0
      %v2037 = vsel %vm487, %v2012, 0
      %v2040 = vsel %vm487, %v2013, 0
      %v2043 = vsel %vm487, %v2014, 0
      %v2046 = vsel %vm487, %v2015, 0
      %v2049 = vsel %vm487, %v2016, 0
      %v2052 = vsel %vm487, %v2017, 0
      %v2055 = vsel %vm487, %v2018, 0
      %v2058 = vsel %vm487, %v2019, 0
      %v2061 = vsel %vm487, %v2020, 0
      %v2064 = vsel %vm487, %v2021, 0
      %v2067 = vsel %vm487, %v2022, 0
      %v2070 = vsel %vm487, %v2023, 0
      %v2073 = vsel %vm487, %v2024, 0
      %v2076 = vsel %vm487, %v2025, 0
      %v2079 = vsel %vm487, %v2026, 0
      %v2082 = vsel %vm487, %v2027, 0
      %v2085 = vsel %vm542, %v2029, 0
      %2087 = vmatpush.bf16.msra.mxu0 0
      %2088 = vmatpush.bf16.msra.mxu0 0
      %2089 = vmatpush.bf16.msra.mxu0 0
      %2090 = vmatpush.bf16.msra.mxu0 0
      %2091 = vmatpush.bf16.msra.mxu0 0
      %2092 = vmatpush.bf16.msra.mxu0 0
      %2093 = vmatpush.bf16.msra.mxu0 0
      %2094 = vmatpush.bf16.msra.mxu0 %v2085
      %2095 = vmatmul.bf16.gmra.mxu0 %v2031
      %v2096 = vpop.f32.mrf.mxu0
      %v2097 = vadd.f32 0.0, %v2096
      %v2098 = vpop.f32.mrf.mxu0
      %v2099 = vadd.f32 0.0, %v2098
      %2100 = vmatmul.bf16.gmra.mxu0 %v2034
      %v2101 = vpop.f32.mrf.mxu0
      %v2102 = vadd.f32 0.0, %v2101
      %v2103 = vpop.f32.mrf.mxu0
      %v2104 = vadd.f32 0.0, %v2103
      %2105 = vmatmul.bf16.gmra.mxu0 %v2037
      %v2106 = vpop.f32.mrf.mxu0
      %v2107 = vadd.f32 0.0, %v2106
      %v2108 = vpop.f32.mrf.mxu0
      %v2109 = vadd.f32 0.0, %v2108
      %2110 = vmatmul.bf16.gmra.mxu0 %v2040
      %v2111 = vpop.f32.mrf.mxu0
      %v2112 = vadd.f32 0.0, %v2111
      %v2113 = vpop.f32.mrf.mxu0
      %v2114 = vadd.f32 0.0, %v2113
      %2115 = vmatmul.bf16.gmra.mxu0 %v2043
      %v2116 = vpop.f32.mrf.mxu0
      %v2117 = vadd.f32 0.0, %v2116
      %v2118 = vpop.f32.mrf.mxu0
      %v2119 = vadd.f32 0.0, %v2118
      %2120 = vmatmul.bf16.gmra.mxu0 %v2046
      %v2121 = vpop.f32.mrf.mxu0
      %v2122 = vadd.f32 0.0, %v2121
      %v2123 = vpop.f32.mrf.mxu0
      %v2124 = vadd.f32 0.0, %v2123
      %2125 = vmatmul.bf16.gmra.mxu0 %v2049
      %v2126 = vpop.f32.mrf.mxu0
      %v2127 = vadd.f32 0.0, %v2126
      %v2128 = vpop.f32.mrf.mxu0
      %v2129 = vadd.f32 0.0, %v2128
      %2130 = vmatmul.bf16.gmra.mxu0 %v2052
      %v2131 = vpop.f32.mrf.mxu0
      %v2132 = vadd.f32 0.0, %v2131
      %v2133 = vpop.f32.mrf.mxu0
      %v2134 = vadd.f32 0.0, %v2133
      %2135 = vmatmul.bf16.gmra.mxu0 %v2055
      %v2136 = vpop.f32.mrf.mxu0
      %v2137 = vadd.f32 0.0, %v2136
      %v2138 = vpop.f32.mrf.mxu0
      %v2139 = vadd.f32 0.0, %v2138
      %2140 = vmatmul.bf16.gmra.mxu0 %v2058
      %v2141 = vpop.f32.mrf.mxu0
      %v2142 = vadd.f32 0.0, %v2141
      %v2143 = vpop.f32.mrf.mxu0
      %v2144 = vadd.f32 0.0, %v2143
      %2145 = vmatmul.bf16.gmra.mxu0 %v2061
      %v2146 = vpop.f32.mrf.mxu0
      %v2147 = vadd.f32 0.0, %v2146
      %v2148 = vpop.f32.mrf.mxu0
      %v2149 = vadd.f32 0.0, %v2148
      %2150 = vmatmul.bf16.gmra.mxu0 %v2064
      %v2151 = vpop.f32.mrf.mxu0
      %v2152 = vadd.f32 0.0, %v2151
      %v2153 = vpop.f32.mrf.mxu0
      %v2154 = vadd.f32 0.0, %v2153
      %2155 = vmatmul.bf16.gmra.mxu0 %v2067
      %v2156 = vpop.f32.mrf.mxu0
      %v2157 = vadd.f32 0.0, %v2156
      %v2158 = vpop.f32.mrf.mxu0
      %v2159 = vadd.f32 0.0, %v2158
      %2160 = vmatmul.bf16.gmra.mxu0 %v2070
      %v2161 = vpop.f32.mrf.mxu0
      %v2162 = vadd.f32 0.0, %v2161
      %v2163 = vpop.f32.mrf.mxu0
      %v2164 = vadd.f32 0.0, %v2163
      %2165 = vmatmul.bf16.gmra.mxu0 %v2073
      %v2166 = vpop.f32.mrf.mxu0
      %v2167 = vadd.f32 0.0, %v2166
      %v2168 = vpop.f32.mrf.mxu0
      %v2169 = vadd.f32 0.0, %v2168
      %2170 = vmatmul.bf16.gmra.mxu0 %v2076
      %v2171 = vpop.f32.mrf.mxu0
      %v2172 = vadd.f32 0.0, %v2171
      %v2173 = vpop.f32.mrf.mxu0
      %v2174 = vadd.f32 0.0, %v2173
      %2175 = vmatmul.bf16.gmra.mxu0 %v2079
      %v2176 = vpop.f32.mrf.mxu0
      %v2177 = vadd.f32 0.0, %v2176
      %v2178 = vpop.f32.mrf.mxu0
      %v2179 = vadd.f32 0.0, %v2178
      %2180 = vmatmul.bf16.gmra.mxu0 %v2082
      %v2181 = vpop.f32.mrf.mxu0
      %v2182 = vadd.f32 0.0, %v2181
      %v2183 = vpop.f32.mrf.mxu0
      %v2184 = vadd.f32 0.0, %v2183
      %2185 = vdwg.mxu0
      %v2186 = vadd.f32 %v1866, %v2097
      %v2187 = vadd.f32 %v1867, %v2099
      %v2188 = vadd.f32 %v1868, %v2102
      %v2189 = vadd.f32 %v1869, %v2104
      %v2190 = vadd.f32 %v1870, %v2107
      %v2191 = vadd.f32 %v1871, %v2109
      %v2192 = vadd.f32 %v1872, %v2112
      %v2193 = vadd.f32 %v1873, %v2114
      %v2194 = vadd.f32 %v1874, %v2117
      %v2195 = vadd.f32 %v1875, %v2119
      %v2196 = vadd.f32 %v1876, %v2122
      %v2197 = vadd.f32 %v1877, %v2124
      %v2198 = vadd.f32 %v1878, %v2127
      %v2199 = vadd.f32 %v1879, %v2129
      %v2200 = vadd.f32 %v1880, %v2132
      %v2201 = vadd.f32 %v1881, %v2134
      %v2202 = vadd.f32 %v1882, %v2137
      %v2203 = vadd.f32 %v1883, %v2139
      %v2204 = vadd.f32 %v1884, %v2142
      %v2205 = vadd.f32 %v1885, %v2144
      %v2206 = vadd.f32 %v1886, %v2147
      %v2207 = vadd.f32 %v1887, %v2149
      %v2208 = vadd.f32 %v1888, %v2152
      %v2209 = vadd.f32 %v1889, %v2154
      %v2210 = vadd.f32 %v1890, %v2157
      %v2211 = vadd.f32 %v1891, %v2159
      %v2212 = vadd.f32 %v1892, %v2162
      %v2213 = vadd.f32 %v1893, %v2164
      %v2214 = vadd.f32 %v1894, %v2167
      %v2215 = vadd.f32 %v1895, %v2169
      %v2216 = vadd.f32 %v1896, %v2172
      %v2217 = vadd.f32 %v1897, %v2174
      %v2218 = vadd.f32 %v1898, %v2177
      %v2219 = vadd.f32 %v1899, %v2179
      %v2220 = vadd.f32 %v1900, %v2182
      %v2221 = vadd.f32 %v1901, %v2184
      %v2222 = vpack.c.bf16 %v1903, %v1902
      %v2223 = vpack.c.bf16 %v1905, %v1904
      %v2224 = vpack.c.bf16 %v1907, %v1906
      %v2225 = vpack.c.bf16 %v1909, %v1908
      %v2226 = vpack.c.bf16 %v1911, %v1910
      %v2227 = vpack.c.bf16 %v1913, %v1912
      %v2228 = vpack.c.bf16 %v1915, %v1914
      %v2229 = vpack.c.bf16 %v1917, %v1916
      %v2230 = vpack.c.bf16 %v1919, %v1918
      %v2231 = vpack.c.bf16 %v1921, %v1920
      %v2232 = vpack.c.bf16 %v1923, %v1922
      %v2233 = vpack.c.bf16 %v1925, %v1924
      %v2234 = vpack.c.bf16 %v1927, %v1926
      %v2235 = vpack.c.bf16 %v1929, %v1928
      %v2236 = vpack.c.bf16 %v1931, %v1930
      %v2237 = vpack.c.bf16 %v1933, %v1932
      %v2238 = vpack.c.bf16 %v1935, %v1934
      %v2239 = vpack.c.bf16 %v1937, %v1936
      %s2240 = scalar_lea.vmem %s3, 14
      %v2241 = vld [vmem:[%s2240] sm:$0x3]
      %v2243 = vsel %vm487, %v2222, 0
      %v2246 = vsel %vm487, %v2223, 0
      %v2249 = vsel %vm487, %v2224, 0
      %v2252 = vsel %vm487, %v2225, 0
      %v2255 = vsel %vm487, %v2226, 0
      %v2258 = vsel %vm487, %v2227, 0
      %v2261 = vsel %vm487, %v2228, 0
      %v2264 = vsel %vm487, %v2229, 0
      %v2267 = vsel %vm487, %v2230, 0
      %v2270 = vsel %vm487, %v2231, 0
      %v2273 = vsel %vm487, %v2232, 0
      %v2276 = vsel %vm487, %v2233, 0
      %v2279 = vsel %vm487, %v2234, 0
      %v2282 = vsel %vm487, %v2235, 0
      %v2285 = vsel %vm487, %v2236, 0
      %v2288 = vsel %vm487, %v2237, 0
      %v2291 = vsel %vm487, %v2238, 0
      %v2294 = vsel %vm487, %v2239, 0
      %v2297 = vsel %vm542, %v2241, 0
      %2299 = vmatpush.bf16.msra.mxu0 0
      %2300 = vmatpush.bf16.msra.mxu0 0
      %2301 = vmatpush.bf16.msra.mxu0 0
      %2302 = vmatpush.bf16.msra.mxu0 0
      %2303 = vmatpush.bf16.msra.mxu0 0
      %2304 = vmatpush.bf16.msra.mxu0 0
      %2305 = vmatpush.bf16.msra.mxu0 0
      %2306 = vmatpush.bf16.msra.mxu0 %v2297
      %2307 = vmatmul.bf16.gmra.mxu0 %v2243
      %v2308 = vpop.f32.mrf.mxu0
      %v2309 = vadd.f32 0.0, %v2308
      %v2310 = vpop.f32.mrf.mxu0
      %v2311 = vadd.f32 0.0, %v2310
      %2312 = vmatmul.bf16.gmra.mxu0 %v2246
      %v2313 = vpop.f32.mrf.mxu0
      %v2314 = vadd.f32 0.0, %v2313
      %v2315 = vpop.f32.mrf.mxu0
      %v2316 = vadd.f32 0.0, %v2315
      %2317 = vmatmul.bf16.gmra.mxu0 %v2249
      %v2318 = vpop.f32.mrf.mxu0
      %v2319 = vadd.f32 0.0, %v2318
      %v2320 = vpop.f32.mrf.mxu0
      %v2321 = vadd.f32 0.0, %v2320
      %2322 = vmatmul.bf16.gmra.mxu0 %v2252
      %v2323 = vpop.f32.mrf.mxu0
      %v2324 = vadd.f32 0.0, %v2323
      %v2325 = vpop.f32.mrf.mxu0
      %v2326 = vadd.f32 0.0, %v2325
      %2327 = vmatmul.bf16.gmra.mxu0 %v2255
      %v2328 = vpop.f32.mrf.mxu0
      %v2329 = vadd.f32 0.0, %v2328
      %v2330 = vpop.f32.mrf.mxu0
      %v2331 = vadd.f32 0.0, %v2330
      %2332 = vmatmul.bf16.gmra.mxu0 %v2258
      %v2333 = vpop.f32.mrf.mxu0
      %v2334 = vadd.f32 0.0, %v2333
      %v2335 = vpop.f32.mrf.mxu0
      %v2336 = vadd.f32 0.0, %v2335
      %2337 = vmatmul.bf16.gmra.mxu0 %v2261
      %v2338 = vpop.f32.mrf.mxu0
      %v2339 = vadd.f32 0.0, %v2338
      %v2340 = vpop.f32.mrf.mxu0
      %v2341 = vadd.f32 0.0, %v2340
      %2342 = vmatmul.bf16.gmra.mxu0 %v2264
      %v2343 = vpop.f32.mrf.mxu0
      %v2344 = vadd.f32 0.0, %v2343
      %v2345 = vpop.f32.mrf.mxu0
      %v2346 = vadd.f32 0.0, %v2345
      %2347 = vmatmul.bf16.gmra.mxu0 %v2267
      %v2348 = vpop.f32.mrf.mxu0
      %v2349 = vadd.f32 0.0, %v2348
      %v2350 = vpop.f32.mrf.mxu0
      %v2351 = vadd.f32 0.0, %v2350
      %2352 = vmatmul.bf16.gmra.mxu0 %v2270
      %v2353 = vpop.f32.mrf.mxu0
      %v2354 = vadd.f32 0.0, %v2353
      %v2355 = vpop.f32.mrf.mxu0
      %v2356 = vadd.f32 0.0, %v2355
      %2357 = vmatmul.bf16.gmra.mxu0 %v2273
      %v2358 = vpop.f32.mrf.mxu0
      %v2359 = vadd.f32 0.0, %v2358
      %v2360 = vpop.f32.mrf.mxu0
      %v2361 = vadd.f32 0.0, %v2360
      %2362 = vmatmul.bf16.gmra.mxu0 %v2276
      %v2363 = vpop.f32.mrf.mxu0
      %v2364 = vadd.f32 0.0, %v2363
      %v2365 = vpop.f32.mrf.mxu0
      %v2366 = vadd.f32 0.0, %v2365
      %2367 = vmatmul.bf16.gmra.mxu0 %v2279
      %v2368 = vpop.f32.mrf.mxu0
      %v2369 = vadd.f32 0.0, %v2368
      %v2370 = vpop.f32.mrf.mxu0
      %v2371 = vadd.f32 0.0, %v2370
      %2372 = vmatmul.bf16.gmra.mxu0 %v2282
      %v2373 = vpop.f32.mrf.mxu0
      %v2374 = vadd.f32 0.0, %v2373
      %v2375 = vpop.f32.mrf.mxu0
      %v2376 = vadd.f32 0.0, %v2375
      %2377 = vmatmul.bf16.gmra.mxu0 %v2285
      %v2378 = vpop.f32.mrf.mxu0
      %v2379 = vadd.f32 0.0, %v2378
      %v2380 = vpop.f32.mrf.mxu0
      %v2381 = vadd.f32 0.0, %v2380
      %2382 = vmatmul.bf16.gmra.mxu0 %v2288
      %v2383 = vpop.f32.mrf.mxu0
      %v2384 = vadd.f32 0.0, %v2383
      %v2385 = vpop.f32.mrf.mxu0
      %v2386 = vadd.f32 0.0, %v2385
      %2387 = vmatmul.bf16.gmra.mxu0 %v2291
      %v2388 = vpop.f32.mrf.mxu0
      %v2389 = vadd.f32 0.0, %v2388
      %v2390 = vpop.f32.mrf.mxu0
      %v2391 = vadd.f32 0.0, %v2390
      %2392 = vmatmul.bf16.gmra.mxu0 %v2294
      %v2393 = vpop.f32.mrf.mxu0
      %v2394 = vadd.f32 0.0, %v2393
      %v2395 = vpop.f32.mrf.mxu0
      %v2396 = vadd.f32 0.0, %v2395
      %2397 = vdwg.mxu0
      %v2398 = vadd.f32 %v2186, %v2309
      %v2399 = vadd.f32 %v2187, %v2311
      %v2400 = vadd.f32 %v2188, %v2314
      %v2401 = vadd.f32 %v2189, %v2316
      %v2402 = vadd.f32 %v2190, %v2319
      %v2403 = vadd.f32 %v2191, %v2321
      %v2404 = vadd.f32 %v2192, %v2324
      %v2405 = vadd.f32 %v2193, %v2326
      %v2406 = vadd.f32 %v2194, %v2329
      %v2407 = vadd.f32 %v2195, %v2331
      %v2408 = vadd.f32 %v2196, %v2334
      %v2409 = vadd.f32 %v2197, %v2336
      %v2410 = vadd.f32 %v2198, %v2339
      %v2411 = vadd.f32 %v2199, %v2341
      %v2412 = vadd.f32 %v2200, %v2344
      %v2413 = vadd.f32 %v2201, %v2346
      %v2414 = vadd.f32 %v2202, %v2349
      %v2415 = vadd.f32 %v2203, %v2351
      %v2416 = vadd.f32 %v2204, %v2354
      %v2417 = vadd.f32 %v2205, %v2356
      %v2418 = vadd.f32 %v2206, %v2359
      %v2419 = vadd.f32 %v2207, %v2361
      %v2420 = vadd.f32 %v2208, %v2364
      %v2421 = vadd.f32 %v2209, %v2366
      %v2422 = vadd.f32 %v2210, %v2369
      %v2423 = vadd.f32 %v2211, %v2371
      %v2424 = vadd.f32 %v2212, %v2374
      %v2425 = vadd.f32 %v2213, %v2376
      %v2426 = vadd.f32 %v2214, %v2379
      %v2427 = vadd.f32 %v2215, %v2381
      %v2428 = vadd.f32 %v2216, %v2384
      %v2429 = vadd.f32 %v2217, %v2386
      %v2430 = vadd.f32 %v2218, %v2389
      %v2431 = vadd.f32 %v2219, %v2391
      %v2432 = vadd.f32 %v2220, %v2394
      %v2433 = vadd.f32 %v2221, %v2396
      %v2434 = vrot.slane %v1902, 1
      %v2435 = vrot.slane %v1903, 1
      %v2436 = vrot.slane %v1904, 1
      %v2437 = vrot.slane %v1905, 1
      %v2438 = vrot.slane %v1906, 1
      %v2439 = vrot.slane %v1907, 1
      %v2440 = vrot.slane %v1908, 1
      %v2441 = vrot.slane %v1909, 1
      %v2442 = vrot.slane %v1910, 1
      %v2443 = vrot.slane %v1911, 1
      %v2444 = vrot.slane %v1912, 1
      %v2445 = vrot.slane %v1913, 1
      %v2446 = vrot.slane %v1914, 1
      %v2447 = vrot.slane %v1915, 1
      %v2448 = vrot.slane %v1916, 1
      %v2449 = vrot.slane %v1917, 1
      %v2450 = vrot.slane %v1918, 1
      %v2451 = vrot.slane %v1919, 1
      %v2452 = vrot.slane %v1920, 1
      %v2453 = vrot.slane %v1921, 1
      %v2454 = vrot.slane %v1922, 1
      %v2455 = vrot.slane %v1923, 1
      %v2456 = vrot.slane %v1924, 1
      %v2457 = vrot.slane %v1925, 1
      %v2458 = vrot.slane %v1926, 1
      %v2459 = vrot.slane %v1927, 1
      %v2460 = vrot.slane %v1928, 1
      %v2461 = vrot.slane %v1929, 1
      %v2462 = vrot.slane %v1930, 1
      %v2463 = vrot.slane %v1931, 1
      %v2464 = vrot.slane %v1932, 1
      %v2465 = vrot.slane %v1933, 1
      %v2466 = vrot.slane %v1934, 1
      %v2467 = vrot.slane %v1935, 1
      %v2468 = vrot.slane %v1936, 1
      %v2469 = vrot.slane %v1937, 1
      %v2470 = vsel %vm837, %v2468, %v2469
      %v2471 = vsel %vm837, %v2467, %v2468
      %v2472 = vsel %vm837, %v2466, %v2467
      %v2473 = vsel %vm837, %v2465, %v2466
      %v2474 = vsel %vm837, %v2464, %v2465
      %v2475 = vsel %vm837, %v2463, %v2464
      %v2476 = vsel %vm837, %v2462, %v2463
      %v2477 = vsel %vm837, %v2461, %v2462
      %v2478 = vsel %vm837, %v2460, %v2461
      %v2479 = vsel %vm837, %v2459, %v2460
      %v2480 = vsel %vm837, %v2458, %v2459
      %v2481 = vsel %vm837, %v2457, %v2458
      %v2482 = vsel %vm837, %v2456, %v2457
      %v2483 = vsel %vm837, %v2455, %v2456
      %v2484 = vsel %vm837, %v2454, %v2455
      %v2485 = vsel %vm837, %v2453, %v2454
      %v2486 = vsel %vm837, %v2452, %v2453
      %v2487 = vsel %vm837, %v2451, %v2452
      %v2488 = vsel %vm837, %v2450, %v2451
      %v2489 = vsel %vm837, %v2449, %v2450
      %v2490 = vsel %vm837, %v2448, %v2449
      %v2491 = vsel %vm837, %v2447, %v2448
      %v2492 = vsel %vm837, %v2446, %v2447
      %v2493 = vsel %vm837, %v2445, %v2446
      %v2494 = vsel %vm837, %v2444, %v2445
      %v2495 = vsel %vm837, %v2443, %v2444
      %v2496 = vsel %vm837, %v2442, %v2443
      %v2497 = vsel %vm837, %v2441, %v2442
      %v2498 = vsel %vm837, %v2440, %v2441
      %v2499 = vsel %vm837, %v2439, %v2440
      %v2500 = vsel %vm837, %v2438, %v2439
      %v2501 = vsel %vm837, %v2437, %v2438
      %v2502 = vsel %vm837, %v2436, %v2437
      %v2503 = vsel %vm837, %v2435, %v2436
      %v2504 = vsel %vm837, %v2434, %v2435
      %v2505 = vsel %vm837, %v2469, %v2434
      %v2506 = vpack.c.bf16 %v2503, %v2504
      %v2507 = vpack.c.bf16 %v2501, %v2502
      %v2508 = vpack.c.bf16 %v2499, %v2500
      %v2509 = vpack.c.bf16 %v2497, %v2498
      %v2510 = vpack.c.bf16 %v2495, %v2496
      %v2511 = vpack.c.bf16 %v2493, %v2494
      %v2512 = vpack.c.bf16 %v2491, %v2492
      %v2513 = vpack.c.bf16 %v2489, %v2490
      %v2514 = vpack.c.bf16 %v2487, %v2488
      %v2515 = vpack.c.bf16 %v2485, %v2486
      %v2516 = vpack.c.bf16 %v2483, %v2484
      %v2517 = vpack.c.bf16 %v2481, %v2482
      %v2518 = vpack.c.bf16 %v2479, %v2480
      %v2519 = vpack.c.bf16 %v2477, %v2478
      %v2520 = vpack.c.bf16 %v2475, %v2476
      %v2521 = vpack.c.bf16 %v2473, %v2474
      %v2522 = vpack.c.bf16 %v2471, %v2472
      %v2523 = vpack.c.bf16 %v2505, %v2470
      %s2524 = scalar_lea.vmem %s3, 16
      %v2525 = vld [vmem:[%s2524] sm:$0x3]
      %v2527 = vsel %vm487, %v2506, 0
      %v2530 = vsel %vm487, %v2507, 0
      %v2533 = vsel %vm487, %v2508, 0
      %v2536 = vsel %vm487, %v2509, 0
      %v2539 = vsel %vm487, %v2510, 0
      %v2542 = vsel %vm487, %v2511, 0
      %v2545 = vsel %vm487, %v2512, 0
      %v2548 = vsel %vm487, %v2513, 0
      %v2551 = vsel %vm487, %v2514, 0
      %v2554 = vsel %vm487, %v2515, 0
      %v2557 = vsel %vm487, %v2516, 0
      %v2560 = vsel %vm487, %v2517, 0
      %v2563 = vsel %vm487, %v2518, 0
      %v2566 = vsel %vm487, %v2519, 0
      %v2569 = vsel %vm487, %v2520, 0
      %v2572 = vsel %vm487, %v2521, 0
      %v2575 = vsel %vm487, %v2522, 0
      %v2578 = vsel %vm487, %v2523, 0
      %v2581 = vsel %vm542, %v2525, 0
      %2583 = vmatpush.bf16.msra.mxu0 0
      %2584 = vmatpush.bf16.msra.mxu0 0
      %2585 = vmatpush.bf16.msra.mxu0 0
      %2586 = vmatpush.bf16.msra.mxu0 0
      %2587 = vmatpush.bf16.msra.mxu0 0
      %2588 = vmatpush.bf16.msra.mxu0 0
      %2589 = vmatpush.bf16.msra.mxu0 0
      %2590 = vmatpush.bf16.msra.mxu0 %v2581
      %2591 = vmatmul.bf16.gmra.mxu0 %v2527
      %v2592 = vpop.f32.mrf.mxu0
      %v2593 = vadd.f32 0.0, %v2592
      %v2594 = vpop.f32.mrf.mxu0
      %v2595 = vadd.f32 0.0, %v2594
      %2596 = vmatmul.bf16.gmra.mxu0 %v2530
      %v2597 = vpop.f32.mrf.mxu0
      %v2598 = vadd.f32 0.0, %v2597
      %v2599 = vpop.f32.mrf.mxu0
      %v2600 = vadd.f32 0.0, %v2599
      %2601 = vmatmul.bf16.gmra.mxu0 %v2533
      %v2602 = vpop.f32.mrf.mxu0
      %v2603 = vadd.f32 0.0, %v2602
      %v2604 = vpop.f32.mrf.mxu0
      %v2605 = vadd.f32 0.0, %v2604
      %2606 = vmatmul.bf16.gmra.mxu0 %v2536
      %v2607 = vpop.f32.mrf.mxu0
      %v2608 = vadd.f32 0.0, %v2607
      %v2609 = vpop.f32.mrf.mxu0
      %v2610 = vadd.f32 0.0, %v2609
      %2611 = vmatmul.bf16.gmra.mxu0 %v2539
      %v2612 = vpop.f32.mrf.mxu0
      %v2613 = vadd.f32 0.0, %v2612
      %v2614 = vpop.f32.mrf.mxu0
      %v2615 = vadd.f32 0.0, %v2614
      %2616 = vmatmul.bf16.gmra.mxu0 %v2542
      %v2617 = vpop.f32.mrf.mxu0
      %v2618 = vadd.f32 0.0, %v2617
      %v2619 = vpop.f32.mrf.mxu0
      %v2620 = vadd.f32 0.0, %v2619
      %2621 = vmatmul.bf16.gmra.mxu0 %v2545
      %v2622 = vpop.f32.mrf.mxu0
      %v2623 = vadd.f32 0.0, %v2622
      %v2624 = vpop.f32.mrf.mxu0
      %v2625 = vadd.f32 0.0, %v2624
      %2626 = vmatmul.bf16.gmra.mxu0 %v2548
      %v2627 = vpop.f32.mrf.mxu0
      %v2628 = vadd.f32 0.0, %v2627
      %v2629 = vpop.f32.mrf.mxu0
      %v2630 = vadd.f32 0.0, %v2629
      %2631 = vmatmul.bf16.gmra.mxu0 %v2551
      %v2632 = vpop.f32.mrf.mxu0
      %v2633 = vadd.f32 0.0, %v2632
      %v2634 = vpop.f32.mrf.mxu0
      %v2635 = vadd.f32 0.0, %v2634
      %2636 = vmatmul.bf16.gmra.mxu0 %v2554
      %v2637 = vpop.f32.mrf.mxu0
      %v2638 = vadd.f32 0.0, %v2637
      %v2639 = vpop.f32.mrf.mxu0
      %v2640 = vadd.f32 0.0, %v2639
      %2641 = vmatmul.bf16.gmra.mxu0 %v2557
      %v2642 = vpop.f32.mrf.mxu0
      %v2643 = vadd.f32 0.0, %v2642
      %v2644 = vpop.f32.mrf.mxu0
      %v2645 = vadd.f32 0.0, %v2644
      %2646 = vmatmul.bf16.gmra.mxu0 %v2560
      %v2647 = vpop.f32.mrf.mxu0
      %v2648 = vadd.f32 0.0, %v2647
      %v2649 = vpop.f32.mrf.mxu0
      %v2650 = vadd.f32 0.0, %v2649
      %2651 = vmatmul.bf16.gmra.mxu0 %v2563
      %v2652 = vpop.f32.mrf.mxu0
      %v2653 = vadd.f32 0.0, %v2652
      %v2654 = vpop.f32.mrf.mxu0
      %v2655 = vadd.f32 0.0, %v2654
      %2656 = vmatmul.bf16.gmra.mxu0 %v2566
      %v2657 = vpop.f32.mrf.mxu0
      %v2658 = vadd.f32 0.0, %v2657
      %v2659 = vpop.f32.mrf.mxu0
      %v2660 = vadd.f32 0.0, %v2659
      %2661 = vmatmul.bf16.gmra.mxu0 %v2569
      %v2662 = vpop.f32.mrf.mxu0
      %v2663 = vadd.f32 0.0, %v2662
      %v2664 = vpop.f32.mrf.mxu0
      %v2665 = vadd.f32 0.0, %v2664
      %2666 = vmatmul.bf16.gmra.mxu0 %v2572
      %v2667 = vpop.f32.mrf.mxu0
      %v2668 = vadd.f32 0.0, %v2667
      %v2669 = vpop.f32.mrf.mxu0
      %v2670 = vadd.f32 0.0, %v2669
      %2671 = vmatmul.bf16.gmra.mxu0 %v2575
      %v2672 = vpop.f32.mrf.mxu0
      %v2673 = vadd.f32 0.0, %v2672
      %v2674 = vpop.f32.mrf.mxu0
      %v2675 = vadd.f32 0.0, %v2674
      %2676 = vmatmul.bf16.gmra.mxu0 %v2578
      %v2677 = vpop.f32.mrf.mxu0
      %v2678 = vadd.f32 0.0, %v2677
      %v2679 = vpop.f32.mrf.mxu0
      %v2680 = vadd.f32 0.0, %v2679
      %2681 = vdwg.mxu0
      %v2682 = vadd.f32 %v2398, %v2593
      %v2683 = vadd.f32 %v2399, %v2595
      %v2684 = vadd.f32 %v2400, %v2598
      %v2685 = vadd.f32 %v2401, %v2600
      %v2686 = vadd.f32 %v2402, %v2603
      %v2687 = vadd.f32 %v2403, %v2605
      %v2688 = vadd.f32 %v2404, %v2608
      %v2689 = vadd.f32 %v2405, %v2610
      %v2690 = vadd.f32 %v2406, %v2613
      %v2691 = vadd.f32 %v2407, %v2615
      %v2692 = vadd.f32 %v2408, %v2618
      %v2693 = vadd.f32 %v2409, %v2620
      %v2694 = vadd.f32 %v2410, %v2623
      %v2695 = vadd.f32 %v2411, %v2625
      %v2696 = vadd.f32 %v2412, %v2628
      %v2697 = vadd.f32 %v2413, %v2630
      %v2698 = vadd.f32 %v2414, %v2633
      %v2699 = vadd.f32 %v2415, %v2635
      %v2700 = vadd.f32 %v2416, %v2638
      %v2701 = vadd.f32 %v2417, %v2640
      %v2702 = vadd.f32 %v2418, %v2643
      %v2703 = vadd.f32 %v2419, %v2645
      %v2704 = vadd.f32 %v2420, %v2648
      %v2705 = vadd.f32 %v2421, %v2650
      %v2706 = vadd.f32 %v2422, %v2653
      %v2707 = vadd.f32 %v2423, %v2655
      %v2708 = vadd.f32 %v2424, %v2658
      %v2709 = vadd.f32 %v2425, %v2660
      %v2710 = vadd.f32 %v2426, %v2663
      %v2711 = vadd.f32 %v2427, %v2665
      %v2712 = vadd.f32 %v2428, %v2668
      %v2713 = vadd.f32 %v2429, %v2670
      %v2714 = vadd.f32 %v2430, %v2673
      %v2715 = vadd.f32 %v2431, %v2675
      %v2716 = vadd.f32 %v2432, %v2678
      %v2717 = vadd.f32 %v2433, %v2680
      %v2718 = vld [vmem:[%s4] sm:$0x1]
      %v2720 = vperm.slane %v2718, 0
      %v2722 = vadd.f32 %v2682, %v2720
      %v2723 = vadd.f32 %v2683, %v2720
      %v2724 = vadd.f32 %v2684, %v2720
      %v2725 = vadd.f32 %v2685, %v2720
      %v2726 = vadd.f32 %v2686, %v2720
      %v2727 = vadd.f32 %v2687, %v2720
      %v2728 = vadd.f32 %v2688, %v2720
      %v2729 = vadd.f32 %v2689, %v2720
      %v2730 = vadd.f32 %v2690, %v2720
      %v2731 = vadd.f32 %v2691, %v2720
      %v2732 = vadd.f32 %v2692, %v2720
      %v2733 = vadd.f32 %v2693, %v2720
      %v2734 = vadd.f32 %v2694, %v2720
      %v2735 = vadd.f32 %v2695, %v2720
      %v2736 = vadd.f32 %v2696, %v2720
      %v2737 = vadd.f32 %v2697, %v2720
      %v2738 = vadd.f32 %v2698, %v2720
      %v2739 = vadd.f32 %v2699, %v2720
      %v2740 = vadd.f32 %v2700, %v2720
      %v2741 = vadd.f32 %v2701, %v2720
      %v2742 = vadd.f32 %v2702, %v2720
      %v2743 = vadd.f32 %v2703, %v2720
      %v2744 = vadd.f32 %v2704, %v2720
      %v2745 = vadd.f32 %v2705, %v2720
      %v2746 = vadd.f32 %v2706, %v2720
      %v2747 = vadd.f32 %v2707, %v2720
      %v2748 = vadd.f32 %v2708, %v2720
      %v2749 = vadd.f32 %v2709, %v2720
      %v2750 = vadd.f32 %v2710, %v2720
      %v2751 = vadd.f32 %v2711, %v2720
      %v2752 = vadd.f32 %v2712, %v2720
      %v2753 = vadd.f32 %v2713, %v2720
      %v2754 = vadd.f32 %v2714, %v2720
      %v2755 = vadd.f32 %v2715, %v2720
      %v2756 = vadd.f32 %v2716, %v2720
      %v2757 = vadd.f32 %v2717, %v2720
      %v2758 = vmax.f32 %v2722, 0.0
      %v2759 = vmax.f32 %v2723, 0.0
      %v2760 = vmax.f32 %v2724, 0.0
      %v2761 = vmax.f32 %v2725, 0.0
      %v2762 = vmax.f32 %v2726, 0.0
      %v2763 = vmax.f32 %v2727, 0.0
      %v2764 = vmax.f32 %v2728, 0.0
      %v2765 = vmax.f32 %v2729, 0.0
      %v2766 = vmax.f32 %v2730, 0.0
      %v2767 = vmax.f32 %v2731, 0.0
      %v2768 = vmax.f32 %v2732, 0.0
      %v2769 = vmax.f32 %v2733, 0.0
      %v2770 = vmax.f32 %v2734, 0.0
      %v2771 = vmax.f32 %v2735, 0.0
      %v2772 = vmax.f32 %v2736, 0.0
      %v2773 = vmax.f32 %v2737, 0.0
      %v2774 = vmax.f32 %v2738, 0.0
      %v2775 = vmax.f32 %v2739, 0.0
      %v2776 = vmax.f32 %v2740, 0.0
      %v2777 = vmax.f32 %v2741, 0.0
      %v2778 = vmax.f32 %v2742, 0.0
      %v2779 = vmax.f32 %v2743, 0.0
      %v2780 = vmax.f32 %v2744, 0.0
      %v2781 = vmax.f32 %v2745, 0.0
      %v2782 = vmax.f32 %v2746, 0.0
      %v2783 = vmax.f32 %v2747, 0.0
      %v2784 = vmax.f32 %v2748, 0.0
      %v2785 = vmax.f32 %v2749, 0.0
      %v2786 = vmax.f32 %v2750, 0.0
      %v2787 = vmax.f32 %v2751, 0.0
      %v2788 = vmax.f32 %v2752, 0.0
      %v2789 = vmax.f32 %v2753, 0.0
      %v2790 = vmax.f32 %v2754, 0.0
      %v2791 = vmax.f32 %v2755, 0.0
      %v2792 = vmax.f32 %v2756, 0.0
      %v2793 = vmax.f32 %v2757, 0.0
      %v2794 = vadd.s32 %v410, 8
      %v2795 = vadd.s32 %v410, 16
      %v2796 = vadd.s32 %v410, 24
      %v2797 = vadd.s32 %v410, 32
      %v2798 = vadd.s32 %v410, 40
      %v2799 = vadd.s32 %v410, 48
      %v2800 = vadd.s32 %v410, 56
      %v2801 = vadd.s32 %v410, 64
      %v2802 = vadd.s32 %v410, 72
      %v2803 = vadd.s32 %v410, 80
      %v2804 = vadd.s32 %v410, 88
      %v2805 = vadd.s32 %v410, 96
      %v2806 = vadd.s32 %v410, 104
      %v2807 = vadd.s32 %v410, 112
      %v2808 = vadd.s32 %v410, 120
      %v2809 = vadd.s32 %v410, 128
      %v2810 = vadd.s32 %v410, 136
      %v2811 = vadd.s32 %v410, 144
      %v2812 = vadd.s32 %v410, 152
      %v2813 = vadd.s32 %v410, 160
      %v2814 = vadd.s32 %v410, 168
      %v2815 = vadd.s32 %v410, 176
      %v2816 = vadd.s32 %v410, 184
      %v2817 = vadd.s32 %v410, 192
      %v2818 = vadd.s32 %v410, 200
      %v2819 = vadd.s32 %v410, 208
      %v2820 = vadd.s32 %v410, 216
      %v2821 = vadd.s32 %v410, 224
      %v2822 = vadd.s32 %v410, 232
      %v2823 = vadd.s32 %v410, 240
      %v2824 = vadd.s32 %v410, 248
      %v2825 = vadd.s32 %v410, 256
      %v2826 = vadd.s32 %v410, 264
      %v2827 = vadd.s32 %v410, 272
      %v2828 = vadd.s32 %v410, 280
      %vm2829 = vcmp.lt.s32.totalorder %v410, 0
      %v2830 = vsub.s32 0, %v410
      %v2831 = vsel %vm2829, %v2830, %v410
      %v2832 = vand.u32 %v2831, 65535
      %v2833 = vshrl.u32 %v2831, 16
      %v2835 = vmul.u32 %v2832, 14564
      %v2836 = vmul.u32 %v2832, 58254
      %v2837 = vmul.u32 %v2833, 14564
      %v2838 = vmul.u32 %v2833, 58254
      %v2839 = vshll.u32 %v2836, 16
      %v2840 = vshrl.u32 %v2836, 16
      %v2841 = vshll.u32 %v2837, 16
      %v2842 = vshrl.u32 %v2837, 16
      %vm2843 = vc.u32 %v2835, %v2839
      %v2844 = vsel %vm2843, 1, 0
      %v2845 = vadd.s32 %v2835, %v2839
      %v2846 = vadd.s32 %v2838, %v2844
      %vm2847 = vc.u32 %v2845, %v2841
      %v2848 = vsel %vm2847, 1, 0
      %v2849 = vadd.s32 %v2845, %v2841
      %v2850 = vadd.s32 %v2846, %v2848
      %v2851 = vadd.s32 %v2850, %v2840
      %v2852 = vadd.s32 %v2851, %v2842
      %v2853 = vshrl.u32 %v2852, 4
      %v2854 = vmul.u32 %v2853, 18
      %v2855 = vsub.s32 %v2831, %v2854
      %v2856 = vsub.s32 0, %v2855
      %v2857 = vsel %vm2829, %v2856, %v2855
      %vm2858 = vcmp.lt.s32.totalorder %v2794, 0
      %v2859 = vsub.s32 0, %v2794
      %v2860 = vsel %vm2858, %v2859, %v2794
      %v2861 = vand.u32 %v2860, 65535
      %v2862 = vshrl.u32 %v2860, 16
      %v2864 = vmul.u32 %v2861, 14564
      %v2865 = vmul.u32 %v2861, 58254
      %v2866 = vmul.u32 %v2862, 14564
      %v2867 = vmul.u32 %v2862, 58254
      %v2868 = vshll.u32 %v2865, 16
      %v2869 = vshrl.u32 %v2865, 16
      %v2870 = vshll.u32 %v2866, 16
      %v2871 = vshrl.u32 %v2866, 16
      %vm2872 = vc.u32 %v2864, %v2868
      %v2873 = vsel %vm2872, 1, 0
      %v2874 = vadd.s32 %v2864, %v2868
      %v2875 = vadd.s32 %v2867, %v2873
      %vm2876 = vc.u32 %v2874, %v2870
      %v2877 = vsel %vm2876, 1, 0
      %v2878 = vadd.s32 %v2874, %v2870
      %v2879 = vadd.s32 %v2875, %v2877
      %v2880 = vadd.s32 %v2879, %v2869
      %v2881 = vadd.s32 %v2880, %v2871
      %v2882 = vshrl.u32 %v2881, 4
      %v2883 = vmul.u32 %v2882, 18
      %v2884 = vsub.s32 %v2860, %v2883
      %v2885 = vsub.s32 0, %v2884
      %v2886 = vsel %vm2858, %v2885, %v2884
      %vm2887 = vcmp.lt.s32.totalorder %v2795, 0
      %v2888 = vsub.s32 0, %v2795
      %v2889 = vsel %vm2887, %v2888, %v2795
      %v2890 = vand.u32 %v2889, 65535
      %v2891 = vshrl.u32 %v2889, 16
      %v2893 = vmul.u32 %v2890, 14564
      %v2894 = vmul.u32 %v2890, 58254
      %v2895 = vmul.u32 %v2891, 14564
      %v2896 = vmul.u32 %v2891, 58254
      %v2897 = vshll.u32 %v2894, 16
      %v2898 = vshrl.u32 %v2894, 16
      %v2899 = vshll.u32 %v2895, 16
      %v2900 = vshrl.u32 %v2895, 16
      %vm2901 = vc.u32 %v2893, %v2897
      %v2902 = vsel %vm2901, 1, 0
      %v2903 = vadd.s32 %v2893, %v2897
      %v2904 = vadd.s32 %v2896, %v2902
      %vm2905 = vc.u32 %v2903, %v2899
      %v2906 = vsel %vm2905, 1, 0
      %v2907 = vadd.s32 %v2903, %v2899
      %v2908 = vadd.s32 %v2904, %v2906
      %v2909 = vadd.s32 %v2908, %v2898
      %v2910 = vadd.s32 %v2909, %v2900
      %v2911 = vshrl.u32 %v2910, 4
      %v2912 = vmul.u32 %v2911, 18
      %v2913 = vsub.s32 %v2889, %v2912
      %v2914 = vsub.s32 0, %v2913
      %v2915 = vsel %vm2887, %v2914, %v2913
      %vm2916 = vcmp.lt.s32.totalorder %v2796, 0
      %v2917 = vsub.s32 0, %v2796
      %v2918 = vsel %vm2916, %v2917, %v2796
      %v2919 = vand.u32 %v2918, 65535
      %v2920 = vshrl.u32 %v2918, 16
      %v2922 = vmul.u32 %v2919, 14564
      %v2923 = vmul.u32 %v2919, 58254
      %v2924 = vmul.u32 %v2920, 14564
      %v2925 = vmul.u32 %v2920, 58254
      %v2926 = vshll.u32 %v2923, 16
      %v2927 = vshrl.u32 %v2923, 16
      %v2928 = vshll.u32 %v2924, 16
      %v2929 = vshrl.u32 %v2924, 16
      %vm2930 = vc.u32 %v2922, %v2926
      %v2931 = vsel %vm2930, 1, 0
      %v2932 = vadd.s32 %v2922, %v2926
      %v2933 = vadd.s32 %v2925, %v2931
      %vm2934 = vc.u32 %v2932, %v2928
      %v2935 = vsel %vm2934, 1, 0
      %v2936 = vadd.s32 %v2932, %v2928
      %v2937 = vadd.s32 %v2933, %v2935
      %v2938 = vadd.s32 %v2937, %v2927
      %v2939 = vadd.s32 %v2938, %v2929
      %v2940 = vshrl.u32 %v2939, 4
      %v2941 = vmul.u32 %v2940, 18
      %v2942 = vsub.s32 %v2918, %v2941
      %v2943 = vsub.s32 0, %v2942
      %v2944 = vsel %vm2916, %v2943, %v2942
      %vm2945 = vcmp.lt.s32.totalorder %v2797, 0
      %v2946 = vsub.s32 0, %v2797
      %v2947 = vsel %vm2945, %v2946, %v2797
      %v2948 = vand.u32 %v2947, 65535
      %v2949 = vshrl.u32 %v2947, 16
      %v2951 = vmul.u32 %v2948, 14564
      %v2952 = vmul.u32 %v2948, 58254
      %v2953 = vmul.u32 %v2949, 14564
      %v2954 = vmul.u32 %v2949, 58254
      %v2955 = vshll.u32 %v2952, 16
      %v2956 = vshrl.u32 %v2952, 16
      %v2957 = vshll.u32 %v2953, 16
      %v2958 = vshrl.u32 %v2953, 16
      %vm2959 = vc.u32 %v2951, %v2955
      %v2960 = vsel %vm2959, 1, 0
      %v2961 = vadd.s32 %v2951, %v2955
      %v2962 = vadd.s32 %v2954, %v2960
      %vm2963 = vc.u32 %v2961, %v2957
      %v2964 = vsel %vm2963, 1, 0
      %v2965 = vadd.s32 %v2961, %v2957
      %v2966 = vadd.s32 %v2962, %v2964
      %v2967 = vadd.s32 %v2966, %v2956
      %v2968 = vadd.s32 %v2967, %v2958
      %v2969 = vshrl.u32 %v2968, 4
      %v2970 = vmul.u32 %v2969, 18
      %v2971 = vsub.s32 %v2947, %v2970
      %v2972 = vsub.s32 0, %v2971
      %v2973 = vsel %vm2945, %v2972, %v2971
      %vm2974 = vcmp.lt.s32.totalorder %v2798, 0
      %v2975 = vsub.s32 0, %v2798
      %v2976 = vsel %vm2974, %v2975, %v2798
      %v2977 = vand.u32 %v2976, 65535
      %v2978 = vshrl.u32 %v2976, 16
      %v2980 = vmul.u32 %v2977, 14564
      %v2981 = vmul.u32 %v2977, 58254
      %v2982 = vmul.u32 %v2978, 14564
      %v2983 = vmul.u32 %v2978, 58254
      %v2984 = vshll.u32 %v2981, 16
      %v2985 = vshrl.u32 %v2981, 16
      %v2986 = vshll.u32 %v2982, 16
      %v2987 = vshrl.u32 %v2982, 16
      %vm2988 = vc.u32 %v2980, %v2984
      %v2989 = vsel %vm2988, 1, 0
      %v2990 = vadd.s32 %v2980, %v2984
      %v2991 = vadd.s32 %v2983, %v2989
      %vm2992 = vc.u32 %v2990, %v2986
      %v2993 = vsel %vm2992, 1, 0
      %v2994 = vadd.s32 %v2990, %v2986
      %v2995 = vadd.s32 %v2991, %v2993
      %v2996 = vadd.s32 %v2995, %v2985
      %v2997 = vadd.s32 %v2996, %v2987
      %v2998 = vshrl.u32 %v2997, 4
      %v2999 = vmul.u32 %v2998, 18
      %v3000 = vsub.s32 %v2976, %v2999
      %v3001 = vsub.s32 0, %v3000
      %v3002 = vsel %vm2974, %v3001, %v3000
      %vm3003 = vcmp.lt.s32.totalorder %v2799, 0
      %v3004 = vsub.s32 0, %v2799
      %v3005 = vsel %vm3003, %v3004, %v2799
      %v3006 = vand.u32 %v3005, 65535
      %v3007 = vshrl.u32 %v3005, 16
      %v3009 = vmul.u32 %v3006, 14564
      %v3010 = vmul.u32 %v3006, 58254
      %v3011 = vmul.u32 %v3007, 14564
      %v3012 = vmul.u32 %v3007, 58254
      %v3013 = vshll.u32 %v3010, 16
      %v3014 = vshrl.u32 %v3010, 16
      %v3015 = vshll.u32 %v3011, 16
      %v3016 = vshrl.u32 %v3011, 16
      %vm3017 = vc.u32 %v3009, %v3013
      %v3018 = vsel %vm3017, 1, 0
      %v3019 = vadd.s32 %v3009, %v3013
      %v3020 = vadd.s32 %v3012, %v3018
      %vm3021 = vc.u32 %v3019, %v3015
      %v3022 = vsel %vm3021, 1, 0
      %v3023 = vadd.s32 %v3019, %v3015
      %v3024 = vadd.s32 %v3020, %v3022
      %v3025 = vadd.s32 %v3024, %v3014
      %v3026 = vadd.s32 %v3025, %v3016
      %v3027 = vshrl.u32 %v3026, 4
      %v3028 = vmul.u32 %v3027, 18
      %v3029 = vsub.s32 %v3005, %v3028
      %v3030 = vsub.s32 0, %v3029
      %v3031 = vsel %vm3003, %v3030, %v3029
      %vm3032 = vcmp.lt.s32.totalorder %v2800, 0
      %v3033 = vsub.s32 0, %v2800
      %v3034 = vsel %vm3032, %v3033, %v2800
      %v3035 = vand.u32 %v3034, 65535
      %v3036 = vshrl.u32 %v3034, 16
      %v3038 = vmul.u32 %v3035, 14564
      %v3039 = vmul.u32 %v3035, 58254
      %v3040 = vmul.u32 %v3036, 14564
      %v3041 = vmul.u32 %v3036, 58254
      %v3042 = vshll.u32 %v3039, 16
      %v3043 = vshrl.u32 %v3039, 16
      %v3044 = vshll.u32 %v3040, 16
      %v3045 = vshrl.u32 %v3040, 16
      %vm3046 = vc.u32 %v3038, %v3042
      %v3047 = vsel %vm3046, 1, 0
      %v3048 = vadd.s32 %v3038, %v3042
      %v3049 = vadd.s32 %v3041, %v3047
      %vm3050 = vc.u32 %v3048, %v3044
      %v3051 = vsel %vm3050, 1, 0
      %v3052 = vadd.s32 %v3048, %v3044
      %v3053 = vadd.s32 %v3049, %v3051
      %v3054 = vadd.s32 %v3053, %v3043
      %v3055 = vadd.s32 %v3054, %v3045
      %v3056 = vshrl.u32 %v3055, 4
      %v3057 = vmul.u32 %v3056, 18
      %v3058 = vsub.s32 %v3034, %v3057
      %v3059 = vsub.s32 0, %v3058
      %v3060 = vsel %vm3032, %v3059, %v3058
      %vm3061 = vcmp.lt.s32.totalorder %v2801, 0
      %v3062 = vsub.s32 0, %v2801
      %v3063 = vsel %vm3061, %v3062, %v2801
      %v3064 = vand.u32 %v3063, 65535
      %v3065 = vshrl.u32 %v3063, 16
      %v3067 = vmul.u32 %v3064, 14564
      %v3068 = vmul.u32 %v3064, 58254
      %v3069 = vmul.u32 %v3065, 14564
      %v3070 = vmul.u32 %v3065, 58254
      %v3071 = vshll.u32 %v3068, 16
      %v3072 = vshrl.u32 %v3068, 16
      %v3073 = vshll.u32 %v3069, 16
      %v3074 = vshrl.u32 %v3069, 16
      %vm3075 = vc.u32 %v3067, %v3071
      %v3076 = vsel %vm3075, 1, 0
      %v3077 = vadd.s32 %v3067, %v3071
      %v3078 = vadd.s32 %v3070, %v3076
      %vm3079 = vc.u32 %v3077, %v3073
      %v3080 = vsel %vm3079, 1, 0
      %v3081 = vadd.s32 %v3077, %v3073
      %v3082 = vadd.s32 %v3078, %v3080
      %v3083 = vadd.s32 %v3082, %v3072
      %v3084 = vadd.s32 %v3083, %v3074
      %v3085 = vshrl.u32 %v3084, 4
      %v3086 = vmul.u32 %v3085, 18
      %v3087 = vsub.s32 %v3063, %v3086
      %v3088 = vsub.s32 0, %v3087
      %v3089 = vsel %vm3061, %v3088, %v3087
      %vm3090 = vcmp.lt.s32.totalorder %v2802, 0
      %v3091 = vsub.s32 0, %v2802
      %v3092 = vsel %vm3090, %v3091, %v2802
      %v3093 = vand.u32 %v3092, 65535
      %v3094 = vshrl.u32 %v3092, 16
      %v3096 = vmul.u32 %v3093, 14564
      %v3097 = vmul.u32 %v3093, 58254
      %v3098 = vmul.u32 %v3094, 14564
      %v3099 = vmul.u32 %v3094, 58254
      %v3100 = vshll.u32 %v3097, 16
      %v3101 = vshrl.u32 %v3097, 16
      %v3102 = vshll.u32 %v3098, 16
      %v3103 = vshrl.u32 %v3098, 16
      %vm3104 = vc.u32 %v3096, %v3100
      %v3105 = vsel %vm3104, 1, 0
      %v3106 = vadd.s32 %v3096, %v3100
      %v3107 = vadd.s32 %v3099, %v3105
      %vm3108 = vc.u32 %v3106, %v3102
      %v3109 = vsel %vm3108, 1, 0
      %v3110 = vadd.s32 %v3106, %v3102
      %v3111 = vadd.s32 %v3107, %v3109
      %v3112 = vadd.s32 %v3111, %v3101
      %v3113 = vadd.s32 %v3112, %v3103
      %v3114 = vshrl.u32 %v3113, 4
      %v3115 = vmul.u32 %v3114, 18
      %v3116 = vsub.s32 %v3092, %v3115
      %v3117 = vsub.s32 0, %v3116
      %v3118 = vsel %vm3090, %v3117, %v3116
      %vm3119 = vcmp.lt.s32.totalorder %v2803, 0
      %v3120 = vsub.s32 0, %v2803
      %v3121 = vsel %vm3119, %v3120, %v2803
      %v3122 = vand.u32 %v3121, 65535
      %v3123 = vshrl.u32 %v3121, 16
      %v3125 = vmul.u32 %v3122, 14564
      %v3126 = vmul.u32 %v3122, 58254
      %v3127 = vmul.u32 %v3123, 14564
      %v3128 = vmul.u32 %v3123, 58254
      %v3129 = vshll.u32 %v3126, 16
      %v3130 = vshrl.u32 %v3126, 16
      %v3131 = vshll.u32 %v3127, 16
      %v3132 = vshrl.u32 %v3127, 16
      %vm3133 = vc.u32 %v3125, %v3129
      %v3134 = vsel %vm3133, 1, 0
      %v3135 = vadd.s32 %v3125, %v3129
      %v3136 = vadd.s32 %v3128, %v3134
      %vm3137 = vc.u32 %v3135, %v3131
      %v3138 = vsel %vm3137, 1, 0
      %v3139 = vadd.s32 %v3135, %v3131
      %v3140 = vadd.s32 %v3136, %v3138
      %v3141 = vadd.s32 %v3140, %v3130
      %v3142 = vadd.s32 %v3141, %v3132
      %v3143 = vshrl.u32 %v3142, 4
      %v3144 = vmul.u32 %v3143, 18
      %v3145 = vsub.s32 %v3121, %v3144
      %v3146 = vsub.s32 0, %v3145
      %v3147 = vsel %vm3119, %v3146, %v3145
      %vm3148 = vcmp.lt.s32.totalorder %v2804, 0
      %v3149 = vsub.s32 0, %v2804
      %v3150 = vsel %vm3148, %v3149, %v2804
      %v3151 = vand.u32 %v3150, 65535
      %v3152 = vshrl.u32 %v3150, 16
      %v3154 = vmul.u32 %v3151, 14564
      %v3155 = vmul.u32 %v3151, 58254
      %v3156 = vmul.u32 %v3152, 14564
      %v3157 = vmul.u32 %v3152, 58254
      %v3158 = vshll.u32 %v3155, 16
      %v3159 = vshrl.u32 %v3155, 16
      %v3160 = vshll.u32 %v3156, 16
      %v3161 = vshrl.u32 %v3156, 16
      %vm3162 = vc.u32 %v3154, %v3158
      %v3163 = vsel %vm3162, 1, 0
      %v3164 = vadd.s32 %v3154, %v3158
      %v3165 = vadd.s32 %v3157, %v3163
      %vm3166 = vc.u32 %v3164, %v3160
      %v3167 = vsel %vm3166, 1, 0
      %v3168 = vadd.s32 %v3164, %v3160
      %v3169 = vadd.s32 %v3165, %v3167
      %v3170 = vadd.s32 %v3169, %v3159
      %v3171 = vadd.s32 %v3170, %v3161
      %v3172 = vshrl.u32 %v3171, 4
      %v3173 = vmul.u32 %v3172, 18
      %v3174 = vsub.s32 %v3150, %v3173
      %v3175 = vsub.s32 0, %v3174
      %v3176 = vsel %vm3148, %v3175, %v3174
      %vm3177 = vcmp.lt.s32.totalorder %v2805, 0
      %v3178 = vsub.s32 0, %v2805
      %v3179 = vsel %vm3177, %v3178, %v2805
      %v3180 = vand.u32 %v3179, 65535
      %v3181 = vshrl.u32 %v3179, 16
      %v3183 = vmul.u32 %v3180, 14564
      %v3184 = vmul.u32 %v3180, 58254
      %v3185 = vmul.u32 %v3181, 14564
      %v3186 = vmul.u32 %v3181, 58254
      %v3187 = vshll.u32 %v3184, 16
      %v3188 = vshrl.u32 %v3184, 16
      %v3189 = vshll.u32 %v3185, 16
      %v3190 = vshrl.u32 %v3185, 16
      %vm3191 = vc.u32 %v3183, %v3187
      %v3192 = vsel %vm3191, 1, 0
      %v3193 = vadd.s32 %v3183, %v3187
      %v3194 = vadd.s32 %v3186, %v3192
      %vm3195 = vc.u32 %v3193, %v3189
      %v3196 = vsel %vm3195, 1, 0
      %v3197 = vadd.s32 %v3193, %v3189
      %v3198 = vadd.s32 %v3194, %v3196
      %v3199 = vadd.s32 %v3198, %v3188
      %v3200 = vadd.s32 %v3199, %v3190
      %v3201 = vshrl.u32 %v3200, 4
      %v3202 = vmul.u32 %v3201, 18
      %v3203 = vsub.s32 %v3179, %v3202
      %v3204 = vsub.s32 0, %v3203
      %v3205 = vsel %vm3177, %v3204, %v3203
      %vm3206 = vcmp.lt.s32.totalorder %v2806, 0
      %v3207 = vsub.s32 0, %v2806
      %v3208 = vsel %vm3206, %v3207, %v2806
      %v3209 = vand.u32 %v3208, 65535
      %v3210 = vshrl.u32 %v3208, 16
      %v3212 = vmul.u32 %v3209, 14564
      %v3213 = vmul.u32 %v3209, 58254
      %v3214 = vmul.u32 %v3210, 14564
      %v3215 = vmul.u32 %v3210, 58254
      %v3216 = vshll.u32 %v3213, 16
      %v3217 = vshrl.u32 %v3213, 16
      %v3218 = vshll.u32 %v3214, 16
      %v3219 = vshrl.u32 %v3214, 16
      %vm3220 = vc.u32 %v3212, %v3216
      %v3221 = vsel %vm3220, 1, 0
      %v3222 = vadd.s32 %v3212, %v3216
      %v3223 = vadd.s32 %v3215, %v3221
      %vm3224 = vc.u32 %v3222, %v3218
      %v3225 = vsel %vm3224, 1, 0
      %v3226 = vadd.s32 %v3222, %v3218
      %v3227 = vadd.s32 %v3223, %v3225
      %v3228 = vadd.s32 %v3227, %v3217
      %v3229 = vadd.s32 %v3228, %v3219
      %v3230 = vshrl.u32 %v3229, 4
      %v3231 = vmul.u32 %v3230, 18
      %v3232 = vsub.s32 %v3208, %v3231
      %v3233 = vsub.s32 0, %v3232
      %v3234 = vsel %vm3206, %v3233, %v3232
      %vm3235 = vcmp.lt.s32.totalorder %v2807, 0
      %v3236 = vsub.s32 0, %v2807
      %v3237 = vsel %vm3235, %v3236, %v2807
      %v3238 = vand.u32 %v3237, 65535
      %v3239 = vshrl.u32 %v3237, 16
      %v3241 = vmul.u32 %v3238, 14564
      %v3242 = vmul.u32 %v3238, 58254
      %v3243 = vmul.u32 %v3239, 14564
      %v3244 = vmul.u32 %v3239, 58254
      %v3245 = vshll.u32 %v3242, 16
      %v3246 = vshrl.u32 %v3242, 16
      %v3247 = vshll.u32 %v3243, 16
      %v3248 = vshrl.u32 %v3243, 16
      %vm3249 = vc.u32 %v3241, %v3245
      %v3250 = vsel %vm3249, 1, 0
      %v3251 = vadd.s32 %v3241, %v3245
      %v3252 = vadd.s32 %v3244, %v3250
      %vm3253 = vc.u32 %v3251, %v3247
      %v3254 = vsel %vm3253, 1, 0
      %v3255 = vadd.s32 %v3251, %v3247
      %v3256 = vadd.s32 %v3252, %v3254
      %v3257 = vadd.s32 %v3256, %v3246
      %v3258 = vadd.s32 %v3257, %v3248
      %v3259 = vshrl.u32 %v3258, 4
      %v3260 = vmul.u32 %v3259, 18
      %v3261 = vsub.s32 %v3237, %v3260
      %v3262 = vsub.s32 0, %v3261
      %v3263 = vsel %vm3235, %v3262, %v3261
      %vm3264 = vcmp.lt.s32.totalorder %v2808, 0
      %v3265 = vsub.s32 0, %v2808
      %v3266 = vsel %vm3264, %v3265, %v2808
      %v3267 = vand.u32 %v3266, 65535
      %v3268 = vshrl.u32 %v3266, 16
      %v3270 = vmul.u32 %v3267, 14564
      %v3271 = vmul.u32 %v3267, 58254
      %v3272 = vmul.u32 %v3268, 14564
      %v3273 = vmul.u32 %v3268, 58254
      %v3274 = vshll.u32 %v3271, 16
      %v3275 = vshrl.u32 %v3271, 16
      %v3276 = vshll.u32 %v3272, 16
      %v3277 = vshrl.u32 %v3272, 16
      %vm3278 = vc.u32 %v3270, %v3274
      %v3279 = vsel %vm3278, 1, 0
      %v3280 = vadd.s32 %v3270, %v3274
      %v3281 = vadd.s32 %v3273, %v3279
      %vm3282 = vc.u32 %v3280, %v3276
      %v3283 = vsel %vm3282, 1, 0
      %v3284 = vadd.s32 %v3280, %v3276
      %v3285 = vadd.s32 %v3281, %v3283
      %v3286 = vadd.s32 %v3285, %v3275
      %v3287 = vadd.s32 %v3286, %v3277
      %v3288 = vshrl.u32 %v3287, 4
      %v3289 = vmul.u32 %v3288, 18
      %v3290 = vsub.s32 %v3266, %v3289
      %v3291 = vsub.s32 0, %v3290
      %v3292 = vsel %vm3264, %v3291, %v3290
      %vm3293 = vcmp.lt.s32.totalorder %v2809, 0
      %v3294 = vsub.s32 0, %v2809
      %v3295 = vsel %vm3293, %v3294, %v2809
      %v3296 = vand.u32 %v3295, 65535
      %v3297 = vshrl.u32 %v3295, 16
      %v3299 = vmul.u32 %v3296, 14564
      %v3300 = vmul.u32 %v3296, 58254
      %v3301 = vmul.u32 %v3297, 14564
      %v3302 = vmul.u32 %v3297, 58254
      %v3303 = vshll.u32 %v3300, 16
      %v3304 = vshrl.u32 %v3300, 16
      %v3305 = vshll.u32 %v3301, 16
      %v3306 = vshrl.u32 %v3301, 16
      %vm3307 = vc.u32 %v3299, %v3303
      %v3308 = vsel %vm3307, 1, 0
      %v3309 = vadd.s32 %v3299, %v3303
      %v3310 = vadd.s32 %v3302, %v3308
      %vm3311 = vc.u32 %v3309, %v3305
      %v3312 = vsel %vm3311, 1, 0
      %v3313 = vadd.s32 %v3309, %v3305
      %v3314 = vadd.s32 %v3310, %v3312
      %v3315 = vadd.s32 %v3314, %v3304
      %v3316 = vadd.s32 %v3315, %v3306
      %v3317 = vshrl.u32 %v3316, 4
      %v3318 = vmul.u32 %v3317, 18
      %v3319 = vsub.s32 %v3295, %v3318
      %v3320 = vsub.s32 0, %v3319
      %v3321 = vsel %vm3293, %v3320, %v3319
      %vm3322 = vcmp.lt.s32.totalorder %v2810, 0
      %v3323 = vsub.s32 0, %v2810
      %v3324 = vsel %vm3322, %v3323, %v2810
      %v3325 = vand.u32 %v3324, 65535
      %v3326 = vshrl.u32 %v3324, 16
      %v3328 = vmul.u32 %v3325, 14564
      %v3329 = vmul.u32 %v3325, 58254
      %v3330 = vmul.u32 %v3326, 14564
      %v3331 = vmul.u32 %v3326, 58254
      %v3332 = vshll.u32 %v3329, 16
      %v3333 = vshrl.u32 %v3329, 16
      %v3334 = vshll.u32 %v3330, 16
      %v3335 = vshrl.u32 %v3330, 16
      %vm3336 = vc.u32 %v3328, %v3332
      %v3337 = vsel %vm3336, 1, 0
      %v3338 = vadd.s32 %v3328, %v3332
      %v3339 = vadd.s32 %v3331, %v3337
      %vm3340 = vc.u32 %v3338, %v3334
      %v3341 = vsel %vm3340, 1, 0
      %v3342 = vadd.s32 %v3338, %v3334
      %v3343 = vadd.s32 %v3339, %v3341
      %v3344 = vadd.s32 %v3343, %v3333
      %v3345 = vadd.s32 %v3344, %v3335
      %v3346 = vshrl.u32 %v3345, 4
      %v3347 = vmul.u32 %v3346, 18
      %v3348 = vsub.s32 %v3324, %v3347
      %v3349 = vsub.s32 0, %v3348
      %v3350 = vsel %vm3322, %v3349, %v3348
      %vm3351 = vcmp.lt.s32.totalorder %v2811, 0
      %v3352 = vsub.s32 0, %v2811
      %v3353 = vsel %vm3351, %v3352, %v2811
      %v3354 = vand.u32 %v3353, 65535
      %v3355 = vshrl.u32 %v3353, 16
      %v3357 = vmul.u32 %v3354, 14564
      %v3358 = vmul.u32 %v3354, 58254
      %v3359 = vmul.u32 %v3355, 14564
      %v3360 = vmul.u32 %v3355, 58254
      %v3361 = vshll.u32 %v3358, 16
      %v3362 = vshrl.u32 %v3358, 16
      %v3363 = vshll.u32 %v3359, 16
      %v3364 = vshrl.u32 %v3359, 16
      %vm3365 = vc.u32 %v3357, %v3361
      %v3366 = vsel %vm3365, 1, 0
      %v3367 = vadd.s32 %v3357, %v3361
      %v3368 = vadd.s32 %v3360, %v3366
      %vm3369 = vc.u32 %v3367, %v3363
      %v3370 = vsel %vm3369, 1, 0
      %v3371 = vadd.s32 %v3367, %v3363
      %v3372 = vadd.s32 %v3368, %v3370
      %v3373 = vadd.s32 %v3372, %v3362
      %v3374 = vadd.s32 %v3373, %v3364
      %v3375 = vshrl.u32 %v3374, 4
      %v3376 = vmul.u32 %v3375, 18
      %v3377 = vsub.s32 %v3353, %v3376
      %v3378 = vsub.s32 0, %v3377
      %v3379 = vsel %vm3351, %v3378, %v3377
      %vm3380 = vcmp.lt.s32.totalorder %v2812, 0
      %v3381 = vsub.s32 0, %v2812
      %v3382 = vsel %vm3380, %v3381, %v2812
      %v3383 = vand.u32 %v3382, 65535
      %v3384 = vshrl.u32 %v3382, 16
      %v3386 = vmul.u32 %v3383, 14564
      %v3387 = vmul.u32 %v3383, 58254
      %v3388 = vmul.u32 %v3384, 14564
      %v3389 = vmul.u32 %v3384, 58254
      %v3390 = vshll.u32 %v3387, 16
      %v3391 = vshrl.u32 %v3387, 16
      %v3392 = vshll.u32 %v3388, 16
      %v3393 = vshrl.u32 %v3388, 16
      %vm3394 = vc.u32 %v3386, %v3390
      %v3395 = vsel %vm3394, 1, 0
      %v3396 = vadd.s32 %v3386, %v3390
      %v3397 = vadd.s32 %v3389, %v3395
      %vm3398 = vc.u32 %v3396, %v3392
      %v3399 = vsel %vm3398, 1, 0
      %v3400 = vadd.s32 %v3396, %v3392
      %v3401 = vadd.s32 %v3397, %v3399
      %v3402 = vadd.s32 %v3401, %v3391
      %v3403 = vadd.s32 %v3402, %v3393
      %v3404 = vshrl.u32 %v3403, 4
      %v3405 = vmul.u32 %v3404, 18
      %v3406 = vsub.s32 %v3382, %v3405
      %v3407 = vsub.s32 0, %v3406
      %v3408 = vsel %vm3380, %v3407, %v3406
      %vm3409 = vcmp.lt.s32.totalorder %v2813, 0
      %v3410 = vsub.s32 0, %v2813
      %v3411 = vsel %vm3409, %v3410, %v2813
      %v3412 = vand.u32 %v3411, 65535
      %v3413 = vshrl.u32 %v3411, 16
      %v3415 = vmul.u32 %v3412, 14564
      %v3416 = vmul.u32 %v3412, 58254
      %v3417 = vmul.u32 %v3413, 14564
      %v3418 = vmul.u32 %v3413, 58254
      %v3419 = vshll.u32 %v3416, 16
      %v3420 = vshrl.u32 %v3416, 16
      %v3421 = vshll.u32 %v3417, 16
      %v3422 = vshrl.u32 %v3417, 16
      %vm3423 = vc.u32 %v3415, %v3419
      %v3424 = vsel %vm3423, 1, 0
      %v3425 = vadd.s32 %v3415, %v3419
      %v3426 = vadd.s32 %v3418, %v3424
      %vm3427 = vc.u32 %v3425, %v3421
      %v3428 = vsel %vm3427, 1, 0
      %v3429 = vadd.s32 %v3425, %v3421
      %v3430 = vadd.s32 %v3426, %v3428
      %v3431 = vadd.s32 %v3430, %v3420
      %v3432 = vadd.s32 %v3431, %v3422
      %v3433 = vshrl.u32 %v3432, 4
      %v3434 = vmul.u32 %v3433, 18
      %v3435 = vsub.s32 %v3411, %v3434
      %v3436 = vsub.s32 0, %v3435
      %v3437 = vsel %vm3409, %v3436, %v3435
      %vm3438 = vcmp.lt.s32.totalorder %v2814, 0
      %v3439 = vsub.s32 0, %v2814
      %v3440 = vsel %vm3438, %v3439, %v2814
      %v3441 = vand.u32 %v3440, 65535
      %v3442 = vshrl.u32 %v3440, 16
      %v3444 = vmul.u32 %v3441, 14564
      %v3445 = vmul.u32 %v3441, 58254
      %v3446 = vmul.u32 %v3442, 14564
      %v3447 = vmul.u32 %v3442, 58254
      %v3448 = vshll.u32 %v3445, 16
      %v3449 = vshrl.u32 %v3445, 16
      %v3450 = vshll.u32 %v3446, 16
      %v3451 = vshrl.u32 %v3446, 16
      %vm3452 = vc.u32 %v3444, %v3448
      %v3453 = vsel %vm3452, 1, 0
      %v3454 = vadd.s32 %v3444, %v3448
      %v3455 = vadd.s32 %v3447, %v3453
      %vm3456 = vc.u32 %v3454, %v3450
      %v3457 = vsel %vm3456, 1, 0
      %v3458 = vadd.s32 %v3454, %v3450
      %v3459 = vadd.s32 %v3455, %v3457
      %v3460 = vadd.s32 %v3459, %v3449
      %v3461 = vadd.s32 %v3460, %v3451
      %v3462 = vshrl.u32 %v3461, 4
      %v3463 = vmul.u32 %v3462, 18
      %v3464 = vsub.s32 %v3440, %v3463
      %v3465 = vsub.s32 0, %v3464
      %v3466 = vsel %vm3438, %v3465, %v3464
      %vm3467 = vcmp.lt.s32.totalorder %v2815, 0
      %v3468 = vsub.s32 0, %v2815
      %v3469 = vsel %vm3467, %v3468, %v2815
      %v3470 = vand.u32 %v3469, 65535
      %v3471 = vshrl.u32 %v3469, 16
      %v3473 = vmul.u32 %v3470, 14564
      %v3474 = vmul.u32 %v3470, 58254
      %v3475 = vmul.u32 %v3471, 14564
      %v3476 = vmul.u32 %v3471, 58254
      %v3477 = vshll.u32 %v3474, 16
      %v3478 = vshrl.u32 %v3474, 16
      %v3479 = vshll.u32 %v3475, 16
      %v3480 = vshrl.u32 %v3475, 16
      %vm3481 = vc.u32 %v3473, %v3477
      %v3482 = vsel %vm3481, 1, 0
      %v3483 = vadd.s32 %v3473, %v3477
      %v3484 = vadd.s32 %v3476, %v3482
      %vm3485 = vc.u32 %v3483, %v3479
      %v3486 = vsel %vm3485, 1, 0
      %v3487 = vadd.s32 %v3483, %v3479
      %v3488 = vadd.s32 %v3484, %v3486
      %v3489 = vadd.s32 %v3488, %v3478
      %v3490 = vadd.s32 %v3489, %v3480
      %v3491 = vshrl.u32 %v3490, 4
      %v3492 = vmul.u32 %v3491, 18
      %v3493 = vsub.s32 %v3469, %v3492
      %v3494 = vsub.s32 0, %v3493
      %v3495 = vsel %vm3467, %v3494, %v3493
      %vm3496 = vcmp.lt.s32.totalorder %v2816, 0
      %v3497 = vsub.s32 0, %v2816
      %v3498 = vsel %vm3496, %v3497, %v2816
      %v3499 = vand.u32 %v3498, 65535
      %v3500 = vshrl.u32 %v3498, 16
      %v3502 = vmul.u32 %v3499, 14564
      %v3503 = vmul.u32 %v3499, 58254
      %v3504 = vmul.u32 %v3500, 14564
      %v3505 = vmul.u32 %v3500, 58254
      %v3506 = vshll.u32 %v3503, 16
      %v3507 = vshrl.u32 %v3503, 16
      %v3508 = vshll.u32 %v3504, 16
      %v3509 = vshrl.u32 %v3504, 16
      %vm3510 = vc.u32 %v3502, %v3506
      %v3511 = vsel %vm3510, 1, 0
      %v3512 = vadd.s32 %v3502, %v3506
      %v3513 = vadd.s32 %v3505, %v3511
      %vm3514 = vc.u32 %v3512, %v3508
      %v3515 = vsel %vm3514, 1, 0
      %v3516 = vadd.s32 %v3512, %v3508
      %v3517 = vadd.s32 %v3513, %v3515
      %v3518 = vadd.s32 %v3517, %v3507
      %v3519 = vadd.s32 %v3518, %v3509
      %v3520 = vshrl.u32 %v3519, 4
      %v3521 = vmul.u32 %v3520, 18
      %v3522 = vsub.s32 %v3498, %v3521
      %v3523 = vsub.s32 0, %v3522
      %v3524 = vsel %vm3496, %v3523, %v3522
      %vm3525 = vcmp.lt.s32.totalorder %v2817, 0
      %v3526 = vsub.s32 0, %v2817
      %v3527 = vsel %vm3525, %v3526, %v2817
      %v3528 = vand.u32 %v3527, 65535
      %v3529 = vshrl.u32 %v3527, 16
      %v3531 = vmul.u32 %v3528, 14564
      %v3532 = vmul.u32 %v3528, 58254
      %v3533 = vmul.u32 %v3529, 14564
      %v3534 = vmul.u32 %v3529, 58254
      %v3535 = vshll.u32 %v3532, 16
      %v3536 = vshrl.u32 %v3532, 16
      %v3537 = vshll.u32 %v3533, 16
      %v3538 = vshrl.u32 %v3533, 16
      %vm3539 = vc.u32 %v3531, %v3535
      %v3540 = vsel %vm3539, 1, 0
      %v3541 = vadd.s32 %v3531, %v3535
      %v3542 = vadd.s32 %v3534, %v3540
      %vm3543 = vc.u32 %v3541, %v3537
      %v3544 = vsel %vm3543, 1, 0
      %v3545 = vadd.s32 %v3541, %v3537
      %v3546 = vadd.s32 %v3542, %v3544
      %v3547 = vadd.s32 %v3546, %v3536
      %v3548 = vadd.s32 %v3547, %v3538
      %v3549 = vshrl.u32 %v3548, 4
      %v3550 = vmul.u32 %v3549, 18
      %v3551 = vsub.s32 %v3527, %v3550
      %v3552 = vsub.s32 0, %v3551
      %v3553 = vsel %vm3525, %v3552, %v3551
      %vm3554 = vcmp.lt.s32.totalorder %v2818, 0
      %v3555 = vsub.s32 0, %v2818
      %v3556 = vsel %vm3554, %v3555, %v2818
      %v3557 = vand.u32 %v3556, 65535
      %v3558 = vshrl.u32 %v3556, 16
      %v3560 = vmul.u32 %v3557, 14564
      %v3561 = vmul.u32 %v3557, 58254
      %v3562 = vmul.u32 %v3558, 14564
      %v3563 = vmul.u32 %v3558, 58254
      %v3564 = vshll.u32 %v3561, 16
      %v3565 = vshrl.u32 %v3561, 16
      %v3566 = vshll.u32 %v3562, 16
      %v3567 = vshrl.u32 %v3562, 16
      %vm3568 = vc.u32 %v3560, %v3564
      %v3569 = vsel %vm3568, 1, 0
      %v3570 = vadd.s32 %v3560, %v3564
      %v3571 = vadd.s32 %v3563, %v3569
      %vm3572 = vc.u32 %v3570, %v3566
      %v3573 = vsel %vm3572, 1, 0
      %v3574 = vadd.s32 %v3570, %v3566
      %v3575 = vadd.s32 %v3571, %v3573
      %v3576 = vadd.s32 %v3575, %v3565
      %v3577 = vadd.s32 %v3576, %v3567
      %v3578 = vshrl.u32 %v3577, 4
      %v3579 = vmul.u32 %v3578, 18
      %v3580 = vsub.s32 %v3556, %v3579
      %v3581 = vsub.s32 0, %v3580
      %v3582 = vsel %vm3554, %v3581, %v3580
      %vm3583 = vcmp.lt.s32.totalorder %v2819, 0
      %v3584 = vsub.s32 0, %v2819
      %v3585 = vsel %vm3583, %v3584, %v2819
      %v3586 = vand.u32 %v3585, 65535
      %v3587 = vshrl.u32 %v3585, 16
      %v3589 = vmul.u32 %v3586, 14564
      %v3590 = vmul.u32 %v3586, 58254
      %v3591 = vmul.u32 %v3587, 14564
      %v3592 = vmul.u32 %v3587, 58254
      %v3593 = vshll.u32 %v3590, 16
      %v3594 = vshrl.u32 %v3590, 16
      %v3595 = vshll.u32 %v3591, 16
      %v3596 = vshrl.u32 %v3591, 16
      %vm3597 = vc.u32 %v3589, %v3593
      %v3598 = vsel %vm3597, 1, 0
      %v3599 = vadd.s32 %v3589, %v3593
      %v3600 = vadd.s32 %v3592, %v3598
      %vm3601 = vc.u32 %v3599, %v3595
      %v3602 = vsel %vm3601, 1, 0
      %v3603 = vadd.s32 %v3599, %v3595
      %v3604 = vadd.s32 %v3600, %v3602
      %v3605 = vadd.s32 %v3604, %v3594
      %v3606 = vadd.s32 %v3605, %v3596
      %v3607 = vshrl.u32 %v3606, 4
      %v3608 = vmul.u32 %v3607, 18
      %v3609 = vsub.s32 %v3585, %v3608
      %v3610 = vsub.s32 0, %v3609
      %v3611 = vsel %vm3583, %v3610, %v3609
      %vm3612 = vcmp.lt.s32.totalorder %v2820, 0
      %v3613 = vsub.s32 0, %v2820
      %v3614 = vsel %vm3612, %v3613, %v2820
      %v3615 = vand.u32 %v3614, 65535
      %v3616 = vshrl.u32 %v3614, 16
      %v3618 = vmul.u32 %v3615, 14564
      %v3619 = vmul.u32 %v3615, 58254
      %v3620 = vmul.u32 %v3616, 14564
      %v3621 = vmul.u32 %v3616, 58254
      %v3622 = vshll.u32 %v3619, 16
      %v3623 = vshrl.u32 %v3619, 16
      %v3624 = vshll.u32 %v3620, 16
      %v3625 = vshrl.u32 %v3620, 16
      %vm3626 = vc.u32 %v3618, %v3622
      %v3627 = vsel %vm3626, 1, 0
      %v3628 = vadd.s32 %v3618, %v3622
      %v3629 = vadd.s32 %v3621, %v3627
      %vm3630 = vc.u32 %v3628, %v3624
      %v3631 = vsel %vm3630, 1, 0
      %v3632 = vadd.s32 %v3628, %v3624
      %v3633 = vadd.s32 %v3629, %v3631
      %v3634 = vadd.s32 %v3633, %v3623
      %v3635 = vadd.s32 %v3634, %v3625
      %v3636 = vshrl.u32 %v3635, 4
      %v3637 = vmul.u32 %v3636, 18
      %v3638 = vsub.s32 %v3614, %v3637
      %v3639 = vsub.s32 0, %v3638
      %v3640 = vsel %vm3612, %v3639, %v3638
      %vm3641 = vcmp.lt.s32.totalorder %v2821, 0
      %v3642 = vsub.s32 0, %v2821
      %v3643 = vsel %vm3641, %v3642, %v2821
      %v3644 = vand.u32 %v3643, 65535
      %v3645 = vshrl.u32 %v3643, 16
      %v3647 = vmul.u32 %v3644, 14564
      %v3648 = vmul.u32 %v3644, 58254
      %v3649 = vmul.u32 %v3645, 14564
      %v3650 = vmul.u32 %v3645, 58254
      %v3651 = vshll.u32 %v3648, 16
      %v3652 = vshrl.u32 %v3648, 16
      %v3653 = vshll.u32 %v3649, 16
      %v3654 = vshrl.u32 %v3649, 16
      %vm3655 = vc.u32 %v3647, %v3651
      %v3656 = vsel %vm3655, 1, 0
      %v3657 = vadd.s32 %v3647, %v3651
      %v3658 = vadd.s32 %v3650, %v3656
      %vm3659 = vc.u32 %v3657, %v3653
      %v3660 = vsel %vm3659, 1, 0
      %v3661 = vadd.s32 %v3657, %v3653
      %v3662 = vadd.s32 %v3658, %v3660
      %v3663 = vadd.s32 %v3662, %v3652
      %v3664 = vadd.s32 %v3663, %v3654
      %v3665 = vshrl.u32 %v3664, 4
      %v3666 = vmul.u32 %v3665, 18
      %v3667 = vsub.s32 %v3643, %v3666
      %v3668 = vsub.s32 0, %v3667
      %v3669 = vsel %vm3641, %v3668, %v3667
      %vm3670 = vcmp.lt.s32.totalorder %v2822, 0
      %v3671 = vsub.s32 0, %v2822
      %v3672 = vsel %vm3670, %v3671, %v2822
      %v3673 = vand.u32 %v3672, 65535
      %v3674 = vshrl.u32 %v3672, 16
      %v3676 = vmul.u32 %v3673, 14564
      %v3677 = vmul.u32 %v3673, 58254
      %v3678 = vmul.u32 %v3674, 14564
      %v3679 = vmul.u32 %v3674, 58254
      %v3680 = vshll.u32 %v3677, 16
      %v3681 = vshrl.u32 %v3677, 16
      %v3682 = vshll.u32 %v3678, 16
      %v3683 = vshrl.u32 %v3678, 16
      %vm3684 = vc.u32 %v3676, %v3680
      %v3685 = vsel %vm3684, 1, 0
      %v3686 = vadd.s32 %v3676, %v3680
      %v3687 = vadd.s32 %v3679, %v3685
      %vm3688 = vc.u32 %v3686, %v3682
      %v3689 = vsel %vm3688, 1, 0
      %v3690 = vadd.s32 %v3686, %v3682
      %v3691 = vadd.s32 %v3687, %v3689
      %v3692 = vadd.s32 %v3691, %v3681
      %v3693 = vadd.s32 %v3692, %v3683
      %v3694 = vshrl.u32 %v3693, 4
      %v3695 = vmul.u32 %v3694, 18
      %v3696 = vsub.s32 %v3672, %v3695
      %v3697 = vsub.s32 0, %v3696
      %v3698 = vsel %vm3670, %v3697, %v3696
      %vm3699 = vcmp.lt.s32.totalorder %v2823, 0
      %v3700 = vsub.s32 0, %v2823
      %v3701 = vsel %vm3699, %v3700, %v2823
      %v3702 = vand.u32 %v3701, 65535
      %v3703 = vshrl.u32 %v3701, 16
      %v3705 = vmul.u32 %v3702, 14564
      %v3706 = vmul.u32 %v3702, 58254
      %v3707 = vmul.u32 %v3703, 14564
      %v3708 = vmul.u32 %v3703, 58254
      %v3709 = vshll.u32 %v3706, 16
      %v3710 = vshrl.u32 %v3706, 16
      %v3711 = vshll.u32 %v3707, 16
      %v3712 = vshrl.u32 %v3707, 16
      %vm3713 = vc.u32 %v3705, %v3709
      %v3714 = vsel %vm3713, 1, 0
      %v3715 = vadd.s32 %v3705, %v3709
      %v3716 = vadd.s32 %v3708, %v3714
      %vm3717 = vc.u32 %v3715, %v3711
      %v3718 = vsel %vm3717, 1, 0
      %v3719 = vadd.s32 %v3715, %v3711
      %v3720 = vadd.s32 %v3716, %v3718
      %v3721 = vadd.s32 %v3720, %v3710
      %v3722 = vadd.s32 %v3721, %v3712
      %v3723 = vshrl.u32 %v3722, 4
      %v3724 = vmul.u32 %v3723, 18
      %v3725 = vsub.s32 %v3701, %v3724
      %v3726 = vsub.s32 0, %v3725
      %v3727 = vsel %vm3699, %v3726, %v3725
      %vm3728 = vcmp.lt.s32.totalorder %v2824, 0
      %v3729 = vsub.s32 0, %v2824
      %v3730 = vsel %vm3728, %v3729, %v2824
      %v3731 = vand.u32 %v3730, 65535
      %v3732 = vshrl.u32 %v3730, 16
      %v3734 = vmul.u32 %v3731, 14564
      %v3735 = vmul.u32 %v3731, 58254
      %v3736 = vmul.u32 %v3732, 14564
      %v3737 = vmul.u32 %v3732, 58254
      %v3738 = vshll.u32 %v3735, 16
      %v3739 = vshrl.u32 %v3735, 16
      %v3740 = vshll.u32 %v3736, 16
      %v3741 = vshrl.u32 %v3736, 16
      %vm3742 = vc.u32 %v3734, %v3738
      %v3743 = vsel %vm3742, 1, 0
      %v3744 = vadd.s32 %v3734, %v3738
      %v3745 = vadd.s32 %v3737, %v3743
      %vm3746 = vc.u32 %v3744, %v3740
      %v3747 = vsel %vm3746, 1, 0
      %v3748 = vadd.s32 %v3744, %v3740
      %v3749 = vadd.s32 %v3745, %v3747
      %v3750 = vadd.s32 %v3749, %v3739
      %v3751 = vadd.s32 %v3750, %v3741
      %v3752 = vshrl.u32 %v3751, 4
      %v3753 = vmul.u32 %v3752, 18
      %v3754 = vsub.s32 %v3730, %v3753
      %v3755 = vsub.s32 0, %v3754
      %v3756 = vsel %vm3728, %v3755, %v3754
      %vm3757 = vcmp.lt.s32.totalorder %v2825, 0
      %v3758 = vsub.s32 0, %v2825
      %v3759 = vsel %vm3757, %v3758, %v2825
      %v3760 = vand.u32 %v3759, 65535
      %v3761 = vshrl.u32 %v3759, 16
      %v3763 = vmul.u32 %v3760, 14564
      %v3764 = vmul.u32 %v3760, 58254
      %v3765 = vmul.u32 %v3761, 14564
      %v3766 = vmul.u32 %v3761, 58254
      %v3767 = vshll.u32 %v3764, 16
      %v3768 = vshrl.u32 %v3764, 16
      %v3769 = vshll.u32 %v3765, 16
      %v3770 = vshrl.u32 %v3765, 16
      %vm3771 = vc.u32 %v3763, %v3767
      %v3772 = vsel %vm3771, 1, 0
      %v3773 = vadd.s32 %v3763, %v3767
      %v3774 = vadd.s32 %v3766, %v3772
      %vm3775 = vc.u32 %v3773, %v3769
      %v3776 = vsel %vm3775, 1, 0
      %v3777 = vadd.s32 %v3773, %v3769
      %v3778 = vadd.s32 %v3774, %v3776
      %v3779 = vadd.s32 %v3778, %v3768
      %v3780 = vadd.s32 %v3779, %v3770
      %v3781 = vshrl.u32 %v3780, 4
      %v3782 = vmul.u32 %v3781, 18
      %v3783 = vsub.s32 %v3759, %v3782
      %v3784 = vsub.s32 0, %v3783
      %v3785 = vsel %vm3757, %v3784, %v3783
      %vm3786 = vcmp.lt.s32.totalorder %v2826, 0
      %v3787 = vsub.s32 0, %v2826
      %v3788 = vsel %vm3786, %v3787, %v2826
      %v3789 = vand.u32 %v3788, 65535
      %v3790 = vshrl.u32 %v3788, 16
      %v3792 = vmul.u32 %v3789, 14564
      %v3793 = vmul.u32 %v3789, 58254
      %v3794 = vmul.u32 %v3790, 14564
      %v3795 = vmul.u32 %v3790, 58254
      %v3796 = vshll.u32 %v3793, 16
      %v3797 = vshrl.u32 %v3793, 16
      %v3798 = vshll.u32 %v3794, 16
      %v3799 = vshrl.u32 %v3794, 16
      %vm3800 = vc.u32 %v3792, %v3796
      %v3801 = vsel %vm3800, 1, 0
      %v3802 = vadd.s32 %v3792, %v3796
      %v3803 = vadd.s32 %v3795, %v3801
      %vm3804 = vc.u32 %v3802, %v3798
      %v3805 = vsel %vm3804, 1, 0
      %v3806 = vadd.s32 %v3802, %v3798
      %v3807 = vadd.s32 %v3803, %v3805
      %v3808 = vadd.s32 %v3807, %v3797
      %v3809 = vadd.s32 %v3808, %v3799
      %v3810 = vshrl.u32 %v3809, 4
      %v3811 = vmul.u32 %v3810, 18
      %v3812 = vsub.s32 %v3788, %v3811
      %v3813 = vsub.s32 0, %v3812
      %v3814 = vsel %vm3786, %v3813, %v3812
      %vm3815 = vcmp.lt.s32.totalorder %v2827, 0
      %v3816 = vsub.s32 0, %v2827
      %v3817 = vsel %vm3815, %v3816, %v2827
      %v3818 = vand.u32 %v3817, 65535
      %v3819 = vshrl.u32 %v3817, 16
      %v3821 = vmul.u32 %v3818, 14564
      %v3822 = vmul.u32 %v3818, 58254
      %v3823 = vmul.u32 %v3819, 14564
      %v3824 = vmul.u32 %v3819, 58254
      %v3825 = vshll.u32 %v3822, 16
      %v3826 = vshrl.u32 %v3822, 16
      %v3827 = vshll.u32 %v3823, 16
      %v3828 = vshrl.u32 %v3823, 16
      %vm3829 = vc.u32 %v3821, %v3825
      %v3830 = vsel %vm3829, 1, 0
      %v3831 = vadd.s32 %v3821, %v3825
      %v3832 = vadd.s32 %v3824, %v3830
      %vm3833 = vc.u32 %v3831, %v3827
      %v3834 = vsel %vm3833, 1, 0
      %v3835 = vadd.s32 %v3831, %v3827
      %v3836 = vadd.s32 %v3832, %v3834
      %v3837 = vadd.s32 %v3836, %v3826
      %v3838 = vadd.s32 %v3837, %v3828
      %v3839 = vshrl.u32 %v3838, 4
      %v3840 = vmul.u32 %v3839, 18
      %v3841 = vsub.s32 %v3817, %v3840
      %v3842 = vsub.s32 0, %v3841
      %v3843 = vsel %vm3815, %v3842, %v3841
      %vm3844 = vcmp.lt.s32.totalorder %v2828, 0
      %v3845 = vsub.s32 0, %v2828
      %v3846 = vsel %vm3844, %v3845, %v2828
      %v3847 = vand.u32 %v3846, 65535
      %v3848 = vshrl.u32 %v3846, 16
      %v3850 = vmul.u32 %v3847, 14564
      %v3851 = vmul.u32 %v3847, 58254
      %v3852 = vmul.u32 %v3848, 14564
      %v3853 = vmul.u32 %v3848, 58254
      %v3854 = vshll.u32 %v3851, 16
      %v3855 = vshrl.u32 %v3851, 16
      %v3856 = vshll.u32 %v3852, 16
      %v3857 = vshrl.u32 %v3852, 16
      %vm3858 = vc.u32 %v3850, %v3854
      %v3859 = vsel %vm3858, 1, 0
      %v3860 = vadd.s32 %v3850, %v3854
      %v3861 = vadd.s32 %v3853, %v3859
      %vm3862 = vc.u32 %v3860, %v3856
      %v3863 = vsel %vm3862, 1, 0
      %v3864 = vadd.s32 %v3860, %v3856
      %v3865 = vadd.s32 %v3861, %v3863
      %v3866 = vadd.s32 %v3865, %v3855
      %v3867 = vadd.s32 %v3866, %v3857
      %v3868 = vshrl.u32 %v3867, 4
      %v3869 = vmul.u32 %v3868, 18
      %v3870 = vsub.s32 %v3846, %v3869
      %v3871 = vsub.s32 0, %v3870
      %v3872 = vsel %vm3844, %v3871, %v3870
      %vm3873 = vcmp.ne.s32.totalorder %v2857, 0
      %vm3874 = vcmp.ne.s32.totalorder %v2886, 0
      %vm3875 = vcmp.ne.s32.totalorder %v2915, 0
      %vm3876 = vcmp.ne.s32.totalorder %v2944, 0
      %vm3877 = vcmp.ne.s32.totalorder %v2973, 0
      %vm3878 = vcmp.ne.s32.totalorder %v3002, 0
      %vm3879 = vcmp.ne.s32.totalorder %v3031, 0
      %vm3880 = vcmp.ne.s32.totalorder %v3060, 0
      %vm3881 = vcmp.ne.s32.totalorder %v3089, 0
      %vm3882 = vcmp.ne.s32.totalorder %v3118, 0
      %vm3883 = vcmp.ne.s32.totalorder %v3147, 0
      %vm3884 = vcmp.ne.s32.totalorder %v3176, 0
      %vm3885 = vcmp.ne.s32.totalorder %v3205, 0
      %vm3886 = vcmp.ne.s32.totalorder %v3234, 0
      %vm3887 = vcmp.ne.s32.totalorder %v3263, 0
      %vm3888 = vcmp.ne.s32.totalorder %v3292, 0
      %vm3889 = vcmp.ne.s32.totalorder %v3321, 0
      %vm3890 = vcmp.ne.s32.totalorder %v3350, 0
      %vm3891 = vcmp.ne.s32.totalorder %v3379, 0
      %vm3892 = vcmp.ne.s32.totalorder %v3408, 0
      %vm3893 = vcmp.ne.s32.totalorder %v3437, 0
      %vm3894 = vcmp.ne.s32.totalorder %v3466, 0
      %vm3895 = vcmp.ne.s32.totalorder %v3495, 0
      %vm3896 = vcmp.ne.s32.totalorder %v3524, 0
      %vm3897 = vcmp.ne.s32.totalorder %v3553, 0
      %vm3898 = vcmp.ne.s32.totalorder %v3582, 0
      %vm3899 = vcmp.ne.s32.totalorder %v3611, 0
      %vm3900 = vcmp.ne.s32.totalorder %v3640, 0
      %vm3901 = vcmp.ne.s32.totalorder %v3669, 0
      %vm3902 = vcmp.ne.s32.totalorder %v3698, 0
      %vm3903 = vcmp.ne.s32.totalorder %v3727, 0
      %vm3904 = vcmp.ne.s32.totalorder %v3756, 0
      %vm3905 = vcmp.ne.s32.totalorder %v3785, 0
      %vm3906 = vcmp.ne.s32.totalorder %v3814, 0
      %vm3907 = vcmp.ne.s32.totalorder %v3843, 0
      %vm3908 = vcmp.ne.s32.totalorder %v3872, 0
      %vm3909 = vcmp.lt.s32.totalorder %v2857, 0
      %vm3910 = vcmp.lt.s32.totalorder %v2886, 0
      %vm3911 = vcmp.lt.s32.totalorder %v2915, 0
      %vm3912 = vcmp.lt.s32.totalorder %v2944, 0
      %vm3913 = vcmp.lt.s32.totalorder %v2973, 0
      %vm3914 = vcmp.lt.s32.totalorder %v3002, 0
      %vm3915 = vcmp.lt.s32.totalorder %v3031, 0
      %vm3916 = vcmp.lt.s32.totalorder %v3060, 0
      %vm3917 = vcmp.lt.s32.totalorder %v3089, 0
      %vm3918 = vcmp.lt.s32.totalorder %v3118, 0
      %vm3919 = vcmp.lt.s32.totalorder %v3147, 0
      %vm3920 = vcmp.lt.s32.totalorder %v3176, 0
      %vm3921 = vcmp.lt.s32.totalorder %v3205, 0
      %vm3922 = vcmp.lt.s32.totalorder %v3234, 0
      %vm3923 = vcmp.lt.s32.totalorder %v3263, 0
      %vm3924 = vcmp.lt.s32.totalorder %v3292, 0
      %vm3925 = vcmp.lt.s32.totalorder %v3321, 0
      %vm3926 = vcmp.lt.s32.totalorder %v3350, 0
      %vm3927 = vcmp.lt.s32.totalorder %v3379, 0
      %vm3928 = vcmp.lt.s32.totalorder %v3408, 0
      %vm3929 = vcmp.lt.s32.totalorder %v3437, 0
      %vm3930 = vcmp.lt.s32.totalorder %v3466, 0
      %vm3931 = vcmp.lt.s32.totalorder %v3495, 0
      %vm3932 = vcmp.lt.s32.totalorder %v3524, 0
      %vm3933 = vcmp.lt.s32.totalorder %v3553, 0
      %vm3934 = vcmp.lt.s32.totalorder %v3582, 0
      %vm3935 = vcmp.lt.s32.totalorder %v3611, 0
      %vm3936 = vcmp.lt.s32.totalorder %v3640, 0
      %vm3937 = vcmp.lt.s32.totalorder %v3669, 0
      %vm3938 = vcmp.lt.s32.totalorder %v3698, 0
      %vm3939 = vcmp.lt.s32.totalorder %v3727, 0
      %vm3940 = vcmp.lt.s32.totalorder %v3756, 0
      %vm3941 = vcmp.lt.s32.totalorder %v3785, 0
      %vm3942 = vcmp.lt.s32.totalorder %v3814, 0
      %vm3943 = vcmp.lt.s32.totalorder %v3843, 0
      %vm3944 = vcmp.lt.s32.totalorder %v3872, 0
      %vm3945 = vmand %vm3909, %vm3873
      %vm3946 = vmand %vm3910, %vm3874
      %vm3947 = vmand %vm3911, %vm3875
      %vm3948 = vmand %vm3912, %vm3876
      %vm3949 = vmand %vm3913, %vm3877
      %vm3950 = vmand %vm3914, %vm3878
      %vm3951 = vmand %vm3915, %vm3879
      %vm3952 = vmand %vm3916, %vm3880
      %vm3953 = vmand %vm3917, %vm3881
      %vm3954 = vmand %vm3918, %vm3882
      %vm3955 = vmand %vm3919, %vm3883
      %vm3956 = vmand %vm3920, %vm3884
      %vm3957 = vmand %vm3921, %vm3885
      %vm3958 = vmand %vm3922, %vm3886
      %vm3959 = vmand %vm3923, %vm3887
      %vm3960 = vmand %vm3924, %vm3888
      %vm3961 = vmand %vm3925, %vm3889
      %vm3962 = vmand %vm3926, %vm3890
      %vm3963 = vmand %vm3927, %vm3891
      %vm3964 = vmand %vm3928, %vm3892
      %vm3965 = vmand %vm3929, %vm3893
      %vm3966 = vmand %vm3930, %vm3894
      %vm3967 = vmand %vm3931, %vm3895
      %vm3968 = vmand %vm3932, %vm3896
      %vm3969 = vmand %vm3933, %vm3897
      %vm3970 = vmand %vm3934, %vm3898
      %vm3971 = vmand %vm3935, %vm3899
      %vm3972 = vmand %vm3936, %vm3900
      %vm3973 = vmand %vm3937, %vm3901
      %vm3974 = vmand %vm3938, %vm3902
      %vm3975 = vmand %vm3939, %vm3903
      %vm3976 = vmand %vm3940, %vm3904
      %vm3977 = vmand %vm3941, %vm3905
      %vm3978 = vmand %vm3942, %vm3906
      %vm3979 = vmand %vm3943, %vm3907
      %vm3980 = vmand %vm3944, %vm3908
      %v3981 = vadd.s32 %v2857, 18
      %v3982 = vadd.s32 %v2886, 18
      %v3983 = vadd.s32 %v2915, 18
      %v3984 = vadd.s32 %v2944, 18
      %v3985 = vadd.s32 %v2973, 18
      %v3986 = vadd.s32 %v3002, 18
      %v3987 = vadd.s32 %v3031, 18
      %v3988 = vadd.s32 %v3060, 18
      %v3989 = vadd.s32 %v3089, 18
      %v3990 = vadd.s32 %v3118, 18
      %v3991 = vadd.s32 %v3147, 18
      %v3992 = vadd.s32 %v3176, 18
      %v3993 = vadd.s32 %v3205, 18
      %v3994 = vadd.s32 %v3234, 18
      %v3995 = vadd.s32 %v3263, 18
      %v3996 = vadd.s32 %v3292, 18
      %v3997 = vadd.s32 %v3321, 18
      %v3998 = vadd.s32 %v3350, 18
      %v3999 = vadd.s32 %v3379, 18
      %v4000 = vadd.s32 %v3408, 18
      %v4001 = vadd.s32 %v3437, 18
      %v4002 = vadd.s32 %v3466, 18
      %v4003 = vadd.s32 %v3495, 18
      %v4004 = vadd.s32 %v3524, 18
      %v4005 = vadd.s32 %v3553, 18
      %v4006 = vadd.s32 %v3582, 18
      %v4007 = vadd.s32 %v3611, 18
      %v4008 = vadd.s32 %v3640, 18
      %v4009 = vadd.s32 %v3669, 18
      %v4010 = vadd.s32 %v3698, 18
      %v4011 = vadd.s32 %v3727, 18
      %v4012 = vadd.s32 %v3756, 18
      %v4013 = vadd.s32 %v3785, 18
      %v4014 = vadd.s32 %v3814, 18
      %v4015 = vadd.s32 %v3843, 18
      %v4016 = vadd.s32 %v3872, 18
      %v4017 = vsel %vm3945, %v3981, %v2857
      %v4018 = vsel %vm3946, %v3982, %v2886
      %v4019 = vsel %vm3947, %v3983, %v2915
      %v4020 = vsel %vm3948, %v3984, %v2944
      %v4021 = vsel %vm3949, %v3985, %v2973
      %v4022 = vsel %vm3950, %v3986, %v3002
      %v4023 = vsel %vm3951, %v3987, %v3031
      %v4024 = vsel %vm3952, %v3988, %v3060
      %v4025 = vsel %vm3953, %v3989, %v3089
      %v4026 = vsel %vm3954, %v3990, %v3118
      %v4027 = vsel %vm3955, %v3991, %v3147
      %v4028 = vsel %vm3956, %v3992, %v3176
      %v4029 = vsel %vm3957, %v3993, %v3205
      %v4030 = vsel %vm3958, %v3994, %v3234
      %v4031 = vsel %vm3959, %v3995, %v3263
      %v4032 = vsel %vm3960, %v3996, %v3292
      %v4033 = vsel %vm3961, %v3997, %v3321
      %v4034 = vsel %vm3962, %v3998, %v3350
      %v4035 = vsel %vm3963, %v3999, %v3379
      %v4036 = vsel %vm3964, %v4000, %v3408
      %v4037 = vsel %vm3965, %v4001, %v3437
      %v4038 = vsel %vm3966, %v4002, %v3466
      %v4039 = vsel %vm3967, %v4003, %v3495
      %v4040 = vsel %vm3968, %v4004, %v3524
      %v4041 = vsel %vm3969, %v4005, %v3553
      %v4042 = vsel %vm3970, %v4006, %v3582
      %v4043 = vsel %vm3971, %v4007, %v3611
      %v4044 = vsel %vm3972, %v4008, %v3640
      %v4045 = vsel %vm3973, %v4009, %v3669
      %v4046 = vsel %vm3974, %v4010, %v3698
      %v4047 = vsel %vm3975, %v4011, %v3727
      %v4048 = vsel %vm3976, %v4012, %v3756
      %v4049 = vsel %vm3977, %v4013, %v3785
      %v4050 = vsel %vm3978, %v4014, %v3814
      %v4051 = vsel %vm3979, %v4015, %v3843
      %v4052 = vsel %vm3980, %v4016, %v3872
      %vm4053 = vcmp.ne.s32.totalorder %v4017, 0
      %vm4054 = vcmp.ne.s32.totalorder %v4018, 0
      %vm4055 = vcmp.ne.s32.totalorder %v4019, 0
      %vm4056 = vcmp.ne.s32.totalorder %v4020, 0
      %vm4057 = vcmp.ne.s32.totalorder %v4021, 0
      %vm4058 = vcmp.ne.s32.totalorder %v4022, 0
      %vm4059 = vcmp.ne.s32.totalorder %v4023, 0
      %vm4060 = vcmp.ne.s32.totalorder %v4024, 0
      %vm4061 = vcmp.ne.s32.totalorder %v4025, 0
      %vm4062 = vcmp.ne.s32.totalorder %v4026, 0
      %vm4063 = vcmp.ne.s32.totalorder %v4027, 0
      %vm4064 = vcmp.ne.s32.totalorder %v4028, 0
      %vm4065 = vcmp.ne.s32.totalorder %v4029, 0
      %vm4066 = vcmp.ne.s32.totalorder %v4030, 0
      %vm4067 = vcmp.ne.s32.totalorder %v4031, 0
      %vm4068 = vcmp.ne.s32.totalorder %v4032, 0
      %vm4069 = vcmp.ne.s32.totalorder %v4033, 0
      %vm4070 = vcmp.ne.s32.totalorder %v4034, 0
      %vm4071 = vcmp.ne.s32.totalorder %v4035, 0
      %vm4072 = vcmp.ne.s32.totalorder %v4036, 0
      %vm4073 = vcmp.ne.s32.totalorder %v4037, 0
      %vm4074 = vcmp.ne.s32.totalorder %v4038, 0
      %vm4075 = vcmp.ne.s32.totalorder %v4039, 0
      %vm4076 = vcmp.ne.s32.totalorder %v4040, 0
      %vm4077 = vcmp.ne.s32.totalorder %v4041, 0
      %vm4078 = vcmp.ne.s32.totalorder %v4042, 0
      %vm4079 = vcmp.ne.s32.totalorder %v4043, 0
      %vm4080 = vcmp.ne.s32.totalorder %v4044, 0
      %vm4081 = vcmp.ne.s32.totalorder %v4045, 0
      %vm4082 = vcmp.ne.s32.totalorder %v4046, 0
      %vm4083 = vcmp.ne.s32.totalorder %v4047, 0
      %vm4084 = vcmp.ne.s32.totalorder %v4048, 0
      %vm4085 = vcmp.ne.s32.totalorder %v4049, 0
      %vm4086 = vcmp.ne.s32.totalorder %v4050, 0
      %vm4087 = vcmp.ne.s32.totalorder %v4051, 0
      %vm4088 = vcmp.ne.s32.totalorder %v4052, 0
      %vm4089 = vcmp.ne.s32.totalorder %v4017, 17
      %vm4090 = vcmp.ne.s32.totalorder %v4018, 17
      %vm4091 = vcmp.ne.s32.totalorder %v4019, 17
      %vm4092 = vcmp.ne.s32.totalorder %v4020, 17
      %vm4093 = vcmp.ne.s32.totalorder %v4021, 17
      %vm4094 = vcmp.ne.s32.totalorder %v4022, 17
      %vm4095 = vcmp.ne.s32.totalorder %v4023, 17
      %vm4096 = vcmp.ne.s32.totalorder %v4024, 17
      %vm4097 = vcmp.ne.s32.totalorder %v4025, 17
      %vm4098 = vcmp.ne.s32.totalorder %v4026, 17
      %vm4099 = vcmp.ne.s32.totalorder %v4027, 17
      %vm4100 = vcmp.ne.s32.totalorder %v4028, 17
      %vm4101 = vcmp.ne.s32.totalorder %v4029, 17
      %vm4102 = vcmp.ne.s32.totalorder %v4030, 17
      %vm4103 = vcmp.ne.s32.totalorder %v4031, 17
      %vm4104 = vcmp.ne.s32.totalorder %v4032, 17
      %vm4105 = vcmp.ne.s32.totalorder %v4033, 17
      %vm4106 = vcmp.ne.s32.totalorder %v4034, 17
      %vm4107 = vcmp.ne.s32.totalorder %v4035, 17
      %vm4108 = vcmp.ne.s32.totalorder %v4036, 17
      %vm4109 = vcmp.ne.s32.totalorder %v4037, 17
      %vm4110 = vcmp.ne.s32.totalorder %v4038, 17
      %vm4111 = vcmp.ne.s32.totalorder %v4039, 17
      %vm4112 = vcmp.ne.s32.totalorder %v4040, 17
      %vm4113 = vcmp.ne.s32.totalorder %v4041, 17
      %vm4114 = vcmp.ne.s32.totalorder %v4042, 17
      %vm4115 = vcmp.ne.s32.totalorder %v4043, 17
      %vm4116 = vcmp.ne.s32.totalorder %v4044, 17
      %vm4117 = vcmp.ne.s32.totalorder %v4045, 17
      %vm4118 = vcmp.ne.s32.totalorder %v4046, 17
      %vm4119 = vcmp.ne.s32.totalorder %v4047, 17
      %vm4120 = vcmp.ne.s32.totalorder %v4048, 17
      %vm4121 = vcmp.ne.s32.totalorder %v4049, 17
      %vm4122 = vcmp.ne.s32.totalorder %v4050, 17
      %vm4123 = vcmp.ne.s32.totalorder %v4051, 17
      %vm4124 = vcmp.ne.s32.totalorder %v4052, 17
      %vm4125 = vmand %vm4053, %vm4089
      %vm4126 = vmand %vm4054, %vm4090
      %vm4127 = vmand %vm4055, %vm4091
      %vm4128 = vmand %vm4056, %vm4092
      %vm4129 = vmand %vm4057, %vm4093
      %vm4130 = vmand %vm4058, %vm4094
      %vm4131 = vmand %vm4059, %vm4095
      %vm4132 = vmand %vm4060, %vm4096
      %vm4133 = vmand %vm4061, %vm4097
      %vm4134 = vmand %vm4062, %vm4098
      %vm4135 = vmand %vm4063, %vm4099
      %vm4136 = vmand %vm4064, %vm4100
      %vm4137 = vmand %vm4065, %vm4101
      %vm4138 = vmand %vm4066, %vm4102
      %vm4139 = vmand %vm4067, %vm4103
      %vm4140 = vmand %vm4068, %vm4104
      %vm4141 = vmand %vm4069, %vm4105
      %vm4142 = vmand %vm4070, %vm4106
      %vm4143 = vmand %vm4071, %vm4107
      %vm4144 = vmand %vm4072, %vm4108
      %vm4145 = vmand %vm4073, %vm4109
      %vm4146 = vmand %vm4074, %vm4110
      %vm4147 = vmand %vm4075, %vm4111
      %vm4148 = vmand %vm4076, %vm4112
      %vm4149 = vmand %vm4077, %vm4113
      %vm4150 = vmand %vm4078, %vm4114
      %vm4151 = vmand %vm4079, %vm4115
      %vm4152 = vmand %vm4080, %vm4116
      %vm4153 = vmand %vm4081, %vm4117
      %vm4154 = vmand %vm4082, %vm4118
      %vm4155 = vmand %vm4083, %vm4119
      %vm4156 = vmand %vm4084, %vm4120
      %vm4157 = vmand %vm4085, %vm4121
      %vm4158 = vmand %vm4086, %vm4122
      %vm4159 = vmand %vm4087, %vm4123
      %vm4160 = vmand %vm4088, %vm4124
      %v4161 = vsel %vm4125, %v2758, 0.0
      %v4162 = vsel %vm4126, %v2759, 0.0
      %v4163 = vsel %vm4127, %v2760, 0.0
      %v4164 = vsel %vm4128, %v2761, 0.0
      %v4165 = vsel %vm4129, %v2762, 0.0
      %v4166 = vsel %vm4130, %v2763, 0.0
      %v4167 = vsel %vm4131, %v2764, 0.0
      %v4168 = vsel %vm4132, %v2765, 0.0
      %v4169 = vsel %vm4133, %v2766, 0.0
      %v4170 = vsel %vm4134, %v2767, 0.0
      %v4171 = vsel %vm4135, %v2768, 0.0
      %v4172 = vsel %vm4136, %v2769, 0.0
      %v4173 = vsel %vm4137, %v2770, 0.0
      %v4174 = vsel %vm4138, %v2771, 0.0
      %v4175 = vsel %vm4139, %v2772, 0.0
      %v4176 = vsel %vm4140, %v2773, 0.0
      %v4177 = vsel %vm4141, %v2774, 0.0
      %v4178 = vsel %vm4142, %v2775, 0.0
      %v4179 = vsel %vm4143, %v2776, 0.0
      %v4180 = vsel %vm4144, %v2777, 0.0
      %v4181 = vsel %vm4145, %v2778, 0.0
      %v4182 = vsel %vm4146, %v2779, 0.0
      %v4183 = vsel %vm4147, %v2780, 0.0
      %v4184 = vsel %vm4148, %v2781, 0.0
      %v4185 = vsel %vm4149, %v2782, 0.0
      %v4186 = vsel %vm4150, %v2783, 0.0
      %v4187 = vsel %vm4151, %v2784, 0.0
      %v4188 = vsel %vm4152, %v2785, 0.0
      %v4189 = vsel %vm4153, %v2786, 0.0
      %v4190 = vsel %vm4154, %v2787, 0.0
      %v4191 = vsel %vm4155, %v2788, 0.0
      %v4192 = vsel %vm4156, %v2789, 0.0
      %v4193 = vsel %vm4157, %v2790, 0.0
      %v4194 = vsel %vm4158, %v2791, 0.0
      %v4195 = vsel %vm4159, %v2792, 0.0
      %v4196 = vsel %vm4160, %v2793, 0.0
      %vm4197 = vcmask 261120
      %4198 = vst.msk [vmem:[%s334] sm:$0xff] %vm4197, %v4161
      %4199 = vst.msk [vmem:[%s334 + $0x8] sm:$0xff] %vm4197, %v4162
      %4200 = vst.msk [vmem:[%s334 + $0x10] sm:$0xff] %vm4197, %v4163
      %4201 = vst.msk [vmem:[%s334 + $0x18] sm:$0xff] %vm4197, %v4164
      %4202 = vst.msk [vmem:[%s334 + $0x20] sm:$0xff] %vm4197, %v4165
      %4203 = vst.msk [vmem:[%s334 + $0x28] sm:$0xff] %vm4197, %v4166
      %4204 = vst.msk [vmem:[%s334 + $0x30] sm:$0xff] %vm4197, %v4167
      %4205 = vst.msk [vmem:[%s334 + $0x38] sm:$0xff] %vm4197, %v4168
      %4206 = vst.msk [vmem:[%s334 + $0x40] sm:$0xff] %vm4197, %v4169
      %4207 = vst.msk [vmem:[%s334 + $0x48] sm:$0xff] %vm4197, %v4170
      %4208 = vst.msk [vmem:[%s334 + $0x50] sm:$0xff] %vm4197, %v4171
      %4209 = vst.msk [vmem:[%s334 + $0x58] sm:$0xff] %vm4197, %v4172
      %4210 = vst.msk [vmem:[%s334 + $0x60] sm:$0xff] %vm4197, %v4173
      %4211 = vst.msk [vmem:[%s334 + $0x68] sm:$0xff] %vm4197, %v4174
      %4212 = vst.msk [vmem:[%s334 + $0x70] sm:$0xff] %vm4197, %v4175
      %4213 = vst.msk [vmem:[%s334 + $0x78] sm:$0xff] %vm4197, %v4176
      %4214 = vst.msk [vmem:[%s334 + $0x80] sm:$0xff] %vm4197, %v4177
      %4215 = vst.msk [vmem:[%s334 + $0x88] sm:$0xff] %vm4197, %v4178
      %4216 = vst.msk [vmem:[%s334 + $0x90] sm:$0xff] %vm4197, %v4179
      %4217 = vst.msk [vmem:[%s334 + $0x98] sm:$0xff] %vm4197, %v4180
      %4218 = vst.msk [vmem:[%s334 + $0xa0] sm:$0xff] %vm4197, %v4181
      %4219 = vst.msk [vmem:[%s334 + $0xa8] sm:$0xff] %vm4197, %v4182
      %4220 = vst.msk [vmem:[%s334 + $0xb0] sm:$0xff] %vm4197, %v4183
      %4221 = vst.msk [vmem:[%s334 + $0xb8] sm:$0xff] %vm4197, %v4184
      %4222 = vst.msk [vmem:[%s334 + $0xc0] sm:$0xff] %vm4197, %v4185
      %4223 = vst.msk [vmem:[%s334 + $0xc8] sm:$0xff] %vm4197, %v4186
      %4224 = vst.msk [vmem:[%s334 + $0xd0] sm:$0xff] %vm4197, %v4187
      %4225 = vst.msk [vmem:[%s334 + $0xd8] sm:$0xff] %vm4197, %v4188
      %4226 = vst.msk [vmem:[%s334 + $0xe0] sm:$0xff] %vm4197, %v4189
      %4227 = vst.msk [vmem:[%s334 + $0xe8] sm:$0xff] %vm4197, %v4190
      %4228 = vst.msk [vmem:[%s334 + $0xf0] sm:$0xff] %vm4197, %v4191
      %4229 = vst.msk [vmem:[%s334 + $0xf8] sm:$0xff] %vm4197, %v4192
      %4230 = vst.msk [vmem:[%s334 + $0x100] sm:$0xff] %vm4197, %v4193
      %4231 = vst.msk [vmem:[%s334 + $0x108] sm:$0xff] %vm4197, %v4194
      %4232 = vst.msk [vmem:[%s334 + $0x110] sm:$0xff] %vm4197, %v4195
      %4233 = vst.msk [vmem:[%s334 + $0x118] sm:$0xff] %vm4197, %v4196
      %s4234 = smul.u32 36, %s21
      %p4235 = scmp.lt.s32.totalorder %s20, 1
      %s4236 = scalar_select %p4235, %s20, 1
      %p4237 = scmp.lt.s32.totalorder %s4234, 35
      %s4238 = scalar_select %p4237, %s4234, 35
      %s4239 = smul.addr %s4236, 36
      %s4240 = sadd.s32 %s4238, %s4239
      %s4241 = smul.addr %s4240, 8
      %s4242 = scalar_lea.vmem %s5, %s4241
      // Predicated region
      $region41: #{_csp_forward.2} parent=39 // pred_check
        %p4243 = pneg %p174
      $region42: #{_csp_forward.2} parent=39 // pred_check_branch
        %4245 = sbr.rel (%p4243) target = $region44
      $region43: #{_csp_forward.2} parent=39 // pred_region
        %s4246 = smul.u32 36, %s21
      $region44: #{_csp_forward.2} parent=39 // pred_fallthru
        _
    $region40: #{_csp_forward.2} parent=5 // pred_fallthru
      _
    %p4247 = scmp.le.s32.totalorder 2, %s11
    // Predicated region
    $region45: #{_csp_forward.2} parent=5 // pred_check
      %p4248 = pneg %p4247
    $region46: #{_csp_forward.2} parent=5 // pred_check_branch
      %4250 = sbr.rel (%p4248) target = $region48
    $region47: #{_csp_forward.2} parent=5 // pred_region
      %s4251 = ssub.s32 %s11, 2
      // Predicated region
      $region49: #{_csp_forward.2} parent=47 // pred_check
        %p4252 = pneg %p180
      $region50: #{_csp_forward.2} parent=47 // pred_check_branch
        %4254 = sbr.rel (%p4252) target = $region52
      $region51: #{_csp_forward.2} parent=47 // pred_region
        %s4255 = smul.u32 36, %s23
        %p4256 = scmp.lt.s32.totalorder %s22, 1
        %s4257 = scalar_select %p4256, %s22, 1
        %p4258 = scmp.lt.s32.totalorder %s4255, 35
        %s4259 = scalar_select %p4258, %s4255, 35
        %s4260 = smul.addr %s4257, 36
        %s4261 = sadd.s32 %s4259, %s4260
        %s4262 = smul.addr %s4261, 8
        %s4263 = scalar_lea.vmem %s5, %s4262
      $region52: #{_csp_forward.2} parent=47 // pred_fallthru
        _
    $region48: #{_csp_forward.2} parent=5 // pred_fallthru
      _
  $region6: #{_csp_forward.2} parent=0 // loop_footer
    %s15 = sadd.s32 1, %s11
  $region7: #{_csp_forward.2} parent=0 // loop_footer_branch
    %10 = sbr.rel target = $region3
  $region8: #{_csp_forward.2} parent=0 // loop_exit
    _

</llo_original>
